<compile_context>
chip_gen: v7x
topology: tpu7x:2x2x1
jax: 0.10.0
libtpu: 0.0.40
codegen_flags: <defaults>
</compile_context>

<pallas_src>
import jax
import jax.numpy as jnp
from jax.experimental import pallas as pl
from jax.experimental.pallas import tpu as pltpu

LANE = 128


def _round_up(n, m):
    return ((n + m - 1) // m) * m


def _pad_axis(a, axis, new_size):
    pad = [(0, 0)] * a.ndim
    pad[axis] = (0, new_size - a.shape[axis])
    return jnp.pad(a, pad)


# ----------------------------------------------------------------------------
# Fused CNN stack kernel: 2x (conv1d k=3 "same" over time -> folded BN -> ReLU)
# Grid: (B,), one batch row per step ("parallel" -> both TensorCores on v7x).
# ----------------------------------------------------------------------------
def cnn2_kernel(x_ref, w1_ref, s1_ref, b1_ref, w2_ref, s2_ref, b2_ref,
                o_ref, xp_ref, y1_ref):
    # x_ref:(1,T,F) bf16   w*:(3F,F) bf16 (taps stacked along K)   s*/b*:(1,F) f32
    # o_ref:(1,T,F) bf16   xp_ref / y1_ref:(T+2,F) bf16 zero-time-halo scratch
    T, F = o_ref.shape[1], o_ref.shape[2]
    zrow = jnp.zeros((1, F), jnp.bfloat16)

    # Layer-1 input with zero halo, built in VMEM (no HBM-side padded copy).
    xp_ref[0:1, :] = zrow
    xp_ref[T + 1:T + 2, :] = zrow
    xp_ref[1:T + 1, :] = x_ref[0]

    def conv_bn_relu(src_ref, w_ref, s_ref, b_ref):
        # im2col: (T, 3F) slab of the 3 shifted views @ (3F, F) stacked weight
        # -> one K=3F MXU matmul per layer (fills the 256-wide v6e/v7x MXU).
        slab = jnp.concatenate(
            [src_ref[0:T, :], src_ref[1:T + 1, :], src_ref[2:T + 2, :]], axis=1)
        acc = jnp.dot(slab, w_ref[...], preferred_element_type=jnp.float32)
        return jnp.maximum(acc * s_ref[...] + b_ref[...], 0.0)

    y1 = conv_bn_relu(xp_ref, w1_ref, s1_ref, b1_ref)
    # Layer-2 input = layer-1 output with its own zero halo (matches torch pad=1).
    y1_ref[0:1, :] = zrow
    y1_ref[T + 1:T + 2, :] = zrow
    y1_ref[1:T + 1, :] = y1.astype(jnp.bfloat16)
    o_ref[0] = conv_bn_relu(y1_ref, w2_ref, s2_ref, b2_ref).astype(o_ref.dtype)


def cnn_stack2(x, p1, p2):
    """x: (B, T, F) bf16 with F lane-padded.  Applies both CNN_Stacks in one pass."""
    # TODO(synk): tile the time axis (halo-overlapping blocks) for very long
    # utterances so the per-row footprint stays inside v7x's 64 MiB VMEM.
    B, T, F = x.shape
    return pl.pallas_call(
        cnn2_kernel,
        out_shape=jax.ShapeDtypeStruct((B, T, F), jnp.bfloat16),
        grid_spec=pltpu.PrefetchScalarGridSpec(
            num_scalar_prefetch=0,
            grid=(B,),
            in_specs=[
                pl.BlockSpec((1, T, F), lambda b: (b, 0, 0)),
                pl.BlockSpec((3 * F, F), lambda b: (0, 0)),
                pl.BlockSpec((1, F), lambda b: (0, 0)),
                pl.BlockSpec((1, F), lambda b: (0, 0)),
                pl.BlockSpec((3 * F, F), lambda b: (0, 0)),
                pl.BlockSpec((1, F), lambda b: (0, 0)),
                pl.BlockSpec((1, F), lambda b: (0, 0)),
            ],
            out_specs=pl.BlockSpec((1, T, F), lambda b: (b, 0, 0)),
            scratch_shapes=[pltpu.VMEM((T + 2, F), jnp.bfloat16)] * 2,
        ),
        compiler_params=pltpu.CompilerParams(dimension_semantics=("parallel",)),
    )(x, p1["w"], p1["scale"], p1["shift"], p2["w"], p2["scale"], p2["shift"])


# ----------------------------------------------------------------------------
# GRU stack kernel.  Grid: (batch-blocks "parallel", time-chunks "arbitrary").
# Hidden state persists across time chunks in a small VMEM scratch; the chunk's
# input-side gate projection is staged in a VMEM scratch and consumed per step.
# ----------------------------------------------------------------------------
def gru_kernel(x_ref, wi_ref, wh_ref, bif_ref, bhn_ref, o_ref, h_ref, g_ref):
    # x_ref:(Bb,TC,F) bf16   wi_ref:(F,3H) bf16 (gates r|z|n concatenated)
    # wh_ref:(H,3H) bf16     bif_ref:(1,3H) f32 (b_i with b_hr/b_hz folded in)
    # bhn_ref:(1,H) f32      o_ref:(Bb,TC,H) bf16
    # h_ref:(Bb,H) f32 persistent hidden-state carry
    # g_ref:(Bb,TC,3H) f32 staged input-side gates for the chunk
    Bb, TC, F = x_ref.shape
    H = o_ref.shape[2]

    @pl.when(pl.program_id(1) == 0)
    def _():
        h_ref[...] = jnp.zeros_like(h_ref)

    # Input-side gate projection for the whole chunk: one (Bb*TC,F)@(F,3H)
    # bf16 MXU matmul, written to VMEM scratch so vreg pressure stays bounded.
    g = jnp.dot(x_ref[...].reshape(Bb * TC, F), wi_ref[...],
                preferred_element_type=jnp.float32) + bif_ref[...]
    g_ref[...] = g.reshape(Bb, TC, 3 * H)

    wh = wh_ref[...]          # bf16; NOTE: could be pinned in MXU staging regs
    bhn = bhn_ref[...]        # (pltpu.matmul_push_rhs) across the step loop.
    h = h_ref[...]            # f32 carry

    # Static unroll of the sequential recurrence; per-step live state is only h,
    # since gates come from g_ref and outputs go straight to o_ref.
    for t in range(TC):
        gt = g_ref[:, t, :]                                             # (Bb, 3H)
        gh = jnp.dot(h.astype(jnp.bfloat16), wh,
                     preferred_element_type=jnp.float32)                # fused r|z|n
        rz = jax.nn.sigmoid(gt[:, :2 * H] + gh[:, :2 * H])              # one wide sigmoid
        r = rz[:, :H]
        z = rz[:, H:]
        n = jnp.tanh(gt[:, 2 * H:] + r * (gh[:, 2 * H:] + bhn))
        h = (1.0 - z) * n + z * h
        o_ref[:, t, :] = h.astype(o_ref.dtype)                          # lane-dense store
    h_ref[...] = h


def gru_stack(x, p, *, t_chunk=32, b_block=None):
    B, T, F = x.shape
    H = p["bhn"].shape[-1]
    Bb = B if b_block is None else b_block
    assert T % t_chunk == 0 and B % Bb == 0
    return pl.pallas_call(
        gru_kernel,
        out_shape=jax.ShapeDtypeStruct((B, T, H), jnp.bfloat16),
        grid_spec=pltpu.PrefetchScalarGridSpec(
            num_scalar_prefetch=0,
            grid=(B // Bb, T // t_chunk),
            in_specs=[
                pl.BlockSpec((Bb, t_chunk, F), lambda b, t: (b, t, 0)),
                pl.BlockSpec((F, 3 * H), lambda b, t: (0, 0)),
                pl.BlockSpec((H, 3 * H), lambda b, t: (0, 0)),
                pl.BlockSpec((1, 3 * H), lambda b, t: (0, 0)),
                pl.BlockSpec((1, H), lambda b, t: (0, 0)),
            ],
            out_specs=pl.BlockSpec((Bb, t_chunk, H), lambda b, t: (b, t, 0)),
            scratch_shapes=[
                pltpu.VMEM((Bb, H), jnp.float32),            # hidden-state carry
                pltpu.VMEM((Bb, t_chunk, 3 * H), jnp.float32),  # staged gates
            ],
        ),
        compiler_params=pltpu.CompilerParams(
            dimension_semantics=("parallel", "arbitrary")),
    )(x, p["wi"], p["wh"], p["bif"], p["bhn"])


# ----------------------------------------------------------------------------
# Parameters: synthetic init in PyTorch-equivalent shapes, then a "prepare" step
# that pads features to lane multiples, concatenates GRU gates, folds biases and
# casts streaming / matmul weights to bf16.
# ----------------------------------------------------------------------------
def init_params(key, f_in, f_out, dtype=jnp.float32):
    eps = 1e-5
    params = {"cnn": [], "rnn": []}
    for _ in range(2):  # two CNN stacks
        key, k1, k2, k3, k4, k5, k6 = jax.random.split(key, 7)
        w = jax.random.normal(k1, (3, f_in, f_in), dtype) / jnp.sqrt(3.0 * f_in)
        bias = 0.1 * jax.random.normal(k2, (f_in,), dtype)
        gamma = 1.0 + 0.1 * jax.random.normal(k3, (f_in,), dtype)
        beta = 0.1 * jax.random.normal(k4, (f_in,), dtype)
        mean = 0.1 * jax.random.normal(k5, (f_in,), dtype)
        var = jax.random.uniform(k6, (f_in,), dtype, 0.5, 1.5)
        scale = gamma / jnp.sqrt(var + eps)
        shift = (bias - mean) * scale + beta          # folded conv-bias + eval BN
        params["cnn"].append({"w": w, "scale": scale, "shift": shift})
    dims = [(f_in, f_out)] + [(f_out, f_out)] * 3     # four RNN stacks
    for fi, fo in dims:
        key, k1, k2, k3, k4 = jax.random.split(key, 5)
        bound = 1.0 / jnp.sqrt(float(fo))
        params["rnn"].append({
            "wi": jax.random.uniform(k1, (3, fi, fo), dtype, -bound, bound),
            "wh": jax.random.uniform(k2, (3, fo, fo), dtype, -bound, bound),
            "bi": jax.random.uniform(k3, (3, fo), dtype, -bound, bound),
            "bh": jax.random.uniform(k4, (3, fo), dtype, -bound, bound),
        })
    return params


def prepare_params(params, f_in, f_out):
    fp = _round_up(f_in, LANE)
    hp = _round_up(f_out, LANE)
    prep = {"cnn": [], "rnn": []}   # arrays only (safe to pass through jit)
    for p in params["cnn"]:
        w = jnp.pad(p["w"], ((0, 0), (0, fp - f_in), (0, fp - f_in)))
        prep["cnn"].append({
            "w": w.reshape(3 * fp, fp).astype(jnp.bfloat16),   # taps stacked along K
            "scale": _pad_axis(p["scale"], 0, fp).reshape(1, fp),
            "shift": _pad_axis(p["shift"], 0, fp).reshape(1, fp),  # zero pad keeps padded chans 0
        })
    for li, p in enumerate(params["rnn"]):
        fi = f_in if li == 0 else f_out
        fip = fp if li == 0 else hp
        wi = jnp.concatenate(
            [jnp.pad(p["wi"][k], ((0, fip - fi), (0, hp - f_out))) for k in range(3)], axis=1)
        wh = jnp.concatenate(
            [jnp.pad(p["wh"][k], ((0, hp - f_out), (0, hp - f_out))) for k in range(3)], axis=1)
        bif = jnp.concatenate([
            jnp.pad(p["bi"][0] + p["bh"][0], (0, hp - f_out)),   # b_ir + b_hr folded
            jnp.pad(p["bi"][1] + p["bh"][1], (0, hp - f_out)),   # b_iz + b_hz folded
            jnp.pad(p["bi"][2], (0, hp - f_out)),                # b_in (b_hn stays per-step)
        ]).reshape(1, 3 * hp)
        bhn = jnp.pad(p["bh"][2], (0, hp - f_out)).reshape(1, hp)
        prep["rnn"].append({
            "wi": wi.astype(jnp.bfloat16),
            "wh": wh.astype(jnp.bfloat16),    # bf16 operands, f32 MXU accumulation
            "bif": bif.astype(jnp.float32),
            "bhn": bhn.astype(jnp.float32),
        })
    return prep


def _default_b_block(B):
    # M-dim of the per-step recurrent matmul.  Prefer >= 8 rows (MXU sublane
    # fill on the serial path); when the batch is big enough, keep >= 2 blocks
    # so the "parallel" grid axis can shard across v7x's two TensorCores.
    if B <= 8:
        return B
    return min(64, max(8, B // 2))


def acoustic_encoder(x, prep, f_out, *, t_chunk=32, b_block=None):
    """x: (B, T, f_in) f32  ->  (B, T, f_out) f32."""
    B, T, f = x.shape
    fp = prep["cnn"][0]["w"].shape[-1]        # lane-padded feature dim (static shape)
    bb = _default_b_block(B) if b_block is None else b_block
    b_pad = _round_up(B, bb)
    xw = x
    if b_pad != B or fp != f:
        xw = jnp.pad(xw, ((0, b_pad - B), (0, 0), (0, fp - f)))
    xw = xw.astype(jnp.bfloat16)              # bf16 activations through the stack
    xw = cnn_stack2(xw, prep["cnn"][0], prep["cnn"][1])
    # Pad time AFTER the CNN (so conv "same"-padding semantics are untouched);
    # extra GRU steps only affect discarded trailing outputs (causal recurrence).
    t_pad = _round_up(T, t_chunk)
    if t_pad != T:
        xw = jnp.pad(xw, ((0, 0), (0, t_pad - T), (0, 0)))
    for p in prep["rnn"]:
        xw = gru_stack(xw, p, t_chunk=t_chunk, b_block=bb)
    return xw[:B, :T, :f_out].astype(jnp.float32)


if __name__ == "__main__":
    B, T = 2, 16
    F_IN, F_OUT = 16, 32  # small stand-ins for the module defaults (81, 256)

    key = jax.random.PRNGKey(0)
    kp, kx = jax.random.split(key)
    params = init_params(kp, F_IN, F_OUT)
    prep = prepare_params(params, F_IN, F_OUT)
    x = jax.random.normal(kx, (B, T, F_IN), jnp.float32)

    @jax.jit
    def fwd(x, prep):
        return acoustic_encoder(x, prep, F_OUT)

    y = fwd(x, prep)
    jax.block_until_ready(y)
    assert y.shape == (B, T, F_OUT), y.shape
    assert bool(jnp.all(jnp.isfinite(y)))
    print("KERNEL_OK")
</pallas_src>

<mosaic_0001>
module attributes {stable_mosaic.version = 11 : i64} {
  func.func @cnn2_kernel(%arg0: i32, %arg1: memref<1x16x128xbf16, #tpu.memory_space<vmem>>, %arg2: memref<384x128xbf16, #tpu.memory_space<vmem>>, %arg3: memref<1x128xf32, #tpu.memory_space<vmem>>, %arg4: memref<1x128xf32, #tpu.memory_space<vmem>>, %arg5: memref<384x128xbf16, #tpu.memory_space<vmem>>, %arg6: memref<1x128xf32, #tpu.memory_space<vmem>>, %arg7: memref<1x128xf32, #tpu.memory_space<vmem>>, %arg8: memref<1x16x128xbf16, #tpu.memory_space<vmem>>, %arg9: memref<18x128xbf16, #tpu.memory_space<vmem>>, %arg10: memref<18x128xbf16, #tpu.memory_space<vmem>>) attributes {dimension_semantics = [#tpu.dimension_semantics<parallel>], iteration_bounds = array<i64: 2>, scalar_prefetch = 0 : i64, scratch_operands = 2 : i64, tpu.core_type = #tpu.core_type<tc>, window_params = [{transform_indices = @transform_0, window_bounds = array<i64: 1, 16, 128>}, {pipeline_mode = #tpu.pipeline_mode<synchronous>, transform_indices = @transform_1, window_bounds = array<i64: 384, 128>}, {pipeline_mode = #tpu.pipeline_mode<synchronous>, transform_indices = @transform_2, window_bounds = array<i64: 1, 128>}, {pipeline_mode = #tpu.pipeline_mode<synchronous>, transform_indices = @transform_3, window_bounds = array<i64: 1, 128>}, {pipeline_mode = #tpu.pipeline_mode<synchronous>, transform_indices = @transform_4, window_bounds = array<i64: 384, 128>}, {pipeline_mode = #tpu.pipeline_mode<synchronous>, transform_indices = @transform_5, window_bounds = array<i64: 1, 128>}, {pipeline_mode = #tpu.pipeline_mode<synchronous>, transform_indices = @transform_6, window_bounds = array<i64: 1, 128>}, {transform_indices = @transform_7, window_bounds = array<i64: 1, 16, 128>}]} {
    %cst = arith.constant 0.000000e+00 : bf16
    %0 = vector.broadcast %cst : bf16 to vector<1x128xbf16>
    %c0 = arith.constant 0 : index
    %c0_0 = arith.constant 0 : index
    %1 = vector.load %arg9[%c0, %c0_0] : memref<18x128xbf16, #tpu.memory_space<vmem>>, vector<1x128xbf16>
    tpu.vector_store %arg9[%c0, %c0_0], %0 {strides = array<i32>} : memref<18x128xbf16, #tpu.memory_space<vmem>>, vector<1x128xbf16>,
    %c17 = arith.constant 17 : index
    %c0_1 = arith.constant 0 : index
    %2 = vector.load %arg9[%c17, %c0_1] : memref<18x128xbf16, #tpu.memory_space<vmem>>, vector<1x128xbf16>
    tpu.vector_store %arg9[%c17, %c0_1], %0 {strides = array<i32>} : memref<18x128xbf16, #tpu.memory_space<vmem>>, vector<1x128xbf16>,
    %c0_2 = arith.constant 0 : index
    %c0_3 = arith.constant 0 : index
    %c0_4 = arith.constant 0 : index
    %3 = vector.load %arg1[%c0_2, %c0_3, %c0_4] : memref<1x16x128xbf16, #tpu.memory_space<vmem>>, vector<1x16x128xbf16>
    %4 = vector.shape_cast %3 : vector<1x16x128xbf16> to vector<16x128xbf16>
    %c1 = arith.constant 1 : index
    %c0_5 = arith.constant 0 : index
    %5 = vector.load %arg9[%c1, %c0_5] : memref<18x128xbf16, #tpu.memory_space<vmem>>, vector<16x128xbf16>
    tpu.vector_store %arg9[%c1, %c0_5], %4 {strides = array<i32>} : memref<18x128xbf16, #tpu.memory_space<vmem>>, vector<16x128xbf16>,
    %c0_6 = arith.constant 0 : index
    %c0_7 = arith.constant 0 : index
    %6 = vector.load %arg9[%c0_6, %c0_7] : memref<18x128xbf16, #tpu.memory_space<vmem>>, vector<16x128xbf16>
    %c1_8 = arith.constant 1 : index
    %c0_9 = arith.constant 0 : index
    %7 = vector.load %arg9[%c1_8, %c0_9] : memref<18x128xbf16, #tpu.memory_space<vmem>>, vector<16x128xbf16>
    %c2 = arith.constant 2 : index
    %c0_10 = arith.constant 0 : index
    %8 = vector.load %arg9[%c2, %c0_10] : memref<18x128xbf16, #tpu.memory_space<vmem>>, vector<16x128xbf16>
    %9 = tpu.concatenate %6, %7, %8 in 1 : vector<16x128xbf16>, vector<16x128xbf16>, vector<16x128xbf16> -> vector<16x384xbf16>
    %c0_11 = arith.constant 0 : index
    %c0_12 = arith.constant 0 : index
    %10 = vector.load %arg2[%c0_11, %c0_12] : memref<384x128xbf16, #tpu.memory_space<vmem>>, vector<384x128xbf16>
    %cst_13 = arith.constant dense<0.000000e+00> : vector<16x128xf32>
    %11 = tpu.matmul %9, %10, %cst_13 {dimension_numbers = #tpu.dot_dimension_numbers<[1], [0], [0], [1], [0, 0, 1, 1], [], []>} : vector<16x384xbf16>, vector<384x128xbf16>, vector<16x128xf32> -> vector<16x128xf32>
    %c0_14 = arith.constant 0 : index
    %c0_15 = arith.constant 0 : index
    %12 = vector.load %arg3[%c0_14, %c0_15] : memref<1x128xf32, #tpu.memory_space<vmem>>, vector<1x128xf32>
    %13 = vector.broadcast %12 : vector<1x128xf32> to vector<16x128xf32>
    %14 = arith.mulf %11, %13 : vector<16x128xf32>
    %c0_16 = arith.constant 0 : index
    %c0_17 = arith.constant 0 : index
    %15 = vector.load %arg4[%c0_16, %c0_17] : memref<1x128xf32, #tpu.memory_space<vmem>>, vector<1x128xf32>
    %16 = vector.broadcast %15 : vector<1x128xf32> to vector<16x128xf32>
    %17 = arith.addf %14, %16 : vector<16x128xf32>
    %cst_18 = arith.constant 0.000000e+00 : f32
    %18 = vector.broadcast %cst_18 : f32 to vector<16x128xf32>
    %19 = arith.maximumf %17, %18 : vector<16x128xf32>
    %c0_19 = arith.constant 0 : index
    %c0_20 = arith.constant 0 : index
    %20 = vector.load %arg10[%c0_19, %c0_20] : memref<18x128xbf16, #tpu.memory_space<vmem>>, vector<1x128xbf16>
    tpu.vector_store %arg10[%c0_19, %c0_20], %0 {strides = array<i32>} : memref<18x128xbf16, #tpu.memory_space<vmem>>, vector<1x128xbf16>,
    %c17_21 = arith.constant 17 : index
    %c0_22 = arith.constant 0 : index
    %21 = vector.load %arg10[%c17_21, %c0_22] : memref<18x128xbf16, #tpu.memory_space<vmem>>, vector<1x128xbf16>
    tpu.vector_store %arg10[%c17_21, %c0_22], %0 {strides = array<i32>} : memref<18x128xbf16, #tpu.memory_space<vmem>>, vector<1x128xbf16>,
    %22 = arith.truncf %19 : vector<16x128xf32> to vector<16x128xbf16>
    %c1_23 = arith.constant 1 : index
    %c0_24 = arith.constant 0 : index
    %23 = vector.load %arg10[%c1_23, %c0_24] : memref<18x128xbf16, #tpu.memory_space<vmem>>, vector<16x128xbf16>
    tpu.vector_store %arg10[%c1_23, %c0_24], %22 {strides = array<i32>} : memref<18x128xbf16, #tpu.memory_space<vmem>>, vector<16x128xbf16>,
    %c0_25 = arith.constant 0 : index
    %c0_26 = arith.constant 0 : index
    %24 = vector.load %arg10[%c0_25, %c0_26] : memref<18x128xbf16, #tpu.memory_space<vmem>>, vector<16x128xbf16>
    %c1_27 = arith.constant 1 : index
    %c0_28 = arith.constant 0 : index
    %25 = vector.load %arg10[%c1_27, %c0_28] : memref<18x128xbf16, #tpu.memory_space<vmem>>, vector<16x128xbf16>
    %c2_29 = arith.constant 2 : index
    %c0_30 = arith.constant 0 : index
    %26 = vector.load %arg10[%c2_29, %c0_30] : memref<18x128xbf16, #tpu.memory_space<vmem>>, vector<16x128xbf16>
    %27 = tpu.concatenate %24, %25, %26 in 1 : vector<16x128xbf16>, vector<16x128xbf16>, vector<16x128xbf16> -> vector<16x384xbf16>
    %c0_31 = arith.constant 0 : index
    %c0_32 = arith.constant 0 : index
    %28 = vector.load %arg5[%c0_31, %c0_32] : memref<384x128xbf16, #tpu.memory_space<vmem>>, vector<384x128xbf16>
    %cst_33 = arith.constant dense<0.000000e+00> : vector<16x128xf32>
    %29 = tpu.matmul %27, %28, %cst_33 {dimension_numbers = #tpu.dot_dimension_numbers<[1], [0], [0], [1], [0, 0, 1, 1], [], []>} : vector<16x384xbf16>, vector<384x128xbf16>, vector<16x128xf32> -> vector<16x128xf32>
    %c0_34 = arith.constant 0 : index
    %c0_35 = arith.constant 0 : index
    %30 = vector.load %arg6[%c0_34, %c0_35] : memref<1x128xf32, #tpu.memory_space<vmem>>, vector<1x128xf32>
    %31 = vector.broadcast %30 : vector<1x128xf32> to vector<16x128xf32>
    %32 = arith.mulf %29, %31 : vector<16x128xf32>
    %c0_36 = arith.constant 0 : index
    %c0_37 = arith.constant 0 : index
    %33 = vector.load %arg7[%c0_36, %c0_37] : memref<1x128xf32, #tpu.memory_space<vmem>>, vector<1x128xf32>
    %34 = vector.broadcast %33 : vector<1x128xf32> to vector<16x128xf32>
    %35 = arith.addf %32, %34 : vector<16x128xf32>
    %cst_38 = arith.constant 0.000000e+00 : f32
    %36 = vector.broadcast %cst_38 : f32 to vector<16x128xf32>
    %37 = arith.maximumf %35, %36 : vector<16x128xf32>
    %38 = arith.truncf %37 : vector<16x128xf32> to vector<16x128xbf16>
    %c0_39 = arith.constant 0 : index
    %c0_40 = arith.constant 0 : index
    %c0_41 = arith.constant 0 : index
    %39 = vector.load %arg8[%c0_39, %c0_40, %c0_41] : memref<1x16x128xbf16, #tpu.memory_space<vmem>>, vector<1x16x128xbf16>
    %40 = vector.shape_cast %39 : vector<1x16x128xbf16> to vector<16x128xbf16>
    %41 = vector.shape_cast %38 : vector<16x128xbf16> to vector<1x16x128xbf16>
    tpu.vector_store %arg8[%c0_39, %c0_40, %c0_41], %41 {strides = array<i32>} : memref<1x16x128xbf16, #tpu.memory_space<vmem>>, vector<1x16x128xbf16>,
    return
  }
  func.func @transform_0(%arg0: i32) -> (i32, i32, i32) {
    %c0_i32 = arith.constant 0 : i32
    %c0_i32_0 = arith.constant 0 : i32
    %c0_i32_1 = arith.constant 0 : i32
    return %arg0, %c0_i32, %c0_i32_0 : i32, i32, i32
  }
  func.func @transform_1(%arg0: i32) -> (i32, i32) {
    %c0_i32 = arith.constant 0 : i32
    %c0_i32_0 = arith.constant 0 : i32
    %c0_i32_1 = arith.constant 0 : i32
    return %c0_i32, %c0_i32_0 : i32, i32
  }
  func.func @transform_2(%arg0: i32) -> (i32, i32) {
    %c0_i32 = arith.constant 0 : i32
    %c0_i32_0 = arith.constant 0 : i32
    %c0_i32_1 = arith.constant 0 : i32
    return %c0_i32, %c0_i32_0 : i32, i32
  }
  func.func @transform_3(%arg0: i32) -> (i32, i32) {
    %c0_i32 = arith.constant 0 : i32
    %c0_i32_0 = arith.constant 0 : i32
    %c0_i32_1 = arith.constant 0 : i32
    return %c0_i32, %c0_i32_0 : i32, i32
  }
  func.func @transform_4(%arg0: i32) -> (i32, i32) {
    %c0_i32 = arith.constant 0 : i32
    %c0_i32_0 = arith.constant 0 : i32
    %c0_i32_1 = arith.constant 0 : i32
    return %c0_i32, %c0_i32_0 : i32, i32
  }
  func.func @transform_5(%arg0: i32) -> (i32, i32) {
    %c0_i32 = arith.constant 0 : i32
    %c0_i32_0 = arith.constant 0 : i32
    %c0_i32_1 = arith.constant 0 : i32
    return %c0_i32, %c0_i32_0 : i32, i32
  }
  func.func @transform_6(%arg0: i32) -> (i32, i32) {
    %c0_i32 = arith.constant 0 : i32
    %c0_i32_0 = arith.constant 0 : i32
    %c0_i32_1 = arith.constant 0 : i32
    return %c0_i32, %c0_i32_0 : i32, i32
  }
  func.func @transform_7(%arg0: i32) -> (i32, i32, i32) {
    %c0_i32 = arith.constant 0 : i32
    %c0_i32_0 = arith.constant 0 : i32
    %c0_i32_1 = arith.constant 0 : i32
    return %arg0, %c0_i32, %c0_i32_0 : i32, i32, i32
  }
}

module attributes {stable_mosaic.version = 11 : i64} {
  func.func @gru_kernel(%arg0: i32, %arg1: i32, %arg2: memref<2x32x128xbf16, #tpu.memory_space<vmem>>, %arg3: memref<128x384xbf16, #tpu.memory_space<vmem>>, %arg4: memref<128x384xbf16, #tpu.memory_space<vmem>>, %arg5: memref<1x384xf32, #tpu.memory_space<vmem>>, %arg6: memref<1x128xf32, #tpu.memory_space<vmem>>, %arg7: memref<2x32x128xbf16, #tpu.memory_space<vmem>>, %arg8: memref<2x128xf32, #tpu.memory_space<vmem>>, %arg9: memref<2x32x384xf32, #tpu.memory_space<vmem>>) attributes {dimension_semantics = [#tpu.dimension_semantics<parallel>, #tpu.dimension_semantics<arbitrary>], iteration_bounds = array<i64: 1, 1>, scalar_prefetch = 0 : i64, scratch_operands = 2 : i64, tpu.core_type = #tpu.core_type<tc>, window_params = [{transform_indices = @transform_0, window_bounds = array<i64: 2, 32, 128>}, {pipeline_mode = #tpu.pipeline_mode<synchronous>, transform_indices = @transform_1, window_bounds = array<i64: 128, 384>}, {pipeline_mode = #tpu.pipeline_mode<synchronous>, transform_indices = @transform_2, window_bounds = array<i64: 128, 384>}, {pipeline_mode = #tpu.pipeline_mode<synchronous>, transform_indices = @transform_3, window_bounds = array<i64: 1, 384>}, {pipeline_mode = #tpu.pipeline_mode<synchronous>, transform_indices = @transform_4, window_bounds = array<i64: 1, 128>}, {transform_indices = @transform_5, window_bounds = array<i64: 2, 32, 128>}]} {
    %c0_i32 = arith.constant 0 : i32
    %0 = arith.cmpi eq, %arg1, %c0_i32 : i32
    %1 = arith.extui %0 : i1 to i32
    %c0_i32_0 = arith.constant 0 : i32
    %2 = arith.cmpi ne, %1, %c0_i32_0 : i32
    scf.if %2 {
      %cst_275 = arith.constant 0.000000e+00 : f32
      %976 = vector.broadcast %cst_275 : f32 to vector<2x128xf32>
      %c0_276 = arith.constant 0 : index
      %c0_277 = arith.constant 0 : index
      %977 = vector.load %arg8[%c0_276, %c0_277] : memref<2x128xf32, #tpu.memory_space<vmem>>, vector<2x128xf32>
      tpu.vector_store %arg8[%c0_276, %c0_277], %976 {strides = array<i32>} : memref<2x128xf32, #tpu.memory_space<vmem>>, vector<2x128xf32>,
    } else {
    }
    %c0 = arith.constant 0 : index
    %c0_1 = arith.constant 0 : index
    %c0_2 = arith.constant 0 : index
    %3 = vector.load %arg2[%c0, %c0_1, %c0_2] : memref<2x32x128xbf16, #tpu.memory_space<vmem>>, vector<2x32x128xbf16>
    %4 = vector.shape_cast %3 : vector<2x32x128xbf16> to vector<64x128xbf16>
    %c0_3 = arith.constant 0 : index
    %c0_4 = arith.constant 0 : index
    %5 = vector.load %arg3[%c0_3, %c0_4] : memref<128x384xbf16, #tpu.memory_space<vmem>>, vector<128x384xbf16>
    %cst = arith.constant dense<0.000000e+00> : vector<64x384xf32>
    %6 = tpu.matmul %4, %5, %cst {dimension_numbers = #tpu.dot_dimension_numbers<[1], [0], [0], [1], [0, 0, 1, 1], [], []>} : vector<64x128xbf16>, vector<128x384xbf16>, vector<64x384xf32> -> vector<64x384xf32>
    %c0_5 = arith.constant 0 : index
    %c0_6 = arith.constant 0 : index
    %7 = vector.load %arg5[%c0_5, %c0_6] : memref<1x384xf32, #tpu.memory_space<vmem>>, vector<1x384xf32>
    %8 = vector.broadcast %7 : vector<1x384xf32> to vector<64x384xf32>
    %9 = arith.addf %6, %8 : vector<64x384xf32>
    %10 = vector.shape_cast %9 : vector<64x384xf32> to vector<2x32x384xf32>
    %c0_7 = arith.constant 0 : index
    %c0_8 = arith.constant 0 : index
    %c0_9 = arith.constant 0 : index
    %11 = vector.load %arg9[%c0_7, %c0_8, %c0_9] : memref<2x32x384xf32, #tpu.memory_space<vmem>>, vector<2x32x384xf32>
    tpu.vector_store %arg9[%c0_7, %c0_8, %c0_9], %10 {strides = array<i32>} : memref<2x32x384xf32, #tpu.memory_space<vmem>>, vector<2x32x384xf32>,
    %c0_10 = arith.constant 0 : index
    %c0_11 = arith.constant 0 : index
    %12 = vector.load %arg4[%c0_10, %c0_11] : memref<128x384xbf16, #tpu.memory_space<vmem>>, vector<128x384xbf16>
    %c0_12 = arith.constant 0 : index
    %c0_13 = arith.constant 0 : index
    %13 = vector.load %arg6[%c0_12, %c0_13] : memref<1x128xf32, #tpu.memory_space<vmem>>, vector<1x128xf32>
    %c0_14 = arith.constant 0 : index
    %c0_15 = arith.constant 0 : index
    %14 = vector.load %arg8[%c0_14, %c0_15] : memref<2x128xf32, #tpu.memory_space<vmem>>, vector<2x128xf32>
    %c0_16 = arith.constant 0 : index
    %c0_17 = arith.constant 0 : index
    %c0_18 = arith.constant 0 : index
    %15 = vector.load %arg9[%c0_16, %c0_17, %c0_18] : memref<2x32x384xf32, #tpu.memory_space<vmem>>, vector<2x1x384xf32>
    %16 = vector.shape_cast %15 : vector<2x1x384xf32> to vector<2x384xf32>
    %17 = arith.truncf %14 : vector<2x128xf32> to vector<2x128xbf16>
    %cst_19 = arith.constant dense<0.000000e+00> : vector<2x384xf32>
    %18 = tpu.matmul %17, %12, %cst_19 {dimension_numbers = #tpu.dot_dimension_numbers<[1], [0], [0], [1], [0, 0, 1, 1], [], []>} : vector<2x128xbf16>, vector<128x384xbf16>, vector<2x384xf32> -> vector<2x384xf32>
    %19 = vector.extract_strided_slice %16 {offsets = [0, 0], sizes = [2, 256], strides = [1, 1]} : vector<2x384xf32> to vector<2x256xf32>
    %20 = vector.extract_strided_slice %18 {offsets = [0, 0], sizes = [2, 256], strides = [1, 1]} : vector<2x384xf32> to vector<2x256xf32>
    %21 = arith.addf %19, %20 : vector<2x256xf32>
    %22 = arith.negf %21 : vector<2x256xf32>
    %23 = math.exp %22 : vector<2x256xf32>
    %cst_20 = arith.constant 1.000000e+00 : f32
    %24 = vector.broadcast %cst_20 : f32 to vector<2x256xf32>
    %25 = arith.addf %24, %23 : vector<2x256xf32>
    %26 = arith.divf %24, %25 : vector<2x256xf32>
    %27 = vector.extract_strided_slice %26 {offsets = [0, 0], sizes = [2, 128], strides = [1, 1]} : vector<2x256xf32> to vector<2x128xf32>
    %28 = vector.extract_strided_slice %26 {offsets = [0, 128], sizes = [2, 128], strides = [1, 1]} : vector<2x256xf32> to vector<2x128xf32>
    %29 = vector.extract_strided_slice %16 {offsets = [0, 256], sizes = [2, 128], strides = [1, 1]} : vector<2x384xf32> to vector<2x128xf32>
    %30 = vector.extract_strided_slice %18 {offsets = [0, 256], sizes = [2, 128], strides = [1, 1]} : vector<2x384xf32> to vector<2x128xf32>
    %31 = vector.broadcast %13 : vector<1x128xf32> to vector<2x128xf32>
    %32 = arith.addf %30, %31 : vector<2x128xf32>
    %33 = arith.mulf %27, %32 : vector<2x128xf32>
    %34 = arith.addf %29, %33 : vector<2x128xf32>
    %35 = math.tanh %34 : vector<2x128xf32>
    %cst_21 = arith.constant 1.000000e+00 : f32
    %36 = vector.broadcast %cst_21 : f32 to vector<2x128xf32>
    %37 = arith.subf %36, %28 : vector<2x128xf32>
    %38 = arith.mulf %37, %35 : vector<2x128xf32>
    %39 = arith.mulf %28, %14 : vector<2x128xf32>
    %40 = arith.addf %38, %39 : vector<2x128xf32>
    %41 = arith.truncf %40 : vector<2x128xf32> to vector<2x128xbf16>
    %c0_22 = arith.constant 0 : index
    %c0_23 = arith.constant 0 : index
    %c0_24 = arith.constant 0 : index
    %42 = vector.load %arg7[%c0_22, %c0_23, %c0_24] : memref<2x32x128xbf16, #tpu.memory_space<vmem>>, vector<2x1x128xbf16>
    %43 = vector.shape_cast %42 : vector<2x1x128xbf16> to vector<2x128xbf16>
    %44 = vector.shape_cast %41 : vector<2x128xbf16> to vector<2x1x128xbf16>
    tpu.vector_store %arg7[%c0_22, %c0_23, %c0_24], %44 {strides = array<i32>} : memref<2x32x128xbf16, #tpu.memory_space<vmem>>, vector<2x1x128xbf16>,
    %c0_25 = arith.constant 0 : index
    %c1 = arith.constant 1 : index
    %c0_26 = arith.constant 0 : index
    %45 = vector.load %arg9[%c0_25, %c1, %c0_26] : memref<2x32x384xf32, #tpu.memory_space<vmem>>, vector<2x1x384xf32>
    %46 = vector.shape_cast %45 : vector<2x1x384xf32> to vector<2x384xf32>
    %47 = arith.truncf %40 : vector<2x128xf32> to vector<2x128xbf16>
    %cst_27 = arith.constant dense<0.000000e+00> : vector<2x384xf32>
    %48 = tpu.matmul %47, %12, %cst_27 {dimension_numbers = #tpu.dot_dimension_numbers<[1], [0], [0], [1], [0, 0, 1, 1], [], []>} : vector<2x128xbf16>, vector<128x384xbf16>, vector<2x384xf32> -> vector<2x384xf32>
    %49 = vector.extract_strided_slice %46 {offsets = [0, 0], sizes = [2, 256], strides = [1, 1]} : vector<2x384xf32> to vector<2x256xf32>
    %50 = vector.extract_strided_slice %48 {offsets = [0, 0], sizes = [2, 256], strides = [1, 1]} : vector<2x384xf32> to vector<2x256xf32>
    %51 = arith.addf %49, %50 : vector<2x256xf32>
    %52 = arith.negf %51 : vector<2x256xf32>
    %53 = math.exp %52 : vector<2x256xf32>
    %cst_28 = arith.constant 1.000000e+00 : f32
    %54 = vector.broadcast %cst_28 : f32 to vector<2x256xf32>
    %55 = arith.addf %54, %53 : vector<2x256xf32>
    %56 = arith.divf %54, %55 : vector<2x256xf32>
    %57 = vector.extract_strided_slice %56 {offsets = [0, 0], sizes = [2, 128], strides = [1, 1]} : vector<2x256xf32> to vector<2x128xf32>
    %58 = vector.extract_strided_slice %56 {offsets = [0, 128], sizes = [2, 128], strides = [1, 1]} : vector<2x256xf32> to vector<2x128xf32>
    %59 = vector.extract_strided_slice %46 {offsets = [0, 256], sizes = [2, 128], strides = [1, 1]} : vector<2x384xf32> to vector<2x128xf32>
    %60 = vector.extract_strided_slice %48 {offsets = [0, 256], sizes = [2, 128], strides = [1, 1]} : vector<2x384xf32> to vector<2x128xf32>
    %61 = vector.broadcast %13 : vector<1x128xf32> to vector<2x128xf32>
    %62 = arith.addf %60, %61 : vector<2x128xf32>
    %63 = arith.mulf %57, %62 : vector<2x128xf32>
    %64 = arith.addf %59, %63 : vector<2x128xf32>
    %65 = math.tanh %64 : vector<2x128xf32>
    %cst_29 = arith.constant 1.000000e+00 : f32
    %66 = vector.broadcast %cst_29 : f32 to vector<2x128xf32>
    %67 = arith.subf %66, %58 : vector<2x128xf32>
    %68 = arith.mulf %67, %65 : vector<2x128xf32>
    %69 = arith.mulf %58, %40 : vector<2x128xf32>
    %70 = arith.addf %68, %69 : vector<2x128xf32>
    %71 = arith.truncf %70 : vector<2x128xf32> to vector<2x128xbf16>
    %c0_30 = arith.constant 0 : index
    %c1_31 = arith.constant 1 : index
    %c0_32 = arith.constant 0 : index
    %72 = vector.load %arg7[%c0_30, %c1_31, %c0_32] : memref<2x32x128xbf16, #tpu.memory_space<vmem>>, vector<2x1x128xbf16>
    %73 = vector.shape_cast %72 : vector<2x1x128xbf16> to vector<2x128xbf16>
    %74 = vector.shape_cast %71 : vector<2x128xbf16> to vector<2x1x128xbf16>
    tpu.vector_store %arg7[%c0_30, %c1_31, %c0_32], %74 {strides = array<i32>} : memref<2x32x128xbf16, #tpu.memory_space<vmem>>, vector<2x1x128xbf16>,
    %c0_33 = arith.constant 0 : index
    %c2 = arith.constant 2 : index
    %c0_34 = arith.constant 0 : index
    %75 = vector.load %arg9[%c0_33, %c2, %c0_34] : memref<2x32x384xf32, #tpu.memory_space<vmem>>, vector<2x1x384xf32>
    %76 = vector.shape_cast %75 : vector<2x1x384xf32> to vector<2x384xf32>
    %77 = arith.truncf %70 : vector<2x128xf32> to vector<2x128xbf16>
    %cst_35 = arith.constant dense<0.000000e+00> : vector<2x384xf32>
    %78 = tpu.matmul %77, %12, %cst_35 {dimension_numbers = #tpu.dot_dimension_numbers<[1], [0], [0], [1], [0, 0, 1, 1], [], []>} : vector<2x128xbf16>, vector<128x384xbf16>, vector<2x384xf32> -> vector<2x384xf32>
    %79 = vector.extract_strided_slice %76 {offsets = [0, 0], sizes = [2, 256], strides = [1, 1]} : vector<2x384xf32> to vector<2x256xf32>
    %80 = vector.extract_strided_slice %78 {offsets = [0, 0], sizes = [2, 256], strides = [1, 1]} : vector<2x384xf32> to vector<2x256xf32>
    %81 = arith.addf %79, %80 : vector<2x256xf32>
    %82 = arith.negf %81 : vector<2x256xf32>
    %83 = math.exp %82 : vector<2x256xf32>
    %cst_36 = arith.constant 1.000000e+00 : f32
    %84 = vector.broadcast %cst_36 : f32 to vector<2x256xf32>
    %85 = arith.addf %84, %83 : vector<2x256xf32>
    %86 = arith.divf %84, %85 : vector<2x256xf32>
    %87 = vector.extract_strided_slice %86 {offsets = [0, 0], sizes = [2, 128], strides = [1, 1]} : vector<2x256xf32> to vector<2x128xf32>
    %88 = vector.extract_strided_slice %86 {offsets = [0, 128], sizes = [2, 128], strides = [1, 1]} : vector<2x256xf32> to vector<2x128xf32>
    %89 = vector.extract_strided_slice %76 {offsets = [0, 256], sizes = [2, 128], strides = [1, 1]} : vector<2x384xf32> to vector<2x128xf32>
    %90 = vector.extract_strided_slice %78 {offsets = [0, 256], sizes = [2, 128], strides = [1, 1]} : vector<2x384xf32> to vector<2x128xf32>
    %91 = vector.broadcast %13 : vector<1x128xf32> to vector<2x128xf32>
    %92 = arith.addf %90, %91 : vector<2x128xf32>
    %93 = arith.mulf %87, %92 : vector<2x128xf32>
    %94 = arith.addf %89, %93 : vector<2x128xf32>
    %95 = math.tanh %94 : vector<2x128xf32>
    %cst_37 = arith.constant 1.000000e+00 : f32
    %96 = vector.broadcast %cst_37 : f32 to vector<2x128xf32>
    %97 = arith.subf %96, %88 : vector<2x128xf32>
    %98 = arith.mulf %97, %95 : vector<2x128xf32>
    %99 = arith.mulf %88, %70 : vector<2x128xf32>
    %100 = arith.addf %98, %99 : vector<2x128xf32>
    %101 = arith.truncf %100 : vector<2x128xf32> to vector<2x128xbf16>
    %c0_38 = arith.constant 0 : index
    %c2_39 = arith.constant 2 : index
    %c0_40 = arith.constant 0 : index
    %102 = vector.load %arg7[%c0_38, %c2_39, %c0_40] : memref<2x32x128xbf16, #tpu.memory_space<vmem>>, vector<2x1x128xbf16>
    %103 = vector.shape_cast %102 : vector<2x1x128xbf16> to vector<2x128xbf16>
    %104 = vector.shape_cast %101 : vector<2x128xbf16> to vector<2x1x128xbf16>
    tpu.vector_store %arg7[%c0_38, %c2_39, %c0_40], %104 {strides = array<i32>} : memref<2x32x128xbf16, #tpu.memory_space<vmem>>, vector<2x1x128xbf16>,
    %c0_41 = arith.constant 0 : index
    %c3 = arith.constant 3 : index
    %c0_42 = arith.constant 0 : index
    %105 = vector.load %arg9[%c0_41, %c3, %c0_42] : memref<2x32x384xf32, #tpu.memory_space<vmem>>, vector<2x1x384xf32>
    %106 = vector.shape_cast %105 : vector<2x1x384xf32> to vector<2x384xf32>
    %107 = arith.truncf %100 : vector<2x128xf32> to vector<2x128xbf16>
    %cst_43 = arith.constant dense<0.000000e+00> : vector<2x384xf32>
    %108 = tpu.matmul %107, %12, %cst_43 {dimension_numbers = #tpu.dot_dimension_numbers<[1], [0], [0], [1], [0, 0, 1, 1], [], []>} : vector<2x128xbf16>, vector<128x384xbf16>, vector<2x384xf32> -> vector<2x384xf32>
    %109 = vector.extract_strided_slice %106 {offsets = [0, 0], sizes = [2, 256], strides = [1, 1]} : vector<2x384xf32> to vector<2x256xf32>
    %110 = vector.extract_strided_slice %108 {offsets = [0, 0], sizes = [2, 256], strides = [1, 1]} : vector<2x384xf32> to vector<2x256xf32>
    %111 = arith.addf %109, %110 : vector<2x256xf32>
    %112 = arith.negf %111 : vector<2x256xf32>
    %113 = math.exp %112 : vector<2x256xf32>
    %cst_44 = arith.constant 1.000000e+00 : f32
    %114 = vector.broadcast %cst_44 : f32 to vector<2x256xf32>
    %115 = arith.addf %114, %113 : vector<2x256xf32>
    %116 = arith.divf %114, %115 : vector<2x256xf32>
    %117 = vector.extract_strided_slice %116 {offsets = [0, 0], sizes = [2, 128], strides = [1, 1]} : vector<2x256xf32> to vector<2x128xf32>
    %118 = vector.extract_strided_slice %116 {offsets = [0, 128], sizes = [2, 128], strides = [1, 1]} : vector<2x256xf32> to vector<2x128xf32>
    %119 = vector.extract_strided_slice %106 {offsets = [0, 256], sizes = [2, 128], strides = [1, 1]} : vector<2x384xf32> to vector<2x128xf32>
    %120 = vector.extract_strided_slice %108 {offsets = [0, 256], sizes = [2, 128], strides = [1, 1]} : vector<2x384xf32> to vector<2x128xf32>
    %121 = vector.broadcast %13 : vector<1x128xf32> to vector<2x128xf32>
    %122 = arith.addf %120, %121 : vector<2x128xf32>
    %123 = arith.mulf %117, %122 : vector<2x128xf32>
    %124 = arith.addf %119, %123 : vector<2x128xf32>
    %125 = math.tanh %124 : vector<2x128xf32>
    %cst_45 = arith.constant 1.000000e+00 : f32
    %126 = vector.broadcast %cst_45 : f32 to vector<2x128xf32>
    %127 = arith.subf %126, %118 : vector<2x128xf32>
    %128 = arith.mulf %127, %125 : vector<2x128xf32>
    %129 = arith.mulf %118, %100 : vector<2x128xf32>
    %130 = arith.addf %128, %129 : vector<2x128xf32>
    %131 = arith.truncf %130 : vector<2x128xf32> to vector<2x128xbf16>
    %c0_46 = arith.constant 0 : index
    %c3_47 = arith.constant 3 : index
    %c0_48 = arith.constant 0 : index
    %132 = vector.load %arg7[%c0_46, %c3_47, %c0_48] : memref<2x32x128xbf16, #tpu.memory_space<vmem>>, vector<2x1x128xbf16>
    %133 = vector.shape_cast %132 : vector<2x1x128xbf16> to vector<2x128xbf16>
    %134 = vector.shape_cast %131 : vector<2x128xbf16> to vector<2x1x128xbf16>
    tpu.vector_store %arg7[%c0_46, %c3_47, %c0_48], %134 {strides = array<i32>} : memref<2x32x128xbf16, #tpu.memory_space<vmem>>, vector<2x1x128xbf16>,
    %c0_49 = arith.constant 0 : index
    %c4 = arith.constant 4 : index
    %c0_50 = arith.constant 0 : index
    %135 = vector.load %arg9[%c0_49, %c4, %c0_50] : memref<2x32x384xf32, #tpu.memory_space<vmem>>, vector<2x1x384xf32>
    %136 = vector.shape_cast %135 : vector<2x1x384xf32> to vector<2x384xf32>
    %137 = arith.truncf %130 : vector<2x128xf32> to vector<2x128xbf16>
    %cst_51 = arith.constant dense<0.000000e+00> : vector<2x384xf32>
    %138 = tpu.matmul %137, %12, %cst_51 {dimension_numbers = #tpu.dot_dimension_numbers<[1], [0], [0], [1], [0, 0, 1, 1], [], []>} : vector<2x128xbf16>, vector<128x384xbf16>, vector<2x384xf32> -> vector<2x384xf32>
    %139 = vector.extract_strided_slice %136 {offsets = [0, 0], sizes = [2, 256], strides = [1, 1]} : vector<2x384xf32> to vector<2x256xf32>
    %140 = vector.extract_strided_slice %138 {offsets = [0, 0], sizes = [2, 256], strides = [1, 1]} : vector<2x384xf32> to vector<2x256xf32>
    %141 = arith.addf %139, %140 : vector<2x256xf32>
    %142 = arith.negf %141 : vector<2x256xf32>
    %143 = math.exp %142 : vector<2x256xf32>
    %cst_52 = arith.constant 1.000000e+00 : f32
    %144 = vector.broadcast %cst_52 : f32 to vector<2x256xf32>
    %145 = arith.addf %144, %143 : vector<2x256xf32>
    %146 = arith.divf %144, %145 : vector<2x256xf32>
    %147 = vector.extract_strided_slice %146 {offsets = [0, 0], sizes = [2, 128], strides = [1, 1]} : vector<2x256xf32> to vector<2x128xf32>
    %148 = vector.extract_strided_slice %146 {offsets = [0, 128], sizes = [2, 128], strides = [1, 1]} : vector<2x256xf32> to vector<2x128xf32>
    %149 = vector.extract_strided_slice %136 {offsets = [0, 256], sizes = [2, 128], strides = [1, 1]} : vector<2x384xf32> to vector<2x128xf32>
    %150 = vector.extract_strided_slice %138 {offsets = [0, 256], sizes = [2, 128], strides = [1, 1]} : vector<2x384xf32> to vector<2x128xf32>
    %151 = vector.broadcast %13 : vector<1x128xf32> to vector<2x128xf32>
    %152 = arith.addf %150, %151 : vector<2x128xf32>
    %153 = arith.mulf %147, %152 : vector<2x128xf32>
    %154 = arith.addf %149, %153 : vector<2x128xf32>
    %155 = math.tanh %154 : vector<2x128xf32>
    %cst_53 = arith.constant 1.000000e+00 : f32
    %156 = vector.broadcast %cst_53 : f32 to vector<2x128xf32>
    %157 = arith.subf %156, %148 : vector<2x128xf32>
    %158 = arith.mulf %157, %155 : vector<2x128xf32>
    %159 = arith.mulf %148, %130 : vector<2x128xf32>
    %160 = arith.addf %158, %159 : vector<2x128xf32>
    %161 = arith.truncf %160 : vector<2x128xf32> to vector<2x128xbf16>
    %c0_54 = arith.constant 0 : index
    %c4_55 = arith.constant 4 : index
    %c0_56 = arith.constant 0 : index
    %162 = vector.load %arg7[%c0_54, %c4_55, %c0_56] : memref<2x32x128xbf16, #tpu.memory_space<vmem>>, vector<2x1x128xbf16>
    %163 = vector.shape_cast %162 : vector<2x1x128xbf16> to vector<2x128xbf16>
    %164 = vector.shape_cast %161 : vector<2x128xbf16> to vector<2x1x128xbf16>
    tpu.vector_store %arg7[%c0_54, %c4_55, %c0_56], %164 {strides = array<i32>} : memref<2x32x128xbf16, #tpu.memory_space<vmem>>, vector<2x1x128xbf16>,
    %c0_57 = arith.constant 0 : index
    %c5 = arith.constant 5 : index
    %c0_58 = arith.constant 0 : index
    %165 = vector.load %arg9[%c0_57, %c5, %c0_58] : memref<2x32x384xf32, #tpu.memory_space<vmem>>, vector<2x1x384xf32>
    %166 = vector.shape_cast %165 : vector<2x1x384xf32> to vector<2x384xf32>
    %167 = arith.truncf %160 : vector<2x128xf32> to vector<2x128xbf16>
    %cst_59 = arith.constant dense<0.000000e+00> : vector<2x384xf32>
    %168 = tpu.matmul %167, %12, %cst_59 {dimension_numbers = #tpu.dot_dimension_numbers<[1], [0], [0], [1], [0, 0, 1, 1], [], []>} : vector<2x128xbf16>, vector<128x384xbf16>, vector<2x384xf32> -> vector<2x384xf32>
    %169 = vector.extract_strided_slice %166 {offsets = [0, 0], sizes = [2, 256], strides = [1, 1]} : vector<2x384xf32> to vector<2x256xf32>
    %170 = vector.extract_strided_slice %168 {offsets = [0, 0], sizes = [2, 256], strides = [1, 1]} : vector<2x384xf32> to vector<2x256xf32>
    %171 = arith.addf %169, %170 : vector<2x256xf32>
    %172 = arith.negf %171 : vector<2x256xf32>
    %173 = math.exp %172 : vector<2x256xf32>
    %cst_60 = arith.constant 1.000000e+00 : f32
    %174 = vector.broadcast %cst_60 : f32 to vector<2x256xf32>
    %175 = arith.addf %174, %173 : vector<2x256xf32>
    %176 = arith.divf %174, %175 : vector<2x256xf32>
    %177 = vector.extract_strided_slice %176 {offsets = [0, 0], sizes = [2, 128], strides = [1, 1]} : vector<2x256xf32> to vector<2x128xf32>
    %178 = vector.extract_strided_slice %176 {offsets = [0, 128], sizes = [2, 128], strides = [1, 1]} : vector<2x256xf32> to vector<2x128xf32>
    %179 = vector.extract_strided_slice %166 {offsets = [0, 256], sizes = [2, 128], strides = [1, 1]} : vector<2x384xf32> to vector<2x128xf32>
    %180 = vector.extract_strided_slice %168 {offsets = [0, 256], sizes = [2, 128], strides = [1, 1]} : vector<2x384xf32> to vector<2x128xf32>
    %181 = vector.broadcast %13 : vector<1x128xf32> to vector<2x128xf32>
    %182 = arith.addf %180, %181 : vector<2x128xf32>
    %183 = arith.mulf %177, %182 : vector<2x128xf32>
    %184 = arith.addf %179, %183 : vector<2x128xf32>
    %185 = math.tanh %184 : vector<2x128xf32>
    %cst_61 = arith.constant 1.000000e+00 : f32
    %186 = vector.broadcast %cst_61 : f32 to vector<2x128xf32>
    %187 = arith.subf %186, %178 : vector<2x128xf32>
    %188 = arith.mulf %187, %185 : vector<2x128xf32>
    %189 = arith.mulf %178, %160 : vector<2x128xf32>
    %190 = arith.addf %188, %189 : vector<2x128xf32>
    %191 = arith.truncf %190 : vector<2x128xf32> to vector<2x128xbf16>
    %c0_62 = arith.constant 0 : index
    %c5_63 = arith.constant 5 : index
    %c0_64 = arith.constant 0 : index
    %192 = vector.load %arg7[%c0_62, %c5_63, %c0_64] : memref<2x32x128xbf16, #tpu.memory_space<vmem>>, vector<2x1x128xbf16>
    %193 = vector.shape_cast %192 : vector<2x1x128xbf16> to vector<2x128xbf16>
    %194 = vector.shape_cast %191 : vector<2x128xbf16> to vector<2x1x128xbf16>
    tpu.vector_store %arg7[%c0_62, %c5_63, %c0_64], %194 {strides = array<i32>} : memref<2x32x128xbf16, #tpu.memory_space<vmem>>, vector<2x1x128xbf16>,
    %c0_65 = arith.constant 0 : index
    %c6 = arith.constant 6 : index
    %c0_66 = arith.constant 0 : index
    %195 = vector.load %arg9[%c0_65, %c6, %c0_66] : memref<2x32x384xf32, #tpu.memory_space<vmem>>, vector<2x1x384xf32>
    %196 = vector.shape_cast %195 : vector<2x1x384xf32> to vector<2x384xf32>
    %197 = arith.truncf %190 : vector<2x128xf32> to vector<2x128xbf16>
    %cst_67 = arith.constant dense<0.000000e+00> : vector<2x384xf32>
    %198 = tpu.matmul %197, %12, %cst_67 {dimension_numbers = #tpu.dot_dimension_numbers<[1], [0], [0], [1], [0, 0, 1, 1], [], []>} : vector<2x128xbf16>, vector<128x384xbf16>, vector<2x384xf32> -> vector<2x384xf32>
    %199 = vector.extract_strided_slice %196 {offsets = [0, 0], sizes = [2, 256], strides = [1, 1]} : vector<2x384xf32> to vector<2x256xf32>
    %200 = vector.extract_strided_slice %198 {offsets = [0, 0], sizes = [2, 256], strides = [1, 1]} : vector<2x384xf32> to vector<2x256xf32>
    %201 = arith.addf %199, %200 : vector<2x256xf32>
    %202 = arith.negf %201 : vector<2x256xf32>
    %203 = math.exp %202 : vector<2x256xf32>
    %cst_68 = arith.constant 1.000000e+00 : f32
    %204 = vector.broadcast %cst_68 : f32 to vector<2x256xf32>
    %205 = arith.addf %204, %203 : vector<2x256xf32>
    %206 = arith.divf %204, %205 : vector<2x256xf32>
    %207 = vector.extract_strided_slice %206 {offsets = [0, 0], sizes = [2, 128], strides = [1, 1]} : vector<2x256xf32> to vector<2x128xf32>
    %208 = vector.extract_strided_slice %206 {offsets = [0, 128], sizes = [2, 128], strides = [1, 1]} : vector<2x256xf32> to vector<2x128xf32>
    %209 = vector.extract_strided_slice %196 {offsets = [0, 256], sizes = [2, 128], strides = [1, 1]} : vector<2x384xf32> to vector<2x128xf32>
    %210 = vector.extract_strided_slice %198 {offsets = [0, 256], sizes = [2, 128], strides = [1, 1]} : vector<2x384xf32> to vector<2x128xf32>
    %211 = vector.broadcast %13 : vector<1x128xf32> to vector<2x128xf32>
    %212 = arith.addf %210, %211 : vector<2x128xf32>
    %213 = arith.mulf %207, %212 : vector<2x128xf32>
    %214 = arith.addf %209, %213 : vector<2x128xf32>
    %215 = math.tanh %214 : vector<2x128xf32>
    %cst_69 = arith.constant 1.000000e+00 : f32
    %216 = vector.broadcast %cst_69 : f32 to vector<2x128xf32>
    %217 = arith.subf %216, %208 : vector<2x128xf32>
    %218 = arith.mulf %217, %215 : vector<2x128xf32>
    %219 = arith.mulf %208, %190 : vector<2x128xf32>
    %220 = arith.addf %218, %219 : vector<2x128xf32>
    %221 = arith.truncf %220 : vector<2x128xf32> to vector<2x128xbf16>
    %c0_70 = arith.constant 0 : index
    %c6_71 = arith.constant 6 : index
    %c0_72 = arith.constant 0 : index
    %222 = vector.load %arg7[%c0_70, %c6_71, %c0_72] : memref<2x32x128xbf16, #tpu.memory_space<vmem>>, vector<2x1x128xbf16>
    %223 = vector.shape_cast %222 : vector<2x1x128xbf16> to vector<2x128xbf16>
    %224 = vector.shape_cast %221 : vector<2x128xbf16> to vector<2x1x128xbf16>
    tpu.vector_store %arg7[%c0_70, %c6_71, %c0_72], %224 {strides = array<i32>} : memref<2x32x128xbf16, #tpu.memory_space<vmem>>, vector<2x1x128xbf16>,
    %c0_73 = arith.constant 0 : index
    %c7 = arith.constant 7 : index
    %c0_74 = arith.constant 0 : index
    %225 = vector.load %arg9[%c0_73, %c7, %c0_74] : memref<2x32x384xf32, #tpu.memory_space<vmem>>, vector<2x1x384xf32>
    %226 = vector.shape_cast %225 : vector<2x1x384xf32> to vector<2x384xf32>
    %227 = arith.truncf %220 : vector<2x128xf32> to vector<2x128xbf16>
    %cst_75 = arith.constant dense<0.000000e+00> : vector<2x384xf32>
    %228 = tpu.matmul %227, %12, %cst_75 {dimension_numbers = #tpu.dot_dimension_numbers<[1], [0], [0], [1], [0, 0, 1, 1], [], []>} : vector<2x128xbf16>, vector<128x384xbf16>, vector<2x384xf32> -> vector<2x384xf32>
    %229 = vector.extract_strided_slice %226 {offsets = [0, 0], sizes = [2, 256], strides = [1, 1]} : vector<2x384xf32> to vector<2x256xf32>
    %230 = vector.extract_strided_slice %228 {offsets = [0, 0], sizes = [2, 256], strides = [1, 1]} : vector<2x384xf32> to vector<2x256xf32>
    %231 = arith.addf %229, %230 : vector<2x256xf32>
    %232 = arith.negf %231 : vector<2x256xf32>
    %233 = math.exp %232 : vector<2x256xf32>
    %cst_76 = arith.constant 1.000000e+00 : f32
    %234 = vector.broadcast %cst_76 : f32 to vector<2x256xf32>
    %235 = arith.addf %234, %233 : vector<2x256xf32>
    %236 = arith.divf %234, %235 : vector<2x256xf32>
    %237 = vector.extract_strided_slice %236 {offsets = [0, 0], sizes = [2, 128], strides = [1, 1]} : vector<2x256xf32> to vector<2x128xf32>
    %238 = vector.extract_strided_slice %236 {offsets = [0, 128], sizes = [2, 128], strides = [1, 1]} : vector<2x256xf32> to vector<2x128xf32>
    %239 = vector.extract_strided_slice %226 {offsets = [0, 256], sizes = [2, 128], strides = [1, 1]} : vector<2x384xf32> to vector<2x128xf32>
    %240 = vector.extract_strided_slice %228 {offsets = [0, 256], sizes = [2, 128], strides = [1, 1]} : vector<2x384xf32> to vector<2x128xf32>
    %241 = vector.broadcast %13 : vector<1x128xf32> to vector<2x128xf32>
    %242 = arith.addf %240, %241 : vector<2x128xf32>
    %243 = arith.mulf %237, %242 : vector<2x128xf32>
    %244 = arith.addf %239, %243 : vector<2x128xf32>
    %245 = math.tanh %244 : vector<2x128xf32>
    %cst_77 = arith.constant 1.000000e+00 : f32
    %246 = vector.broadcast %cst_77 : f32 to vector<2x128xf32>
    %247 = arith.subf %246, %238 : vector<2x128xf32>
    %248 = arith.mulf %247, %245 : vector<2x128xf32>
    %249 = arith.mulf %238, %220 : vector<2x128xf32>
    %250 = arith.addf %248, %249 : vector<2x128xf32>
    %251 = arith.truncf %250 : vector<2x128xf32> to vector<2x128xbf16>
    %c0_78 = arith.constant 0 : index
    %c7_79 = arith.constant 7 : index
    %c0_80 = arith.constant 0 : index
    %252 = vector.load %arg7[%c0_78, %c7_79, %c0_80] : memref<2x32x128xbf16, #tpu.memory_space<vmem>>, vector<2x1x128xbf16>
    %253 = vector.shape_cast %252 : vector<2x1x128xbf16> to vector<2x128xbf16>
    %254 = vector.shape_cast %251 : vector<2x128xbf16> to vector<2x1x128xbf16>
    tpu.vector_store %arg7[%c0_78, %c7_79, %c0_80], %254 {strides = array<i32>} : memref<2x32x128xbf16, #tpu.memory_space<vmem>>, vector<2x1x128xbf16>,
    %c0_81 = arith.constant 0 : index
    %c8 = arith.constant 8 : index
    %c0_82 = arith.constant 0 : index
    %255 = vector.load %arg9[%c0_81, %c8, %c0_82] : memref<2x32x384xf32, #tpu.memory_space<vmem>>, vector<2x1x384xf32>
    %256 = vector.shape_cast %255 : vector<2x1x384xf32> to vector<2x384xf32>
    %257 = arith.truncf %250 : vector<2x128xf32> to vector<2x128xbf16>
    %cst_83 = arith.constant dense<0.000000e+00> : vector<2x384xf32>
    %258 = tpu.matmul %257, %12, %cst_83 {dimension_numbers = #tpu.dot_dimension_numbers<[1], [0], [0], [1], [0, 0, 1, 1], [], []>} : vector<2x128xbf16>, vector<128x384xbf16>, vector<2x384xf32> -> vector<2x384xf32>
    %259 = vector.extract_strided_slice %256 {offsets = [0, 0], sizes = [2, 256], strides = [1, 1]} : vector<2x384xf32> to vector<2x256xf32>
    %260 = vector.extract_strided_slice %258 {offsets = [0, 0], sizes = [2, 256], strides = [1, 1]} : vector<2x384xf32> to vector<2x256xf32>
    %261 = arith.addf %259, %260 : vector<2x256xf32>
    %262 = arith.negf %261 : vector<2x256xf32>
    %263 = math.exp %262 : vector<2x256xf32>
    %cst_84 = arith.constant 1.000000e+00 : f32
    %264 = vector.broadcast %cst_84 : f32 to vector<2x256xf32>
    %265 = arith.addf %264, %263 : vector<2x256xf32>
    %266 = arith.divf %264, %265 : vector<2x256xf32>
    %267 = vector.extract_strided_slice %266 {offsets = [0, 0], sizes = [2, 128], strides = [1, 1]} : vector<2x256xf32> to vector<2x128xf32>
    %268 = vector.extract_strided_slice %266 {offsets = [0, 128], sizes = [2, 128], strides = [1, 1]} : vector<2x256xf32> to vector<2x128xf32>
    %269 = vector.extract_strided_slice %256 {offsets = [0, 256], sizes = [2, 128], strides = [1, 1]} : vector<2x384xf32> to vector<2x128xf32>
    %270 = vector.extract_strided_slice %258 {offsets = [0, 256], sizes = [2, 128], strides = [1, 1]} : vector<2x384xf32> to vector<2x128xf32>
    %271 = vector.broadcast %13 : vector<1x128xf32> to vector<2x128xf32>
    %272 = arith.addf %270, %271 : vector<2x128xf32>
    %273 = arith.mulf %267, %272 : vector<2x128xf32>
    %274 = arith.addf %269, %273 : vector<2x128xf32>
    %275 = math.tanh %274 : vector<2x128xf32>
    %cst_85 = arith.constant 1.000000e+00 : f32
    %276 = vector.broadcast %cst_85 : f32 to vector<2x128xf32>
    %277 = arith.subf %276, %268 : vector<2x128xf32>
    %278 = arith.mulf %277, %275 : vector<2x128xf32>
    %279 = arith.mulf %268, %250 : vector<2x128xf32>
    %280 = arith.addf %278, %279 : vector<2x128xf32>
    %281 = arith.truncf %280 : vector<2x128xf32> to vector<2x128xbf16>
    %c0_86 = arith.constant 0 : index
    %c8_87 = arith.constant 8 : index
    %c0_88 = arith.constant 0 : index
    %282 = vector.load %arg7[%c0_86, %c8_87, %c0_88] : memref<2x32x128xbf16, #tpu.memory_space<vmem>>, vector<2x1x128xbf16>
    %283 = vector.shape_cast %282 : vector<2x1x128xbf16> to vector<2x128xbf16>
    %284 = vector.shape_cast %281 : vector<2x128xbf16> to vector<2x1x128xbf16>
    tpu.vector_store %arg7[%c0_86, %c8_87, %c0_88], %284 {strides = array<i32>} : memref<2x32x128xbf16, #tpu.memory_space<vmem>>, vector<2x1x128xbf16>,
    %c0_89 = arith.constant 0 : index
    %c9 = arith.constant 9 : index
    %c0_90 = arith.constant 0 : index
    %285 = vector.load %arg9[%c0_89, %c9, %c0_90] : memref<2x32x384xf32, #tpu.memory_space<vmem>>, vector<2x1x384xf32>
    %286 = vector.shape_cast %285 : vector<2x1x384xf32> to vector<2x384xf32>
    %287 = arith.truncf %280 : vector<2x128xf32> to vector<2x128xbf16>
    %cst_91 = arith.constant dense<0.000000e+00> : vector<2x384xf32>
    %288 = tpu.matmul %287, %12, %cst_91 {dimension_numbers = #tpu.dot_dimension_numbers<[1], [0], [0], [1], [0, 0, 1, 1], [], []>} : vector<2x128xbf16>, vector<128x384xbf16>, vector<2x384xf32> -> vector<2x384xf32>
    %289 = vector.extract_strided_slice %286 {offsets = [0, 0], sizes = [2, 256], strides = [1, 1]} : vector<2x384xf32> to vector<2x256xf32>
    %290 = vector.extract_strided_slice %288 {offsets = [0, 0], sizes = [2, 256], strides = [1, 1]} : vector<2x384xf32> to vector<2x256xf32>
    %291 = arith.addf %289, %290 : vector<2x256xf32>
    %292 = arith.negf %291 : vector<2x256xf32>
    %293 = math.exp %292 : vector<2x256xf32>
    %cst_92 = arith.constant 1.000000e+00 : f32
    %294 = vector.broadcast %cst_92 : f32 to vector<2x256xf32>
    %295 = arith.addf %294, %293 : vector<2x256xf32>
    %296 = arith.divf %294, %295 : vector<2x256xf32>
    %297 = vector.extract_strided_slice %296 {offsets = [0, 0], sizes = [2, 128], strides = [1, 1]} : vector<2x256xf32> to vector<2x128xf32>
    %298 = vector.extract_strided_slice %296 {offsets = [0, 128], sizes = [2, 128], strides = [1, 1]} : vector<2x256xf32> to vector<2x128xf32>
    %299 = vector.extract_strided_slice %286 {offsets = [0, 256], sizes = [2, 128], strides = [1, 1]} : vector<2x384xf32> to vector<2x128xf32>
    %300 = vector.extract_strided_slice %288 {offsets = [0, 256], sizes = [2, 128], strides = [1, 1]} : vector<2x384xf32> to vector<2x128xf32>
    %301 = vector.broadcast %13 : vector<1x128xf32> to vector<2x128xf32>
    %302 = arith.addf %300, %301 : vector<2x128xf32>
    %303 = arith.mulf %297, %302 : vector<2x128xf32>
    %304 = arith.addf %299, %303 : vector<2x128xf32>
    %305 = math.tanh %304 : vector<2x128xf32>
    %cst_93 = arith.constant 1.000000e+00 : f32
    %306 = vector.broadcast %cst_93 : f32 to vector<2x128xf32>
    %307 = arith.subf %306, %298 : vector<2x128xf32>
    %308 = arith.mulf %307, %305 : vector<2x128xf32>
    %309 = arith.mulf %298, %280 : vector<2x128xf32>
    %310 = arith.addf %308, %309 : vector<2x128xf32>
    %311 = arith.truncf %310 : vector<2x128xf32> to vector<2x128xbf16>
    %c0_94 = arith.constant 0 : index
    %c9_95 = arith.constant 9 : index
    %c0_96 = arith.constant 0 : index
    %312 = vector.load %arg7[%c0_94, %c9_95, %c0_96] : memref<2x32x128xbf16, #tpu.memory_space<vmem>>, vector<2x1x128xbf16>
    %313 = vector.shape_cast %312 : vector<2x1x128xbf16> to vector<2x128xbf16>
    %314 = vector.shape_cast %311 : vector<2x128xbf16> to vector<2x1x128xbf16>
    tpu.vector_store %arg7[%c0_94, %c9_95, %c0_96], %314 {strides = array<i32>} : memref<2x32x128xbf16, #tpu.memory_space<vmem>>, vector<2x1x128xbf16>,
    %c0_97 = arith.constant 0 : index
    %c10 = arith.constant 10 : index
    %c0_98 = arith.constant 0 : index
    %315 = vector.load %arg9[%c0_97, %c10, %c0_98] : memref<2x32x384xf32, #tpu.memory_space<vmem>>, vector<2x1x384xf32>
    %316 = vector.shape_cast %315 : vector<2x1x384xf32> to vector<2x384xf32>
    %317 = arith.truncf %310 : vector<2x128xf32> to vector<2x128xbf16>
    %cst_99 = arith.constant dense<0.000000e+00> : vector<2x384xf32>
    %318 = tpu.matmul %317, %12, %cst_99 {dimension_numbers = #tpu.dot_dimension_numbers<[1], [0], [0], [1], [0, 0, 1, 1], [], []>} : vector<2x128xbf16>, vector<128x384xbf16>, vector<2x384xf32> -> vector<2x384xf32>
    %319 = vector.extract_strided_slice %316 {offsets = [0, 0], sizes = [2, 256], strides = [1, 1]} : vector<2x384xf32> to vector<2x256xf32>
    %320 = vector.extract_strided_slice %318 {offsets = [0, 0], sizes = [2, 256], strides = [1, 1]} : vector<2x384xf32> to vector<2x256xf32>
    %321 = arith.addf %319, %320 : vector<2x256xf32>
    %322 = arith.negf %321 : vector<2x256xf32>
    %323 = math.exp %322 : vector<2x256xf32>
    %cst_100 = arith.constant 1.000000e+00 : f32
    %324 = vector.broadcast %cst_100 : f32 to vector<2x256xf32>
    %325 = arith.addf %324, %323 : vector<2x256xf32>
    %326 = arith.divf %324, %325 : vector<2x256xf32>
    %327 = vector.extract_strided_slice %326 {offsets = [0, 0], sizes = [2, 128], strides = [1, 1]} : vector<2x256xf32> to vector<2x128xf32>
    %328 = vector.extract_strided_slice %326 {offsets = [0, 128], sizes = [2, 128], strides = [1, 1]} : vector<2x256xf32> to vector<2x128xf32>
    %329 = vector.extract_strided_slice %316 {offsets = [0, 256], sizes = [2, 128], strides = [1, 1]} : vector<2x384xf32> to vector<2x128xf32>
    %330 = vector.extract_strided_slice %318 {offsets = [0, 256], sizes = [2, 128], strides = [1, 1]} : vector<2x384xf32> to vector<2x128xf32>
    %331 = vector.broadcast %13 : vector<1x128xf32> to vector<2x128xf32>
    %332 = arith.addf %330, %331 : vector<2x128xf32>
    %333 = arith.mulf %327, %332 : vector<2x128xf32>
    %334 = arith.addf %329, %333 : vector<2x128xf32>
    %335 = math.tanh %334 : vector<2x128xf32>
    %cst_101 = arith.constant 1.000000e+00 : f32
    %336 = vector.broadcast %cst_101 : f32 to vector<2x128xf32>
    %337 = arith.subf %336, %328 : vector<2x128xf32>
    %338 = arith.mulf %337, %335 : vector<2x128xf32>
    %339 = arith.mulf %328, %310 : vector<2x128xf32>
    %340 = arith.addf %338, %339 : vector<2x128xf32>
    %341 = arith.truncf %340 : vector<2x128xf32> to vector<2x128xbf16>
    %c0_102 = arith.constant 0 : index
    %c10_103 = arith.constant 10 : index
    %c0_104 = arith.constant 0 : index
    %342 = vector.load %arg7[%c0_102, %c10_103, %c0_104] : memref<2x32x128xbf16, #tpu.memory_space<vmem>>, vector<2x1x128xbf16>
    %343 = vector.shape_cast %342 : vector<2x1x128xbf16> to vector<2x128xbf16>
    %344 = vector.shape_cast %341 : vector<2x128xbf16> to vector<2x1x128xbf16>
    tpu.vector_store %arg7[%c0_102, %c10_103, %c0_104], %344 {strides = array<i32>} : memref<2x32x128xbf16, #tpu.memory_space<vmem>>, vector<2x1x128xbf16>,
    %c0_105 = arith.constant 0 : index
    %c11 = arith.constant 11 : index
    %c0_106 = arith.constant 0 : index
    %345 = vector.load %arg9[%c0_105, %c11, %c0_106] : memref<2x32x384xf32, #tpu.memory_space<vmem>>, vector<2x1x384xf32>
    %346 = vector.shape_cast %345 : vector<2x1x384xf32> to vector<2x384xf32>
    %347 = arith.truncf %340 : vector<2x128xf32> to vector<2x128xbf16>
    %cst_107 = arith.constant dense<0.000000e+00> : vector<2x384xf32>
    %348 = tpu.matmul %347, %12, %cst_107 {dimension_numbers = #tpu.dot_dimension_numbers<[1], [0], [0], [1], [0, 0, 1, 1], [], []>} : vector<2x128xbf16>, vector<128x384xbf16>, vector<2x384xf32> -> vector<2x384xf32>
    %349 = vector.extract_strided_slice %346 {offsets = [0, 0], sizes = [2, 256], strides = [1, 1]} : vector<2x384xf32> to vector<2x256xf32>
    %350 = vector.extract_strided_slice %348 {offsets = [0, 0], sizes = [2, 256], strides = [1, 1]} : vector<2x384xf32> to vector<2x256xf32>
    %351 = arith.addf %349, %350 : vector<2x256xf32>
    %352 = arith.negf %351 : vector<2x256xf32>
    %353 = math.exp %352 : vector<2x256xf32>
    %cst_108 = arith.constant 1.000000e+00 : f32
    %354 = vector.broadcast %cst_108 : f32 to vector<2x256xf32>
    %355 = arith.addf %354, %353 : vector<2x256xf32>
    %356 = arith.divf %354, %355 : vector<2x256xf32>
    %357 = vector.extract_strided_slice %356 {offsets = [0, 0], sizes = [2, 128], strides = [1, 1]} : vector<2x256xf32> to vector<2x128xf32>
    %358 = vector.extract_strided_slice %356 {offsets = [0, 128], sizes = [2, 128], strides = [1, 1]} : vector<2x256xf32> to vector<2x128xf32>
    %359 = vector.extract_strided_slice %346 {offsets = [0, 256], sizes = [2, 128], strides = [1, 1]} : vector<2x384xf32> to vector<2x128xf32>
    %360 = vector.extract_strided_slice %348 {offsets = [0, 256], sizes = [2, 128], strides = [1, 1]} : vector<2x384xf32> to vector<2x128xf32>
    %361 = vector.broadcast %13 : vector<1x128xf32> to vector<2x128xf32>
    %362 = arith.addf %360, %361 : vector<2x128xf32>
    %363 = arith.mulf %357, %362 : vector<2x128xf32>
    %364 = arith.addf %359, %363 : vector<2x128xf32>
    %365 = math.tanh %364 : vector<2x128xf32>
    %cst_109 = arith.constant 1.000000e+00 : f32
    %366 = vector.broadcast %cst_109 : f32 to vector<2x128xf32>
    %367 = arith.subf %366, %358 : vector<2x128xf32>
    %368 = arith.mulf %367, %365 : vector<2x128xf32>
    %369 = arith.mulf %358, %340 : vector<2x128xf32>
    %370 = arith.addf %368, %369 : vector<2x128xf32>
    %371 = arith.truncf %370 : vector<2x128xf32> to vector<2x128xbf16>
    %c0_110 = arith.constant 0 : index
    %c11_111 = arith.constant 11 : index
    %c0_112 = arith.constant 0 : index
    %372 = vector.load %arg7[%c0_110, %c11_111, %c0_112] : memref<2x32x128xbf16, #tpu.memory_space<vmem>>, vector<2x1x128xbf16>
    %373 = vector.shape_cast %372 : vector<2x1x128xbf16> to vector<2x128xbf16>
    %374 = vector.shape_cast %371 : vector<2x128xbf16> to vector<2x1x128xbf16>
    tpu.vector_store %arg7[%c0_110, %c11_111, %c0_112], %374 {strides = array<i32>} : memref<2x32x128xbf16, #tpu.memory_space<vmem>>, vector<2x1x128xbf16>,
    %c0_113 = arith.constant 0 : index
    %c12 = arith.constant 12 : index
    %c0_114 = arith.constant 0 : index
    %375 = vector.load %arg9[%c0_113, %c12, %c0_114] : memref<2x32x384xf32, #tpu.memory_space<vmem>>, vector<2x1x384xf32>
    %376 = vector.shape_cast %375 : vector<2x1x384xf32> to vector<2x384xf32>
    %377 = arith.truncf %370 : vector<2x128xf32> to vector<2x128xbf16>
    %cst_115 = arith.constant dense<0.000000e+00> : vector<2x384xf32>
    %378 = tpu.matmul %377, %12, %cst_115 {dimension_numbers = #tpu.dot_dimension_numbers<[1], [0], [0], [1], [0, 0, 1, 1], [], []>} : vector<2x128xbf16>, vector<128x384xbf16>, vector<2x384xf32> -> vector<2x384xf32>
    %379 = vector.extract_strided_slice %376 {offsets = [0, 0], sizes = [2, 256], strides = [1, 1]} : vector<2x384xf32> to vector<2x256xf32>
    %380 = vector.extract_strided_slice %378 {offsets = [0, 0], sizes = [2, 256], strides = [1, 1]} : vector<2x384xf32> to vector<2x256xf32>
    %381 = arith.addf %379, %380 : vector<2x256xf32>
    %382 = arith.negf %381 : vector<2x256xf32>
    %383 = math.exp %382 : vector<2x256xf32>
    %cst_116 = arith.constant 1.000000e+00 : f32
    %384 = vector.broadcast %cst_116 : f32 to vector<2x256xf32>
    %385 = arith.addf %384, %383 : vector<2x256xf32>
    %386 = arith.divf %384, %385 : vector<2x256xf32>
    %387 = vector.extract_strided_slice %386 {offsets = [0, 0], sizes = [2, 128], strides = [1, 1]} : vector<2x256xf32> to vector<2x128xf32>
    %388 = vector.extract_strided_slice %386 {offsets = [0, 128], sizes = [2, 128], strides = [1, 1]} : vector<2x256xf32> to vector<2x128xf32>
    %389 = vector.extract_strided_slice %376 {offsets = [0, 256], sizes = [2, 128], strides = [1, 1]} : vector<2x384xf32> to vector<2x128xf32>
    %390 = vector.extract_strided_slice %378 {offsets = [0, 256], sizes = [2, 128], strides = [1, 1]} : vector<2x384xf32> to vector<2x128xf32>
    %391 = vector.broadcast %13 : vector<1x128xf32> to vector<2x128xf32>
    %392 = arith.addf %390, %391 : vector<2x128xf32>
    %393 = arith.mulf %387, %392 : vector<2x128xf32>
    %394 = arith.addf %389, %393 : vector<2x128xf32>
    %395 = math.tanh %394 : vector<2x128xf32>
    %cst_117 = arith.constant 1.000000e+00 : f32
    %396 = vector.broadcast %cst_117 : f32 to vector<2x128xf32>
    %397 = arith.subf %396, %388 : vector<2x128xf32>
    %398 = arith.mulf %397, %395 : vector<2x128xf32>
    %399 = arith.mulf %388, %370 : vector<2x128xf32>
    %400 = arith.addf %398, %399 : vector<2x128xf32>
    %401 = arith.truncf %400 : vector<2x128xf32> to vector<2x128xbf16>
    %c0_118 = arith.constant 0 : index
    %c12_119 = arith.constant 12 : index
    %c0_120 = arith.constant 0 : index
    %402 = vector.load %arg7[%c0_118, %c12_119, %c0_120] : memref<2x32x128xbf16, #tpu.memory_space<vmem>>, vector<2x1x128xbf16>
    %403 = vector.shape_cast %402 : vector<2x1x128xbf16> to vector<2x128xbf16>
    %404 = vector.shape_cast %401 : vector<2x128xbf16> to vector<2x1x128xbf16>
    tpu.vector_store %arg7[%c0_118, %c12_119, %c0_120], %404 {strides = array<i32>} : memref<2x32x128xbf16, #tpu.memory_space<vmem>>, vector<2x1x128xbf16>,
    %c0_121 = arith.constant 0 : index
    %c13 = arith.constant 13 : index
    %c0_122 = arith.constant 0 : index
    %405 = vector.load %arg9[%c0_121, %c13, %c0_122] : memref<2x32x384xf32, #tpu.memory_space<vmem>>, vector<2x1x384xf32>
    %406 = vector.shape_cast %405 : vector<2x1x384xf32> to vector<2x384xf32>
    %407 = arith.truncf %400 : vector<2x128xf32> to vector<2x128xbf16>
    %cst_123 = arith.constant dense<0.000000e+00> : vector<2x384xf32>
    %408 = tpu.matmul %407, %12, %cst_123 {dimension_numbers = #tpu.dot_dimension_numbers<[1], [0], [0], [1], [0, 0, 1, 1], [], []>} : vector<2x128xbf16>, vector<128x384xbf16>, vector<2x384xf32> -> vector<2x384xf32>
    %409 = vector.extract_strided_slice %406 {offsets = [0, 0], sizes = [2, 256], strides = [1, 1]} : vector<2x384xf32> to vector<2x256xf32>
    %410 = vector.extract_strided_slice %408 {offsets = [0, 0], sizes = [2, 256], strides = [1, 1]} : vector<2x384xf32> to vector<2x256xf32>
    %411 = arith.addf %409, %410 : vector<2x256xf32>
    %412 = arith.negf %411 : vector<2x256xf32>
    %413 = math.exp %412 : vector<2x256xf32>
    %cst_124 = arith.constant 1.000000e+00 : f32
    %414 = vector.broadcast %cst_124 : f32 to vector<2x256xf32>
    %415 = arith.addf %414, %413 : vector<2x256xf32>
    %416 = arith.divf %414, %415 : vector<2x256xf32>
    %417 = vector.extract_strided_slice %416 {offsets = [0, 0], sizes = [2, 128], strides = [1, 1]} : vector<2x256xf32> to vector<2x128xf32>
    %418 = vector.extract_strided_slice %416 {offsets = [0, 128], sizes = [2, 128], strides = [1, 1]} : vector<2x256xf32> to vector<2x128xf32>
    %419 = vector.extract_strided_slice %406 {offsets = [0, 256], sizes = [2, 128], strides = [1, 1]} : vector<2x384xf32> to vector<2x128xf32>
    %420 = vector.extract_strided_slice %408 {offsets = [0, 256], sizes = [2, 128], strides = [1, 1]} : vector<2x384xf32> to vector<2x128xf32>
    %421 = vector.broadcast %13 : vector<1x128xf32> to vector<2x128xf32>
    %422 = arith.addf %420, %421 : vector<2x128xf32>
    %423 = arith.mulf %417, %422 : vector<2x128xf32>
    %424 = arith.addf %419, %423 : vector<2x128xf32>
    %425 = math.tanh %424 : vector<2x128xf32>
    %cst_125 = arith.constant 1.000000e+00 : f32
    %426 = vector.broadcast %cst_125 : f32 to vector<2x128xf32>
    %427 = arith.subf %426, %418 : vector<2x128xf32>
    %428 = arith.mulf %427, %425 : vector<2x128xf32>
    %429 = arith.mulf %418, %400 : vector<2x128xf32>
    %430 = arith.addf %428, %429 : vector<2x128xf32>
    %431 = arith.truncf %430 : vector<2x128xf32> to vector<2x128xbf16>
    %c0_126 = arith.constant 0 : index
    %c13_127 = arith.constant 13 : index
    %c0_128 = arith.constant 0 : index
    %432 = vector.load %arg7[%c0_126, %c13_127, %c0_128] : memref<2x32x128xbf16, #tpu.memory_space<vmem>>, vector<2x1x128xbf16>
    %433 = vector.shape_cast %432 : vector<2x1x128xbf16> to vector<2x128xbf16>
    %434 = vector.shape_cast %431 : vector<2x128xbf16> to vector<2x1x128xbf16>
    tpu.vector_store %arg7[%c0_126, %c13_127, %c0_128], %434 {strides = array<i32>} : memref<2x32x128xbf16, #tpu.memory_space<vmem>>, vector<2x1x128xbf16>,
    %c0_129 = arith.constant 0 : index
    %c14 = arith.constant 14 : index
    %c0_130 = arith.constant 0 : index
    %435 = vector.load %arg9[%c0_129, %c14, %c0_130] : memref<2x32x384xf32, #tpu.memory_space<vmem>>, vector<2x1x384xf32>
    %436 = vector.shape_cast %435 : vector<2x1x384xf32> to vector<2x384xf32>
    %437 = arith.truncf %430 : vector<2x128xf32> to vector<2x128xbf16>
    %cst_131 = arith.constant dense<0.000000e+00> : vector<2x384xf32>
    %438 = tpu.matmul %437, %12, %cst_131 {dimension_numbers = #tpu.dot_dimension_numbers<[1], [0], [0], [1], [0, 0, 1, 1], [], []>} : vector<2x128xbf16>, vector<128x384xbf16>, vector<2x384xf32> -> vector<2x384xf32>
    %439 = vector.extract_strided_slice %436 {offsets = [0, 0], sizes = [2, 256], strides = [1, 1]} : vector<2x384xf32> to vector<2x256xf32>
    %440 = vector.extract_strided_slice %438 {offsets = [0, 0], sizes = [2, 256], strides = [1, 1]} : vector<2x384xf32> to vector<2x256xf32>
    %441 = arith.addf %439, %440 : vector<2x256xf32>
    %442 = arith.negf %441 : vector<2x256xf32>
    %443 = math.exp %442 : vector<2x256xf32>
    %cst_132 = arith.constant 1.000000e+00 : f32
    %444 = vector.broadcast %cst_132 : f32 to vector<2x256xf32>
    %445 = arith.addf %444, %443 : vector<2x256xf32>
    %446 = arith.divf %444, %445 : vector<2x256xf32>
    %447 = vector.extract_strided_slice %446 {offsets = [0, 0], sizes = [2, 128], strides = [1, 1]} : vector<2x256xf32> to vector<2x128xf32>
    %448 = vector.extract_strided_slice %446 {offsets = [0, 128], sizes = [2, 128], strides = [1, 1]} : vector<2x256xf32> to vector<2x128xf32>
    %449 = vector.extract_strided_slice %436 {offsets = [0, 256], sizes = [2, 128], strides = [1, 1]} : vector<2x384xf32> to vector<2x128xf32>
    %450 = vector.extract_strided_slice %438 {offsets = [0, 256], sizes = [2, 128], strides = [1, 1]} : vector<2x384xf32> to vector<2x128xf32>
    %451 = vector.broadcast %13 : vector<1x128xf32> to vector<2x128xf32>
    %452 = arith.addf %450, %451 : vector<2x128xf32>
    %453 = arith.mulf %447, %452 : vector<2x128xf32>
    %454 = arith.addf %449, %453 : vector<2x128xf32>
    %455 = math.tanh %454 : vector<2x128xf32>
    %cst_133 = arith.constant 1.000000e+00 : f32
    %456 = vector.broadcast %cst_133 : f32 to vector<2x128xf32>
    %457 = arith.subf %456, %448 : vector<2x128xf32>
    %458 = arith.mulf %457, %455 : vector<2x128xf32>
    %459 = arith.mulf %448, %430 : vector<2x128xf32>
    %460 = arith.addf %458, %459 : vector<2x128xf32>
    %461 = arith.truncf %460 : vector<2x128xf32> to vector<2x128xbf16>
    %c0_134 = arith.constant 0 : index
    %c14_135 = arith.constant 14 : index
    %c0_136 = arith.constant 0 : index
    %462 = vector.load %arg7[%c0_134, %c14_135, %c0_136] : memref<2x32x128xbf16, #tpu.memory_space<vmem>>, vector<2x1x128xbf16>
    %463 = vector.shape_cast %462 : vector<2x1x128xbf16> to vector<2x128xbf16>
    %464 = vector.shape_cast %461 : vector<2x128xbf16> to vector<2x1x128xbf16>
    tpu.vector_store %arg7[%c0_134, %c14_135, %c0_136], %464 {strides = array<i32>} : memref<2x32x128xbf16, #tpu.memory_space<vmem>>, vector<2x1x128xbf16>,
    %c0_137 = arith.constant 0 : index
    %c15 = arith.constant 15 : index
    %c0_138 = arith.constant 0 : index
    %465 = vector.load %arg9[%c0_137, %c15, %c0_138] : memref<2x32x384xf32, #tpu.memory_space<vmem>>, vector<2x1x384xf32>
    %466 = vector.shape_cast %465 : vector<2x1x384xf32> to vector<2x384xf32>
    %467 = arith.truncf %460 : vector<2x128xf32> to vector<2x128xbf16>
    %cst_139 = arith.constant dense<0.000000e+00> : vector<2x384xf32>
    %468 = tpu.matmul %467, %12, %cst_139 {dimension_numbers = #tpu.dot_dimension_numbers<[1], [0], [0], [1], [0, 0, 1, 1], [], []>} : vector<2x128xbf16>, vector<128x384xbf16>, vector<2x384xf32> -> vector<2x384xf32>
    %469 = vector.extract_strided_slice %466 {offsets = [0, 0], sizes = [2, 256], strides = [1, 1]} : vector<2x384xf32> to vector<2x256xf32>
    %470 = vector.extract_strided_slice %468 {offsets = [0, 0], sizes = [2, 256], strides = [1, 1]} : vector<2x384xf32> to vector<2x256xf32>
    %471 = arith.addf %469, %470 : vector<2x256xf32>
    %472 = arith.negf %471 : vector<2x256xf32>
    %473 = math.exp %472 : vector<2x256xf32>
    %cst_140 = arith.constant 1.000000e+00 : f32
    %474 = vector.broadcast %cst_140 : f32 to vector<2x256xf32>
    %475 = arith.addf %474, %473 : vector<2x256xf32>
    %476 = arith.divf %474, %475 : vector<2x256xf32>
    %477 = vector.extract_strided_slice %476 {offsets = [0, 0], sizes = [2, 128], strides = [1, 1]} : vector<2x256xf32> to vector<2x128xf32>
    %478 = vector.extract_strided_slice %476 {offsets = [0, 128], sizes = [2, 128], strides = [1, 1]} : vector<2x256xf32> to vector<2x128xf32>
    %479 = vector.extract_strided_slice %466 {offsets = [0, 256], sizes = [2, 128], strides = [1, 1]} : vector<2x384xf32> to vector<2x128xf32>
    %480 = vector.extract_strided_slice %468 {offsets = [0, 256], sizes = [2, 128], strides = [1, 1]} : vector<2x384xf32> to vector<2x128xf32>
    %481 = vector.broadcast %13 : vector<1x128xf32> to vector<2x128xf32>
    %482 = arith.addf %480, %481 : vector<2x128xf32>
    %483 = arith.mulf %477, %482 : vector<2x128xf32>
    %484 = arith.addf %479, %483 : vector<2x128xf32>
    %485 = math.tanh %484 : vector<2x128xf32>
    %cst_141 = arith.constant 1.000000e+00 : f32
    %486 = vector.broadcast %cst_141 : f32 to vector<2x128xf32>
    %487 = arith.subf %486, %478 : vector<2x128xf32>
    %488 = arith.mulf %487, %485 : vector<2x128xf32>
    %489 = arith.mulf %478, %460 : vector<2x128xf32>
    %490 = arith.addf %488, %489 : vector<2x128xf32>
    %491 = arith.truncf %490 : vector<2x128xf32> to vector<2x128xbf16>
    %c0_142 = arith.constant 0 : index
    %c15_143 = arith.constant 15 : index
    %c0_144 = arith.constant 0 : index
    %492 = vector.load %arg7[%c0_142, %c15_143, %c0_144] : memref<2x32x128xbf16, #tpu.memory_space<vmem>>, vector<2x1x128xbf16>
    %493 = vector.shape_cast %492 : vector<2x1x128xbf16> to vector<2x128xbf16>
    %494 = vector.shape_cast %491 : vector<2x128xbf16> to vector<2x1x128xbf16>
    tpu.vector_store %arg7[%c0_142, %c15_143, %c0_144], %494 {strides = array<i32>} : memref<2x32x128xbf16, #tpu.memory_space<vmem>>, vector<2x1x128xbf16>,
    %c0_145 = arith.constant 0 : index
    %c16 = arith.constant 16 : index
    %c0_146 = arith.constant 0 : index
    %495 = vector.load %arg9[%c0_145, %c16, %c0_146] : memref<2x32x384xf32, #tpu.memory_space<vmem>>, vector<2x1x384xf32>
    %496 = vector.shape_cast %495 : vector<2x1x384xf32> to vector<2x384xf32>
    %497 = arith.truncf %490 : vector<2x128xf32> to vector<2x128xbf16>
    %cst_147 = arith.constant dense<0.000000e+00> : vector<2x384xf32>
    %498 = tpu.matmul %497, %12, %cst_147 {dimension_numbers = #tpu.dot_dimension_numbers<[1], [0], [0], [1], [0, 0, 1, 1], [], []>} : vector<2x128xbf16>, vector<128x384xbf16>, vector<2x384xf32> -> vector<2x384xf32>
    %499 = vector.extract_strided_slice %496 {offsets = [0, 0], sizes = [2, 256], strides = [1, 1]} : vector<2x384xf32> to vector<2x256xf32>
    %500 = vector.extract_strided_slice %498 {offsets = [0, 0], sizes = [2, 256], strides = [1, 1]} : vector<2x384xf32> to vector<2x256xf32>
    %501 = arith.addf %499, %500 : vector<2x256xf32>
    %502 = arith.negf %501 : vector<2x256xf32>
    %503 = math.exp %502 : vector<2x256xf32>
    %cst_148 = arith.constant 1.000000e+00 : f32
    %504 = vector.broadcast %cst_148 : f32 to vector<2x256xf32>
    %505 = arith.addf %504, %503 : vector<2x256xf32>
    %506 = arith.divf %504, %505 : vector<2x256xf32>
    %507 = vector.extract_strided_slice %506 {offsets = [0, 0], sizes = [2, 128], strides = [1, 1]} : vector<2x256xf32> to vector<2x128xf32>
    %508 = vector.extract_strided_slice %506 {offsets = [0, 128], sizes = [2, 128], strides = [1, 1]} : vector<2x256xf32> to vector<2x128xf32>
    %509 = vector.extract_strided_slice %496 {offsets = [0, 256], sizes = [2, 128], strides = [1, 1]} : vector<2x384xf32> to vector<2x128xf32>
    %510 = vector.extract_strided_slice %498 {offsets = [0, 256], sizes = [2, 128], strides = [1, 1]} : vector<2x384xf32> to vector<2x128xf32>
    %511 = vector.broadcast %13 : vector<1x128xf32> to vector<2x128xf32>
    %512 = arith.addf %510, %511 : vector<2x128xf32>
    %513 = arith.mulf %507, %512 : vector<2x128xf32>
    %514 = arith.addf %509, %513 : vector<2x128xf32>
    %515 = math.tanh %514 : vector<2x128xf32>
    %cst_149 = arith.constant 1.000000e+00 : f32
    %516 = vector.broadcast %cst_149 : f32 to vector<2x128xf32>
    %517 = arith.subf %516, %508 : vector<2x128xf32>
    %518 = arith.mulf %517, %515 : vector<2x128xf32>
    %519 = arith.mulf %508, %490 : vector<2x128xf32>
    %520 = arith.addf %518, %519 : vector<2x128xf32>
    %521 = arith.truncf %520 : vector<2x128xf32> to vector<2x128xbf16>
    %c0_150 = arith.constant 0 : index
    %c16_151 = arith.constant 16 : index
    %c0_152 = arith.constant 0 : index
    %522 = vector.load %arg7[%c0_150, %c16_151, %c0_152] : memref<2x32x128xbf16, #tpu.memory_space<vmem>>, vector<2x1x128xbf16>
    %523 = vector.shape_cast %522 : vector<2x1x128xbf16> to vector<2x128xbf16>
    %524 = vector.shape_cast %521 : vector<2x128xbf16> to vector<2x1x128xbf16>
    tpu.vector_store %arg7[%c0_150, %c16_151, %c0_152], %524 {strides = array<i32>} : memref<2x32x128xbf16, #tpu.memory_space<vmem>>, vector<2x1x128xbf16>,
    %c0_153 = arith.constant 0 : index
    %c17 = arith.constant 17 : index
    %c0_154 = arith.constant 0 : index
    %525 = vector.load %arg9[%c0_153, %c17, %c0_154] : memref<2x32x384xf32, #tpu.memory_space<vmem>>, vector<2x1x384xf32>
    %526 = vector.shape_cast %525 : vector<2x1x384xf32> to vector<2x384xf32>
    %527 = arith.truncf %520 : vector<2x128xf32> to vector<2x128xbf16>
    %cst_155 = arith.constant dense<0.000000e+00> : vector<2x384xf32>
    %528 = tpu.matmul %527, %12, %cst_155 {dimension_numbers = #tpu.dot_dimension_numbers<[1], [0], [0], [1], [0, 0, 1, 1], [], []>} : vector<2x128xbf16>, vector<128x384xbf16>, vector<2x384xf32> -> vector<2x384xf32>
    %529 = vector.extract_strided_slice %526 {offsets = [0, 0], sizes = [2, 256], strides = [1, 1]} : vector<2x384xf32> to vector<2x256xf32>
    %530 = vector.extract_strided_slice %528 {offsets = [0, 0], sizes = [2, 256], strides = [1, 1]} : vector<2x384xf32> to vector<2x256xf32>
    %531 = arith.addf %529, %530 : vector<2x256xf32>
    %532 = arith.negf %531 : vector<2x256xf32>
    %533 = math.exp %532 : vector<2x256xf32>
    %cst_156 = arith.constant 1.000000e+00 : f32
    %534 = vector.broadcast %cst_156 : f32 to vector<2x256xf32>
    %535 = arith.addf %534, %533 : vector<2x256xf32>
    %536 = arith.divf %534, %535 : vector<2x256xf32>
    %537 = vector.extract_strided_slice %536 {offsets = [0, 0], sizes = [2, 128], strides = [1, 1]} : vector<2x256xf32> to vector<2x128xf32>
    %538 = vector.extract_strided_slice %536 {offsets = [0, 128], sizes = [2, 128], strides = [1, 1]} : vector<2x256xf32> to vector<2x128xf32>
    %539 = vector.extract_strided_slice %526 {offsets = [0, 256], sizes = [2, 128], strides = [1, 1]} : vector<2x384xf32> to vector<2x128xf32>
    %540 = vector.extract_strided_slice %528 {offsets = [0, 256], sizes = [2, 128], strides = [1, 1]} : vector<2x384xf32> to vector<2x128xf32>
    %541 = vector.broadcast %13 : vector<1x128xf32> to vector<2x128xf32>
    %542 = arith.addf %540, %541 : vector<2x128xf32>
    %543 = arith.mulf %537, %542 : vector<2x128xf32>
    %544 = arith.addf %539, %543 : vector<2x128xf32>
    %545 = math.tanh %544 : vector<2x128xf32>
    %cst_157 = arith.constant 1.000000e+00 : f32
    %546 = vector.broadcast %cst_157 : f32 to vector<2x128xf32>
    %547 = arith.subf %546, %538 : vector<2x128xf32>
    %548 = arith.mulf %547, %545 : vector<2x128xf32>
    %549 = arith.mulf %538, %520 : vector<2x128xf32>
    %550 = arith.addf %548, %549 : vector<2x128xf32>
    %551 = arith.truncf %550 : vector<2x128xf32> to vector<2x128xbf16>
    %c0_158 = arith.constant 0 : index
    %c17_159 = arith.constant 17 : index
    %c0_160 = arith.constant 0 : index
    %552 = vector.load %arg7[%c0_158, %c17_159, %c0_160] : memref<2x32x128xbf16, #tpu.memory_space<vmem>>, vector<2x1x128xbf16>
    %553 = vector.shape_cast %552 : vector<2x1x128xbf16> to vector<2x128xbf16>
    %554 = vector.shape_cast %551 : vector<2x128xbf16> to vector<2x1x128xbf16>
    tpu.vector_store %arg7[%c0_158, %c17_159, %c0_160], %554 {strides = array<i32>} : memref<2x32x128xbf16, #tpu.memory_space<vmem>>, vector<2x1x128xbf16>,
    %c0_161 = arith.constant 0 : index
    %c18 = arith.constant 18 : index
    %c0_162 = arith.constant 0 : index
    %555 = vector.load %arg9[%c0_161, %c18, %c0_162] : memref<2x32x384xf32, #tpu.memory_space<vmem>>, vector<2x1x384xf32>
    %556 = vector.shape_cast %555 : vector<2x1x384xf32> to vector<2x384xf32>
    %557 = arith.truncf %550 : vector<2x128xf32> to vector<2x128xbf16>
    %cst_163 = arith.constant dense<0.000000e+00> : vector<2x384xf32>
    %558 = tpu.matmul %557, %12, %cst_163 {dimension_numbers = #tpu.dot_dimension_numbers<[1], [0], [0], [1], [0, 0, 1, 1], [], []>} : vector<2x128xbf16>, vector<128x384xbf16>, vector<2x384xf32> -> vector<2x384xf32>
    %559 = vector.extract_strided_slice %556 {offsets = [0, 0], sizes = [2, 256], strides = [1, 1]} : vector<2x384xf32> to vector<2x256xf32>
    %560 = vector.extract_strided_slice %558 {offsets = [0, 0], sizes = [2, 256], strides = [1, 1]} : vector<2x384xf32> to vector<2x256xf32>
    %561 = arith.addf %559, %560 : vector<2x256xf32>
    %562 = arith.negf %561 : vector<2x256xf32>
    %563 = math.exp %562 : vector<2x256xf32>
    %cst_164 = arith.constant 1.000000e+00 : f32
    %564 = vector.broadcast %cst_164 : f32 to vector<2x256xf32>
    %565 = arith.addf %564, %563 : vector<2x256xf32>
    %566 = arith.divf %564, %565 : vector<2x256xf32>
    %567 = vector.extract_strided_slice %566 {offsets = [0, 0], sizes = [2, 128], strides = [1, 1]} : vector<2x256xf32> to vector<2x128xf32>
    %568 = vector.extract_strided_slice %566 {offsets = [0, 128], sizes = [2, 128], strides = [1, 1]} : vector<2x256xf32> to vector<2x128xf32>
    %569 = vector.extract_strided_slice %556 {offsets = [0, 256], sizes = [2, 128], strides = [1, 1]} : vector<2x384xf32> to vector<2x128xf32>
    %570 = vector.extract_strided_slice %558 {offsets = [0, 256], sizes = [2, 128], strides = [1, 1]} : vector<2x384xf32> to vector<2x128xf32>
    %571 = vector.broadcast %13 : vector<1x128xf32> to vector<2x128xf32>
    %572 = arith.addf %570, %571 : vector<2x128xf32>
    %573 = arith.mulf %567, %572 : vector<2x128xf32>
    %574 = arith.addf %569, %573 : vector<2x128xf32>
    %575 = math.tanh %574 : vector<2x128xf32>
    %cst_165 = arith.constant 1.000000e+00 : f32
    %576 = vector.broadcast %cst_165 : f32 to vector<2x128xf32>
    %577 = arith.subf %576, %568 : vector<2x128xf32>
    %578 = arith.mulf %577, %575 : vector<2x128xf32>
    %579 = arith.mulf %568, %550 : vector<2x128xf32>
    %580 = arith.addf %578, %579 : vector<2x128xf32>
    %581 = arith.truncf %580 : vector<2x128xf32> to vector<2x128xbf16>
    %c0_166 = arith.constant 0 : index
    %c18_167 = arith.constant 18 : index
    %c0_168 = arith.constant 0 : index
    %582 = vector.load %arg7[%c0_166, %c18_167, %c0_168] : memref<2x32x128xbf16, #tpu.memory_space<vmem>>, vector<2x1x128xbf16>
    %583 = vector.shape_cast %582 : vector<2x1x128xbf16> to vector<2x128xbf16>
    %584 = vector.shape_cast %581 : vector<2x128xbf16> to vector<2x1x128xbf16>
    tpu.vector_store %arg7[%c0_166, %c18_167, %c0_168], %584 {strides = array<i32>} : memref<2x32x128xbf16, #tpu.memory_space<vmem>>, vector<2x1x128xbf16>,
    %c0_169 = arith.constant 0 : index
    %c19 = arith.constant 19 : index
    %c0_170 = arith.constant 0 : index
    %585 = vector.load %arg9[%c0_169, %c19, %c0_170] : memref<2x32x384xf32, #tpu.memory_space<vmem>>, vector<2x1x384xf32>
    %586 = vector.shape_cast %585 : vector<2x1x384xf32> to vector<2x384xf32>
    %587 = arith.truncf %580 : vector<2x128xf32> to vector<2x128xbf16>
    %cst_171 = arith.constant dense<0.000000e+00> : vector<2x384xf32>
    %588 = tpu.matmul %587, %12, %cst_171 {dimension_numbers = #tpu.dot_dimension_numbers<[1], [0], [0], [1], [0, 0, 1, 1], [], []>} : vector<2x128xbf16>, vector<128x384xbf16>, vector<2x384xf32> -> vector<2x384xf32>
    %589 = vector.extract_strided_slice %586 {offsets = [0, 0], sizes = [2, 256], strides = [1, 1]} : vector<2x384xf32> to vector<2x256xf32>
    %590 = vector.extract_strided_slice %588 {offsets = [0, 0], sizes = [2, 256], strides = [1, 1]} : vector<2x384xf32> to vector<2x256xf32>
    %591 = arith.addf %589, %590 : vector<2x256xf32>
    %592 = arith.negf %591 : vector<2x256xf32>
    %593 = math.exp %592 : vector<2x256xf32>
    %cst_172 = arith.constant 1.000000e+00 : f32
    %594 = vector.broadcast %cst_172 : f32 to vector<2x256xf32>
    %595 = arith.addf %594, %593 : vector<2x256xf32>
    %596 = arith.divf %594, %595 : vector<2x256xf32>
    %597 = vector.extract_strided_slice %596 {offsets = [0, 0], sizes = [2, 128], strides = [1, 1]} : vector<2x256xf32> to vector<2x128xf32>
    %598 = vector.extract_strided_slice %596 {offsets = [0, 128], sizes = [2, 128], strides = [1, 1]} : vector<2x256xf32> to vector<2x128xf32>
    %599 = vector.extract_strided_slice %586 {offsets = [0, 256], sizes = [2, 128], strides = [1, 1]} : vector<2x384xf32> to vector<2x128xf32>
    %600 = vector.extract_strided_slice %588 {offsets = [0, 256], sizes = [2, 128], strides = [1, 1]} : vector<2x384xf32> to vector<2x128xf32>
    %601 = vector.broadcast %13 : vector<1x128xf32> to vector<2x128xf32>
    %602 = arith.addf %600, %601 : vector<2x128xf32>
    %603 = arith.mulf %597, %602 : vector<2x128xf32>
    %604 = arith.addf %599, %603 : vector<2x128xf32>
    %605 = math.tanh %604 : vector<2x128xf32>
    %cst_173 = arith.constant 1.000000e+00 : f32
    %606 = vector.broadcast %cst_173 : f32 to vector<2x128xf32>
    %607 = arith.subf %606, %598 : vector<2x128xf32>
    %608 = arith.mulf %607, %605 : vector<2x128xf32>
    %609 = arith.mulf %598, %580 : vector<2x128xf32>
    %610 = arith.addf %608, %609 : vector<2x128xf32>
    %611 = arith.truncf %610 : vector<2x128xf32> to vector<2x128xbf16>
    %c0_174 = arith.constant 0 : index
    %c19_175 = arith.constant 19 : index
    %c0_176 = arith.constant 0 : index
    %612 = vector.load %arg7[%c0_174, %c19_175, %c0_176] : memref<2x32x128xbf16, #tpu.memory_space<vmem>>, vector<2x1x128xbf16>
    %613 = vector.shape_cast %612 : vector<2x1x128xbf16> to vector<2x128xbf16>
    %614 = vector.shape_cast %611 : vector<2x128xbf16> to vector<2x1x128xbf16>
    tpu.vector_store %arg7[%c0_174, %c19_175, %c0_176], %614 {strides = array<i32>} : memref<2x32x128xbf16, #tpu.memory_space<vmem>>, vector<2x1x128xbf16>,
    %c0_177 = arith.constant 0 : index
    %c20 = arith.constant 20 : index
    %c0_178 = arith.constant 0 : index
    %615 = vector.load %arg9[%c0_177, %c20, %c0_178] : memref<2x32x384xf32, #tpu.memory_space<vmem>>, vector<2x1x384xf32>
    %616 = vector.shape_cast %615 : vector<2x1x384xf32> to vector<2x384xf32>
    %617 = arith.truncf %610 : vector<2x128xf32> to vector<2x128xbf16>
    %cst_179 = arith.constant dense<0.000000e+00> : vector<2x384xf32>
    %618 = tpu.matmul %617, %12, %cst_179 {dimension_numbers = #tpu.dot_dimension_numbers<[1], [0], [0], [1], [0, 0, 1, 1], [], []>} : vector<2x128xbf16>, vector<128x384xbf16>, vector<2x384xf32> -> vector<2x384xf32>
    %619 = vector.extract_strided_slice %616 {offsets = [0, 0], sizes = [2, 256], strides = [1, 1]} : vector<2x384xf32> to vector<2x256xf32>
    %620 = vector.extract_strided_slice %618 {offsets = [0, 0], sizes = [2, 256], strides = [1, 1]} : vector<2x384xf32> to vector<2x256xf32>
    %621 = arith.addf %619, %620 : vector<2x256xf32>
    %622 = arith.negf %621 : vector<2x256xf32>
    %623 = math.exp %622 : vector<2x256xf32>
    %cst_180 = arith.constant 1.000000e+00 : f32
    %624 = vector.broadcast %cst_180 : f32 to vector<2x256xf32>
    %625 = arith.addf %624, %623 : vector<2x256xf32>
    %626 = arith.divf %624, %625 : vector<2x256xf32>
    %627 = vector.extract_strided_slice %626 {offsets = [0, 0], sizes = [2, 128], strides = [1, 1]} : vector<2x256xf32> to vector<2x128xf32>
    %628 = vector.extract_strided_slice %626 {offsets = [0, 128], sizes = [2, 128], strides = [1, 1]} : vector<2x256xf32> to vector<2x128xf32>
    %629 = vector.extract_strided_slice %616 {offsets = [0, 256], sizes = [2, 128], strides = [1, 1]} : vector<2x384xf32> to vector<2x128xf32>
    %630 = vector.extract_strided_slice %618 {offsets = [0, 256], sizes = [2, 128], strides = [1, 1]} : vector<2x384xf32> to vector<2x128xf32>
    %631 = vector.broadcast %13 : vector<1x128xf32> to vector<2x128xf32>
    %632 = arith.addf %630, %631 : vector<2x128xf32>
    %633 = arith.mulf %627, %632 : vector<2x128xf32>
    %634 = arith.addf %629, %633 : vector<2x128xf32>
    %635 = math.tanh %634 : vector<2x128xf32>
    %cst_181 = arith.constant 1.000000e+00 : f32
    %636 = vector.broadcast %cst_181 : f32 to vector<2x128xf32>
    %637 = arith.subf %636, %628 : vector<2x128xf32>
    %638 = arith.mulf %637, %635 : vector<2x128xf32>
    %639 = arith.mulf %628, %610 : vector<2x128xf32>
    %640 = arith.addf %638, %639 : vector<2x128xf32>
    %641 = arith.truncf %640 : vector<2x128xf32> to vector<2x128xbf16>
    %c0_182 = arith.constant 0 : index
    %c20_183 = arith.constant 20 : index
    %c0_184 = arith.constant 0 : index
    %642 = vector.load %arg7[%c0_182, %c20_183, %c0_184] : memref<2x32x128xbf16, #tpu.memory_space<vmem>>, vector<2x1x128xbf16>
    %643 = vector.shape_cast %642 : vector<2x1x128xbf16> to vector<2x128xbf16>
    %644 = vector.shape_cast %641 : vector<2x128xbf16> to vector<2x1x128xbf16>
    tpu.vector_store %arg7[%c0_182, %c20_183, %c0_184], %644 {strides = array<i32>} : memref<2x32x128xbf16, #tpu.memory_space<vmem>>, vector<2x1x128xbf16>,
    %c0_185 = arith.constant 0 : index
    %c21 = arith.constant 21 : index
    %c0_186 = arith.constant 0 : index
    %645 = vector.load %arg9[%c0_185, %c21, %c0_186] : memref<2x32x384xf32, #tpu.memory_space<vmem>>, vector<2x1x384xf32>
    %646 = vector.shape_cast %645 : vector<2x1x384xf32> to vector<2x384xf32>
    %647 = arith.truncf %640 : vector<2x128xf32> to vector<2x128xbf16>
    %cst_187 = arith.constant dense<0.000000e+00> : vector<2x384xf32>
    %648 = tpu.matmul %647, %12, %cst_187 {dimension_numbers = #tpu.dot_dimension_numbers<[1], [0], [0], [1], [0, 0, 1, 1], [], []>} : vector<2x128xbf16>, vector<128x384xbf16>, vector<2x384xf32> -> vector<2x384xf32>
    %649 = vector.extract_strided_slice %646 {offsets = [0, 0], sizes = [2, 256], strides = [1, 1]} : vector<2x384xf32> to vector<2x256xf32>
    %650 = vector.extract_strided_slice %648 {offsets = [0, 0], sizes = [2, 256], strides = [1, 1]} : vector<2x384xf32> to vector<2x256xf32>
    %651 = arith.addf %649, %650 : vector<2x256xf32>
    %652 = arith.negf %651 : vector<2x256xf32>
    %653 = math.exp %652 : vector<2x256xf32>
    %cst_188 = arith.constant 1.000000e+00 : f32
    %654 = vector.broadcast %cst_188 : f32 to vector<2x256xf32>
    %655 = arith.addf %654, %653 : vector<2x256xf32>
    %656 = arith.divf %654, %655 : vector<2x256xf32>
    %657 = vector.extract_strided_slice %656 {offsets = [0, 0], sizes = [2, 128], strides = [1, 1]} : vector<2x256xf32> to vector<2x128xf32>
    %658 = vector.extract_strided_slice %656 {offsets = [0, 128], sizes = [2, 128], strides = [1, 1]} : vector<2x256xf32> to vector<2x128xf32>
    %659 = vector.extract_strided_slice %646 {offsets = [0, 256], sizes = [2, 128], strides = [1, 1]} : vector<2x384xf32> to vector<2x128xf32>
    %660 = vector.extract_strided_slice %648 {offsets = [0, 256], sizes = [2, 128], strides = [1, 1]} : vector<2x384xf32> to vector<2x128xf32>
    %661 = vector.broadcast %13 : vector<1x128xf32> to vector<2x128xf32>
    %662 = arith.addf %660, %661 : vector<2x128xf32>
    %663 = arith.mulf %657, %662 : vector<2x128xf32>
    %664 = arith.addf %659, %663 : vector<2x128xf32>
    %665 = math.tanh %664 : vector<2x128xf32>
    %cst_189 = arith.constant 1.000000e+00 : f32
    %666 = vector.broadcast %cst_189 : f32 to vector<2x128xf32>
    %667 = arith.subf %666, %658 : vector<2x128xf32>
    %668 = arith.mulf %667, %665 : vector<2x128xf32>
    %669 = arith.mulf %658, %640 : vector<2x128xf32>
    %670 = arith.addf %668, %669 : vector<2x128xf32>
    %671 = arith.truncf %670 : vector<2x128xf32> to vector<2x128xbf16>
    %c0_190 = arith.constant 0 : index
    %c21_191 = arith.constant 21 : index
    %c0_192 = arith.constant 0 : index
    %672 = vector.load %arg7[%c0_190, %c21_191, %c0_192] : memref<2x32x128xbf16, #tpu.memory_space<vmem>>, vector<2x1x128xbf16>
    %673 = vector.shape_cast %672 : vector<2x1x128xbf16> to vector<2x128xbf16>
    %674 = vector.shape_cast %671 : vector<2x128xbf16> to vector<2x1x128xbf16>
    tpu.vector_store %arg7[%c0_190, %c21_191, %c0_192], %674 {strides = array<i32>} : memref<2x32x128xbf16, #tpu.memory_space<vmem>>, vector<2x1x128xbf16>,
    %c0_193 = arith.constant 0 : index
    %c22 = arith.constant 22 : index
    %c0_194 = arith.constant 0 : index
    %675 = vector.load %arg9[%c0_193, %c22, %c0_194] : memref<2x32x384xf32, #tpu.memory_space<vmem>>, vector<2x1x384xf32>
    %676 = vector.shape_cast %675 : vector<2x1x384xf32> to vector<2x384xf32>
    %677 = arith.truncf %670 : vector<2x128xf32> to vector<2x128xbf16>
    %cst_195 = arith.constant dense<0.000000e+00> : vector<2x384xf32>
    %678 = tpu.matmul %677, %12, %cst_195 {dimension_numbers = #tpu.dot_dimension_numbers<[1], [0], [0], [1], [0, 0, 1, 1], [], []>} : vector<2x128xbf16>, vector<128x384xbf16>, vector<2x384xf32> -> vector<2x384xf32>
    %679 = vector.extract_strided_slice %676 {offsets = [0, 0], sizes = [2, 256], strides = [1, 1]} : vector<2x384xf32> to vector<2x256xf32>
    %680 = vector.extract_strided_slice %678 {offsets = [0, 0], sizes = [2, 256], strides = [1, 1]} : vector<2x384xf32> to vector<2x256xf32>
    %681 = arith.addf %679, %680 : vector<2x256xf32>
    %682 = arith.negf %681 : vector<2x256xf32>
    %683 = math.exp %682 : vector<2x256xf32>
    %cst_196 = arith.constant 1.000000e+00 : f32
    %684 = vector.broadcast %cst_196 : f32 to vector<2x256xf32>
    %685 = arith.addf %684, %683 : vector<2x256xf32>
    %686 = arith.divf %684, %685 : vector<2x256xf32>
    %687 = vector.extract_strided_slice %686 {offsets = [0, 0], sizes = [2, 128], strides = [1, 1]} : vector<2x256xf32> to vector<2x128xf32>
    %688 = vector.extract_strided_slice %686 {offsets = [0, 128], sizes = [2, 128], strides = [1, 1]} : vector<2x256xf32> to vector<2x128xf32>
    %689 = vector.extract_strided_slice %676 {offsets = [0, 256], sizes = [2, 128], strides = [1, 1]} : vector<2x384xf32> to vector<2x128xf32>
    %690 = vector.extract_strided_slice %678 {offsets = [0, 256], sizes = [2, 128], strides = [1, 1]} : vector<2x384xf32> to vector<2x128xf32>
    %691 = vector.broadcast %13 : vector<1x128xf32> to vector<2x128xf32>
    %692 = arith.addf %690, %691 : vector<2x128xf32>
    %693 = arith.mulf %687, %692 : vector<2x128xf32>
    %694 = arith.addf %689, %693 : vector<2x128xf32>
    %695 = math.tanh %694 : vector<2x128xf32>
    %cst_197 = arith.constant 1.000000e+00 : f32
    %696 = vector.broadcast %cst_197 : f32 to vector<2x128xf32>
    %697 = arith.subf %696, %688 : vector<2x128xf32>
    %698 = arith.mulf %697, %695 : vector<2x128xf32>
    %699 = arith.mulf %688, %670 : vector<2x128xf32>
    %700 = arith.addf %698, %699 : vector<2x128xf32>
    %701 = arith.truncf %700 : vector<2x128xf32> to vector<2x128xbf16>
    %c0_198 = arith.constant 0 : index
    %c22_199 = arith.constant 22 : index
    %c0_200 = arith.constant 0 : index
    %702 = vector.load %arg7[%c0_198, %c22_199, %c0_200] : memref<2x32x128xbf16, #tpu.memory_space<vmem>>, vector<2x1x128xbf16>
    %703 = vector.shape_cast %702 : vector<2x1x128xbf16> to vector<2x128xbf16>
    %704 = vector.shape_cast %701 : vector<2x128xbf16> to vector<2x1x128xbf16>
    tpu.vector_store %arg7[%c0_198, %c22_199, %c0_200], %704 {strides = array<i32>} : memref<2x32x128xbf16, #tpu.memory_space<vmem>>, vector<2x1x128xbf16>,
    %c0_201 = arith.constant 0 : index
    %c23 = arith.constant 23 : index
    %c0_202 = arith.constant 0 : index
    %705 = vector.load %arg9[%c0_201, %c23, %c0_202] : memref<2x32x384xf32, #tpu.memory_space<vmem>>, vector<2x1x384xf32>
    %706 = vector.shape_cast %705 : vector<2x1x384xf32> to vector<2x384xf32>
    %707 = arith.truncf %700 : vector<2x128xf32> to vector<2x128xbf16>
    %cst_203 = arith.constant dense<0.000000e+00> : vector<2x384xf32>
    %708 = tpu.matmul %707, %12, %cst_203 {dimension_numbers = #tpu.dot_dimension_numbers<[1], [0], [0], [1], [0, 0, 1, 1], [], []>} : vector<2x128xbf16>, vector<128x384xbf16>, vector<2x384xf32> -> vector<2x384xf32>
    %709 = vector.extract_strided_slice %706 {offsets = [0, 0], sizes = [2, 256], strides = [1, 1]} : vector<2x384xf32> to vector<2x256xf32>
    %710 = vector.extract_strided_slice %708 {offsets = [0, 0], sizes = [2, 256], strides = [1, 1]} : vector<2x384xf32> to vector<2x256xf32>
    %711 = arith.addf %709, %710 : vector<2x256xf32>
    %712 = arith.negf %711 : vector<2x256xf32>
    %713 = math.exp %712 : vector<2x256xf32>
    %cst_204 = arith.constant 1.000000e+00 : f32
    %714 = vector.broadcast %cst_204 : f32 to vector<2x256xf32>
    %715 = arith.addf %714, %713 : vector<2x256xf32>
    %716 = arith.divf %714, %715 : vector<2x256xf32>
    %717 = vector.extract_strided_slice %716 {offsets = [0, 0], sizes = [2, 128], strides = [1, 1]} : vector<2x256xf32> to vector<2x128xf32>
    %718 = vector.extract_strided_slice %716 {offsets = [0, 128], sizes = [2, 128], strides = [1, 1]} : vector<2x256xf32> to vector<2x128xf32>
    %719 = vector.extract_strided_slice %706 {offsets = [0, 256], sizes = [2, 128], strides = [1, 1]} : vector<2x384xf32> to vector<2x128xf32>
    %720 = vector.extract_strided_slice %708 {offsets = [0, 256], sizes = [2, 128], strides = [1, 1]} : vector<2x384xf32> to vector<2x128xf32>
    %721 = vector.broadcast %13 : vector<1x128xf32> to vector<2x128xf32>
    %722 = arith.addf %720, %721 : vector<2x128xf32>
    %723 = arith.mulf %717, %722 : vector<2x128xf32>
    %724 = arith.addf %719, %723 : vector<2x128xf32>
    %725 = math.tanh %724 : vector<2x128xf32>
    %cst_205 = arith.constant 1.000000e+00 : f32
    %726 = vector.broadcast %cst_205 : f32 to vector<2x128xf32>
    %727 = arith.subf %726, %718 : vector<2x128xf32>
    %728 = arith.mulf %727, %725 : vector<2x128xf32>
    %729 = arith.mulf %718, %700 : vector<2x128xf32>
    %730 = arith.addf %728, %729 : vector<2x128xf32>
    %731 = arith.truncf %730 : vector<2x128xf32> to vector<2x128xbf16>
    %c0_206 = arith.constant 0 : index
    %c23_207 = arith.constant 23 : index
    %c0_208 = arith.constant 0 : index
    %732 = vector.load %arg7[%c0_206, %c23_207, %c0_208] : memref<2x32x128xbf16, #tpu.memory_space<vmem>>, vector<2x1x128xbf16>
    %733 = vector.shape_cast %732 : vector<2x1x128xbf16> to vector<2x128xbf16>
    %734 = vector.shape_cast %731 : vector<2x128xbf16> to vector<2x1x128xbf16>
    tpu.vector_store %arg7[%c0_206, %c23_207, %c0_208], %734 {strides = array<i32>} : memref<2x32x128xbf16, #tpu.memory_space<vmem>>, vector<2x1x128xbf16>,
    %c0_209 = arith.constant 0 : index
    %c24 = arith.constant 24 : index
    %c0_210 = arith.constant 0 : index
    %735 = vector.load %arg9[%c0_209, %c24, %c0_210] : memref<2x32x384xf32, #tpu.memory_space<vmem>>, vector<2x1x384xf32>
    %736 = vector.shape_cast %735 : vector<2x1x384xf32> to vector<2x384xf32>
    %737 = arith.truncf %730 : vector<2x128xf32> to vector<2x128xbf16>
    %cst_211 = arith.constant dense<0.000000e+00> : vector<2x384xf32>
    %738 = tpu.matmul %737, %12, %cst_211 {dimension_numbers = #tpu.dot_dimension_numbers<[1], [0], [0], [1], [0, 0, 1, 1], [], []>} : vector<2x128xbf16>, vector<128x384xbf16>, vector<2x384xf32> -> vector<2x384xf32>
    %739 = vector.extract_strided_slice %736 {offsets = [0, 0], sizes = [2, 256], strides = [1, 1]} : vector<2x384xf32> to vector<2x256xf32>
    %740 = vector.extract_strided_slice %738 {offsets = [0, 0], sizes = [2, 256], strides = [1, 1]} : vector<2x384xf32> to vector<2x256xf32>
    %741 = arith.addf %739, %740 : vector<2x256xf32>
    %742 = arith.negf %741 : vector<2x256xf32>
    %743 = math.exp %742 : vector<2x256xf32>
    %cst_212 = arith.constant 1.000000e+00 : f32
    %744 = vector.broadcast %cst_212 : f32 to vector<2x256xf32>
    %745 = arith.addf %744, %743 : vector<2x256xf32>
    %746 = arith.divf %744, %745 : vector<2x256xf32>
    %747 = vector.extract_strided_slice %746 {offsets = [0, 0], sizes = [2, 128], strides = [1, 1]} : vector<2x256xf32> to vector<2x128xf32>
    %748 = vector.extract_strided_slice %746 {offsets = [0, 128], sizes = [2, 128], strides = [1, 1]} : vector<2x256xf32> to vector<2x128xf32>
    %749 = vector.extract_strided_slice %736 {offsets = [0, 256], sizes = [2, 128], strides = [1, 1]} : vector<2x384xf32> to vector<2x128xf32>
    %750 = vector.extract_strided_slice %738 {offsets = [0, 256], sizes = [2, 128], strides = [1, 1]} : vector<2x384xf32> to vector<2x128xf32>
    %751 = vector.broadcast %13 : vector<1x128xf32> to vector<2x128xf32>
    %752 = arith.addf %750, %751 : vector<2x128xf32>
    %753 = arith.mulf %747, %752 : vector<2x128xf32>
    %754 = arith.addf %749, %753 : vector<2x128xf32>
    %755 = math.tanh %754 : vector<2x128xf32>
    %cst_213 = arith.constant 1.000000e+00 : f32
    %756 = vector.broadcast %cst_213 : f32 to vector<2x128xf32>
    %757 = arith.subf %756, %748 : vector<2x128xf32>
    %758 = arith.mulf %757, %755 : vector<2x128xf32>
    %759 = arith.mulf %748, %730 : vector<2x128xf32>
    %760 = arith.addf %758, %759 : vector<2x128xf32>
    %761 = arith.truncf %760 : vector<2x128xf32> to vector<2x128xbf16>
    %c0_214 = arith.constant 0 : index
    %c24_215 = arith.constant 24 : index
    %c0_216 = arith.constant 0 : index
    %762 = vector.load %arg7[%c0_214, %c24_215, %c0_216] : memref<2x32x128xbf16, #tpu.memory_space<vmem>>, vector<2x1x128xbf16>
    %763 = vector.shape_cast %762 : vector<2x1x128xbf16> to vector<2x128xbf16>
    %764 = vector.shape_cast %761 : vector<2x128xbf16> to vector<2x1x128xbf16>
    tpu.vector_store %arg7[%c0_214, %c24_215, %c0_216], %764 {strides = array<i32>} : memref<2x32x128xbf16, #tpu.memory_space<vmem>>, vector<2x1x128xbf16>,
    %c0_217 = arith.constant 0 : index
    %c25 = arith.constant 25 : index
    %c0_218 = arith.constant 0 : index
    %765 = vector.load %arg9[%c0_217, %c25, %c0_218] : memref<2x32x384xf32, #tpu.memory_space<vmem>>, vector<2x1x384xf32>
    %766 = vector.shape_cast %765 : vector<2x1x384xf32> to vector<2x384xf32>
    %767 = arith.truncf %760 : vector<2x128xf32> to vector<2x128xbf16>
    %cst_219 = arith.constant dense<0.000000e+00> : vector<2x384xf32>
    %768 = tpu.matmul %767, %12, %cst_219 {dimension_numbers = #tpu.dot_dimension_numbers<[1], [0], [0], [1], [0, 0, 1, 1], [], []>} : vector<2x128xbf16>, vector<128x384xbf16>, vector<2x384xf32> -> vector<2x384xf32>
    %769 = vector.extract_strided_slice %766 {offsets = [0, 0], sizes = [2, 256], strides = [1, 1]} : vector<2x384xf32> to vector<2x256xf32>
    %770 = vector.extract_strided_slice %768 {offsets = [0, 0], sizes = [2, 256], strides = [1, 1]} : vector<2x384xf32> to vector<2x256xf32>
    %771 = arith.addf %769, %770 : vector<2x256xf32>
    %772 = arith.negf %771 : vector<2x256xf32>
    %773 = math.exp %772 : vector<2x256xf32>
    %cst_220 = arith.constant 1.000000e+00 : f32
    %774 = vector.broadcast %cst_220 : f32 to vector<2x256xf32>
    %775 = arith.addf %774, %773 : vector<2x256xf32>
    %776 = arith.divf %774, %775 : vector<2x256xf32>
    %777 = vector.extract_strided_slice %776 {offsets = [0, 0], sizes = [2, 128], strides = [1, 1]} : vector<2x256xf32> to vector<2x128xf32>
    %778 = vector.extract_strided_slice %776 {offsets = [0, 128], sizes = [2, 128], strides = [1, 1]} : vector<2x256xf32> to vector<2x128xf32>
    %779 = vector.extract_strided_slice %766 {offsets = [0, 256], sizes = [2, 128], strides = [1, 1]} : vector<2x384xf32> to vector<2x128xf32>
    %780 = vector.extract_strided_slice %768 {offsets = [0, 256], sizes = [2, 128], strides = [1, 1]} : vector<2x384xf32> to vector<2x128xf32>
    %781 = vector.broadcast %13 : vector<1x128xf32> to vector<2x128xf32>
    %782 = arith.addf %780, %781 : vector<2x128xf32>
    %783 = arith.mulf %777, %782 : vector<2x128xf32>
    %784 = arith.addf %779, %783 : vector<2x128xf32>
    %785 = math.tanh %784 : vector<2x128xf32>
    %cst_221 = arith.constant 1.000000e+00 : f32
    %786 = vector.broadcast %cst_221 : f32 to vector<2x128xf32>
    %787 = arith.subf %786, %778 : vector<2x128xf32>
    %788 = arith.mulf %787, %785 : vector<2x128xf32>
    %789 = arith.mulf %778, %760 : vector<2x128xf32>
    %790 = arith.addf %788, %789 : vector<2x128xf32>
    %791 = arith.truncf %790 : vector<2x128xf32> to vector<2x128xbf16>
    %c0_222 = arith.constant 0 : index
    %c25_223 = arith.constant 25 : index
    %c0_224 = arith.constant 0 : index
    %792 = vector.load %arg7[%c0_222, %c25_223, %c0_224] : memref<2x32x128xbf16, #tpu.memory_space<vmem>>, vector<2x1x128xbf16>
    %793 = vector.shape_cast %792 : vector<2x1x128xbf16> to vector<2x128xbf16>
    %794 = vector.shape_cast %791 : vector<2x128xbf16> to vector<2x1x128xbf16>
    tpu.vector_store %arg7[%c0_222, %c25_223, %c0_224], %794 {strides = array<i32>} : memref<2x32x128xbf16, #tpu.memory_space<vmem>>, vector<2x1x128xbf16>,
    %c0_225 = arith.constant 0 : index
    %c26 = arith.constant 26 : index
    %c0_226 = arith.constant 0 : index
    %795 = vector.load %arg9[%c0_225, %c26, %c0_226] : memref<2x32x384xf32, #tpu.memory_space<vmem>>, vector<2x1x384xf32>
    %796 = vector.shape_cast %795 : vector<2x1x384xf32> to vector<2x384xf32>
    %797 = arith.truncf %790 : vector<2x128xf32> to vector<2x128xbf16>
    %cst_227 = arith.constant dense<0.000000e+00> : vector<2x384xf32>
    %798 = tpu.matmul %797, %12, %cst_227 {dimension_numbers = #tpu.dot_dimension_numbers<[1], [0], [0], [1], [0, 0, 1, 1], [], []>} : vector<2x128xbf16>, vector<128x384xbf16>, vector<2x384xf32> -> vector<2x384xf32>
    %799 = vector.extract_strided_slice %796 {offsets = [0, 0], sizes = [2, 256], strides = [1, 1]} : vector<2x384xf32> to vector<2x256xf32>
    %800 = vector.extract_strided_slice %798 {offsets = [0, 0], sizes = [2, 256], strides = [1, 1]} : vector<2x384xf32> to vector<2x256xf32>
    %801 = arith.addf %799, %800 : vector<2x256xf32>
    %802 = arith.negf %801 : vector<2x256xf32>
    %803 = math.exp %802 : vector<2x256xf32>
    %cst_228 = arith.constant 1.000000e+00 : f32
    %804 = vector.broadcast %cst_228 : f32 to vector<2x256xf32>
    %805 = arith.addf %804, %803 : vector<2x256xf32>
    %806 = arith.divf %804, %805 : vector<2x256xf32>
    %807 = vector.extract_strided_slice %806 {offsets = [0, 0], sizes = [2, 128], strides = [1, 1]} : vector<2x256xf32> to vector<2x128xf32>
    %808 = vector.extract_strided_slice %806 {offsets = [0, 128], sizes = [2, 128], strides = [1, 1]} : vector<2x256xf32> to vector<2x128xf32>
    %809 = vector.extract_strided_slice %796 {offsets = [0, 256], sizes = [2, 128], strides = [1, 1]} : vector<2x384xf32> to vector<2x128xf32>
    %810 = vector.extract_strided_slice %798 {offsets = [0, 256], sizes = [2, 128], strides = [1, 1]} : vector<2x384xf32> to vector<2x128xf32>
    %811 = vector.broadcast %13 : vector<1x128xf32> to vector<2x128xf32>
    %812 = arith.addf %810, %811 : vector<2x128xf32>
    %813 = arith.mulf %807, %812 : vector<2x128xf32>
    %814 = arith.addf %809, %813 : vector<2x128xf32>
    %815 = math.tanh %814 : vector<2x128xf32>
    %cst_229 = arith.constant 1.000000e+00 : f32
    %816 = vector.broadcast %cst_229 : f32 to vector<2x128xf32>
    %817 = arith.subf %816, %808 : vector<2x128xf32>
    %818 = arith.mulf %817, %815 : vector<2x128xf32>
    %819 = arith.mulf %808, %790 : vector<2x128xf32>
    %820 = arith.addf %818, %819 : vector<2x128xf32>
    %821 = arith.truncf %820 : vector<2x128xf32> to vector<2x128xbf16>
    %c0_230 = arith.constant 0 : index
    %c26_231 = arith.constant 26 : index
    %c0_232 = arith.constant 0 : index
    %822 = vector.load %arg7[%c0_230, %c26_231, %c0_232] : memref<2x32x128xbf16, #tpu.memory_space<vmem>>, vector<2x1x128xbf16>
    %823 = vector.shape_cast %822 : vector<2x1x128xbf16> to vector<2x128xbf16>
    %824 = vector.shape_cast %821 : vector<2x128xbf16> to vector<2x1x128xbf16>
    tpu.vector_store %arg7[%c0_230, %c26_231, %c0_232], %824 {strides = array<i32>} : memref<2x32x128xbf16, #tpu.memory_space<vmem>>, vector<2x1x128xbf16>,
    %c0_233 = arith.constant 0 : index
    %c27 = arith.constant 27 : index
    %c0_234 = arith.constant 0 : index
    %825 = vector.load %arg9[%c0_233, %c27, %c0_234] : memref<2x32x384xf32, #tpu.memory_space<vmem>>, vector<2x1x384xf32>
    %826 = vector.shape_cast %825 : vector<2x1x384xf32> to vector<2x384xf32>
    %827 = arith.truncf %820 : vector<2x128xf32> to vector<2x128xbf16>
    %cst_235 = arith.constant dense<0.000000e+00> : vector<2x384xf32>
    %828 = tpu.matmul %827, %12, %cst_235 {dimension_numbers = #tpu.dot_dimension_numbers<[1], [0], [0], [1], [0, 0, 1, 1], [], []>} : vector<2x128xbf16>, vector<128x384xbf16>, vector<2x384xf32> -> vector<2x384xf32>
    %829 = vector.extract_strided_slice %826 {offsets = [0, 0], sizes = [2, 256], strides = [1, 1]} : vector<2x384xf32> to vector<2x256xf32>
    %830 = vector.extract_strided_slice %828 {offsets = [0, 0], sizes = [2, 256], strides = [1, 1]} : vector<2x384xf32> to vector<2x256xf32>
    %831 = arith.addf %829, %830 : vector<2x256xf32>
    %832 = arith.negf %831 : vector<2x256xf32>
    %833 = math.exp %832 : vector<2x256xf32>
    %cst_236 = arith.constant 1.000000e+00 : f32
    %834 = vector.broadcast %cst_236 : f32 to vector<2x256xf32>
    %835 = arith.addf %834, %833 : vector<2x256xf32>
    %836 = arith.divf %834, %835 : vector<2x256xf32>
    %837 = vector.extract_strided_slice %836 {offsets = [0, 0], sizes = [2, 128], strides = [1, 1]} : vector<2x256xf32> to vector<2x128xf32>
    %838 = vector.extract_strided_slice %836 {offsets = [0, 128], sizes = [2, 128], strides = [1, 1]} : vector<2x256xf32> to vector<2x128xf32>
    %839 = vector.extract_strided_slice %826 {offsets = [0, 256], sizes = [2, 128], strides = [1, 1]} : vector<2x384xf32> to vector<2x128xf32>
    %840 = vector.extract_strided_slice %828 {offsets = [0, 256], sizes = [2, 128], strides = [1, 1]} : vector<2x384xf32> to vector<2x128xf32>
    %841 = vector.broadcast %13 : vector<1x128xf32> to vector<2x128xf32>
    %842 = arith.addf %840, %841 : vector<2x128xf32>
    %843 = arith.mulf %837, %842 : vector<2x128xf32>
    %844 = arith.addf %839, %843 : vector<2x128xf32>
    %845 = math.tanh %844 : vector<2x128xf32>
    %cst_237 = arith.constant 1.000000e+00 : f32
    %846 = vector.broadcast %cst_237 : f32 to vector<2x128xf32>
    %847 = arith.subf %846, %838 : vector<2x128xf32>
    %848 = arith.mulf %847, %845 : vector<2x128xf32>
    %849 = arith.mulf %838, %820 : vector<2x128xf32>
    %850 = arith.addf %848, %849 : vector<2x128xf32>
    %851 = arith.truncf %850 : vector<2x128xf32> to vector<2x128xbf16>
    %c0_238 = arith.constant 0 : index
    %c27_239 = arith.constant 27 : index
    %c0_240 = arith.constant 0 : index
    %852 = vector.load %arg7[%c0_238, %c27_239, %c0_240] : memref<2x32x128xbf16, #tpu.memory_space<vmem>>, vector<2x1x128xbf16>
    %853 = vector.shape_cast %852 : vector<2x1x128xbf16> to vector<2x128xbf16>
    %854 = vector.shape_cast %851 : vector<2x128xbf16> to vector<2x1x128xbf16>
    tpu.vector_store %arg7[%c0_238, %c27_239, %c0_240], %854 {strides = array<i32>} : memref<2x32x128xbf16, #tpu.memory_space<vmem>>, vector<2x1x128xbf16>,
    %c0_241 = arith.constant 0 : index
    %c28 = arith.constant 28 : index
    %c0_242 = arith.constant 0 : index
    %855 = vector.load %arg9[%c0_241, %c28, %c0_242] : memref<2x32x384xf32, #tpu.memory_space<vmem>>, vector<2x1x384xf32>
    %856 = vector.shape_cast %855 : vector<2x1x384xf32> to vector<2x384xf32>
    %857 = arith.truncf %850 : vector<2x128xf32> to vector<2x128xbf16>
    %cst_243 = arith.constant dense<0.000000e+00> : vector<2x384xf32>
    %858 = tpu.matmul %857, %12, %cst_243 {dimension_numbers = #tpu.dot_dimension_numbers<[1], [0], [0], [1], [0, 0, 1, 1], [], []>} : vector<2x128xbf16>, vector<128x384xbf16>, vector<2x384xf32> -> vector<2x384xf32>
    %859 = vector.extract_strided_slice %856 {offsets = [0, 0], sizes = [2, 256], strides = [1, 1]} : vector<2x384xf32> to vector<2x256xf32>
    %860 = vector.extract_strided_slice %858 {offsets = [0, 0], sizes = [2, 256], strides = [1, 1]} : vector<2x384xf32> to vector<2x256xf32>
    %861 = arith.addf %859, %860 : vector<2x256xf32>
    %862 = arith.negf %861 : vector<2x256xf32>
    %863 = math.exp %862 : vector<2x256xf32>
    %cst_244 = arith.constant 1.000000e+00 : f32
    %864 = vector.broadcast %cst_244 : f32 to vector<2x256xf32>
    %865 = arith.addf %864, %863 : vector<2x256xf32>
    %866 = arith.divf %864, %865 : vector<2x256xf32>
    %867 = vector.extract_strided_slice %866 {offsets = [0, 0], sizes = [2, 128], strides = [1, 1]} : vector<2x256xf32> to vector<2x128xf32>
    %868 = vector.extract_strided_slice %866 {offsets = [0, 128], sizes = [2, 128], strides = [1, 1]} : vector<2x256xf32> to vector<2x128xf32>
    %869 = vector.extract_strided_slice %856 {offsets = [0, 256], sizes = [2, 128], strides = [1, 1]} : vector<2x384xf32> to vector<2x128xf32>
    %870 = vector.extract_strided_slice %858 {offsets = [0, 256], sizes = [2, 128], strides = [1, 1]} : vector<2x384xf32> to vector<2x128xf32>
    %871 = vector.broadcast %13 : vector<1x128xf32> to vector<2x128xf32>
    %872 = arith.addf %870, %871 : vector<2x128xf32>
    %873 = arith.mulf %867, %872 : vector<2x128xf32>
    %874 = arith.addf %869, %873 : vector<2x128xf32>
    %875 = math.tanh %874 : vector<2x128xf32>
    %cst_245 = arith.constant 1.000000e+00 : f32
    %876 = vector.broadcast %cst_245 : f32 to vector<2x128xf32>
    %877 = arith.subf %876, %868 : vector<2x128xf32>
    %878 = arith.mulf %877, %875 : vector<2x128xf32>
    %879 = arith.mulf %868, %850 : vector<2x128xf32>
    %880 = arith.addf %878, %879 : vector<2x128xf32>
    %881 = arith.truncf %880 : vector<2x128xf32> to vector<2x128xbf16>
    %c0_246 = arith.constant 0 : index
    %c28_247 = arith.constant 28 : index
    %c0_248 = arith.constant 0 : index
    %882 = vector.load %arg7[%c0_246, %c28_247, %c0_248] : memref<2x32x128xbf16, #tpu.memory_space<vmem>>, vector<2x1x128xbf16>
    %883 = vector.shape_cast %882 : vector<2x1x128xbf16> to vector<2x128xbf16>
    %884 = vector.shape_cast %881 : vector<2x128xbf16> to vector<2x1x128xbf16>
    tpu.vector_store %arg7[%c0_246, %c28_247, %c0_248], %884 {strides = array<i32>} : memref<2x32x128xbf16, #tpu.memory_space<vmem>>, vector<2x1x128xbf16>,
    %c0_249 = arith.constant 0 : index
    %c29 = arith.constant 29 : index
    %c0_250 = arith.constant 0 : index
    %885 = vector.load %arg9[%c0_249, %c29, %c0_250] : memref<2x32x384xf32, #tpu.memory_space<vmem>>, vector<2x1x384xf32>
    %886 = vector.shape_cast %885 : vector<2x1x384xf32> to vector<2x384xf32>
    %887 = arith.truncf %880 : vector<2x128xf32> to vector<2x128xbf16>
    %cst_251 = arith.constant dense<0.000000e+00> : vector<2x384xf32>
    %888 = tpu.matmul %887, %12, %cst_251 {dimension_numbers = #tpu.dot_dimension_numbers<[1], [0], [0], [1], [0, 0, 1, 1], [], []>} : vector<2x128xbf16>, vector<128x384xbf16>, vector<2x384xf32> -> vector<2x384xf32>
    %889 = vector.extract_strided_slice %886 {offsets = [0, 0], sizes = [2, 256], strides = [1, 1]} : vector<2x384xf32> to vector<2x256xf32>
    %890 = vector.extract_strided_slice %888 {offsets = [0, 0], sizes = [2, 256], strides = [1, 1]} : vector<2x384xf32> to vector<2x256xf32>
    %891 = arith.addf %889, %890 : vector<2x256xf32>
    %892 = arith.negf %891 : vector<2x256xf32>
    %893 = math.exp %892 : vector<2x256xf32>
    %cst_252 = arith.constant 1.000000e+00 : f32
    %894 = vector.broadcast %cst_252 : f32 to vector<2x256xf32>
    %895 = arith.addf %894, %893 : vector<2x256xf32>
    %896 = arith.divf %894, %895 : vector<2x256xf32>
    %897 = vector.extract_strided_slice %896 {offsets = [0, 0], sizes = [2, 128], strides = [1, 1]} : vector<2x256xf32> to vector<2x128xf32>
    %898 = vector.extract_strided_slice %896 {offsets = [0, 128], sizes = [2, 128], strides = [1, 1]} : vector<2x256xf32> to vector<2x128xf32>
    %899 = vector.extract_strided_slice %886 {offsets = [0, 256], sizes = [2, 128], strides = [1, 1]} : vector<2x384xf32> to vector<2x128xf32>
    %900 = vector.extract_strided_slice %888 {offsets = [0, 256], sizes = [2, 128], strides = [1, 1]} : vector<2x384xf32> to vector<2x128xf32>
    %901 = vector.broadcast %13 : vector<1x128xf32> to vector<2x128xf32>
    %902 = arith.addf %900, %901 : vector<2x128xf32>
    %903 = arith.mulf %897, %902 : vector<2x128xf32>
    %904 = arith.addf %899, %903 : vector<2x128xf32>
    %905 = math.tanh %904 : vector<2x128xf32>
    %cst_253 = arith.constant 1.000000e+00 : f32
    %906 = vector.broadcast %cst_253 : f32 to vector<2x128xf32>
    %907 = arith.subf %906, %898 : vector<2x128xf32>
    %908 = arith.mulf %907, %905 : vector<2x128xf32>
    %909 = arith.mulf %898, %880 : vector<2x128xf32>
    %910 = arith.addf %908, %909 : vector<2x128xf32>
    %911 = arith.truncf %910 : vector<2x128xf32> to vector<2x128xbf16>
    %c0_254 = arith.constant 0 : index
    %c29_255 = arith.constant 29 : index
    %c0_256 = arith.constant 0 : index
    %912 = vector.load %arg7[%c0_254, %c29_255, %c0_256] : memref<2x32x128xbf16, #tpu.memory_space<vmem>>, vector<2x1x128xbf16>
    %913 = vector.shape_cast %912 : vector<2x1x128xbf16> to vector<2x128xbf16>
    %914 = vector.shape_cast %911 : vector<2x128xbf16> to vector<2x1x128xbf16>
    tpu.vector_store %arg7[%c0_254, %c29_255, %c0_256], %914 {strides = array<i32>} : memref<2x32x128xbf16, #tpu.memory_space<vmem>>, vector<2x1x128xbf16>,
    %c0_257 = arith.constant 0 : index
    %c30 = arith.constant 30 : index
    %c0_258 = arith.constant 0 : index
    %915 = vector.load %arg9[%c0_257, %c30, %c0_258] : memref<2x32x384xf32, #tpu.memory_space<vmem>>, vector<2x1x384xf32>
    %916 = vector.shape_cast %915 : vector<2x1x384xf32> to vector<2x384xf32>
    %917 = arith.truncf %910 : vector<2x128xf32> to vector<2x128xbf16>
    %cst_259 = arith.constant dense<0.000000e+00> : vector<2x384xf32>
    %918 = tpu.matmul %917, %12, %cst_259 {dimension_numbers = #tpu.dot_dimension_numbers<[1], [0], [0], [1], [0, 0, 1, 1], [], []>} : vector<2x128xbf16>, vector<128x384xbf16>, vector<2x384xf32> -> vector<2x384xf32>
    %919 = vector.extract_strided_slice %916 {offsets = [0, 0], sizes = [2, 256], strides = [1, 1]} : vector<2x384xf32> to vector<2x256xf32>
    %920 = vector.extract_strided_slice %918 {offsets = [0, 0], sizes = [2, 256], strides = [1, 1]} : vector<2x384xf32> to vector<2x256xf32>
    %921 = arith.addf %919, %920 : vector<2x256xf32>
    %922 = arith.negf %921 : vector<2x256xf32>
    %923 = math.exp %922 : vector<2x256xf32>
    %cst_260 = arith.constant 1.000000e+00 : f32
    %924 = vector.broadcast %cst_260 : f32 to vector<2x256xf32>
    %925 = arith.addf %924, %923 : vector<2x256xf32>
    %926 = arith.divf %924, %925 : vector<2x256xf32>
    %927 = vector.extract_strided_slice %926 {offsets = [0, 0], sizes = [2, 128], strides = [1, 1]} : vector<2x256xf32> to vector<2x128xf32>
    %928 = vector.extract_strided_slice %926 {offsets = [0, 128], sizes = [2, 128], strides = [1, 1]} : vector<2x256xf32> to vector<2x128xf32>
    %929 = vector.extract_strided_slice %916 {offsets = [0, 256], sizes = [2, 128], strides = [1, 1]} : vector<2x384xf32> to vector<2x128xf32>
    %930 = vector.extract_strided_slice %918 {offsets = [0, 256], sizes = [2, 128], strides = [1, 1]} : vector<2x384xf32> to vector<2x128xf32>
    %931 = vector.broadcast %13 : vector<1x128xf32> to vector<2x128xf32>
    %932 = arith.addf %930, %931 : vector<2x128xf32>
    %933 = arith.mulf %927, %932 : vector<2x128xf32>
    %934 = arith.addf %929, %933 : vector<2x128xf32>
    %935 = math.tanh %934 : vector<2x128xf32>
    %cst_261 = arith.constant 1.000000e+00 : f32
    %936 = vector.broadcast %cst_261 : f32 to vector<2x128xf32>
    %937 = arith.subf %936, %928 : vector<2x128xf32>
    %938 = arith.mulf %937, %935 : vector<2x128xf32>
    %939 = arith.mulf %928, %910 : vector<2x128xf32>
    %940 = arith.addf %938, %939 : vector<2x128xf32>
    %941 = arith.truncf %940 : vector<2x128xf32> to vector<2x128xbf16>
    %c0_262 = arith.constant 0 : index
    %c30_263 = arith.constant 30 : index
    %c0_264 = arith.constant 0 : index
    %942 = vector.load %arg7[%c0_262, %c30_263, %c0_264] : memref<2x32x128xbf16, #tpu.memory_space<vmem>>, vector<2x1x128xbf16>
    %943 = vector.shape_cast %942 : vector<2x1x128xbf16> to vector<2x128xbf16>
    %944 = vector.shape_cast %941 : vector<2x128xbf16> to vector<2x1x128xbf16>
    tpu.vector_store %arg7[%c0_262, %c30_263, %c0_264], %944 {strides = array<i32>} : memref<2x32x128xbf16, #tpu.memory_space<vmem>>, vector<2x1x128xbf16>,
    %c0_265 = arith.constant 0 : index
    %c31 = arith.constant 31 : index
    %c0_266 = arith.constant 0 : index
    %945 = vector.load %arg9[%c0_265, %c31, %c0_266] : memref<2x32x384xf32, #tpu.memory_space<vmem>>, vector<2x1x384xf32>
    %946 = vector.shape_cast %945 : vector<2x1x384xf32> to vector<2x384xf32>
    %947 = arith.truncf %940 : vector<2x128xf32> to vector<2x128xbf16>
    %cst_267 = arith.constant dense<0.000000e+00> : vector<2x384xf32>
    %948 = tpu.matmul %947, %12, %cst_267 {dimension_numbers = #tpu.dot_dimension_numbers<[1], [0], [0], [1], [0, 0, 1, 1], [], []>} : vector<2x128xbf16>, vector<128x384xbf16>, vector<2x384xf32> -> vector<2x384xf32>
    %949 = vector.extract_strided_slice %946 {offsets = [0, 0], sizes = [2, 256], strides = [1, 1]} : vector<2x384xf32> to vector<2x256xf32>
    %950 = vector.extract_strided_slice %948 {offsets = [0, 0], sizes = [2, 256], strides = [1, 1]} : vector<2x384xf32> to vector<2x256xf32>
    %951 = arith.addf %949, %950 : vector<2x256xf32>
    %952 = arith.negf %951 : vector<2x256xf32>
    %953 = math.exp %952 : vector<2x256xf32>
    %cst_268 = arith.constant 1.000000e+00 : f32
    %954 = vector.broadcast %cst_268 : f32 to vector<2x256xf32>
    %955 = arith.addf %954, %953 : vector<2x256xf32>
    %956 = arith.divf %954, %955 : vector<2x256xf32>
    %957 = vector.extract_strided_slice %956 {offsets = [0, 0], sizes = [2, 128], strides = [1, 1]} : vector<2x256xf32> to vector<2x128xf32>
    %958 = vector.extract_strided_slice %956 {offsets = [0, 128], sizes = [2, 128], strides = [1, 1]} : vector<2x256xf32> to vector<2x128xf32>
    %959 = vector.extract_strided_slice %946 {offsets = [0, 256], sizes = [2, 128], strides = [1, 1]} : vector<2x384xf32> to vector<2x128xf32>
    %960 = vector.extract_strided_slice %948 {offsets = [0, 256], sizes = [2, 128], strides = [1, 1]} : vector<2x384xf32> to vector<2x128xf32>
    %961 = vector.broadcast %13 : vector<1x128xf32> to vector<2x128xf32>
    %962 = arith.addf %960, %961 : vector<2x128xf32>
    %963 = arith.mulf %957, %962 : vector<2x128xf32>
    %964 = arith.addf %959, %963 : vector<2x128xf32>
    %965 = math.tanh %964 : vector<2x128xf32>
    %cst_269 = arith.constant 1.000000e+00 : f32
    %966 = vector.broadcast %cst_269 : f32 to vector<2x128xf32>
    %967 = arith.subf %966, %958 : vector<2x128xf32>
    %968 = arith.mulf %967, %965 : vector<2x128xf32>
    %969 = arith.mulf %958, %940 : vector<2x128xf32>
    %970 = arith.addf %968, %969 : vector<2x128xf32>
    %971 = arith.truncf %970 : vector<2x128xf32> to vector<2x128xbf16>
    %c0_270 = arith.constant 0 : index
    %c31_271 = arith.constant 31 : index
    %c0_272 = arith.constant 0 : index
    %972 = vector.load %arg7[%c0_270, %c31_271, %c0_272] : memref<2x32x128xbf16, #tpu.memory_space<vmem>>, vector<2x1x128xbf16>
    %973 = vector.shape_cast %972 : vector<2x1x128xbf16> to vector<2x128xbf16>
    %974 = vector.shape_cast %971 : vector<2x128xbf16> to vector<2x1x128xbf16>
    tpu.vector_store %arg7[%c0_270, %c31_271, %c0_272], %974 {strides = array<i32>} : memref<2x32x128xbf16, #tpu.memory_space<vmem>>, vector<2x1x128xbf16>,
    %c0_273 = arith.constant 0 : index
    %c0_274 = arith.constant 0 : index
    %975 = vector.load %arg8[%c0_273, %c0_274] : memref<2x128xf32, #tpu.memory_space<vmem>>, vector<2x128xf32>
    tpu.vector_store %arg8[%c0_273, %c0_274], %970 {strides = array<i32>} : memref<2x128xf32, #tpu.memory_space<vmem>>, vector<2x128xf32>,
    return
  }
  func.func @transform_0(%arg0: i32, %arg1: i32) -> (i32, i32, i32) {
    %c0_i32 = arith.constant 0 : i32
    %c0_i32_0 = arith.constant 0 : i32
    return %arg0, %arg1, %c0_i32 : i32, i32, i32
  }
  func.func @transform_1(%arg0: i32, %arg1: i32) -> (i32, i32) {
    %c0_i32 = arith.constant 0 : i32
    %c0_i32_0 = arith.constant 0 : i32
    %c0_i32_1 = arith.constant 0 : i32
    return %c0_i32, %c0_i32_0 : i32, i32
  }
  func.func @transform_2(%arg0: i32, %arg1: i32) -> (i32, i32) {
    %c0_i32 = arith.constant 0 : i32
    %c0_i32_0 = arith.constant 0 : i32
    %c0_i32_1 = arith.constant 0 : i32
    return %c0_i32, %c0_i32_0 : i32, i32
  }
  func.func @transform_3(%arg0: i32, %arg1: i32) -> (i32, i32) {
    %c0_i32 = arith.constant 0 : i32
    %c0_i32_0 = arith.constant 0 : i32
    %c0_i32_1 = arith.constant 0 : i32
    return %c0_i32, %c0_i32_0 : i32, i32
  }
  func.func @transform_4(%arg0: i32, %arg1: i32) -> (i32, i32) {
    %c0_i32 = arith.constant 0 : i32
    %c0_i32_0 = arith.constant 0 : i32
    %c0_i32_1 = arith.constant 0 : i32
    return %c0_i32, %c0_i32_0 : i32, i32
  }
  func.func @transform_5(%arg0: i32, %arg1: i32) -> (i32, i32, i32) {
    %c0_i32 = arith.constant 0 : i32
    %c0_i32_0 = arith.constant 0 : i32
    return %arg0, %arg1, %c0_i32 : i32, i32, i32
  }
}

</mosaic_0001>

<llo_original>
// kernel: fwd.5
$region0: #{fwd.5}
  #allocation0 [shape = 'u32[]', space=smem, size = 0x4, offset = 0x4, fixed_abs, tag = 'smem constant byte address 0x4 - core index']
  #allocation1 [shape = 'u32[144,128]{1,0:T(1,128)}', space=vmem, size = 0x12000, scoped, tag = 'internal scratch']
  #allocation2 [shape = 'bf16[18,128]{1,0:T(8,128)(2,1)}', space=vmem, size = 0x1800, scoped, tag = 'scratch operand']
  #allocation3 [shape = 'bf16[18,128]{1,0:T(8,128)(2,1)}', space=vmem, size = 0x1800, scoped, tag = 'scratch operand']
  %s0 = inlined_call_operand.vmem [shape: bf16[2,16,128], index: 0, kind: input, shape index: {}]
  %s1 = inlined_call_operand.hbm [shape: bf16[384,128], index: 1, kind: input, shape index: {}]
  %s2 = inlined_call_operand.vmem [shape: f32[1,128], index: 2, kind: input, shape index: {}]
  %s3 = inlined_call_operand.vmem [shape: f32[1,128], index: 3, kind: input, shape index: {}]
  %s4 = inlined_call_operand.hbm [shape: bf16[384,128], index: 4, kind: input, shape index: {}]
  %s5 = inlined_call_operand.vmem [shape: f32[1,128], index: 5, kind: input, shape index: {}]
  %s6 = inlined_call_operand.vmem [shape: f32[1,128], index: 6, kind: input, shape index: {}]
  %s7 = inlined_call_operand.vmem [shape: bf16[2,16,128], index: 7, kind: output, shape index: {}]
  %s8 = sld [smem:[#allocation0]]
  $region69: #{fwd.5} parent=0
    _
  %s10 = ssub.s32 1, %s8
  %s11 = scalar_select 0, %s10, %s8
  $region1: #{fwd.5} parent=0
    #allocation4 [shape = 'u8[98304]{0}', space=vmem, size = 0x18000, scoped, tag = 'input window, operand 1, single buffered']
    #allocation5 [shape = 's32[2]{0}', space=sflag, size = 0x8, scoped, tag = 'scoped memory for fwd.5']
    #allocation6 [shape = 'u8[98304]{0}', space=vmem, size = 0x18000, scoped, tag = 'input window, operand 4, single buffered']
    #allocation7 [shape = 's32[1]{0}', space=sflag, size = 0x4, scoped, tag = 'scoped memory for fwd.5']
    %12 = vsyncpa [#allocation5], 0
    %13 = vsyncpa [#allocation7], 0
    loop: start=0, step=1, limit=4
    $region2: #{fwd.5} parent=1 // loop_pre_header
      _
    $region3: #{fwd.5} parent=1 // loop_header
      %s15 = sphi 0, %s19
      %p16 = scmp.ge.s32.totalorder %s15, 4
      %s25 = sphi 0, %s27
      %s28 = sphi 0, %s25
      %s29 = sphi 0, %s28
      %s45 = sphi 0, %s29
      %s49 = sphi 0, %s49
      %s51 = sphi 0, %s49
      %s52 = sphi 0, %s51
      %s66 = sphi 0, %s52
      %s70 = sphi 0, %s70
      %s72 = sphi 0, %s70
      %s73 = sphi 0, %s72
      %s87 = sphi 0, %s73
      %s91 = sphi 0, %s91
      %s93 = sphi 0, %s91
      %s94 = sphi 0, %s93
      %s108 = sphi 0, %s94
      %s112 = sphi 0, %s112
      %s114 = sphi 0, %s112
      %s115 = sphi 0, %s114
      %s129 = sphi 0, %s115
      %s133 = sphi 0, %s133
      %s135 = sphi 0, %s133
      %s136 = sphi 0, %s135
      %s150 = sphi 0, %s136
      %s154 = sphi 0, %s154
      %s156 = sphi 0, %s154
      %s157 = sphi 0, %s156
      %s171 = sphi 0, %s157
      %s177 = sphi 0, %s179
      %s180 = sphi 0, %s177
      %s181 = sphi 0, %s180
      %s197 = sphi 0, %s181
    $region4: #{fwd.5} parent=1 // loop_header_branch
      %18 = sbr.rel (%p16) target = $region8
    $region5: #{fwd.5} parent=1 // loop_body
      %s20 = ssub.s32 %s15, 1
      %s21 = ssub.s32 %s15, 2
      %s22 = sadd.s32 %s15, 1
      %s23 = ssub.s32 %s15, %s22
      %p24 = scmp.eq.s32.totalorder %s23, 0
      %s26 = sadd.s32 %s25, 1
      %s27 = scalar_select %p24, %s25, %s26
      %p30 = pneg %p24
      %p31 = scmp.eq.s32.totalorder %s15, 1
      %p32 = por %p30, %p31
      %p33 = scmp.ne.s32.totalorder %s25, %s28
      %p34 = scmp.eq.s32.totalorder %s15, 0
      %p35 = por %p33, %p34
      %p36 = scmp.ne.s32.totalorder %s25, %s28
      %p37 = scmp.eq.s32.totalorder %s20, 1
      %p38 = por %p36, %p37
      %p39 = scmp.ne.s32.totalorder %s28, %s29
      %p40 = scmp.eq.s32.totalorder %s20, 0
      %p41 = por %p39, %p40
      %p42 = scmp.ne.s32.totalorder %s28, %s29
      %p43 = scmp.eq.s32.totalorder %s21, 1
      %p44 = por %p42, %p43
      %p46 = scmp.ne.s32.totalorder %s29, %s45
      %p47 = scmp.eq.s32.totalorder %s21, 0
      %p48 = por %p46, %p47
      %s50 = sadd.s32 %s49, 1
      %p53 = scmp.eq.s32.totalorder %s15, 1
      %p54 = scmp.ne.s32.totalorder %s49, %s51
      %p55 = scmp.eq.s32.totalorder %s15, 0
      %p56 = por %p54, %p55
      %p57 = scmp.ne.s32.totalorder %s49, %s51
      %p58 = scmp.eq.s32.totalorder %s20, 1
      %p59 = por %p57, %p58
      %p60 = scmp.ne.s32.totalorder %s51, %s52
      %p61 = scmp.eq.s32.totalorder %s20, 0
      %p62 = por %p60, %p61
      %p63 = scmp.ne.s32.totalorder %s51, %s52
      %p64 = scmp.eq.s32.totalorder %s21, 1
      %p65 = por %p63, %p64
      %p67 = scmp.ne.s32.totalorder %s52, %s66
      %p68 = scmp.eq.s32.totalorder %s21, 0
      %p69 = por %p67, %p68
      %s71 = sadd.s32 %s70, 1
      %p74 = scmp.eq.s32.totalorder %s15, 1
      %p75 = scmp.ne.s32.totalorder %s70, %s72
      %p76 = scmp.eq.s32.totalorder %s15, 0
      %p77 = por %p75, %p76
      %p78 = scmp.ne.s32.totalorder %s70, %s72
      %p79 = scmp.eq.s32.totalorder %s20, 1
      %p80 = por %p78, %p79
      %p81 = scmp.ne.s32.totalorder %s72, %s73
      %p82 = scmp.eq.s32.totalorder %s20, 0
      %p83 = por %p81, %p82
      %p84 = scmp.ne.s32.totalorder %s72, %s73
      %p85 = scmp.eq.s32.totalorder %s21, 1
      %p86 = por %p84, %p85
      %p88 = scmp.ne.s32.totalorder %s73, %s87
      %p89 = scmp.eq.s32.totalorder %s21, 0
      %p90 = por %p88, %p89
      %s92 = sadd.s32 %s91, 1
      %p95 = scmp.eq.s32.totalorder %s15, 1
      %p96 = scmp.ne.s32.totalorder %s91, %s93
      %p97 = scmp.eq.s32.totalorder %s15, 0
      %p98 = por %p96, %p97
      %p99 = scmp.ne.s32.totalorder %s91, %s93
      %p100 = scmp.eq.s32.totalorder %s20, 1
      %p101 = por %p99, %p100
      %p102 = scmp.ne.s32.totalorder %s93, %s94
      %p103 = scmp.eq.s32.totalorder %s20, 0
      %p104 = por %p102, %p103
      %p105 = scmp.ne.s32.totalorder %s93, %s94
      %p106 = scmp.eq.s32.totalorder %s21, 1
      %p107 = por %p105, %p106
      %p109 = scmp.ne.s32.totalorder %s94, %s108
      %p110 = scmp.eq.s32.totalorder %s21, 0
      %p111 = por %p109, %p110
      %s113 = sadd.s32 %s112, 1
      %p116 = scmp.eq.s32.totalorder %s15, 1
      %p117 = scmp.ne.s32.totalorder %s112, %s114
      %p118 = scmp.eq.s32.totalorder %s15, 0
      %p119 = por %p117, %p118
      %p120 = scmp.ne.s32.totalorder %s112, %s114
      %p121 = scmp.eq.s32.totalorder %s20, 1
      %p122 = por %p120, %p121
      %p123 = scmp.ne.s32.totalorder %s114, %s115
      %p124 = scmp.eq.s32.totalorder %s20, 0
      %p125 = por %p123, %p124
      %p126 = scmp.ne.s32.totalorder %s114, %s115
      %p127 = scmp.eq.s32.totalorder %s21, 1
      %p128 = por %p126, %p127
      %p130 = scmp.ne.s32.totalorder %s115, %s129
      %p131 = scmp.eq.s32.totalorder %s21, 0
      %p132 = por %p130, %p131
      %s134 = sadd.s32 %s133, 1
      %p137 = scmp.eq.s32.totalorder %s15, 1
      %p138 = scmp.ne.s32.totalorder %s133, %s135
      %p139 = scmp.eq.s32.totalorder %s15, 0
      %p140 = por %p138, %p139
      %p141 = scmp.ne.s32.totalorder %s133, %s135
      %p142 = scmp.eq.s32.totalorder %s20, 1
      %p143 = por %p141, %p142
      %p144 = scmp.ne.s32.totalorder %s135, %s136
      %p145 = scmp.eq.s32.totalorder %s20, 0
      %p146 = por %p144, %p145
      %p147 = scmp.ne.s32.totalorder %s135, %s136
      %p148 = scmp.eq.s32.totalorder %s21, 1
      %p149 = por %p147, %p148
      %p151 = scmp.ne.s32.totalorder %s136, %s150
      %p152 = scmp.eq.s32.totalorder %s21, 0
      %p153 = por %p151, %p152
      %s155 = sadd.s32 %s154, 1
      %p158 = scmp.eq.s32.totalorder %s15, 1
      %p159 = scmp.ne.s32.totalorder %s154, %s156
      %p160 = scmp.eq.s32.totalorder %s15, 0
      %p161 = por %p159, %p160
      %p162 = scmp.ne.s32.totalorder %s154, %s156
      %p163 = scmp.eq.s32.totalorder %s20, 1
      %p164 = por %p162, %p163
      %p165 = scmp.ne.s32.totalorder %s156, %s157
      %p166 = scmp.eq.s32.totalorder %s20, 0
      %p167 = por %p165, %p166
      %p168 = scmp.ne.s32.totalorder %s156, %s157
      %p169 = scmp.eq.s32.totalorder %s21, 1
      %p170 = por %p168, %p169
      %p172 = scmp.ne.s32.totalorder %s157, %s171
      %p173 = scmp.eq.s32.totalorder %s21, 0
      %p174 = por %p172, %p173
      %s175 = ssub.s32 %s15, %s22
      %p176 = scmp.eq.s32.totalorder %s175, 0
      %s178 = sadd.s32 %s177, 1
      %s179 = scalar_select %p176, %s177, %s178
      %p182 = pneg %p176
      %p183 = scmp.eq.s32.totalorder %s15, 1
      %p184 = por %p182, %p183
      %p185 = scmp.ne.s32.totalorder %s177, %s180
      %p186 = scmp.eq.s32.totalorder %s15, 0
      %p187 = por %p185, %p186
      %p188 = scmp.ne.s32.totalorder %s177, %s180
      %p189 = scmp.eq.s32.totalorder %s20, 1
      %p190 = por %p188, %p189
      %p191 = scmp.ne.s32.totalorder %s180, %s181
      %p192 = scmp.eq.s32.totalorder %s20, 0
      %p193 = por %p191, %p192
      %p194 = scmp.ne.s32.totalorder %s180, %s181
      %p195 = scmp.eq.s32.totalorder %s21, 1
      %p196 = por %p194, %p195
      %p198 = scmp.ne.s32.totalorder %s181, %s197
      %p199 = scmp.eq.s32.totalorder %s21, 0
      %p200 = por %p198, %p199
      %p201 = scmp.le.s32.totalorder 1, %s15
      %p202 = scmp.lt.s32.totalorder %s15, 3
      %p203 = pnand %p201, %p202
      %p204 = pneg %p203
      // Predicated region
      $region9: #{fwd.5} parent=5 // pred_check
        _
      $region10: #{fwd.5} parent=5 // pred_check_branch
        %206 = sbr.rel (%p203) target = $region12
      $region11: #{fwd.5} parent=5 // pred_region
        %s207 = ssub.s32 %s15, 1
        // Predicated region
        $region13: #{fwd.5} parent=11 // pred_check
          %p208 = pneg %p62
        $region14: #{fwd.5} parent=11 // pred_check_branch
          %210 = sbr.rel (%p208) target = $region16
        $region15: #{fwd.5} parent=11 // pred_region
          %s212 = ssub.s32 3072, 3072
          %213 = vsyncadd [#allocation5], %s212
          %s214 = sshll.u32 [#allocation4], 4
          %s215 = int_to_ptr.vmem [resolvable:$true] %s214
          %220 = dma.hbm_to_vmem [thread:$0]  %s1, 3072, %s215, [#allocation5], 64, 64, 4
        $region16: #{fwd.5} parent=11 // pred_fallthru
          _
        // Predicated region
        $region17: #{fwd.5} parent=11 // pred_check
          %p221 = pneg %p83
        $region18: #{fwd.5} parent=11 // pred_check_branch
          %223 = sbr.rel (%p221) target = $region20
        $region19: #{fwd.5} parent=11 // pred_region
          _
        $region20: #{fwd.5} parent=11 // pred_fallthru
          _
        // Predicated region
        $region21: #{fwd.5} parent=11 // pred_check
          %p224 = pneg %p104
        $region22: #{fwd.5} parent=11 // pred_check_branch
          %226 = sbr.rel (%p224) target = $region24
        $region23: #{fwd.5} parent=11 // pred_region
          _
        $region24: #{fwd.5} parent=11 // pred_fallthru
          _
        // Predicated region
        $region25: #{fwd.5} parent=11 // pred_check
          %p227 = pneg %p125
        $region26: #{fwd.5} parent=11 // pred_check_branch
          %229 = sbr.rel (%p227) target = $region28
        $region27: #{fwd.5} parent=11 // pred_region
          %s231 = ssub.s32 3072, 3072
          %232 = vsyncadd [#allocation7], %s231
          %s233 = sshll.u32 [#allocation6], 4
          %s234 = int_to_ptr.vmem [resolvable:$true] %s233
          %239 = dma.hbm_to_vmem [thread:$0]  %s4, 3072, %s234, [#allocation7], 64, 64, 4
        $region28: #{fwd.5} parent=11 // pred_fallthru
          _
        // Predicated region
        $region29: #{fwd.5} parent=11 // pred_check
          %p240 = pneg %p146
        $region30: #{fwd.5} parent=11 // pred_check_branch
          %242 = sbr.rel (%p240) target = $region32
        $region31: #{fwd.5} parent=11 // pred_region
          _
        $region32: #{fwd.5} parent=11 // pred_fallthru
          _
        // Predicated region
        $region33: #{fwd.5} parent=11 // pred_check
          %p243 = pneg %p167
        $region34: #{fwd.5} parent=11 // pred_check_branch
          %245 = sbr.rel (%p243) target = $region36
        $region35: #{fwd.5} parent=11 // pred_region
          _
        $region36: #{fwd.5} parent=11 // pred_fallthru
          _
      $region12: #{fwd.5} parent=5 // pred_fallthru
        _
      %p246 = scmp.lt.s32.totalorder %s15, 2
      // Predicated region
      $region37: #{fwd.5} parent=5 // pred_check
        %p247 = pneg %p246
      $region38: #{fwd.5} parent=5 // pred_check_branch
        %249 = sbr.rel (%p247) target = $region40
      $region39: #{fwd.5} parent=5 // pred_region
        // Predicated region
        $region41: #{fwd.5} parent=39 // pred_check
          %p250 = pneg %p35
        $region42: #{fwd.5} parent=39 // pred_check_branch
          %252 = sbr.rel (%p250) target = $region44
        $region43: #{fwd.5} parent=39 // pred_region
          %p253 = scmp.lt.s32.totalorder %s15, 1
          %s254 = scalar_select %p253, %s15, 1
          %s255 = smul.addr %s254, 2
          %s256 = smul.addr %s255, 4
          %s257 = scalar_lea.vmem %s0, %s256
        $region44: #{fwd.5} parent=39 // pred_fallthru
          _
      $region40: #{fwd.5} parent=5 // pred_fallthru
        _
      %p258 = scmp.le.s32.totalorder 1, %s15
      %p259 = scmp.lt.s32.totalorder %s15, 3
      %p260 = pnand %p258, %p259
      %p261 = pneg %p260
      // Predicated region
      $region45: #{fwd.5} parent=5 // pred_check
        _
      $region46: #{fwd.5} parent=5 // pred_check_branch
        %263 = sbr.rel (%p260) target = $region48
      $region47: #{fwd.5} parent=5 // pred_region
        %s264 = ssub.s32 %s15, 1
        // Predicated region
        $region49: #{fwd.5} parent=47 // pred_check
          %p265 = pneg %p62
        $region50: #{fwd.5} parent=47 // pred_check_branch
          %267 = sbr.rel (%p265) target = $region52
        $region51: #{fwd.5} parent=47 // pred_region
          %268 = dma.done [#allocation5], 3072
        $region52: #{fwd.5} parent=47 // pred_fallthru
          _
        // Predicated region
        $region53: #{fwd.5} parent=47 // pred_check
          %p269 = pneg %p125
        $region54: #{fwd.5} parent=47 // pred_check_branch
          %271 = sbr.rel (%p269) target = $region56
        $region55: #{fwd.5} parent=47 // pred_region
          %272 = dma.done [#allocation7], 3072
        $region56: #{fwd.5} parent=47 // pred_fallthru
          _
        %p273 = scmp.lt.s32.totalorder %s20, 1
        %s274 = scalar_select %p273, %s20, 1
        %s275 = smul.addr %s274, 2
        %s276 = smul.addr %s275, 4
        %s277 = scalar_lea.vmem %s0, %s276
        %p278 = pneg %p41
        %p279 = pneg %p38
        %p280 = pneg %p62
        %p281 = pneg %p59
        %p282 = pneg %p83
        %p283 = pneg %p80
        %p284 = pneg %p104
        %p285 = pneg %p101
        %p286 = pneg %p125
        %p287 = pneg %p122
        %p288 = pneg %p146
        %p289 = pneg %p143
        %p290 = pneg %p167
        %p291 = pneg %p164
        %p292 = pneg %p193
        %p293 = pneg %p190
        %p294 = scmp.lt.s32.totalorder %s20, 1
        %s295 = scalar_select %p294, %s20, 1
        %s296 = smul.addr %s295, 2
        %s297 = smul.addr %s296, 4
        %s298 = scalar_lea.vmem %s7, %s297
        %p299 = scmp.lt.s32.totalorder %s20, 1
        %s300 = scalar_select %p299, %s20, 1
        %s301 = smul.addr %s300, 2
        %s302 = smul.addr %s301, 4
        %s303 = scalar_lea.vmem %s0, %s302
        %p304 = scmp.lt.s32.totalorder %s20, 1
        %s305 = scalar_select %p304, %s20, 1
        %s306 = smul.addr %s305, 2
        %s307 = smul.addr %s306, 4
        %s308 = scalar_lea.vmem %s7, %s307
        %vm310 = vcmask 1040384
        %vm311 = vsmask.f32 256
        %vm312 = vmand %vm310, %vm311
        %v313 = vld [vmem:[#allocation2] sm:$0x1]
        %v314 = vsel %vm312, 0, %v313
        %315 = vst [vmem:[#allocation2] sm:$0x1] %v314
        %vm316 = vsmask.f32 7938
        %vm317 = vmand %vm310, %vm316
        %v318 = vld [vmem:[#allocation2 + $0x8] sm:$0x1]
        %v319 = vsel %vm317, 0, %v318
        %320 = vst [vmem:[#allocation2 + $0x8] sm:$0x1] %v319
        %v321 = vld [vmem:[%s303] sm:$0xf]
        %v322 = vld [vmem:[%s303 + $0x4] sm:$0xf]
        %vm323 = vsmask.f32 4368
        %vm324 = vmor %vm311, %vm323
        %v326 = vshrl.u32 %v321, 16
        %v328 = vrot.slane %v326, 7
        %v329 = vshll.u32 %v321, 16
        %v331 = vor.u32 %v328, %v329
        %v332 = vrot.slane %v328, 4
        %v334 = vshrl.u32 %v322, 16
        %v336 = vrot.slane %v334, 7
        %v337 = vshll.u32 %v322, 16
        %v339 = vor.u32 %v336, %v337
        %v340 = vsel %vm324, %v332, %v339
        %v341 = vrot.slane %v336, 4
        %vm345 = vcmask 1043456
        %vm346 = vmand %vm345, %vm316
        %v347 = vld [vmem:[#allocation2] sm:$0xf]
        %v348 = vsel %vm346, %v331, %v347
        %349 = vst [vmem:[#allocation2] sm:$0xf] %v348
        %350 = vst [vmem:[#allocation2 + $0x4] sm:$0xf] %v340
        %v351 = vld [vmem:[#allocation2 + $0x8] sm:$0x1]
        %v352 = vsel %vm312, %v341, %v351
        %353 = vst [vmem:[#allocation2 + $0x8] sm:$0x1] %v352
        %v354 = vld [vmem:[#allocation2] sm:$0xf]
        %v355 = vld [vmem:[#allocation2 + $0x4] sm:$0xf]
        %v356 = vld [vmem:[#allocation2 + $0x8] sm:$0x1]
        %v357 = vld [vmem:[#allocation2] sm:$0xe]
        %v360 = vunpack.c.l.b16 %v354
        %v361 = vunpack.c.l.b16 %v355
        %v362 = vpack.c.b16 %v361, %v360
        %v365 = vunpack.c.l.b16 %v356
        %v366 = vpack.c.b16 %v365, %v365
        %vm367 = vsmask.f32 7424
        %v369 = vshrl.u32 %v362, 16
        %v371 = vshll.u32 %v362, 16
        %v373 = vrot.slane %v371, 1
        %v374 = vor.u32 %v369, %v373
        %v376 = vshll.u32 %v366, 16
        %v378 = vrot.slane %v376, 1
        %v379 = vsel %vm367, %v374, %v378
        %v382 = vunpack.c.l.b16 %v357
        %v383 = vpack.c.b16 %v361, %v382
        %vm384 = vcmask 1046528
        %v385 = vrot.slane %v383, 1
        %v386 = vrot.slane %v366, 1
        %v387 = vsel %vm384, %v385, %v386
        %v389 = vld [vmem:[#allocation4] sm:$0xf]
        %v390 = vld [vmem:[#allocation4 + $0x4] sm:$0xf]
        %v391 = vld [vmem:[#allocation4 + $0x8] sm:$0xf]
        %v392 = vld [vmem:[#allocation4 + $0xc] sm:$0xf]
        %v393 = vld [vmem:[#allocation4 + $0x10] sm:$0xf]
        %v394 = vld [vmem:[#allocation4 + $0x14] sm:$0xf]
        %v395 = vld [vmem:[#allocation4 + $0x18] sm:$0xf]
        %v396 = vld [vmem:[#allocation4 + $0x1c] sm:$0xf]
        %v397 = vld [vmem:[#allocation4 + $0x20] sm:$0xf]
        %v398 = vld [vmem:[#allocation4 + $0x24] sm:$0xf]
        %v399 = vld [vmem:[#allocation4 + $0x28] sm:$0xf]
        %v400 = vld [vmem:[#allocation4 + $0x2c] sm:$0xf]
        %v401 = vld [vmem:[#allocation4 + $0x30] sm:$0xf]
        %v402 = vld [vmem:[#allocation4 + $0x34] sm:$0xf]
        %v403 = vld [vmem:[#allocation4 + $0x38] sm:$0xf]
        %v404 = vld [vmem:[#allocation4 + $0x3c] sm:$0xf]
        %v405 = vld [vmem:[#allocation4 + $0x40] sm:$0xf]
        %v406 = vld [vmem:[#allocation4 + $0x44] sm:$0xf]
        %v407 = vld [vmem:[#allocation4 + $0x48] sm:$0xf]
        %v408 = vld [vmem:[#allocation4 + $0x4c] sm:$0xf]
        %v409 = vld [vmem:[#allocation4 + $0x50] sm:$0xf]
        %v410 = vld [vmem:[#allocation4 + $0x54] sm:$0xf]
        %v411 = vld [vmem:[#allocation4 + $0x58] sm:$0xf]
        %v412 = vld [vmem:[#allocation4 + $0x5c] sm:$0xf]
        %v413 = vld [vmem:[#allocation4 + $0x60] sm:$0xf]
        %v414 = vld [vmem:[#allocation4 + $0x64] sm:$0xf]
        %v415 = vld [vmem:[#allocation4 + $0x68] sm:$0xf]
        %v416 = vld [vmem:[#allocation4 + $0x6c] sm:$0xf]
        %v417 = vld [vmem:[#allocation4 + $0x70] sm:$0xf]
        %v418 = vld [vmem:[#allocation4 + $0x74] sm:$0xf]
        %v419 = vld [vmem:[#allocation4 + $0x78] sm:$0xf]
        %v420 = vld [vmem:[#allocation4 + $0x7c] sm:$0xf]
        %v421 = vld [vmem:[#allocation4 + $0x80] sm:$0xf]
        %v422 = vld [vmem:[#allocation4 + $0x84] sm:$0xf]
        %v423 = vld [vmem:[#allocation4 + $0x88] sm:$0xf]
        %v424 = vld [vmem:[#allocation4 + $0x8c] sm:$0xf]
        %v425 = vld [vmem:[#allocation4 + $0x90] sm:$0xf]
        %v426 = vld [vmem:[#allocation4 + $0x94] sm:$0xf]
        %v427 = vld [vmem:[#allocation4 + $0x98] sm:$0xf]
        %v428 = vld [vmem:[#allocation4 + $0x9c] sm:$0xf]
        %v429 = vld [vmem:[#allocation4 + $0xa0] sm:$0xf]
        %v430 = vld [vmem:[#allocation4 + $0xa4] sm:$0xf]
        %v431 = vld [vmem:[#allocation4 + $0xa8] sm:$0xf]
        %v432 = vld [vmem:[#allocation4 + $0xac] sm:$0xf]
        %v433 = vld [vmem:[#allocation4 + $0xb0] sm:$0xf]
        %v434 = vld [vmem:[#allocation4 + $0xb4] sm:$0xf]
        %v435 = vld [vmem:[#allocation4 + $0xb8] sm:$0xf]
        %v436 = vld [vmem:[#allocation4 + $0xbc] sm:$0xf]
        %v485 = vunpack.c.l.b16 %v389
        %v486 = vunpack.c.l.b16 %v390
        %v487 = vunpack.c.l.b16 %v391
        %v488 = vunpack.c.l.b16 %v392
        %v489 = vunpack.c.l.b16 %v393
        %v490 = vunpack.c.l.b16 %v394
        %v491 = vunpack.c.l.b16 %v395
        %v492 = vunpack.c.l.b16 %v396
        %v493 = vunpack.c.l.b16 %v397
        %v494 = vunpack.c.l.b16 %v398
        %v495 = vunpack.c.l.b16 %v399
        %v496 = vunpack.c.l.b16 %v400
        %v497 = vunpack.c.l.b16 %v401
        %v498 = vunpack.c.l.b16 %v402
        %v499 = vunpack.c.l.b16 %v403
        %v500 = vunpack.c.l.b16 %v404
        %v501 = vunpack.c.l.b16 %v405
        %v502 = vunpack.c.l.b16 %v406
        %v503 = vunpack.c.l.b16 %v407
        %v504 = vunpack.c.l.b16 %v408
        %v505 = vunpack.c.l.b16 %v409
        %v506 = vunpack.c.l.b16 %v410
        %v507 = vunpack.c.l.b16 %v411
        %v508 = vunpack.c.l.b16 %v412
        %v509 = vunpack.c.l.b16 %v413
        %v510 = vunpack.c.l.b16 %v414
        %v511 = vunpack.c.l.b16 %v415
        %v512 = vunpack.c.l.b16 %v416
        %v513 = vunpack.c.l.b16 %v417
        %v514 = vunpack.c.l.b16 %v418
        %v515 = vunpack.c.l.b16 %v419
        %v516 = vunpack.c.l.b16 %v420
        %v517 = vunpack.c.l.b16 %v421
        %v518 = vunpack.c.l.b16 %v422
        %v519 = vunpack.c.l.b16 %v423
        %v520 = vunpack.c.l.b16 %v424
        %v521 = vunpack.c.l.b16 %v425
        %v522 = vunpack.c.l.b16 %v426
        %v523 = vunpack.c.l.b16 %v427
        %v524 = vunpack.c.l.b16 %v428
        %v525 = vunpack.c.l.b16 %v429
        %v526 = vunpack.c.l.b16 %v430
        %v527 = vunpack.c.l.b16 %v431
        %v528 = vunpack.c.l.b16 %v432
        %v529 = vunpack.c.l.b16 %v433
        %v530 = vunpack.c.l.b16 %v434
        %v531 = vunpack.c.l.b16 %v435
        %v532 = vunpack.c.l.b16 %v436
        %v533 = vpack.c.b16 %v486, %v485
        %v534 = vpack.c.b16 %v488, %v487
        %v535 = vpack.c.b16 %v490, %v489
        %v536 = vpack.c.b16 %v492, %v491
        %v537 = vpack.c.b16 %v494, %v493
        %v538 = vpack.c.b16 %v496, %v495
        %v539 = vpack.c.b16 %v498, %v497
        %v540 = vpack.c.b16 %v500, %v499
        %v541 = vpack.c.b16 %v502, %v501
        %v542 = vpack.c.b16 %v504, %v503
        %v543 = vpack.c.b16 %v506, %v505
        %v544 = vpack.c.b16 %v508, %v507
        %v545 = vpack.c.b16 %v510, %v509
        %v546 = vpack.c.b16 %v512, %v511
        %v547 = vpack.c.b16 %v514, %v513
        %v548 = vpack.c.b16 %v516, %v515
        %v549 = vpack.c.b16 %v518, %v517
        %v550 = vpack.c.b16 %v520, %v519
        %v551 = vpack.c.b16 %v522, %v521
        %v552 = vpack.c.b16 %v524, %v523
        %v553 = vpack.c.b16 %v526, %v525
        %v554 = vpack.c.b16 %v528, %v527
        %v555 = vpack.c.b16 %v530, %v529
        %v556 = vpack.c.b16 %v532, %v531
        %581 = vmatprep.subr.bf16.mxu0 0
        %582 = vmatpush1.bf16.msra.mxu0 %v533
        %583 = vmatprep.subr.bf16.mxu0 0
        %584 = vmatpush1.bf16.msra.mxu0 %v534
        %585 = vmatprep.subr.bf16.mxu0 0
        %586 = vmatpush1.bf16.msra.mxu0 %v535
        %587 = vmatprep.subr.bf16.mxu0 0
        %588 = vmatpush1.bf16.msra.mxu0 %v536
        %589 = vmatprep.subr.bf16.mxu0 0
        %590 = vmatpush1.bf16.msra.mxu0 %v537
        %591 = vmatprep.subr.bf16.mxu0 0
        %592 = vmatpush1.bf16.msra.mxu0 %v538
        %593 = vmatprep.subr.bf16.mxu0 0
        %594 = vmatpush1.bf16.msra.mxu0 %v539
        %595 = vmatprep.subr.bf16.mxu0 0
        %596 = vmatpush1.bf16.msra.mxu0 %v540
        %597 = vmatprep.subr.bf16.mxu0 0
        %598 = vmatpush1.bf16.msra.mxu0 %v541
        %599 = vmatprep.subr.bf16.mxu0 0
        %600 = vmatpush1.bf16.msra.mxu0 %v542
        %601 = vmatprep.subr.bf16.mxu0 0
        %602 = vmatpush1.bf16.msra.mxu0 %v543
        %603 = vmatprep.subr.bf16.mxu0 0
        %604 = vmatpush1.bf16.msra.mxu0 %v544
        %605 = vmatprep.subr.bf16.mxu0 0
        %606 = vmatpush1.bf16.msra.mxu0 %v545
        %607 = vmatprep.subr.bf16.mxu0 0
        %608 = vmatpush1.bf16.msra.mxu0 %v546
        %609 = vmatprep.subr.bf16.mxu0 0
        %610 = vmatpush1.bf16.msra.mxu0 %v547
        %611 = vmatprep.subr.bf16.mxu0 0
        %612 = vmatpush1.bf16.msra.mxu0 %v548
        %613 = vmatprep.mubr.bf16.mxu0 %v379
        %614 = vmatmul.mubr.bf16.gmra.mrb[0].mxu0 %v362
        %v615 = vpop.f32.mrb[0].mxu0
        %v616 = vadd.f32 0.0, %v615
        %v617 = vpop.f32.mrb[0].mxu0
        %v618 = vpop.f32.mrb[0].mxu0
        %v619 = vadd.f32 0.0, %v618
        %v620 = vpop.f32.mrb[0].mxu0
        %621 = vdwg.mxu0
        %622 = vmatprep.subr.bf16.mxu0 0
        %623 = vmatpush1.bf16.msra.mxu0 %v549
        %624 = vmatprep.subr.bf16.mxu0 0
        %625 = vmatpush1.bf16.msra.mxu0 %v550
        %626 = vmatprep.subr.bf16.mxu0 0
        %627 = vmatpush1.bf16.msra.mxu0 %v551
        %628 = vmatprep.subr.bf16.mxu0 0
        %629 = vmatpush1.bf16.msra.mxu0 %v552
        %630 = vmatprep.subr.bf16.mxu0 0
        %631 = vmatpush1.bf16.msra.mxu0 %v553
        %632 = vmatprep.subr.bf16.mxu0 0
        %633 = vmatpush1.bf16.msra.mxu0 %v554
        %634 = vmatprep.subr.bf16.mxu0 0
        %635 = vmatpush1.bf16.msra.mxu0 %v555
        %636 = vmatprep.subr.bf16.mxu0 0
        %637 = vmatpush1.bf16.msra.mxu0 %v556
        %638 = vmatprep.subr.bf16.mxu0 0
        %639 = vmatpush1.bf16.msra.mxu0 0
        %640 = vmatprep.subr.bf16.mxu0 0
        %641 = vmatpush1.bf16.msra.mxu0 0
        %642 = vmatprep.subr.bf16.mxu0 0
        %643 = vmatpush1.bf16.msra.mxu0 0
        %644 = vmatprep.subr.bf16.mxu0 0
        %645 = vmatpush1.bf16.msra.mxu0 0
        %646 = vmatprep.subr.bf16.mxu0 0
        %647 = vmatpush1.bf16.msra.mxu0 0
        %648 = vmatprep.subr.bf16.mxu0 0
        %649 = vmatpush1.bf16.msra.mxu0 0
        %650 = vmatprep.subr.bf16.mxu0 0
        %651 = vmatpush1.bf16.msra.mxu0 0
        %652 = vmatprep.subr.bf16.mxu0 0
        %653 = vmatpush1.bf16.msra.mxu0 0
        %654 = vmatprep.mubr.bf16.mxu0 0
        %655 = vmatmul.mubr.bf16.gmra.mrb[0].mxu0 %v387
        %v656 = vpop.f32.mrb[0].mxu0
        %v657 = vadd.f32 %v616, %v656
        %v658 = vpop.f32.mrb[0].mxu0
        %v659 = vpop.f32.mrb[0].mxu0
        %v660 = vadd.f32 %v619, %v659
        %v661 = vpop.f32.mrb[0].mxu0
        %662 = vdwg.mxu0
        %v663 = vld [vmem:[%s2] sm:$0x1]
        %v665 = vlaneseq
        %v666 = vshrl.u32 %v665, 7
        %v667 = vsub.s32 0, %v666
        %v668 = vrot.slane %v663, %v667
        %v670 = vmul.f32 %v657, %v668
        %v671 = vmul.f32 %v660, %v668
        %v672 = vld [vmem:[%s3] sm:$0x1]
        %v674 = vlaneseq
        %v675 = vshrl.u32 %v674, 7
        %v676 = vsub.s32 0, %v675
        %v677 = vrot.slane %v672, %v676
        %v679 = vadd.f32 %v670, %v677
        %v680 = vadd.f32 %v671, %v677
        %v681 = vmax.f32 %v679, 0.0
        %v682 = vmax.f32 %v680, 0.0
        %v683 = vld [vmem:[#allocation3] sm:$0x1]
        %v684 = vsel %vm312, 0, %v683
        %685 = vst [vmem:[#allocation3] sm:$0x1] %v684
        %v686 = vld [vmem:[#allocation3 + $0x8] sm:$0x1]
        %v687 = vsel %vm317, 0, %v686
        %688 = vst [vmem:[#allocation3 + $0x8] sm:$0x1] %v687
        %v689 = vpack.c.bf16 %v682, %v681
        %v691 = vunpack.c.l.b16 %v689
        %v692 = vunpack.c.h.b16 %v689
        %v693 = vpack.c.b16 %v691, %v691
        %v694 = vpack.c.b16 %v692, %v692
        %v696 = vshrl.u32 %v693, 16
        %v698 = vrot.slane %v696, 7
        %v699 = vshll.u32 %v693, 16
        %v701 = vor.u32 %v698, %v699
        %v702 = vrot.slane %v698, 4
        %v704 = vshrl.u32 %v694, 16
        %v706 = vrot.slane %v704, 7
        %v707 = vshll.u32 %v694, 16
        %v709 = vor.u32 %v706, %v707
        %v710 = vsel %vm324, %v702, %v709
        %v711 = vrot.slane %v706, 4
        %v715 = vld [vmem:[#allocation3] sm:$0xf]
        %v716 = vsel %vm346, %v701, %v715
        %717 = vst [vmem:[#allocation3] sm:$0xf] %v716
        %718 = vst [vmem:[#allocation3 + $0x4] sm:$0xf] %v710
        %v719 = vld [vmem:[#allocation3 + $0x8] sm:$0x1]
        %v720 = vsel %vm312, %v711, %v719
        %721 = vst [vmem:[#allocation3 + $0x8] sm:$0x1] %v720
        %v722 = vld [vmem:[#allocation3] sm:$0xf]
        %v723 = vld [vmem:[#allocation3 + $0x4] sm:$0xf]
        %v724 = vld [vmem:[#allocation3 + $0x8] sm:$0x1]
        %v725 = vld [vmem:[#allocation3] sm:$0xe]
        %v728 = vunpack.c.l.b16 %v722
        %v729 = vunpack.c.l.b16 %v723
        %v730 = vpack.c.b16 %v729, %v728
        %v733 = vunpack.c.l.b16 %v724
        %v734 = vpack.c.b16 %v733, %v733
        %v736 = vshrl.u32 %v730, 16
        %v738 = vshll.u32 %v730, 16
        %v740 = vrot.slane %v738, 1
        %v741 = vor.u32 %v736, %v740
        %v743 = vshll.u32 %v734, 16
        %v745 = vrot.slane %v743, 1
        %v746 = vsel %vm367, %v741, %v745
        %v749 = vunpack.c.l.b16 %v725
        %v750 = vpack.c.b16 %v729, %v749
        %v751 = vrot.slane %v750, 1
        %v752 = vrot.slane %v734, 1
        %v753 = vsel %vm384, %v751, %v752
        %v755 = vld [vmem:[#allocation6] sm:$0xf]
        %v756 = vld [vmem:[#allocation6 + $0x4] sm:$0xf]
        %v757 = vld [vmem:[#allocation6 + $0x8] sm:$0xf]
        %v758 = vld [vmem:[#allocation6 + $0xc] sm:$0xf]
        %v759 = vld [vmem:[#allocation6 + $0x10] sm:$0xf]
        %v760 = vld [vmem:[#allocation6 + $0x14] sm:$0xf]
        %v761 = vld [vmem:[#allocation6 + $0x18] sm:$0xf]
        %v762 = vld [vmem:[#allocation6 + $0x1c] sm:$0xf]
        %v763 = vld [vmem:[#allocation6 + $0x20] sm:$0xf]
        %v764 = vld [vmem:[#allocation6 + $0x24] sm:$0xf]
        %v765 = vld [vmem:[#allocation6 + $0x28] sm:$0xf]
        %v766 = vld [vmem:[#allocation6 + $0x2c] sm:$0xf]
        %v767 = vld [vmem:[#allocation6 + $0x30] sm:$0xf]
        %v768 = vld [vmem:[#allocation6 + $0x34] sm:$0xf]
        %v769 = vld [vmem:[#allocation6 + $0x38] sm:$0xf]
        %v770 = vld [vmem:[#allocation6 + $0x3c] sm:$0xf]
        %v771 = vld [vmem:[#allocation6 + $0x40] sm:$0xf]
        %v772 = vld [vmem:[#allocation6 + $0x44] sm:$0xf]
        %v773 = vld [vmem:[#allocation6 + $0x48] sm:$0xf]
        %v774 = vld [vmem:[#allocation6 + $0x4c] sm:$0xf]
        %v775 = vld [vmem:[#allocation6 + $0x50] sm:$0xf]
        %v776 = vld [vmem:[#allocation6 + $0x54] sm:$0xf]
        %v777 = vld [vmem:[#allocation6 + $0x58] sm:$0xf]
        %v778 = vld [vmem:[#allocation6 + $0x5c] sm:$0xf]
        %v779 = vld [vmem:[#allocation6 + $0x60] sm:$0xf]
        %v780 = vld [vmem:[#allocation6 + $0x64] sm:$0xf]
        %v781 = vld [vmem:[#allocation6 + $0x68] sm:$0xf]
        %v782 = vld [vmem:[#allocation6 + $0x6c] sm:$0xf]
        %v783 = vld [vmem:[#allocation6 + $0x70] sm:$0xf]
        %v784 = vld [vmem:[#allocation6 + $0x74] sm:$0xf]
        %v785 = vld [vmem:[#allocation6 + $0x78] sm:$0xf]
        %v786 = vld [vmem:[#allocation6 + $0x7c] sm:$0xf]
        %v787 = vld [vmem:[#allocation6 + $0x80] sm:$0xf]
        %v788 = vld [vmem:[#allocation6 + $0x84] sm:$0xf]
        %v789 = vld [vmem:[#allocation6 + $0x88] sm:$0xf]
        %v790 = vld [vmem:[#allocation6 + $0x8c] sm:$0xf]
        %v791 = vld [vmem:[#allocation6 + $0x90] sm:$0xf]
        %v792 = vld [vmem:[#allocation6 + $0x94] sm:$0xf]
        %v793 = vld [vmem:[#allocation6 + $0x98] sm:$0xf]
        %v794 = vld [vmem:[#allocation6 + $0x9c] sm:$0xf]
        %v795 = vld [vmem:[#allocation6 + $0xa0] sm:$0xf]
        %v796 = vld [vmem:[#allocation6 + $0xa4] sm:$0xf]
        %v797 = vld [vmem:[#allocation6 + $0xa8] sm:$0xf]
        %v798 = vld [vmem:[#allocation6 + $0xac] sm:$0xf]
        %v799 = vld [vmem:[#allocation6 + $0xb0] sm:$0xf]
        %v800 = vld [vmem:[#allocation6 + $0xb4] sm:$0xf]
        %v801 = vld [vmem:[#allocation6 + $0xb8] sm:$0xf]
        %v802 = vld [vmem:[#allocation6 + $0xbc] sm:$0xf]
        %v851 = vunpack.c.l.b16 %v755
        %v852 = vunpack.c.l.b16 %v756
        %v853 = vunpack.c.l.b16 %v757
        %v854 = vunpack.c.l.b16 %v758
        %v855 = vunpack.c.l.b16 %v759
        %v856 = vunpack.c.l.b16 %v760
        %v857 = vunpack.c.l.b16 %v761
        %v858 = vunpack.c.l.b16 %v762
        %v859 = vunpack.c.l.b16 %v763
        %v860 = vunpack.c.l.b16 %v764
        %v861 = vunpack.c.l.b16 %v765
        %v862 = vunpack.c.l.b16 %v766
        %v863 = vunpack.c.l.b16 %v767
        %v864 = vunpack.c.l.b16 %v768
        %v865 = vunpack.c.l.b16 %v769
        %v866 = vunpack.c.l.b16 %v770
        %v867 = vunpack.c.l.b16 %v771
        %v868 = vunpack.c.l.b16 %v772
        %v869 = vunpack.c.l.b16 %v773
        %v870 = vunpack.c.l.b16 %v774
        %v871 = vunpack.c.l.b16 %v775
        %v872 = vunpack.c.l.b16 %v776
        %v873 = vunpack.c.l.b16 %v777
        %v874 = vunpack.c.l.b16 %v778
        %v875 = vunpack.c.l.b16 %v779
        %v876 = vunpack.c.l.b16 %v780
        %v877 = vunpack.c.l.b16 %v781
        %v878 = vunpack.c.l.b16 %v782
        %v879 = vunpack.c.l.b16 %v783
        %v880 = vunpack.c.l.b16 %v784
        %v881 = vunpack.c.l.b16 %v785
        %v882 = vunpack.c.l.b16 %v786
        %v883 = vunpack.c.l.b16 %v787
        %v884 = vunpack.c.l.b16 %v788
        %v885 = vunpack.c.l.b16 %v789
        %v886 = vunpack.c.l.b16 %v790
        %v887 = vunpack.c.l.b16 %v791
        %v888 = vunpack.c.l.b16 %v792
        %v889 = vunpack.c.l.b16 %v793
        %v890 = vunpack.c.l.b16 %v794
        %v891 = vunpack.c.l.b16 %v795
        %v892 = vunpack.c.l.b16 %v796
        %v893 = vunpack.c.l.b16 %v797
        %v894 = vunpack.c.l.b16 %v798
        %v895 = vunpack.c.l.b16 %v799
        %v896 = vunpack.c.l.b16 %v800
        %v897 = vunpack.c.l.b16 %v801
        %v898 = vunpack.c.l.b16 %v802
        %v899 = vpack.c.b16 %v852, %v851
        %v900 = vpack.c.b16 %v854, %v853
        %v901 = vpack.c.b16 %v856, %v855
        %v902 = vpack.c.b16 %v858, %v857
        %v903 = vpack.c.b16 %v860, %v859
        %v904 = vpack.c.b16 %v862, %v861
        %v905 = vpack.c.b16 %v864, %v863
        %v906 = vpack.c.b16 %v866, %v865
        %v907 = vpack.c.b16 %v868, %v867
        %v908 = vpack.c.b16 %v870, %v869
        %v909 = vpack.c.b16 %v872, %v871
        %v910 = vpack.c.b16 %v874, %v873
        %v911 = vpack.c.b16 %v876, %v875
        %v912 = vpack.c.b16 %v878, %v877
        %v913 = vpack.c.b16 %v880, %v879
        %v914 = vpack.c.b16 %v882, %v881
        %v915 = vpack.c.b16 %v884, %v883
        %v916 = vpack.c.b16 %v886, %v885
        %v917 = vpack.c.b16 %v888, %v887
        %v918 = vpack.c.b16 %v890, %v889
        %v919 = vpack.c.b16 %v892, %v891
        %v920 = vpack.c.b16 %v894, %v893
        %v921 = vpack.c.b16 %v896, %v895
        %v922 = vpack.c.b16 %v898, %v897
        %947 = vmatprep.subr.bf16.mxu0 0
        %948 = vmatpush1.bf16.msra.mxu0 %v899
        %949 = vmatprep.subr.bf16.mxu0 0
        %950 = vmatpush1.bf16.msra.mxu0 %v900
        %951 = vmatprep.subr.bf16.mxu0 0
        %952 = vmatpush1.bf16.msra.mxu0 %v901
        %953 = vmatprep.subr.bf16.mxu0 0
        %954 = vmatpush1.bf16.msra.mxu0 %v902
        %955 = vmatprep.subr.bf16.mxu0 0
        %956 = vmatpush1.bf16.msra.mxu0 %v903
        %957 = vmatprep.subr.bf16.mxu0 0
        %958 = vmatpush1.bf16.msra.mxu0 %v904
        %959 = vmatprep.subr.bf16.mxu0 0
        %960 = vmatpush1.bf16.msra.mxu0 %v905
        %961 = vmatprep.subr.bf16.mxu0 0
        %962 = vmatpush1.bf16.msra.mxu0 %v906
        %963 = vmatprep.subr.bf16.mxu0 0
        %964 = vmatpush1.bf16.msra.mxu0 %v907
        %965 = vmatprep.subr.bf16.mxu0 0
        %966 = vmatpush1.bf16.msra.mxu0 %v908
        %967 = vmatprep.subr.bf16.mxu0 0
        %968 = vmatpush1.bf16.msra.mxu0 %v909
        %969 = vmatprep.subr.bf16.mxu0 0
        %970 = vmatpush1.bf16.msra.mxu0 %v910
        %971 = vmatprep.subr.bf16.mxu0 0
        %972 = vmatpush1.bf16.msra.mxu0 %v911
        %973 = vmatprep.subr.bf16.mxu0 0
        %974 = vmatpush1.bf16.msra.mxu0 %v912
        %975 = vmatprep.subr.bf16.mxu0 0
        %976 = vmatpush1.bf16.msra.mxu0 %v913
        %977 = vmatprep.subr.bf16.mxu0 0
        %978 = vmatpush1.bf16.msra.mxu0 %v914
        %979 = vmatprep.mubr.bf16.mxu0 %v746
        %980 = vmatmul.mubr.bf16.gmra.mrb[0].mxu0 %v730
        %v981 = vpop.f32.mrb[0].mxu0
        %v982 = vadd.f32 0.0, %v981
        %v983 = vpop.f32.mrb[0].mxu0
        %v984 = vpop.f32.mrb[0].mxu0
        %v985 = vadd.f32 0.0, %v984
        %v986 = vpop.f32.mrb[0].mxu0
        %987 = vdwg.mxu0
        %988 = vmatprep.subr.bf16.mxu0 0
        %989 = vmatpush1.bf16.msra.mxu0 %v915
        %990 = vmatprep.subr.bf16.mxu0 0
        %991 = vmatpush1.bf16.msra.mxu0 %v916
        %992 = vmatprep.subr.bf16.mxu0 0
        %993 = vmatpush1.bf16.msra.mxu0 %v917
        %994 = vmatprep.subr.bf16.mxu0 0
        %995 = vmatpush1.bf16.msra.mxu0 %v918
        %996 = vmatprep.subr.bf16.mxu0 0
        %997 = vmatpush1.bf16.msra.mxu0 %v919
        %998 = vmatprep.subr.bf16.mxu0 0
        %999 = vmatpush1.bf16.msra.mxu0 %v920
        %1000 = vmatprep.subr.bf16.mxu0 0
        %1001 = vmatpush1.bf16.msra.mxu0 %v921
        %1002 = vmatprep.subr.bf16.mxu0 0
        %1003 = vmatpush1.bf16.msra.mxu0 %v922
        %1004 = vmatprep.subr.bf16.mxu0 0
        %1005 = vmatpush1.bf16.msra.mxu0 0
        %1006 = vmatprep.subr.bf16.mxu0 0
        %1007 = vmatpush1.bf16.msra.mxu0 0
        %1008 = vmatprep.subr.bf16.mxu0 0
        %1009 = vmatpush1.bf16.msra.mxu0 0
        %1010 = vmatprep.subr.bf16.mxu0 0
        %1011 = vmatpush1.bf16.msra.mxu0 0
        %1012 = vmatprep.subr.bf16.mxu0 0
        %1013 = vmatpush1.bf16.msra.mxu0 0
        %1014 = vmatprep.subr.bf16.mxu0 0
        %1015 = vmatpush1.bf16.msra.mxu0 0
        %1016 = vmatprep.subr.bf16.mxu0 0
        %1017 = vmatpush1.bf16.msra.mxu0 0
        %1018 = vmatprep.subr.bf16.mxu0 0
        %1019 = vmatpush1.bf16.msra.mxu0 0
        %1020 = vmatprep.mubr.bf16.mxu0 0
        %1021 = vmatmul.mubr.bf16.gmra.mrb[0].mxu0 %v753
        %v1022 = vpop.f32.mrb[0].mxu0
        %v1023 = vadd.f32 %v982, %v1022
        %v1024 = vpop.f32.mrb[0].mxu0
        %v1025 = vpop.f32.mrb[0].mxu0
        %v1026 = vadd.f32 %v985, %v1025
        %v1027 = vpop.f32.mrb[0].mxu0
        %1028 = vdwg.mxu0
        %v1029 = vld [vmem:[%s5] sm:$0x1]
        %v1031 = vlaneseq
        %v1032 = vshrl.u32 %v1031, 7
        %v1033 = vsub.s32 0, %v1032
        %v1034 = vrot.slane %v1029, %v1033
        %v1036 = vmul.f32 %v1023, %v1034
        %v1037 = vmul.f32 %v1026, %v1034
        %v1038 = vld [vmem:[%s6] sm:$0x1]
        %v1040 = vlaneseq
        %v1041 = vshrl.u32 %v1040, 7
        %v1042 = vsub.s32 0, %v1041
        %v1043 = vrot.slane %v1038, %v1042
        %v1045 = vadd.f32 %v1036, %v1043
        %v1046 = vadd.f32 %v1037, %v1043
        %v1047 = vmax.f32 %v1045, 0.0
        %v1048 = vmax.f32 %v1046, 0.0
        %v1049 = vpack.c.bf16 %v1048, %v1047
        %v1051 = vunpack.c.l.b16 %v1049
        %v1052 = vunpack.c.h.b16 %v1049
        %v1053 = vpack.c.b16 %v1051, %v1051
        %v1054 = vpack.c.b16 %v1052, %v1052
        %1057 = vst [vmem:[%s308] sm:$0xf] %v1053
        %1058 = vst [vmem:[%s308 + $0x4] sm:$0xf] %v1054
        %p1059 = scmp.lt.s32.totalorder %s20, 1
        %s1060 = scalar_select %p1059, %s20, 1
        %s1061 = smul.addr %s1060, 2
        %s1062 = smul.addr %s1061, 4
        %s1063 = scalar_lea.vmem %s7, %s1062
        // Predicated region
        $region57: #{fwd.5} parent=47 // pred_check
          %p1064 = pneg %p190
        $region58: #{fwd.5} parent=47 // pred_check_branch
          %1066 = sbr.rel (%p1064) target = $region60
        $region59: #{fwd.5} parent=47 // pred_region
          _
        $region60: #{fwd.5} parent=47 // pred_fallthru
          _
      $region48: #{fwd.5} parent=5 // pred_fallthru
        _
      %p1067 = scmp.le.s32.totalorder 2, %s15
      // Predicated region
      $region61: #{fwd.5} parent=5 // pred_check
        %p1068 = pneg %p1067
      $region62: #{fwd.5} parent=5 // pred_check_branch
        %1070 = sbr.rel (%p1068) target = $region64
      $region63: #{fwd.5} parent=5 // pred_region
        %s1071 = ssub.s32 %s15, 2
        // Predicated region
        $region65: #{fwd.5} parent=63 // pred_check
          %p1072 = pneg %p196
        $region66: #{fwd.5} parent=63 // pred_check_branch
          %1074 = sbr.rel (%p1072) target = $region68
        $region67: #{fwd.5} parent=63 // pred_region
          %p1075 = scmp.lt.s32.totalorder %s21, 1
          %s1076 = scalar_select %p1075, %s21, 1
          %s1077 = smul.addr %s1076, 2
          %s1078 = smul.addr %s1077, 4
          %s1079 = scalar_lea.vmem %s7, %s1078
        $region68: #{fwd.5} parent=63 // pred_fallthru
          _
      $region64: #{fwd.5} parent=5 // pred_fallthru
        _
    $region6: #{fwd.5} parent=1 // loop_footer
      %s19 = sadd.s32 1, %s15
    $region7: #{fwd.5} parent=1 // loop_footer_branch
      %14 = sbr.rel target = $region3
    $region8: #{fwd.5} parent=1 // loop_exit
      _
    %1080 = vsyncpa [#allocation5], 1
    %s1081 = scalar_lea.sflag [#allocation5], 1
    %1082 = vsyncpa %s1081, 1
    %1083 = vsyncpa [#allocation7], 1

// kernel: fwd.6
$region0: #{fwd.6}
  #allocation0 [shape = 'u32[]', space=smem, size = 0x4, offset = 0x4, fixed_abs, tag = 'smem constant byte address 0x4 - core index']
  #allocation1 [shape = 'u32[144,128]{1,0:T(1,128)}', space=vmem, size = 0x12000, scoped, tag = 'internal scratch']
  #allocation2 [shape = 'f32[2,128]{1,0:T(2,128)}', space=vmem, size = 0x400, scoped, tag = 'scratch operand']
  #allocation3 [shape = 'f32[2,32,384]{2,1,0:T(8,128)}', space=vmem, size = 0x18000, scoped, tag = 'scratch operand']
  %s0 = inlined_call_operand.vmem [shape: bf16[2,32,128], index: 0, kind: input, shape index: {}]
  %s1 = inlined_call_operand.vmem [shape: bf16[128,384], index: 1, kind: input, shape index: {}]
  %s2 = inlined_call_operand.vmem [shape: bf16[128,384], index: 2, kind: input, shape index: {}]
  %s3 = inlined_call_operand.vmem [shape: f32[1,384], index: 3, kind: input, shape index: {}]
  %s4 = inlined_call_operand.vmem [shape: f32[1,128], index: 4, kind: input, shape index: {}]
  %s5 = inlined_call_operand.vmem [shape: bf16[2,32,128], index: 5, kind: output, shape index: {}]
  %s6 = sld [smem:[#allocation0]]
  $region34: #{fwd.6} parent=0
    _
  %s8 = ssub.s32 1, %s6
  %s9 = scalar_select 0, %s8, %s6
  // Predicated region
  $region2: #{fwd.6} parent=0 // pred_check
    _
  $region3: #{fwd.6} parent=0 // pred_check_branch
    %11 = sbr.rel (0) target = $region5
  $region4: #{fwd.6} parent=0 // pred_region
    _
  $region5: #{fwd.6} parent=0 // pred_fallthru
    _
  // Predicated region
  $region6: #{fwd.6} parent=0 // pred_check
    _
  $region7: #{fwd.6} parent=0 // pred_check_branch
    %13 = sbr.rel (0) target = $region9
  $region8: #{fwd.6} parent=0 // pred_region
    _
  $region9: #{fwd.6} parent=0 // pred_fallthru
    _
  // Predicated region
  $region10: #{fwd.6} parent=0 // pred_check
    _
  $region11: #{fwd.6} parent=0 // pred_check_branch
    %15 = sbr.rel (0) target = $region13
  $region12: #{fwd.6} parent=0 // pred_region
    _
  $region13: #{fwd.6} parent=0 // pred_fallthru
    _
  // Predicated region
  $region14: #{fwd.6} parent=0 // pred_check
    _
  $region15: #{fwd.6} parent=0 // pred_check_branch
    %17 = sbr.rel (0) target = $region17
  $region16: #{fwd.6} parent=0 // pred_region
    _
  $region17: #{fwd.6} parent=0 // pred_fallthru
    _
  // Predicated region
  $region18: #{fwd.6} parent=0 // pred_check
    _
  $region19: #{fwd.6} parent=0 // pred_check_branch
    %19 = sbr.rel (0) target = $region21
  $region20: #{fwd.6} parent=0 // pred_region
    _
  $region21: #{fwd.6} parent=0 // pred_fallthru
    _
  %p21 = scmp.eq.s32.totalorder 0, 0
  // Predicated region
  $region22: #{fwd.6} parent=0 // pred_check
    %p22 = pneg %p21
  $region23: #{fwd.6} parent=0 // pred_check_branch
    %24 = sbr.rel (%p22) target = $region25
  $region24: #{fwd.6} parent=0 // pred_region
    %25 = vst [vmem:[#allocation2] sm:$0x3] 0.0
  $region25: #{fwd.6} parent=0 // pred_fallthru
    _
  %v26 = vld [vmem:[%s0] sm:$0xf]
  %v27 = vld [vmem:[%s0 + $0x4] sm:$0xf]
  %v28 = vld [vmem:[%s0 + $0x8] sm:$0xf]
  %v29 = vld [vmem:[%s0 + $0xc] sm:$0xf]
  %v30 = vld [vmem:[%s0 + $0x10] sm:$0xf]
  %v31 = vld [vmem:[%s0 + $0x14] sm:$0xf]
  %v32 = vld [vmem:[%s0 + $0x18] sm:$0xf]
  %v33 = vld [vmem:[%s0 + $0x1c] sm:$0xf]
  %v34 = vld [vmem:[%s1] sm:$0xff]
  %v35 = vld [vmem:[%s1 + $0x8] sm:$0xf]
  %v36 = vld [vmem:[%s1 + $0xc] sm:$0xff]
  %v37 = vld [vmem:[%s1 + $0x14] sm:$0xf]
  %v38 = vld [vmem:[%s1 + $0x18] sm:$0xff]
  %v39 = vld [vmem:[%s1 + $0x20] sm:$0xf]
  %v40 = vld [vmem:[%s1 + $0x24] sm:$0xff]
  %v41 = vld [vmem:[%s1 + $0x2c] sm:$0xf]
  %v42 = vld [vmem:[%s1 + $0x30] sm:$0xff]
  %v43 = vld [vmem:[%s1 + $0x38] sm:$0xf]
  %v44 = vld [vmem:[%s1 + $0x3c] sm:$0xff]
  %v45 = vld [vmem:[%s1 + $0x44] sm:$0xf]
  %v46 = vld [vmem:[%s1 + $0x48] sm:$0xff]
  %v47 = vld [vmem:[%s1 + $0x50] sm:$0xf]
  %v48 = vld [vmem:[%s1 + $0x54] sm:$0xff]
  %v49 = vld [vmem:[%s1 + $0x5c] sm:$0xf]
  %v50 = vld [vmem:[%s1 + $0x60] sm:$0xff]
  %v51 = vld [vmem:[%s1 + $0x68] sm:$0xf]
  %v52 = vld [vmem:[%s1 + $0x6c] sm:$0xff]
  %v53 = vld [vmem:[%s1 + $0x74] sm:$0xf]
  %v54 = vld [vmem:[%s1 + $0x78] sm:$0xff]
  %v55 = vld [vmem:[%s1 + $0x80] sm:$0xf]
  %v56 = vld [vmem:[%s1 + $0x84] sm:$0xff]
  %v57 = vld [vmem:[%s1 + $0x8c] sm:$0xf]
  %v58 = vld [vmem:[%s1 + $0x90] sm:$0xff]
  %v59 = vld [vmem:[%s1 + $0x98] sm:$0xf]
  %v60 = vld [vmem:[%s1 + $0x9c] sm:$0xff]
  %v61 = vld [vmem:[%s1 + $0xa4] sm:$0xf]
  %v62 = vld [vmem:[%s1 + $0xa8] sm:$0xff]
  %v63 = vld [vmem:[%s1 + $0xb0] sm:$0xf]
  %v64 = vld [vmem:[%s1 + $0xb4] sm:$0xff]
  %v65 = vld [vmem:[%s1 + $0xbc] sm:$0xf]
  %v66 = vld [vmem:[%s3] sm:$0x7]
  %v68 = vlaneseq
  %v69 = vshrl.u32 %v68, 7
  %v70 = vsub.s32 0, %v69
  %v71 = vrot.slane %v66, %v70
  %v72 = vlaneseq
  %v73 = vshrl.u32 %v72, 7
  %v74 = vsub.s32 1, %v73
  %v75 = vrot.slane %v66, %v74
  %v76 = vlaneseq
  %v77 = vshrl.u32 %v76, 7
  %v78 = vsub.s32 2, %v77
  %v79 = vrot.slane %v66, %v78
  %v91 = vunpack.c.l.b16 %v26
  %v92 = vunpack.c.l.b16 %v27
  %v93 = vunpack.c.l.b16 %v28
  %v94 = vunpack.c.l.b16 %v29
  %v95 = vunpack.c.l.b16 %v30
  %v96 = vunpack.c.l.b16 %v31
  %v97 = vunpack.c.l.b16 %v32
  %v98 = vunpack.c.l.b16 %v33
  %v99 = vpack.c.b16 %v92, %v91
  %v100 = vpack.c.b16 %v94, %v93
  %v101 = vpack.c.b16 %v96, %v95
  %v102 = vpack.c.b16 %v98, %v97
  %v139 = vunpack.c.l.b16 %v34
  %v140 = vunpack.c.h.b16 %v34
  %v141 = vunpack.c.l.b16 %v35
  %v142 = vunpack.c.l.b16 %v36
  %v143 = vunpack.c.h.b16 %v36
  %v144 = vunpack.c.l.b16 %v37
  %v145 = vunpack.c.l.b16 %v38
  %v146 = vunpack.c.h.b16 %v38
  %v147 = vunpack.c.l.b16 %v39
  %v148 = vunpack.c.l.b16 %v40
  %v149 = vunpack.c.h.b16 %v40
  %v150 = vunpack.c.l.b16 %v41
  %v151 = vunpack.c.l.b16 %v42
  %v152 = vunpack.c.h.b16 %v42
  %v153 = vunpack.c.l.b16 %v43
  %v154 = vunpack.c.l.b16 %v44
  %v155 = vunpack.c.h.b16 %v44
  %v156 = vunpack.c.l.b16 %v45
  %v157 = vunpack.c.l.b16 %v46
  %v158 = vunpack.c.h.b16 %v46
  %v159 = vunpack.c.l.b16 %v47
  %v160 = vunpack.c.l.b16 %v48
  %v161 = vunpack.c.h.b16 %v48
  %v162 = vunpack.c.l.b16 %v49
  %v163 = vunpack.c.l.b16 %v50
  %v164 = vunpack.c.h.b16 %v50
  %v165 = vunpack.c.l.b16 %v51
  %v166 = vunpack.c.l.b16 %v52
  %v167 = vunpack.c.h.b16 %v52
  %v168 = vunpack.c.l.b16 %v53
  %v169 = vunpack.c.l.b16 %v54
  %v170 = vunpack.c.h.b16 %v54
  %v171 = vunpack.c.l.b16 %v55
  %v172 = vunpack.c.l.b16 %v56
  %v173 = vunpack.c.h.b16 %v56
  %v174 = vunpack.c.l.b16 %v57
  %v175 = vunpack.c.l.b16 %v58
  %v176 = vunpack.c.h.b16 %v58
  %v177 = vunpack.c.l.b16 %v59
  %v178 = vunpack.c.l.b16 %v60
  %v179 = vunpack.c.h.b16 %v60
  %v180 = vunpack.c.l.b16 %v61
  %v181 = vunpack.c.l.b16 %v62
  %v182 = vunpack.c.h.b16 %v62
  %v183 = vunpack.c.l.b16 %v63
  %v184 = vunpack.c.l.b16 %v64
  %v185 = vunpack.c.h.b16 %v64
  %v186 = vunpack.c.l.b16 %v65
  %v187 = vpack.c.b16 %v142, %v139
  %v188 = vpack.c.b16 %v143, %v140
  %v189 = vpack.c.b16 %v144, %v141
  %v190 = vpack.c.b16 %v148, %v145
  %v191 = vpack.c.b16 %v149, %v146
  %v192 = vpack.c.b16 %v150, %v147
  %v193 = vpack.c.b16 %v154, %v151
  %v194 = vpack.c.b16 %v155, %v152
  %v195 = vpack.c.b16 %v156, %v153
  %v196 = vpack.c.b16 %v160, %v157
  %v197 = vpack.c.b16 %v161, %v158
  %v198 = vpack.c.b16 %v162, %v159
  %v199 = vpack.c.b16 %v166, %v163
  %v200 = vpack.c.b16 %v167, %v164
  %v201 = vpack.c.b16 %v168, %v165
  %v202 = vpack.c.b16 %v172, %v169
  %v203 = vpack.c.b16 %v173, %v170
  %v204 = vpack.c.b16 %v174, %v171
  %v205 = vpack.c.b16 %v178, %v175
  %v206 = vpack.c.b16 %v179, %v176
  %v207 = vpack.c.b16 %v180, %v177
  %v208 = vpack.c.b16 %v184, %v181
  %v209 = vpack.c.b16 %v185, %v182
  %v210 = vpack.c.b16 %v186, %v183
  %235 = vmatprep.subr.bf16.mxu0 %v188
  %236 = vmatpush1.bf16.msra.mxu0 %v187
  %237 = vmatprep.subr.bf16.mxu0 %v191
  %238 = vmatpush1.bf16.msra.mxu0 %v190
  %239 = vmatprep.subr.bf16.mxu0 %v194
  %240 = vmatpush1.bf16.msra.mxu0 %v193
  %241 = vmatprep.subr.bf16.mxu0 %v197
  %242 = vmatpush1.bf16.msra.mxu0 %v196
  %243 = vmatprep.subr.bf16.mxu0 %v200
  %244 = vmatpush1.bf16.msra.mxu0 %v199
  %245 = vmatprep.subr.bf16.mxu0 %v203
  %246 = vmatpush1.bf16.msra.mxu0 %v202
  %247 = vmatprep.subr.bf16.mxu0 %v206
  %248 = vmatpush1.bf16.msra.mxu0 %v205
  %249 = vmatprep.subr.bf16.mxu0 %v209
  %250 = vmatpush1.bf16.msra.mxu0 %v208
  %251 = vmatprep.subr.bf16.mxu0 0
  %252 = vmatpush1.bf16.msra.mxu0 0
  %253 = vmatprep.subr.bf16.mxu0 0
  %254 = vmatpush1.bf16.msra.mxu0 0
  %255 = vmatprep.subr.bf16.mxu0 0
  %256 = vmatpush1.bf16.msra.mxu0 0
  %257 = vmatprep.subr.bf16.mxu0 0
  %258 = vmatpush1.bf16.msra.mxu0 0
  %259 = vmatprep.subr.bf16.mxu0 0
  %260 = vmatpush1.bf16.msra.mxu0 0
  %261 = vmatprep.subr.bf16.mxu0 0
  %262 = vmatpush1.bf16.msra.mxu0 0
  %263 = vmatprep.subr.bf16.mxu0 0
  %264 = vmatpush1.bf16.msra.mxu0 0
  %265 = vmatprep.subr.bf16.mxu0 0
  %266 = vmatpush1.bf16.msra.mxu0 0
  %267 = vmatprep.mubr.bf16.mxu0 0
  %268 = vmatmul.mubr.bf16.gmra.mrb[0].mxu0 %v99
  %v269 = vpop.f32.mrb[0].mxu0
  %v270 = vadd.f32 %v71, %v269
  %v271 = vpop.f32.mrb[0].mxu0
  %v272 = vadd.f32 %v75, %v271
  %v273 = vpop.f32.mrb[0].mxu0
  %v274 = vadd.f32 %v71, %v273
  %v275 = vpop.f32.mrb[0].mxu0
  %v276 = vadd.f32 %v75, %v275
  %277 = vmatprep.mubr.bf16.mxu0 0
  %278 = vmatmul.mubr.bf16.gmra.mrb[0].mxu0 %v100
  %v279 = vpop.f32.mrb[0].mxu0
  %v280 = vadd.f32 %v71, %v279
  %v281 = vpop.f32.mrb[0].mxu0
  %v282 = vadd.f32 %v75, %v281
  %v283 = vpop.f32.mrb[0].mxu0
  %v284 = vadd.f32 %v71, %v283
  %v285 = vpop.f32.mrb[0].mxu0
  %v286 = vadd.f32 %v75, %v285
  %287 = vmatprep.mubr.bf16.mxu0 0
  %288 = vmatmul.mubr.bf16.gmra.mrb[0].mxu0 %v101
  %v289 = vpop.f32.mrb[0].mxu0
  %v290 = vadd.f32 %v71, %v289
  %v291 = vpop.f32.mrb[0].mxu0
  %v292 = vadd.f32 %v75, %v291
  %v293 = vpop.f32.mrb[0].mxu0
  %v294 = vadd.f32 %v71, %v293
  %v295 = vpop.f32.mrb[0].mxu0
  %v296 = vadd.f32 %v75, %v295
  %297 = vmatprep.mubr.bf16.mxu0 0
  %298 = vmatmul.mubr.bf16.gmra.mrb[0].mxu0 %v102
  %v299 = vpop.f32.mrb[0].mxu0
  %v300 = vadd.f32 %v71, %v299
  %v301 = vpop.f32.mrb[0].mxu0
  %v302 = vadd.f32 %v75, %v301
  %v303 = vpop.f32.mrb[0].mxu0
  %v304 = vadd.f32 %v71, %v303
  %v305 = vpop.f32.mrb[0].mxu0
  %v306 = vadd.f32 %v75, %v305
  %307 = vdwg.mxu0
  %308 = vmatprep.subr.bf16.mxu0 0
  %309 = vmatpush1.bf16.msra.mxu0 %v189
  %310 = vmatprep.subr.bf16.mxu0 0
  %311 = vmatpush1.bf16.msra.mxu0 %v192
  %312 = vmatprep.subr.bf16.mxu0 0
  %313 = vmatpush1.bf16.msra.mxu0 %v195
  %314 = vmatprep.subr.bf16.mxu0 0
  %315 = vmatpush1.bf16.msra.mxu0 %v198
  %316 = vmatprep.subr.bf16.mxu0 0
  %317 = vmatpush1.bf16.msra.mxu0 %v201
  %318 = vmatprep.subr.bf16.mxu0 0
  %319 = vmatpush1.bf16.msra.mxu0 %v204
  %320 = vmatprep.subr.bf16.mxu0 0
  %321 = vmatpush1.bf16.msra.mxu0 %v207
  %322 = vmatprep.subr.bf16.mxu0 0
  %323 = vmatpush1.bf16.msra.mxu0 %v210
  %324 = vmatprep.subr.bf16.mxu0 0
  %325 = vmatpush1.bf16.msra.mxu0 0
  %326 = vmatprep.subr.bf16.mxu0 0
  %327 = vmatpush1.bf16.msra.mxu0 0
  %328 = vmatprep.subr.bf16.mxu0 0
  %329 = vmatpush1.bf16.msra.mxu0 0
  %330 = vmatprep.subr.bf16.mxu0 0
  %331 = vmatpush1.bf16.msra.mxu0 0
  %332 = vmatprep.subr.bf16.mxu0 0
  %333 = vmatpush1.bf16.msra.mxu0 0
  %334 = vmatprep.subr.bf16.mxu0 0
  %335 = vmatpush1.bf16.msra.mxu0 0
  %336 = vmatprep.subr.bf16.mxu0 0
  %337 = vmatpush1.bf16.msra.mxu0 0
  %338 = vmatprep.subr.bf16.mxu0 0
  %339 = vmatpush1.bf16.msra.mxu0 0
  %340 = vmatprep.mubr.bf16.mxu0 0
  %341 = vmatmul.mubr.bf16.gmra.mrb[0].mxu0 %v99
  %v342 = vpop.f32.mrb[0].mxu0
  %v343 = vadd.f32 %v79, %v342
  %v344 = vpop.f32.mrb[0].mxu0
  %v345 = vpop.f32.mrb[0].mxu0
  %v346 = vadd.f32 %v79, %v345
  %v347 = vpop.f32.mrb[0].mxu0
  %348 = vmatprep.mubr.bf16.mxu0 0
  %349 = vmatmul.mubr.bf16.gmra.mrb[0].mxu0 %v100
  %v350 = vpop.f32.mrb[0].mxu0
  %v351 = vadd.f32 %v79, %v350
  %v352 = vpop.f32.mrb[0].mxu0
  %v353 = vpop.f32.mrb[0].mxu0
  %v354 = vadd.f32 %v79, %v353
  %v355 = vpop.f32.mrb[0].mxu0
  %356 = vmatprep.mubr.bf16.mxu0 0
  %357 = vmatmul.mubr.bf16.gmra.mrb[0].mxu0 %v101
  %v358 = vpop.f32.mrb[0].mxu0
  %v359 = vadd.f32 %v79, %v358
  %v360 = vpop.f32.mrb[0].mxu0
  %v361 = vpop.f32.mrb[0].mxu0
  %v362 = vadd.f32 %v79, %v361
  %v363 = vpop.f32.mrb[0].mxu0
  %364 = vmatprep.mubr.bf16.mxu0 0
  %365 = vmatmul.mubr.bf16.gmra.mrb[0].mxu0 %v102
  %v366 = vpop.f32.mrb[0].mxu0
  %v367 = vadd.f32 %v79, %v366
  %v368 = vpop.f32.mrb[0].mxu0
  %v369 = vpop.f32.mrb[0].mxu0
  %v370 = vadd.f32 %v79, %v369
  %v371 = vpop.f32.mrb[0].mxu0
  %372 = vdwg.mxu0
  %373 = vst [vmem:[#allocation3] sm:$0xff] %v270
  %374 = vst [vmem:[#allocation3 + $0x8] sm:$0xff] %v272
  %375 = vst [vmem:[#allocation3 + $0x10] sm:$0xff] %v343
  %376 = vst [vmem:[#allocation3 + $0x18] sm:$0xff] %v274
  %377 = vst [vmem:[#allocation3 + $0x20] sm:$0xff] %v276
  %378 = vst [vmem:[#allocation3 + $0x28] sm:$0xff] %v346
  %379 = vst [vmem:[#allocation3 + $0x30] sm:$0xff] %v280
  %380 = vst [vmem:[#allocation3 + $0x38] sm:$0xff] %v282
  %381 = vst [vmem:[#allocation3 + $0x40] sm:$0xff] %v351
  %382 = vst [vmem:[#allocation3 + $0x48] sm:$0xff] %v284
  %383 = vst [vmem:[#allocation3 + $0x50] sm:$0xff] %v286
  %384 = vst [vmem:[#allocation3 + $0x58] sm:$0xff] %v354
  %385 = vst [vmem:[#allocation3 + $0x60] sm:$0xff] %v290
  %386 = vst [vmem:[#allocation3 + $0x68] sm:$0xff] %v292
  %387 = vst [vmem:[#allocation3 + $0x70] sm:$0xff] %v359
  %388 = vst [vmem:[#allocation3 + $0x78] sm:$0xff] %v294
  %389 = vst [vmem:[#allocation3 + $0x80] sm:$0xff] %v296
  %390 = vst [vmem:[#allocation3 + $0x88] sm:$0xff] %v362
  %391 = vst [vmem:[#allocation3 + $0x90] sm:$0xff] %v300
  %392 = vst [vmem:[#allocation3 + $0x98] sm:$0xff] %v302
  %393 = vst [vmem:[#allocation3 + $0xa0] sm:$0xff] %v367
  %394 = vst [vmem:[#allocation3 + $0xa8] sm:$0xff] %v304
  %395 = vst [vmem:[#allocation3 + $0xb0] sm:$0xff] %v306
  %396 = vst [vmem:[#allocation3 + $0xb8] sm:$0xff] %v370
  %v397 = vld [vmem:[%s2] sm:$0xff]
  %v398 = vld [vmem:[%s2 + $0x8] sm:$0xf]
  %v399 = vld [vmem:[%s2 + $0xc] sm:$0xff]
  %v400 = vld [vmem:[%s2 + $0x14] sm:$0xf]
  %v401 = vld [vmem:[%s2 + $0x18] sm:$0xff]
  %v402 = vld [vmem:[%s2 + $0x20] sm:$0xf]
  %v403 = vld [vmem:[%s2 + $0x24] sm:$0xff]
  %v404 = vld [vmem:[%s2 + $0x2c] sm:$0xf]
  %v405 = vld [vmem:[%s2 + $0x30] sm:$0xff]
  %v406 = vld [vmem:[%s2 + $0x38] sm:$0xf]
  %v407 = vld [vmem:[%s2 + $0x3c] sm:$0xff]
  %v408 = vld [vmem:[%s2 + $0x44] sm:$0xf]
  %v409 = vld [vmem:[%s2 + $0x48] sm:$0xff]
  %v410 = vld [vmem:[%s2 + $0x50] sm:$0xf]
  %v411 = vld [vmem:[%s2 + $0x54] sm:$0xff]
  %v412 = vld [vmem:[%s2 + $0x5c] sm:$0xf]
  %v413 = vld [vmem:[%s2 + $0x60] sm:$0xff]
  %v414 = vld [vmem:[%s2 + $0x68] sm:$0xf]
  %v415 = vld [vmem:[%s2 + $0x6c] sm:$0xff]
  %v416 = vld [vmem:[%s2 + $0x74] sm:$0xf]
  %v417 = vld [vmem:[%s2 + $0x78] sm:$0xff]
  %v418 = vld [vmem:[%s2 + $0x80] sm:$0xf]
  %v419 = vld [vmem:[%s2 + $0x84] sm:$0xff]
  %v420 = vld [vmem:[%s2 + $0x8c] sm:$0xf]
  %v421 = vld [vmem:[%s2 + $0x90] sm:$0xff]
  %v422 = vld [vmem:[%s2 + $0x98] sm:$0xf]
  %v423 = vld [vmem:[%s2 + $0x9c] sm:$0xff]
  %v424 = vld [vmem:[%s2 + $0xa4] sm:$0xf]
  %v425 = vld [vmem:[%s2 + $0xa8] sm:$0xff]
  %v426 = vld [vmem:[%s2 + $0xb0] sm:$0xf]
  %v427 = vld [vmem:[%s2 + $0xb4] sm:$0xff]
  %v428 = vld [vmem:[%s2 + $0xbc] sm:$0xf]
  %v429 = vld [vmem:[%s4] sm:$0x1]
  %v430 = vld [vmem:[#allocation2] sm:$0x3]
  %v431 = vld [vmem:[#allocation3] ss:$8 sm:$0x7]
  %s432 = scalar_lea.vmem [#allocation3], 96
  %v433 = vld [vmem:[%s432] ss:$8 sm:$0x7]
  %v434 = vpack.c.bf16 %v430, %v430
  %v467 = vunpack.c.l.b16 %v397
  %v468 = vunpack.c.h.b16 %v397
  %v469 = vunpack.c.l.b16 %v398
  %v470 = vunpack.c.l.b16 %v399
  %v471 = vunpack.c.h.b16 %v399
  %v472 = vunpack.c.l.b16 %v400
  %v473 = vunpack.c.l.b16 %v401
  %v474 = vunpack.c.h.b16 %v401
  %v475 = vunpack.c.l.b16 %v402
  %v476 = vunpack.c.l.b16 %v403
  %v477 = vunpack.c.h.b16 %v403
  %v478 = vunpack.c.l.b16 %v404
  %v479 = vunpack.c.l.b16 %v405
  %v480 = vunpack.c.h.b16 %v405
  %v481 = vunpack.c.l.b16 %v406
  %v482 = vunpack.c.l.b16 %v407
  %v483 = vunpack.c.h.b16 %v407
  %v484 = vunpack.c.l.b16 %v408
  %v485 = vunpack.c.l.b16 %v409
  %v486 = vunpack.c.h.b16 %v409
  %v487 = vunpack.c.l.b16 %v410
  %v488 = vunpack.c.l.b16 %v411
  %v489 = vunpack.c.h.b16 %v411
  %v490 = vunpack.c.l.b16 %v412
  %v491 = vunpack.c.l.b16 %v413
  %v492 = vunpack.c.h.b16 %v413
  %v493 = vunpack.c.l.b16 %v414
  %v494 = vunpack.c.l.b16 %v415
  %v495 = vunpack.c.h.b16 %v415
  %v496 = vunpack.c.l.b16 %v416
  %v497 = vunpack.c.l.b16 %v417
  %v498 = vunpack.c.h.b16 %v417
  %v499 = vunpack.c.l.b16 %v418
  %v500 = vunpack.c.l.b16 %v419
  %v501 = vunpack.c.h.b16 %v419
  %v502 = vunpack.c.l.b16 %v420
  %v503 = vunpack.c.l.b16 %v421
  %v504 = vunpack.c.h.b16 %v421
  %v505 = vunpack.c.l.b16 %v422
  %v506 = vunpack.c.l.b16 %v423
  %v507 = vunpack.c.h.b16 %v423
  %v508 = vunpack.c.l.b16 %v424
  %v509 = vunpack.c.l.b16 %v425
  %v510 = vunpack.c.h.b16 %v425
  %v511 = vunpack.c.l.b16 %v426
  %v512 = vunpack.c.l.b16 %v427
  %v513 = vunpack.c.h.b16 %v427
  %v514 = vunpack.c.l.b16 %v428
  %v515 = vpack.c.b16 %v470, %v467
  %v516 = vpack.c.b16 %v471, %v468
  %v517 = vpack.c.b16 %v472, %v469
  %v518 = vpack.c.b16 %v476, %v473
  %v519 = vpack.c.b16 %v477, %v474
  %v520 = vpack.c.b16 %v478, %v475
  %v521 = vpack.c.b16 %v482, %v479
  %v522 = vpack.c.b16 %v483, %v480
  %v523 = vpack.c.b16 %v484, %v481
  %v524 = vpack.c.b16 %v488, %v485
  %v525 = vpack.c.b16 %v489, %v486
  %v526 = vpack.c.b16 %v490, %v487
  %v527 = vpack.c.b16 %v494, %v491
  %v528 = vpack.c.b16 %v495, %v492
  %v529 = vpack.c.b16 %v496, %v493
  %v530 = vpack.c.b16 %v500, %v497
  %v531 = vpack.c.b16 %v501, %v498
  %v532 = vpack.c.b16 %v502, %v499
  %v533 = vpack.c.b16 %v506, %v503
  %v534 = vpack.c.b16 %v507, %v504
  %v535 = vpack.c.b16 %v508, %v505
  %v536 = vpack.c.b16 %v512, %v509
  %v537 = vpack.c.b16 %v513, %v510
  %v538 = vpack.c.b16 %v514, %v511
  %563 = vmatprep.subr.bf16.mxu0 %v516
  %564 = vmatpush1.bf16.msra.mxu0 %v515
  %565 = vmatprep.subr.bf16.mxu0 %v519
  %566 = vmatpush1.bf16.msra.mxu0 %v518
  %567 = vmatprep.subr.bf16.mxu0 %v522
  %568 = vmatpush1.bf16.msra.mxu0 %v521
  %569 = vmatprep.subr.bf16.mxu0 %v525
  %570 = vmatpush1.bf16.msra.mxu0 %v524
  %571 = vmatprep.subr.bf16.mxu0 %v528
  %572 = vmatpush1.bf16.msra.mxu0 %v527
  %573 = vmatprep.subr.bf16.mxu0 %v531
  %574 = vmatpush1.bf16.msra.mxu0 %v530
  %575 = vmatprep.subr.bf16.mxu0 %v534
  %576 = vmatpush1.bf16.msra.mxu0 %v533
  %577 = vmatprep.subr.bf16.mxu0 %v537
  %578 = vmatpush1.bf16.msra.mxu0 %v536
  %579 = vmatprep.subr.bf16.mxu0 0
  %580 = vmatpush1.bf16.msra.mxu0 0
  %581 = vmatprep.subr.bf16.mxu0 0
  %582 = vmatpush1.bf16.msra.mxu0 0
  %583 = vmatprep.subr.bf16.mxu0 0
  %584 = vmatpush1.bf16.msra.mxu0 0
  %585 = vmatprep.subr.bf16.mxu0 0
  %586 = vmatpush1.bf16.msra.mxu0 0
  %587 = vmatprep.subr.bf16.mxu0 0
  %588 = vmatpush1.bf16.msra.mxu0 0
  %589 = vmatprep.subr.bf16.mxu0 0
  %590 = vmatpush1.bf16.msra.mxu0 0
  %591 = vmatprep.subr.bf16.mxu0 0
  %592 = vmatpush1.bf16.msra.mxu0 0
  %593 = vmatprep.subr.bf16.mxu0 0
  %594 = vmatpush1.bf16.msra.mxu0 0
  %595 = vmatprep.mubr.bf16.mxu0 0
  %596 = vmatmul.mubr.bf16.gmra.mrb[0].mxu0 %v434
  %v597 = vpop.f32.mrb[0].mxu0
  %v598 = vadd.f32 0.0, %v597
  %v599 = vpop.f32.mrb[0].mxu0
  %v600 = vadd.f32 0.0, %v599
  %v601 = vpop.f32.mrb[0].mxu0
  %v602 = vpop.f32.mrb[0].mxu0
  %603 = vdwg.mxu0
  %604 = vmatprep.subr.bf16.mxu0 0
  %605 = vmatpush1.bf16.msra.mxu0 %v517
  %606 = vmatprep.subr.bf16.mxu0 0
  %607 = vmatpush1.bf16.msra.mxu0 %v520
  %608 = vmatprep.subr.bf16.mxu0 0
  %609 = vmatpush1.bf16.msra.mxu0 %v523
  %610 = vmatprep.subr.bf16.mxu0 0
  %611 = vmatpush1.bf16.msra.mxu0 %v526
  %612 = vmatprep.subr.bf16.mxu0 0
  %613 = vmatpush1.bf16.msra.mxu0 %v529
  %614 = vmatprep.subr.bf16.mxu0 0
  %615 = vmatpush1.bf16.msra.mxu0 %v532
  %616 = vmatprep.subr.bf16.mxu0 0
  %617 = vmatpush1.bf16.msra.mxu0 %v535
  %618 = vmatprep.subr.bf16.mxu0 0
  %619 = vmatpush1.bf16.msra.mxu0 %v538
  %620 = vmatprep.subr.bf16.mxu0 0
  %621 = vmatpush1.bf16.msra.mxu0 0
  %622 = vmatprep.subr.bf16.mxu0 0
  %623 = vmatpush1.bf16.msra.mxu0 0
  %624 = vmatprep.subr.bf16.mxu0 0
  %625 = vmatpush1.bf16.msra.mxu0 0
  %626 = vmatprep.subr.bf16.mxu0 0
  %627 = vmatpush1.bf16.msra.mxu0 0
  %628 = vmatprep.subr.bf16.mxu0 0
  %629 = vmatpush1.bf16.msra.mxu0 0
  %630 = vmatprep.subr.bf16.mxu0 0
  %631 = vmatpush1.bf16.msra.mxu0 0
  %632 = vmatprep.subr.bf16.mxu0 0
  %633 = vmatpush1.bf16.msra.mxu0 0
  %634 = vmatprep.subr.bf16.mxu0 0
  %635 = vmatpush1.bf16.msra.mxu0 0
  %636 = vmatprep.mubr.bf16.mxu0 0
  %637 = vmatmul.mubr.bf16.gmra.mrb[0].mxu0 %v434
  %v638 = vpop.f32.mrb[0].mxu0
  %v639 = vadd.f32 0.0, %v638
  %v640 = vpop.f32.mrb[0].mxu0
  %v641 = vpop.f32.mrb[0].mxu0
  %v642 = vpop.f32.mrb[0].mxu0
  %643 = vdwg.mxu0
  %v646 = vcombine.low %v598, %v600
  %v648 = vunpack.c.l.s4 1966171168
  %v649 = vunpack.c.0.s8 %v648
  %v650 = vlaneseq
  %v651 = vshrl.u32 %v650, 7
  %v652 = vsub.s32 %v649, %v651
  %v653 = vrot.slane %v646, %v652
  %v654 = vcombine.high %v653, %v653
  %v656 = vunpack.c.l.s4 1966171168
  %v657 = vunpack.c.0.s8 %v656
  %v658 = vlaneseq
  %v659 = vshrl.u32 %v658, 7
  %v660 = vsub.s32 %v657, %v659
  %v661 = vrot.slane %v653, %v660
  %v663 = vunpack.c.l.s4 1966171168
  %v664 = vunpack.c.0.s8 %v663
  %v665 = vlaneseq
  %v666 = vshrl.u32 %v665, 7
  %v667 = vsub.s32 %v664, %v666
  %v668 = vrot.slane %v654, %v667
  %v671 = vadd.f32 %v431, %v661
  %v672 = vadd.f32 %v433, %v668
  %v673 = vxor.u32 %v671, 2147483648
  %v674 = vxor.u32 %v672, 2147483648
  %v675 = vmul.f32 %v673, 1.442695
  %v676 = vpow.pop %v675
  %v677 = vmul.f32 %v674, 1.442695
  %v678 = vpow.pop %v677
  %v679 = vadd.f32 %v676, 1.0
  %v680 = vadd.f32 %v678, 1.0
  %v681 = vrcp.pop %v679
  %v682 = vmul.f32 1.0, %v681
  %v683 = vrcp.pop %v680
  %v684 = vmul.f32 1.0, %v683
  %v686 = vlaneseq
  %v687 = vshrl.u32 %v686, 7
  %v688 = vsub.s32 0, %v687
  %v689 = vrot.slane %v429, %v688
  %v691 = vadd.f32 %v639, %v689
  %v694 = vunpack.c.l.s4 1966171168
  %v695 = vunpack.c.0.s8 %v694
  %v696 = vlaneseq
  %v697 = vshrl.u32 %v696, 7
  %v698 = vsub.s32 %v695, %v697
  %v699 = vrot.slane %v691, %v698
  %v700 = vcombine.high %v699, %v699
  %v702 = vunpack.c.l.s4 1966171168
  %v703 = vunpack.c.0.s8 %v702
  %v704 = vlaneseq
  %v705 = vshrl.u32 %v704, 7
  %v706 = vsub.s32 %v703, %v705
  %v707 = vrot.slane %v699, %v706
  %v709 = vunpack.c.l.s4 1966171168
  %v710 = vunpack.c.0.s8 %v709
  %v711 = vlaneseq
  %v712 = vshrl.u32 %v711, 7
  %v713 = vsub.s32 %v710, %v712
  %v714 = vrot.slane %v700, %v713
  %v717 = vmul.f32 %v682, %v707
  %v718 = vmul.f32 %v684, %v714
  %v721 = vrot.slane %v431, 2
  %v722 = vrot.slane %v433, 2
  %v725 = vadd.f32 %v721, %v717
  %v726 = vadd.f32 %v722, %v718
  %v727 = vtanh.pop %v725
  %v728 = vtanh.pop %v726
  %v731 = vrot.slane %v682, 1
  %v732 = vrot.slane %v684, 1
  %v735 = vsub.f32 1.0, %v731
  %v736 = vsub.f32 1.0, %v732
  %v737 = vmul.f32 %v735, %v727
  %v738 = vmul.f32 %v736, %v728
  %v741 = vunpack.c.l.s4 1966171168
  %v742 = vunpack.c.0.s8 %v741
  %v743 = vlaneseq
  %v744 = vshrl.u32 %v743, 7
  %v745 = vsub.s32 %v742, %v744
  %v746 = vrot.slane %v430, %v745
  %v747 = vcombine.high %v746, %v746
  %v749 = vunpack.c.l.s4 1966171168
  %v750 = vunpack.c.0.s8 %v749
  %v751 = vlaneseq
  %v752 = vshrl.u32 %v751, 7
  %v753 = vsub.s32 %v750, %v752
  %v754 = vrot.slane %v746, %v753
  %v756 = vunpack.c.l.s4 1966171168
  %v757 = vunpack.c.0.s8 %v756
  %v758 = vlaneseq
  %v759 = vshrl.u32 %v758, 7
  %v760 = vsub.s32 %v757, %v759
  %v761 = vrot.slane %v747, %v760
  %v764 = vmul.f32 %v731, %v754
  %v765 = vmul.f32 %v732, %v761
  %v766 = vadd.f32 %v737, %v764
  %v767 = vadd.f32 %v738, %v765
  %v768 = vpack.c.bf16 %v766, %v766
  %v769 = vpack.c.bf16 %v767, %v767
  %vm770 = vcmask 1040384
  %vm771 = vsmask.f32 256
  %vm772 = vmand %vm770, %vm771
  %v773 = vld [vmem:[%s5] sm:$0x1]
  %v774 = vsel %vm772, %v768, %v773
  %775 = vst [vmem:[%s5] sm:$0x1] %v774
  %v776 = vld [vmem:[%s5 + $0x10] sm:$0x1]
  %v777 = vsel %vm772, %v769, %v776
  %778 = vst [vmem:[%s5 + $0x10] sm:$0x1] %v777
  %s779 = scalar_lea.vmem [#allocation3], 1
  %v780 = vld [vmem:[%s779] ss:$8 sm:$0x7]
  %s781 = scalar_lea.vmem [#allocation3], 97
  %v782 = vld [vmem:[%s781] ss:$8 sm:$0x7]
  %v785 = vunpack.c.l.b16 %v768
  %v786 = vunpack.c.l.b16 %v769
  %v787 = vrot.slane %v786, 7
  %vm788 = vcmask 1041409
  %v789 = vsel %vm788, %v787, %v785
  %v790 = vpack.c.b16 %v789, %v789
  %792 = vmatprep.subr.bf16.mxu0 %v516
  %793 = vmatpush1.bf16.msra.mxu0 %v515
  %794 = vmatprep.subr.bf16.mxu0 %v519
  %795 = vmatpush1.bf16.msra.mxu0 %v518
  %796 = vmatprep.subr.bf16.mxu0 %v522
  %797 = vmatpush1.bf16.msra.mxu0 %v521
  %798 = vmatprep.subr.bf16.mxu0 %v525
  %799 = vmatpush1.bf16.msra.mxu0 %v524
  %800 = vmatprep.subr.bf16.mxu0 %v528
  %801 = vmatpush1.bf16.msra.mxu0 %v527
  %802 = vmatprep.subr.bf16.mxu0 %v531
  %803 = vmatpush1.bf16.msra.mxu0 %v530
  %804 = vmatprep.subr.bf16.mxu0 %v534
  %805 = vmatpush1.bf16.msra.mxu0 %v533
  %806 = vmatprep.subr.bf16.mxu0 %v537
  %807 = vmatpush1.bf16.msra.mxu0 %v536
  %808 = vmatprep.subr.bf16.mxu0 0
  %809 = vmatpush1.bf16.msra.mxu0 0
  %810 = vmatprep.subr.bf16.mxu0 0
  %811 = vmatpush1.bf16.msra.mxu0 0
  %812 = vmatprep.subr.bf16.mxu0 0
  %813 = vmatpush1.bf16.msra.mxu0 0
  %814 = vmatprep.subr.bf16.mxu0 0
  %815 = vmatpush1.bf16.msra.mxu0 0
  %816 = vmatprep.subr.bf16.mxu0 0
  %817 = vmatpush1.bf16.msra.mxu0 0
  %818 = vmatprep.subr.bf16.mxu0 0
  %819 = vmatpush1.bf16.msra.mxu0 0
  %820 = vmatprep.subr.bf16.mxu0 0
  %821 = vmatpush1.bf16.msra.mxu0 0
  %822 = vmatprep.subr.bf16.mxu0 0
  %823 = vmatpush1.bf16.msra.mxu0 0
  %824 = vmatprep.mubr.bf16.mxu0 0
  %825 = vmatmul.mubr.bf16.gmra.mrb[0].mxu0 %v790
  %v826 = vpop.f32.mrb[0].mxu0
  %v827 = vadd.f32 0.0, %v826
  %v828 = vpop.f32.mrb[0].mxu0
  %v829 = vadd.f32 0.0, %v828
  %v830 = vpop.f32.mrb[0].mxu0
  %v831 = vpop.f32.mrb[0].mxu0
  %832 = vdwg.mxu0
  %833 = vmatprep.subr.bf16.mxu0 0
  %834 = vmatpush1.bf16.msra.mxu0 %v517
  %835 = vmatprep.subr.bf16.mxu0 0
  %836 = vmatpush1.bf16.msra.mxu0 %v520
  %837 = vmatprep.subr.bf16.mxu0 0
  %838 = vmatpush1.bf16.msra.mxu0 %v523
  %839 = vmatprep.subr.bf16.mxu0 0
  %840 = vmatpush1.bf16.msra.mxu0 %v526
  %841 = vmatprep.subr.bf16.mxu0 0
  %842 = vmatpush1.bf16.msra.mxu0 %v529
  %843 = vmatprep.subr.bf16.mxu0 0
  %844 = vmatpush1.bf16.msra.mxu0 %v532
  %845 = vmatprep.subr.bf16.mxu0 0
  %846 = vmatpush1.bf16.msra.mxu0 %v535
  %847 = vmatprep.subr.bf16.mxu0 0
  %848 = vmatpush1.bf16.msra.mxu0 %v538
  %849 = vmatprep.subr.bf16.mxu0 0
  %850 = vmatpush1.bf16.msra.mxu0 0
  %851 = vmatprep.subr.bf16.mxu0 0
  %852 = vmatpush1.bf16.msra.mxu0 0
  %853 = vmatprep.subr.bf16.mxu0 0
  %854 = vmatpush1.bf16.msra.mxu0 0
  %855 = vmatprep.subr.bf16.mxu0 0
  %856 = vmatpush1.bf16.msra.mxu0 0
  %857 = vmatprep.subr.bf16.mxu0 0
  %858 = vmatpush1.bf16.msra.mxu0 0
  %859 = vmatprep.subr.bf16.mxu0 0
  %860 = vmatpush1.bf16.msra.mxu0 0
  %861 = vmatprep.subr.bf16.mxu0 0
  %862 = vmatpush1.bf16.msra.mxu0 0
  %863 = vmatprep.subr.bf16.mxu0 0
  %864 = vmatpush1.bf16.msra.mxu0 0
  %865 = vmatprep.mubr.bf16.mxu0 0
  %866 = vmatmul.mubr.bf16.gmra.mrb[0].mxu0 %v790
  %v867 = vpop.f32.mrb[0].mxu0
  %v868 = vadd.f32 0.0, %v867
  %v869 = vpop.f32.mrb[0].mxu0
  %v870 = vpop.f32.mrb[0].mxu0
  %v871 = vpop.f32.mrb[0].mxu0
  %872 = vdwg.mxu0
  %v875 = vcombine.low %v827, %v829
  %v877 = vunpack.c.l.s4 1966171168
  %v878 = vunpack.c.0.s8 %v877
  %v879 = vlaneseq
  %v880 = vshrl.u32 %v879, 7
  %v881 = vsub.s32 %v878, %v880
  %v882 = vrot.slane %v875, %v881
  %v883 = vcombine.high %v882, %v882
  %v885 = vunpack.c.l.s4 1966171168
  %v886 = vunpack.c.0.s8 %v885
  %v887 = vlaneseq
  %v888 = vshrl.u32 %v887, 7
  %v889 = vsub.s32 %v886, %v888
  %v890 = vrot.slane %v882, %v889
  %v892 = vunpack.c.l.s4 1966171168
  %v893 = vunpack.c.0.s8 %v892
  %v894 = vlaneseq
  %v895 = vshrl.u32 %v894, 7
  %v896 = vsub.s32 %v893, %v895
  %v897 = vrot.slane %v883, %v896
  %v900 = vadd.f32 %v780, %v890
  %v901 = vadd.f32 %v782, %v897
  %v902 = vxor.u32 %v900, 2147483648
  %v903 = vxor.u32 %v901, 2147483648
  %v904 = vmul.f32 %v902, 1.442695
  %v905 = vpow.pop %v904
  %v906 = vmul.f32 %v903, 1.442695
  %v907 = vpow.pop %v906
  %v908 = vadd.f32 %v905, 1.0
  %v909 = vadd.f32 %v907, 1.0
  %v910 = vrcp.pop %v908
  %v911 = vmul.f32 1.0, %v910
  %v912 = vrcp.pop %v909
  %v913 = vmul.f32 1.0, %v912
  %v914 = vadd.f32 %v868, %v689
  %v917 = vunpack.c.l.s4 1966171168
  %v918 = vunpack.c.0.s8 %v917
  %v919 = vlaneseq
  %v920 = vshrl.u32 %v919, 7
  %v921 = vsub.s32 %v918, %v920
  %v922 = vrot.slane %v914, %v921
  %v923 = vcombine.high %v922, %v922
  %v925 = vunpack.c.l.s4 1966171168
  %v926 = vunpack.c.0.s8 %v925
  %v927 = vlaneseq
  %v928 = vshrl.u32 %v927, 7
  %v929 = vsub.s32 %v926, %v928
  %v930 = vrot.slane %v922, %v929
  %v932 = vunpack.c.l.s4 1966171168
  %v933 = vunpack.c.0.s8 %v932
  %v934 = vlaneseq
  %v935 = vshrl.u32 %v934, 7
  %v936 = vsub.s32 %v933, %v935
  %v937 = vrot.slane %v923, %v936
  %v940 = vmul.f32 %v911, %v930
  %v941 = vmul.f32 %v913, %v937
  %v944 = vrot.slane %v780, 2
  %v945 = vrot.slane %v782, 2
  %v948 = vadd.f32 %v944, %v940
  %v949 = vadd.f32 %v945, %v941
  %v950 = vtanh.pop %v948
  %v951 = vtanh.pop %v949
  %v954 = vrot.slane %v911, 1
  %v955 = vrot.slane %v913, 1
  %v958 = vsub.f32 1.0, %v954
  %v959 = vsub.f32 1.0, %v955
  %v960 = vmul.f32 %v958, %v950
  %v961 = vmul.f32 %v959, %v951
  %v962 = vmul.f32 %v954, %v766
  %v963 = vmul.f32 %v955, %v767
  %v964 = vadd.f32 %v960, %v962
  %v965 = vadd.f32 %v961, %v963
  %v966 = vpack.c.bf16 %v964, %v964
  %v967 = vpack.c.bf16 %v965, %v965
  %v970 = vunpack.c.l.b16 %v966
  %v971 = vunpack.c.l.b16 %v967
  %v972 = vpack.c.b16 %v970, %v970
  %v973 = vpack.c.b16 %v971, %v971
  %v975 = vshll.u32 %v972, 16
  %v978 = vshll.u32 %v973, 16
  %vm982 = vsmask.f32 7938
  %vm983 = vmand %vm770, %vm982
  %v984 = vld [vmem:[%s5] sm:$0x1]
  %v985 = vsel %vm983, %v975, %v984
  %986 = vst [vmem:[%s5] sm:$0x1] %v985
  %v987 = vld [vmem:[%s5 + $0x10] sm:$0x1]
  %v988 = vsel %vm983, %v978, %v987
  %989 = vst [vmem:[%s5 + $0x10] sm:$0x1] %v988
  %s990 = scalar_lea.vmem [#allocation3], 2
  %v991 = vld [vmem:[%s990] ss:$8 sm:$0x7]
  %s992 = scalar_lea.vmem [#allocation3], 98
  %v993 = vld [vmem:[%s992] ss:$8 sm:$0x7]
  %v994 = vrot.slane %v971, 7
  %v995 = vsel %vm788, %v994, %v970
  %v996 = vpack.c.b16 %v995, %v995
  %998 = vmatprep.subr.bf16.mxu0 %v516
  %999 = vmatpush1.bf16.msra.mxu0 %v515
  %1000 = vmatprep.subr.bf16.mxu0 %v519
  %1001 = vmatpush1.bf16.msra.mxu0 %v518
  %1002 = vmatprep.subr.bf16.mxu0 %v522
  %1003 = vmatpush1.bf16.msra.mxu0 %v521
  %1004 = vmatprep.subr.bf16.mxu0 %v525
  %1005 = vmatpush1.bf16.msra.mxu0 %v524
  %1006 = vmatprep.subr.bf16.mxu0 %v528
  %1007 = vmatpush1.bf16.msra.mxu0 %v527
  %1008 = vmatprep.subr.bf16.mxu0 %v531
  %1009 = vmatpush1.bf16.msra.mxu0 %v530
  %1010 = vmatprep.subr.bf16.mxu0 %v534
  %1011 = vmatpush1.bf16.msra.mxu0 %v533
  %1012 = vmatprep.subr.bf16.mxu0 %v537
  %1013 = vmatpush1.bf16.msra.mxu0 %v536
  %1014 = vmatprep.subr.bf16.mxu0 0
  %1015 = vmatpush1.bf16.msra.mxu0 0
  %1016 = vmatprep.subr.bf16.mxu0 0
  %1017 = vmatpush1.bf16.msra.mxu0 0
  %1018 = vmatprep.subr.bf16.mxu0 0
  %1019 = vmatpush1.bf16.msra.mxu0 0
  %1020 = vmatprep.subr.bf16.mxu0 0
  %1021 = vmatpush1.bf16.msra.mxu0 0
  %1022 = vmatprep.subr.bf16.mxu0 0
  %1023 = vmatpush1.bf16.msra.mxu0 0
  %1024 = vmatprep.subr.bf16.mxu0 0
  %1025 = vmatpush1.bf16.msra.mxu0 0
  %1026 = vmatprep.subr.bf16.mxu0 0
  %1027 = vmatpush1.bf16.msra.mxu0 0
  %1028 = vmatprep.subr.bf16.mxu0 0
  %1029 = vmatpush1.bf16.msra.mxu0 0
  %1030 = vmatprep.mubr.bf16.mxu0 0
  %1031 = vmatmul.mubr.bf16.gmra.mrb[0].mxu0 %v996
  %v1032 = vpop.f32.mrb[0].mxu0
  %v1033 = vadd.f32 0.0, %v1032
  %v1034 = vpop.f32.mrb[0].mxu0
  %v1035 = vadd.f32 0.0, %v1034
  %v1036 = vpop.f32.mrb[0].mxu0
  %v1037 = vpop.f32.mrb[0].mxu0
  %1038 = vdwg.mxu0
  %1039 = vmatprep.subr.bf16.mxu0 0
  %1040 = vmatpush1.bf16.msra.mxu0 %v517
  %1041 = vmatprep.subr.bf16.mxu0 0
  %1042 = vmatpush1.bf16.msra.mxu0 %v520
  %1043 = vmatprep.subr.bf16.mxu0 0
  %1044 = vmatpush1.bf16.msra.mxu0 %v523
  %1045 = vmatprep.subr.bf16.mxu0 0
  %1046 = vmatpush1.bf16.msra.mxu0 %v526
  %1047 = vmatprep.subr.bf16.mxu0 0
  %1048 = vmatpush1.bf16.msra.mxu0 %v529
  %1049 = vmatprep.subr.bf16.mxu0 0
  %1050 = vmatpush1.bf16.msra.mxu0 %v532
  %1051 = vmatprep.subr.bf16.mxu0 0
  %1052 = vmatpush1.bf16.msra.mxu0 %v535
  %1053 = vmatprep.subr.bf16.mxu0 0
  %1054 = vmatpush1.bf16.msra.mxu0 %v538
  %1055 = vmatprep.subr.bf16.mxu0 0
  %1056 = vmatpush1.bf16.msra.mxu0 0
  %1057 = vmatprep.subr.bf16.mxu0 0
  %1058 = vmatpush1.bf16.msra.mxu0 0
  %1059 = vmatprep.subr.bf16.mxu0 0
  %1060 = vmatpush1.bf16.msra.mxu0 0
  %1061 = vmatprep.subr.bf16.mxu0 0
  %1062 = vmatpush1.bf16.msra.mxu0 0
  %1063 = vmatprep.subr.bf16.mxu0 0
  %1064 = vmatpush1.bf16.msra.mxu0 0
  %1065 = vmatprep.subr.bf16.mxu0 0
  %1066 = vmatpush1.bf16.msra.mxu0 0
  %1067 = vmatprep.subr.bf16.mxu0 0
  %1068 = vmatpush1.bf16.msra.mxu0 0
  %1069 = vmatprep.subr.bf16.mxu0 0
  %1070 = vmatpush1.bf16.msra.mxu0 0
  %1071 = vmatprep.mubr.bf16.mxu0 0
  %1072 = vmatmul.mubr.bf16.gmra.mrb[0].mxu0 %v996
  %v1073 = vpop.f32.mrb[0].mxu0
  %v1074 = vadd.f32 0.0, %v1073
  %v1075 = vpop.f32.mrb[0].mxu0
  %v1076 = vpop.f32.mrb[0].mxu0
  %v1077 = vpop.f32.mrb[0].mxu0
  %1078 = vdwg.mxu0
  %v1081 = vcombine.low %v1033, %v1035
  %v1083 = vunpack.c.l.s4 1966171168
  %v1084 = vunpack.c.0.s8 %v1083
  %v1085 = vlaneseq
  %v1086 = vshrl.u32 %v1085, 7
  %v1087 = vsub.s32 %v1084, %v1086
  %v1088 = vrot.slane %v1081, %v1087
  %v1089 = vcombine.high %v1088, %v1088
  %v1091 = vunpack.c.l.s4 1966171168
  %v1092 = vunpack.c.0.s8 %v1091
  %v1093 = vlaneseq
  %v1094 = vshrl.u32 %v1093, 7
  %v1095 = vsub.s32 %v1092, %v1094
  %v1096 = vrot.slane %v1088, %v1095
  %v1098 = vunpack.c.l.s4 1966171168
  %v1099 = vunpack.c.0.s8 %v1098
  %v1100 = vlaneseq
  %v1101 = vshrl.u32 %v1100, 7
  %v1102 = vsub.s32 %v1099, %v1101
  %v1103 = vrot.slane %v1089, %v1102
  %v1106 = vadd.f32 %v991, %v1096
  %v1107 = vadd.f32 %v993, %v1103
  %v1108 = vxor.u32 %v1106, 2147483648
  %v1109 = vxor.u32 %v1107, 2147483648
  %v1110 = vmul.f32 %v1108, 1.442695
  %v1111 = vpow.pop %v1110
  %v1112 = vmul.f32 %v1109, 1.442695
  %v1113 = vpow.pop %v1112
  %v1114 = vadd.f32 %v1111, 1.0
  %v1115 = vadd.f32 %v1113, 1.0
  %v1116 = vrcp.pop %v1114
  %v1117 = vmul.f32 1.0, %v1116
  %v1118 = vrcp.pop %v1115
  %v1119 = vmul.f32 1.0, %v1118
  %v1120 = vadd.f32 %v1074, %v689
  %v1123 = vunpack.c.l.s4 1966171168
  %v1124 = vunpack.c.0.s8 %v1123
  %v1125 = vlaneseq
  %v1126 = vshrl.u32 %v1125, 7
  %v1127 = vsub.s32 %v1124, %v1126
  %v1128 = vrot.slane %v1120, %v1127
  %v1129 = vcombine.high %v1128, %v1128
  %v1131 = vunpack.c.l.s4 1966171168
  %v1132 = vunpack.c.0.s8 %v1131
  %v1133 = vlaneseq
  %v1134 = vshrl.u32 %v1133, 7
  %v1135 = vsub.s32 %v1132, %v1134
  %v1136 = vrot.slane %v1128, %v1135
  %v1138 = vunpack.c.l.s4 1966171168
  %v1139 = vunpack.c.0.s8 %v1138
  %v1140 = vlaneseq
  %v1141 = vshrl.u32 %v1140, 7
  %v1142 = vsub.s32 %v1139, %v1141
  %v1143 = vrot.slane %v1129, %v1142
  %v1146 = vmul.f32 %v1117, %v1136
  %v1147 = vmul.f32 %v1119, %v1143
  %v1150 = vrot.slane %v991, 2
  %v1151 = vrot.slane %v993, 2
  %v1154 = vadd.f32 %v1150, %v1146
  %v1155 = vadd.f32 %v1151, %v1147
  %v1156 = vtanh.pop %v1154
  %v1157 = vtanh.pop %v1155
  %v1160 = vrot.slane %v1117, 1
  %v1161 = vrot.slane %v1119, 1
  %v1164 = vsub.f32 1.0, %v1160
  %v1165 = vsub.f32 1.0, %v1161
  %v1166 = vmul.f32 %v1164, %v1156
  %v1167 = vmul.f32 %v1165, %v1157
  %v1168 = vmul.f32 %v1160, %v964
  %v1169 = vmul.f32 %v1161, %v965
  %v1170 = vadd.f32 %v1166, %v1168
  %v1171 = vadd.f32 %v1167, %v1169
  %v1172 = vpack.c.bf16 %v1170, %v1170
  %v1173 = vpack.c.bf16 %v1171, %v1171
  %v1176 = vunpack.c.l.b16 %v1172
  %v1177 = vunpack.c.l.b16 %v1173
  %v1178 = vpack.c.b16 %v1176, %v1176
  %v1179 = vpack.c.b16 %v1177, %v1177
  %v1180 = vrot.slane %v1178, 7
  %v1181 = vrot.slane %v1179, 7
  %vm1184 = vcmask 1041409
  %vm1185 = vsmask.f32 1280
  %vm1186 = vmand %vm1184, %vm1185
  %v1187 = vld [vmem:[%s5] sm:$0x2]
  %v1188 = vsel %vm1186, %v1180, %v1187
  %1189 = vst [vmem:[%s5] sm:$0x2] %v1188
  %v1190 = vld [vmem:[%s5 + $0x10] sm:$0x2]
  %v1191 = vsel %vm1186, %v1181, %v1190
  %1192 = vst [vmem:[%s5 + $0x10] sm:$0x2] %v1191
  %s1193 = scalar_lea.vmem [#allocation3], 3
  %v1194 = vld [vmem:[%s1193] ss:$8 sm:$0x7]
  %s1195 = scalar_lea.vmem [#allocation3], 99
  %v1196 = vld [vmem:[%s1195] ss:$8 sm:$0x7]
  %v1197 = vrot.slane %v1177, 7
  %v1198 = vsel %vm788, %v1197, %v1176
  %v1199 = vpack.c.b16 %v1198, %v1198
  %1201 = vmatprep.subr.bf16.mxu0 %v516
  %1202 = vmatpush1.bf16.msra.mxu0 %v515
  %1203 = vmatprep.subr.bf16.mxu0 %v519
  %1204 = vmatpush1.bf16.msra.mxu0 %v518
  %1205 = vmatprep.subr.bf16.mxu0 %v522
  %1206 = vmatpush1.bf16.msra.mxu0 %v521
  %1207 = vmatprep.subr.bf16.mxu0 %v525
  %1208 = vmatpush1.bf16.msra.mxu0 %v524
  %1209 = vmatprep.subr.bf16.mxu0 %v528
  %1210 = vmatpush1.bf16.msra.mxu0 %v527
  %1211 = vmatprep.subr.bf16.mxu0 %v531
  %1212 = vmatpush1.bf16.msra.mxu0 %v530
  %1213 = vmatprep.subr.bf16.mxu0 %v534
  %1214 = vmatpush1.bf16.msra.mxu0 %v533
  %1215 = vmatprep.subr.bf16.mxu0 %v537
  %1216 = vmatpush1.bf16.msra.mxu0 %v536
  %1217 = vmatprep.subr.bf16.mxu0 0
  %1218 = vmatpush1.bf16.msra.mxu0 0
  %1219 = vmatprep.subr.bf16.mxu0 0
  %1220 = vmatpush1.bf16.msra.mxu0 0
  %1221 = vmatprep.subr.bf16.mxu0 0
  %1222 = vmatpush1.bf16.msra.mxu0 0
  %1223 = vmatprep.subr.bf16.mxu0 0
  %1224 = vmatpush1.bf16.msra.mxu0 0
  %1225 = vmatprep.subr.bf16.mxu0 0
  %1226 = vmatpush1.bf16.msra.mxu0 0
  %1227 = vmatprep.subr.bf16.mxu0 0
  %1228 = vmatpush1.bf16.msra.mxu0 0
  %1229 = vmatprep.subr.bf16.mxu0 0
  %1230 = vmatpush1.bf16.msra.mxu0 0
  %1231 = vmatprep.subr.bf16.mxu0 0
  %1232 = vmatpush1.bf16.msra.mxu0 0
  %1233 = vmatprep.mubr.bf16.mxu0 0
  %1234 = vmatmul.mubr.bf16.gmra.mrb[0].mxu0 %v1199
  %v1235 = vpop.f32.mrb[0].mxu0
  %v1236 = vadd.f32 0.0, %v1235
  %v1237 = vpop.f32.mrb[0].mxu0
  %v1238 = vadd.f32 0.0, %v1237
  %v1239 = vpop.f32.mrb[0].mxu0
  %v1240 = vpop.f32.mrb[0].mxu0
  %1241 = vdwg.mxu0
  %1242 = vmatprep.subr.bf16.mxu0 0
  %1243 = vmatpush1.bf16.msra.mxu0 %v517
  %1244 = vmatprep.subr.bf16.mxu0 0
  %1245 = vmatpush1.bf16.msra.mxu0 %v520
  %1246 = vmatprep.subr.bf16.mxu0 0
  %1247 = vmatpush1.bf16.msra.mxu0 %v523
  %1248 = vmatprep.subr.bf16.mxu0 0
  %1249 = vmatpush1.bf16.msra.mxu0 %v526
  %1250 = vmatprep.subr.bf16.mxu0 0
  %1251 = vmatpush1.bf16.msra.mxu0 %v529
  %1252 = vmatprep.subr.bf16.mxu0 0
  %1253 = vmatpush1.bf16.msra.mxu0 %v532
  %1254 = vmatprep.subr.bf16.mxu0 0
  %1255 = vmatpush1.bf16.msra.mxu0 %v535
  %1256 = vmatprep.subr.bf16.mxu0 0
  %1257 = vmatpush1.bf16.msra.mxu0 %v538
  %1258 = vmatprep.subr.bf16.mxu0 0
  %1259 = vmatpush1.bf16.msra.mxu0 0
  %1260 = vmatprep.subr.bf16.mxu0 0
  %1261 = vmatpush1.bf16.msra.mxu0 0
  %1262 = vmatprep.subr.bf16.mxu0 0
  %1263 = vmatpush1.bf16.msra.mxu0 0
  %1264 = vmatprep.subr.bf16.mxu0 0
  %1265 = vmatpush1.bf16.msra.mxu0 0
  %1266 = vmatprep.subr.bf16.mxu0 0
  %1267 = vmatpush1.bf16.msra.mxu0 0
  %1268 = vmatprep.subr.bf16.mxu0 0
  %1269 = vmatpush1.bf16.msra.mxu0 0
  %1270 = vmatprep.subr.bf16.mxu0 0
  %1271 = vmatpush1.bf16.msra.mxu0 0
  %1272 = vmatprep.subr.bf16.mxu0 0
  %1273 = vmatpush1.bf16.msra.mxu0 0
  %1274 = vmatprep.mubr.bf16.mxu0 0
  %1275 = vmatmul.mubr.bf16.gmra.mrb[0].mxu0 %v1199
  %v1276 = vpop.f32.mrb[0].mxu0
  %v1277 = vadd.f32 0.0, %v1276
  %v1278 = vpop.f32.mrb[0].mxu0
  %v1279 = vpop.f32.mrb[0].mxu0
  %v1280 = vpop.f32.mrb[0].mxu0
  %1281 = vdwg.mxu0
  %v1284 = vcombine.low %v1236, %v1238
  %v1286 = vunpack.c.l.s4 1966171168
  %v1287 = vunpack.c.0.s8 %v1286
  %v1288 = vlaneseq
  %v1289 = vshrl.u32 %v1288, 7
  %v1290 = vsub.s32 %v1287, %v1289
  %v1291 = vrot.slane %v1284, %v1290
  %v1292 = vcombine.high %v1291, %v1291
  %v1294 = vunpack.c.l.s4 1966171168
  %v1295 = vunpack.c.0.s8 %v1294
  %v1296 = vlaneseq
  %v1297 = vshrl.u32 %v1296, 7
  %v1298 = vsub.s32 %v1295, %v1297
  %v1299 = vrot.slane %v1291, %v1298
  %v1301 = vunpack.c.l.s4 1966171168
  %v1302 = vunpack.c.0.s8 %v1301
  %v1303 = vlaneseq
  %v1304 = vshrl.u32 %v1303, 7
  %v1305 = vsub.s32 %v1302, %v1304
  %v1306 = vrot.slane %v1292, %v1305
  %v1309 = vadd.f32 %v1194, %v1299
  %v1310 = vadd.f32 %v1196, %v1306
  %v1311 = vxor.u32 %v1309, 2147483648
  %v1312 = vxor.u32 %v1310, 2147483648
  %v1313 = vmul.f32 %v1311, 1.442695
  %v1314 = vpow.pop %v1313
  %v1315 = vmul.f32 %v1312, 1.442695
  %v1316 = vpow.pop %v1315
  %v1317 = vadd.f32 %v1314, 1.0
  %v1318 = vadd.f32 %v1316, 1.0
  %v1319 = vrcp.pop %v1317
  %v1320 = vmul.f32 1.0, %v1319
  %v1321 = vrcp.pop %v1318
  %v1322 = vmul.f32 1.0, %v1321
  %v1323 = vadd.f32 %v1277, %v689
  %v1326 = vunpack.c.l.s4 1966171168
  %v1327 = vunpack.c.0.s8 %v1326
  %v1328 = vlaneseq
  %v1329 = vshrl.u32 %v1328, 7
  %v1330 = vsub.s32 %v1327, %v1329
  %v1331 = vrot.slane %v1323, %v1330
  %v1332 = vcombine.high %v1331, %v1331
  %v1334 = vunpack.c.l.s4 1966171168
  %v1335 = vunpack.c.0.s8 %v1334
  %v1336 = vlaneseq
  %v1337 = vshrl.u32 %v1336, 7
  %v1338 = vsub.s32 %v1335, %v1337
  %v1339 = vrot.slane %v1331, %v1338
  %v1341 = vunpack.c.l.s4 1966171168
  %v1342 = vunpack.c.0.s8 %v1341
  %v1343 = vlaneseq
  %v1344 = vshrl.u32 %v1343, 7
  %v1345 = vsub.s32 %v1342, %v1344
  %v1346 = vrot.slane %v1332, %v1345
  %v1349 = vmul.f32 %v1320, %v1339
  %v1350 = vmul.f32 %v1322, %v1346
  %v1353 = vrot.slane %v1194, 2
  %v1354 = vrot.slane %v1196, 2
  %v1357 = vadd.f32 %v1353, %v1349
  %v1358 = vadd.f32 %v1354, %v1350
  %v1359 = vtanh.pop %v1357
  %v1360 = vtanh.pop %v1358
  %v1363 = vrot.slane %v1320, 1
  %v1364 = vrot.slane %v1322, 1
  %v1367 = vsub.f32 1.0, %v1363
  %v1368 = vsub.f32 1.0, %v1364
  %v1369 = vmul.f32 %v1367, %v1359
  %v1370 = vmul.f32 %v1368, %v1360
  %v1371 = vmul.f32 %v1363, %v1170
  %v1372 = vmul.f32 %v1364, %v1171
  %v1373 = vadd.f32 %v1369, %v1371
  %v1374 = vadd.f32 %v1370, %v1372
  %v1375 = vpack.c.bf16 %v1373, %v1373
  %v1376 = vpack.c.bf16 %v1374, %v1374
  %v1379 = vunpack.c.l.b16 %v1375
  %v1380 = vunpack.c.l.b16 %v1376
  %v1381 = vpack.c.b16 %v1379, %v1379
  %v1382 = vpack.c.b16 %v1380, %v1380
  %v1384 = vshll.u32 %v1381, 16
  %v1386 = vrot.slane %v1384, 7
  %v1388 = vshll.u32 %v1382, 16
  %v1390 = vrot.slane %v1388, 7
  %vm1393 = vsmask.f32 7942
  %vm1394 = vmand %vm1184, %vm1393
  %v1395 = vld [vmem:[%s5] sm:$0x2]
  %v1396 = vsel %vm1394, %v1386, %v1395
  %1397 = vst [vmem:[%s5] sm:$0x2] %v1396
  %v1398 = vld [vmem:[%s5 + $0x10] sm:$0x2]
  %v1399 = vsel %vm1394, %v1390, %v1398
  %1400 = vst [vmem:[%s5 + $0x10] sm:$0x2] %v1399
  %s1401 = scalar_lea.vmem [#allocation3], 4
  %v1402 = vld [vmem:[%s1401] ss:$8 sm:$0x7]
  %s1403 = scalar_lea.vmem [#allocation3], 100
  %v1404 = vld [vmem:[%s1403] ss:$8 sm:$0x7]
  %v1405 = vrot.slane %v1380, 7
  %v1406 = vsel %vm788, %v1405, %v1379
  %v1407 = vpack.c.b16 %v1406, %v1406
  %1409 = vmatprep.subr.bf16.mxu0 %v516
  %1410 = vmatpush1.bf16.msra.mxu0 %v515
  %1411 = vmatprep.subr.bf16.mxu0 %v519
  %1412 = vmatpush1.bf16.msra.mxu0 %v518
  %1413 = vmatprep.subr.bf16.mxu0 %v522
  %1414 = vmatpush1.bf16.msra.mxu0 %v521
  %1415 = vmatprep.subr.bf16.mxu0 %v525
  %1416 = vmatpush1.bf16.msra.mxu0 %v524
  %1417 = vmatprep.subr.bf16.mxu0 %v528
  %1418 = vmatpush1.bf16.msra.mxu0 %v527
  %1419 = vmatprep.subr.bf16.mxu0 %v531
  %1420 = vmatpush1.bf16.msra.mxu0 %v530
  %1421 = vmatprep.subr.bf16.mxu0 %v534
  %1422 = vmatpush1.bf16.msra.mxu0 %v533
  %1423 = vmatprep.subr.bf16.mxu0 %v537
  %1424 = vmatpush1.bf16.msra.mxu0 %v536
  %1425 = vmatprep.subr.bf16.mxu0 0
  %1426 = vmatpush1.bf16.msra.mxu0 0
  %1427 = vmatprep.subr.bf16.mxu0 0
  %1428 = vmatpush1.bf16.msra.mxu0 0
  %1429 = vmatprep.subr.bf16.mxu0 0
  %1430 = vmatpush1.bf16.msra.mxu0 0
  %1431 = vmatprep.subr.bf16.mxu0 0
  %1432 = vmatpush1.bf16.msra.mxu0 0
  %1433 = vmatprep.subr.bf16.mxu0 0
  %1434 = vmatpush1.bf16.msra.mxu0 0
  %1435 = vmatprep.subr.bf16.mxu0 0
  %1436 = vmatpush1.bf16.msra.mxu0 0
  %1437 = vmatprep.subr.bf16.mxu0 0
  %1438 = vmatpush1.bf16.msra.mxu0 0
  %1439 = vmatprep.subr.bf16.mxu0 0
  %1440 = vmatpush1.bf16.msra.mxu0 0
  %1441 = vmatprep.mubr.bf16.mxu0 0
  %1442 = vmatmul.mubr.bf16.gmra.mrb[0].mxu0 %v1407
  %v1443 = vpop.f32.mrb[0].mxu0
  %v1444 = vadd.f32 0.0, %v1443
  %v1445 = vpop.f32.mrb[0].mxu0
  %v1446 = vadd.f32 0.0, %v1445
  %v1447 = vpop.f32.mrb[0].mxu0
  %v1448 = vpop.f32.mrb[0].mxu0
  %1449 = vdwg.mxu0
  %1450 = vmatprep.subr.bf16.mxu0 0
  %1451 = vmatpush1.bf16.msra.mxu0 %v517
  %1452 = vmatprep.subr.bf16.mxu0 0
  %1453 = vmatpush1.bf16.msra.mxu0 %v520
  %1454 = vmatprep.subr.bf16.mxu0 0
  %1455 = vmatpush1.bf16.msra.mxu0 %v523
  %1456 = vmatprep.subr.bf16.mxu0 0
  %1457 = vmatpush1.bf16.msra.mxu0 %v526
  %1458 = vmatprep.subr.bf16.mxu0 0
  %1459 = vmatpush1.bf16.msra.mxu0 %v529
  %1460 = vmatprep.subr.bf16.mxu0 0
  %1461 = vmatpush1.bf16.msra.mxu0 %v532
  %1462 = vmatprep.subr.bf16.mxu0 0
  %1463 = vmatpush1.bf16.msra.mxu0 %v535
  %1464 = vmatprep.subr.bf16.mxu0 0
  %1465 = vmatpush1.bf16.msra.mxu0 %v538
  %1466 = vmatprep.subr.bf16.mxu0 0
  %1467 = vmatpush1.bf16.msra.mxu0 0
  %1468 = vmatprep.subr.bf16.mxu0 0
  %1469 = vmatpush1.bf16.msra.mxu0 0
  %1470 = vmatprep.subr.bf16.mxu0 0
  %1471 = vmatpush1.bf16.msra.mxu0 0
  %1472 = vmatprep.subr.bf16.mxu0 0
  %1473 = vmatpush1.bf16.msra.mxu0 0
  %1474 = vmatprep.subr.bf16.mxu0 0
  %1475 = vmatpush1.bf16.msra.mxu0 0
  %1476 = vmatprep.subr.bf16.mxu0 0
  %1477 = vmatpush1.bf16.msra.mxu0 0
  %1478 = vmatprep.subr.bf16.mxu0 0
  %1479 = vmatpush1.bf16.msra.mxu0 0
  %1480 = vmatprep.subr.bf16.mxu0 0
  %1481 = vmatpush1.bf16.msra.mxu0 0
  %1482 = vmatprep.mubr.bf16.mxu0 0
  %1483 = vmatmul.mubr.bf16.gmra.mrb[0].mxu0 %v1407
  %v1484 = vpop.f32.mrb[0].mxu0
  %v1485 = vadd.f32 0.0, %v1484
  %v1486 = vpop.f32.mrb[0].mxu0
  %v1487 = vpop.f32.mrb[0].mxu0
  %v1488 = vpop.f32.mrb[0].mxu0
  %1489 = vdwg.mxu0
  %v1492 = vcombine.low %v1444, %v1446
  %v1494 = vunpack.c.l.s4 1966171168
  %v1495 = vunpack.c.0.s8 %v1494
  %v1496 = vlaneseq
  %v1497 = vshrl.u32 %v1496, 7
  %v1498 = vsub.s32 %v1495, %v1497
  %v1499 = vrot.slane %v1492, %v1498
  %v1500 = vcombine.high %v1499, %v1499
  %v1502 = vunpack.c.l.s4 1966171168
  %v1503 = vunpack.c.0.s8 %v1502
  %v1504 = vlaneseq
  %v1505 = vshrl.u32 %v1504, 7
  %v1506 = vsub.s32 %v1503, %v1505
  %v1507 = vrot.slane %v1499, %v1506
  %v1509 = vunpack.c.l.s4 1966171168
  %v1510 = vunpack.c.0.s8 %v1509
  %v1511 = vlaneseq
  %v1512 = vshrl.u32 %v1511, 7
  %v1513 = vsub.s32 %v1510, %v1512
  %v1514 = vrot.slane %v1500, %v1513
  %v1517 = vadd.f32 %v1402, %v1507
  %v1518 = vadd.f32 %v1404, %v1514
  %v1519 = vxor.u32 %v1517, 2147483648
  %v1520 = vxor.u32 %v1518, 2147483648
  %v1521 = vmul.f32 %v1519, 1.442695
  %v1522 = vpow.pop %v1521
  %v1523 = vmul.f32 %v1520, 1.442695
  %v1524 = vpow.pop %v1523
  %v1525 = vadd.f32 %v1522, 1.0
  %v1526 = vadd.f32 %v1524, 1.0
  %v1527 = vrcp.pop %v1525
  %v1528 = vmul.f32 1.0, %v1527
  %v1529 = vrcp.pop %v1526
  %v1530 = vmul.f32 1.0, %v1529
  %v1531 = vadd.f32 %v1485, %v689
  %v1534 = vunpack.c.l.s4 1966171168
  %v1535 = vunpack.c.0.s8 %v1534
  %v1536 = vlaneseq
  %v1537 = vshrl.u32 %v1536, 7
  %v1538 = vsub.s32 %v1535, %v1537
  %v1539 = vrot.slane %v1531, %v1538
  %v1540 = vcombine.high %v1539, %v1539
  %v1542 = vunpack.c.l.s4 1966171168
  %v1543 = vunpack.c.0.s8 %v1542
  %v1544 = vlaneseq
  %v1545 = vshrl.u32 %v1544, 7
  %v1546 = vsub.s32 %v1543, %v1545
  %v1547 = vrot.slane %v1539, %v1546
  %v1549 = vunpack.c.l.s4 1966171168
  %v1550 = vunpack.c.0.s8 %v1549
  %v1551 = vlaneseq
  %v1552 = vshrl.u32 %v1551, 7
  %v1553 = vsub.s32 %v1550, %v1552
  %v1554 = vrot.slane %v1540, %v1553
  %v1557 = vmul.f32 %v1528, %v1547
  %v1558 = vmul.f32 %v1530, %v1554
  %v1561 = vrot.slane %v1402, 2
  %v1562 = vrot.slane %v1404, 2
  %v1565 = vadd.f32 %v1561, %v1557
  %v1566 = vadd.f32 %v1562, %v1558
  %v1567 = vtanh.pop %v1565
  %v1568 = vtanh.pop %v1566
  %v1571 = vrot.slane %v1528, 1
  %v1572 = vrot.slane %v1530, 1
  %v1575 = vsub.f32 1.0, %v1571
  %v1576 = vsub.f32 1.0, %v1572
  %v1577 = vmul.f32 %v1575, %v1567
  %v1578 = vmul.f32 %v1576, %v1568
  %v1579 = vmul.f32 %v1571, %v1373
  %v1580 = vmul.f32 %v1572, %v1374
  %v1581 = vadd.f32 %v1577, %v1579
  %v1582 = vadd.f32 %v1578, %v1580
  %v1583 = vpack.c.bf16 %v1581, %v1581
  %v1584 = vpack.c.bf16 %v1582, %v1582
  %v1587 = vunpack.c.l.b16 %v1583
  %v1588 = vunpack.c.l.b16 %v1584
  %v1589 = vpack.c.b16 %v1587, %v1587
  %v1590 = vpack.c.b16 %v1588, %v1588
  %v1591 = vrot.slane %v1589, 6
  %v1592 = vrot.slane %v1590, 6
  %vm1595 = vcmask 1042434
  %vm1596 = vsmask.f32 2304
  %vm1597 = vmand %vm1595, %vm1596
  %v1598 = vld [vmem:[%s5] sm:$0x4]
  %v1599 = vsel %vm1597, %v1591, %v1598
  %1600 = vst [vmem:[%s5] sm:$0x4] %v1599
  %v1601 = vld [vmem:[%s5 + $0x10] sm:$0x4]
  %v1602 = vsel %vm1597, %v1592, %v1601
  %1603 = vst [vmem:[%s5 + $0x10] sm:$0x4] %v1602
  %s1604 = scalar_lea.vmem [#allocation3], 5
  %v1605 = vld [vmem:[%s1604] ss:$8 sm:$0x7]
  %s1606 = scalar_lea.vmem [#allocation3], 101
  %v1607 = vld [vmem:[%s1606] ss:$8 sm:$0x7]
  %v1608 = vrot.slane %v1588, 7
  %v1609 = vsel %vm788, %v1608, %v1587
  %v1610 = vpack.c.b16 %v1609, %v1609
  %1612 = vmatprep.subr.bf16.mxu0 %v516
  %1613 = vmatpush1.bf16.msra.mxu0 %v515
  %1614 = vmatprep.subr.bf16.mxu0 %v519
  %1615 = vmatpush1.bf16.msra.mxu0 %v518
  %1616 = vmatprep.subr.bf16.mxu0 %v522
  %1617 = vmatpush1.bf16.msra.mxu0 %v521
  %1618 = vmatprep.subr.bf16.mxu0 %v525
  %1619 = vmatpush1.bf16.msra.mxu0 %v524
  %1620 = vmatprep.subr.bf16.mxu0 %v528
  %1621 = vmatpush1.bf16.msra.mxu0 %v527
  %1622 = vmatprep.subr.bf16.mxu0 %v531
  %1623 = vmatpush1.bf16.msra.mxu0 %v530
  %1624 = vmatprep.subr.bf16.mxu0 %v534
  %1625 = vmatpush1.bf16.msra.mxu0 %v533
  %1626 = vmatprep.subr.bf16.mxu0 %v537
  %1627 = vmatpush1.bf16.msra.mxu0 %v536
  %1628 = vmatprep.subr.bf16.mxu0 0
  %1629 = vmatpush1.bf16.msra.mxu0 0
  %1630 = vmatprep.subr.bf16.mxu0 0
  %1631 = vmatpush1.bf16.msra.mxu0 0
  %1632 = vmatprep.subr.bf16.mxu0 0
  %1633 = vmatpush1.bf16.msra.mxu0 0
  %1634 = vmatprep.subr.bf16.mxu0 0
  %1635 = vmatpush1.bf16.msra.mxu0 0
  %1636 = vmatprep.subr.bf16.mxu0 0
  %1637 = vmatpush1.bf16.msra.mxu0 0
  %1638 = vmatprep.subr.bf16.mxu0 0
  %1639 = vmatpush1.bf16.msra.mxu0 0
  %1640 = vmatprep.subr.bf16.mxu0 0
  %1641 = vmatpush1.bf16.msra.mxu0 0
  %1642 = vmatprep.subr.bf16.mxu0 0
  %1643 = vmatpush1.bf16.msra.mxu0 0
  %1644 = vmatprep.mubr.bf16.mxu0 0
  %1645 = vmatmul.mubr.bf16.gmra.mrb[0].mxu0 %v1610
  %v1646 = vpop.f32.mrb[0].mxu0
  %v1647 = vadd.f32 0.0, %v1646
  %v1648 = vpop.f32.mrb[0].mxu0
  %v1649 = vadd.f32 0.0, %v1648
  %v1650 = vpop.f32.mrb[0].mxu0
  %v1651 = vpop.f32.mrb[0].mxu0
  %1652 = vdwg.mxu0
  %1653 = vmatprep.subr.bf16.mxu0 0
  %1654 = vmatpush1.bf16.msra.mxu0 %v517
  %1655 = vmatprep.subr.bf16.mxu0 0
  %1656 = vmatpush1.bf16.msra.mxu0 %v520
  %1657 = vmatprep.subr.bf16.mxu0 0
  %1658 = vmatpush1.bf16.msra.mxu0 %v523
  %1659 = vmatprep.subr.bf16.mxu0 0
  %1660 = vmatpush1.bf16.msra.mxu0 %v526
  %1661 = vmatprep.subr.bf16.mxu0 0
  %1662 = vmatpush1.bf16.msra.mxu0 %v529
  %1663 = vmatprep.subr.bf16.mxu0 0
  %1664 = vmatpush1.bf16.msra.mxu0 %v532
  %1665 = vmatprep.subr.bf16.mxu0 0
  %1666 = vmatpush1.bf16.msra.mxu0 %v535
  %1667 = vmatprep.subr.bf16.mxu0 0
  %1668 = vmatpush1.bf16.msra.mxu0 %v538
  %1669 = vmatprep.subr.bf16.mxu0 0
  %1670 = vmatpush1.bf16.msra.mxu0 0
  %1671 = vmatprep.subr.bf16.mxu0 0
  %1672 = vmatpush1.bf16.msra.mxu0 0
  %1673 = vmatprep.subr.bf16.mxu0 0
  %1674 = vmatpush1.bf16.msra.mxu0 0
  %1675 = vmatprep.subr.bf16.mxu0 0
  %1676 = vmatpush1.bf16.msra.mxu0 0
  %1677 = vmatprep.subr.bf16.mxu0 0
  %1678 = vmatpush1.bf16.msra.mxu0 0
  %1679 = vmatprep.subr.bf16.mxu0 0
  %1680 = vmatpush1.bf16.msra.mxu0 0
  %1681 = vmatprep.subr.bf16.mxu0 0
  %1682 = vmatpush1.bf16.msra.mxu0 0
  %1683 = vmatprep.subr.bf16.mxu0 0
  %1684 = vmatpush1.bf16.msra.mxu0 0
  %1685 = vmatprep.mubr.bf16.mxu0 0
  %1686 = vmatmul.mubr.bf16.gmra.mrb[0].mxu0 %v1610
  %v1687 = vpop.f32.mrb[0].mxu0
  %v1688 = vadd.f32 0.0, %v1687
  %v1689 = vpop.f32.mrb[0].mxu0
  %v1690 = vpop.f32.mrb[0].mxu0
  %v1691 = vpop.f32.mrb[0].mxu0
  %1692 = vdwg.mxu0
  %v1695 = vcombine.low %v1647, %v1649
  %v1697 = vunpack.c.l.s4 1966171168
  %v1698 = vunpack.c.0.s8 %v1697
  %v1699 = vlaneseq
  %v1700 = vshrl.u32 %v1699, 7
  %v1701 = vsub.s32 %v1698, %v1700
  %v1702 = vrot.slane %v1695, %v1701
  %v1703 = vcombine.high %v1702, %v1702
  %v1705 = vunpack.c.l.s4 1966171168
  %v1706 = vunpack.c.0.s8 %v1705
  %v1707 = vlaneseq
  %v1708 = vshrl.u32 %v1707, 7
  %v1709 = vsub.s32 %v1706, %v1708
  %v1710 = vrot.slane %v1702, %v1709
  %v1712 = vunpack.c.l.s4 1966171168
  %v1713 = vunpack.c.0.s8 %v1712
  %v1714 = vlaneseq
  %v1715 = vshrl.u32 %v1714, 7
  %v1716 = vsub.s32 %v1713, %v1715
  %v1717 = vrot.slane %v1703, %v1716
  %v1720 = vadd.f32 %v1605, %v1710
  %v1721 = vadd.f32 %v1607, %v1717
  %v1722 = vxor.u32 %v1720, 2147483648
  %v1723 = vxor.u32 %v1721, 2147483648
  %v1724 = vmul.f32 %v1722, 1.442695
  %v1725 = vpow.pop %v1724
  %v1726 = vmul.f32 %v1723, 1.442695
  %v1727 = vpow.pop %v1726
  %v1728 = vadd.f32 %v1725, 1.0
  %v1729 = vadd.f32 %v1727, 1.0
  %v1730 = vrcp.pop %v1728
  %v1731 = vmul.f32 1.0, %v1730
  %v1732 = vrcp.pop %v1729
  %v1733 = vmul.f32 1.0, %v1732
  %v1734 = vadd.f32 %v1688, %v689
  %v1737 = vunpack.c.l.s4 1966171168
  %v1738 = vunpack.c.0.s8 %v1737
  %v1739 = vlaneseq
  %v1740 = vshrl.u32 %v1739, 7
  %v1741 = vsub.s32 %v1738, %v1740
  %v1742 = vrot.slane %v1734, %v1741
  %v1743 = vcombine.high %v1742, %v1742
  %v1745 = vunpack.c.l.s4 1966171168
  %v1746 = vunpack.c.0.s8 %v1745
  %v1747 = vlaneseq
  %v1748 = vshrl.u32 %v1747, 7
  %v1749 = vsub.s32 %v1746, %v1748
  %v1750 = vrot.slane %v1742, %v1749
  %v1752 = vunpack.c.l.s4 1966171168
  %v1753 = vunpack.c.0.s8 %v1752
  %v1754 = vlaneseq
  %v1755 = vshrl.u32 %v1754, 7
  %v1756 = vsub.s32 %v1753, %v1755
  %v1757 = vrot.slane %v1743, %v1756
  %v1760 = vmul.f32 %v1731, %v1750
  %v1761 = vmul.f32 %v1733, %v1757
  %v1764 = vrot.slane %v1605, 2
  %v1765 = vrot.slane %v1607, 2
  %v1768 = vadd.f32 %v1764, %v1760
  %v1769 = vadd.f32 %v1765, %v1761
  %v1770 = vtanh.pop %v1768
  %v1771 = vtanh.pop %v1769
  %v1774 = vrot.slane %v1731, 1
  %v1775 = vrot.slane %v1733, 1
  %v1778 = vsub.f32 1.0, %v1774
  %v1779 = vsub.f32 1.0, %v1775
  %v1780 = vmul.f32 %v1778, %v1770
  %v1781 = vmul.f32 %v1779, %v1771
  %v1782 = vmul.f32 %v1774, %v1581
  %v1783 = vmul.f32 %v1775, %v1582
  %v1784 = vadd.f32 %v1780, %v1782
  %v1785 = vadd.f32 %v1781, %v1783
  %v1786 = vpack.c.bf16 %v1784, %v1784
  %v1787 = vpack.c.bf16 %v1785, %v1785
  %v1790 = vunpack.c.l.b16 %v1786
  %v1791 = vunpack.c.l.b16 %v1787
  %v1792 = vpack.c.b16 %v1790, %v1790
  %v1793 = vpack.c.b16 %v1791, %v1791
  %v1795 = vshll.u32 %v1792, 16
  %v1797 = vrot.slane %v1795, 6
  %v1799 = vshll.u32 %v1793, 16
  %v1801 = vrot.slane %v1799, 6
  %vm1804 = vsmask.f32 7946
  %vm1805 = vmand %vm1595, %vm1804
  %v1806 = vld [vmem:[%s5] sm:$0x4]
  %v1807 = vsel %vm1805, %v1797, %v1806
  %1808 = vst [vmem:[%s5] sm:$0x4] %v1807
  %v1809 = vld [vmem:[%s5 + $0x10] sm:$0x4]
  %v1810 = vsel %vm1805, %v1801, %v1809
  %1811 = vst [vmem:[%s5 + $0x10] sm:$0x4] %v1810
  %s1812 = scalar_lea.vmem [#allocation3], 6
  %v1813 = vld [vmem:[%s1812] ss:$8 sm:$0x7]
  %s1814 = scalar_lea.vmem [#allocation3], 102
  %v1815 = vld [vmem:[%s1814] ss:$8 sm:$0x7]
  %v1816 = vrot.slane %v1791, 7
  %v1817 = vsel %vm788, %v1816, %v1790
  %v1818 = vpack.c.b16 %v1817, %v1817
  %1820 = vmatprep.subr.bf16.mxu0 %v516
  %1821 = vmatpush1.bf16.msra.mxu0 %v515
  %1822 = vmatprep.subr.bf16.mxu0 %v519
  %1823 = vmatpush1.bf16.msra.mxu0 %v518
  %1824 = vmatprep.subr.bf16.mxu0 %v522
  %1825 = vmatpush1.bf16.msra.mxu0 %v521
  %1826 = vmatprep.subr.bf16.mxu0 %v525
  %1827 = vmatpush1.bf16.msra.mxu0 %v524
  %1828 = vmatprep.subr.bf16.mxu0 %v528
  %1829 = vmatpush1.bf16.msra.mxu0 %v527
  %1830 = vmatprep.subr.bf16.mxu0 %v531
  %1831 = vmatpush1.bf16.msra.mxu0 %v530
  %1832 = vmatprep.subr.bf16.mxu0 %v534
  %1833 = vmatpush1.bf16.msra.mxu0 %v533
  %1834 = vmatprep.subr.bf16.mxu0 %v537
  %1835 = vmatpush1.bf16.msra.mxu0 %v536
  %1836 = vmatprep.subr.bf16.mxu0 0
  %1837 = vmatpush1.bf16.msra.mxu0 0
  %1838 = vmatprep.subr.bf16.mxu0 0
  %1839 = vmatpush1.bf16.msra.mxu0 0
  %1840 = vmatprep.subr.bf16.mxu0 0
  %1841 = vmatpush1.bf16.msra.mxu0 0
  %1842 = vmatprep.subr.bf16.mxu0 0
  %1843 = vmatpush1.bf16.msra.mxu0 0
  %1844 = vmatprep.subr.bf16.mxu0 0
  %1845 = vmatpush1.bf16.msra.mxu0 0
  %1846 = vmatprep.subr.bf16.mxu0 0
  %1847 = vmatpush1.bf16.msra.mxu0 0
  %1848 = vmatprep.subr.bf16.mxu0 0
  %1849 = vmatpush1.bf16.msra.mxu0 0
  %1850 = vmatprep.subr.bf16.mxu0 0
  %1851 = vmatpush1.bf16.msra.mxu0 0
  %1852 = vmatprep.mubr.bf16.mxu0 0
  %1853 = vmatmul.mubr.bf16.gmra.mrb[0].mxu0 %v1818
  %v1854 = vpop.f32.mrb[0].mxu0
  %v1855 = vadd.f32 0.0, %v1854
  %v1856 = vpop.f32.mrb[0].mxu0
  %v1857 = vadd.f32 0.0, %v1856
  %v1858 = vpop.f32.mrb[0].mxu0
  %v1859 = vpop.f32.mrb[0].mxu0
  %1860 = vdwg.mxu0
  %1861 = vmatprep.subr.bf16.mxu0 0
  %1862 = vmatpush1.bf16.msra.mxu0 %v517
  %1863 = vmatprep.subr.bf16.mxu0 0
  %1864 = vmatpush1.bf16.msra.mxu0 %v520
  %1865 = vmatprep.subr.bf16.mxu0 0
  %1866 = vmatpush1.bf16.msra.mxu0 %v523
  %1867 = vmatprep.subr.bf16.mxu0 0
  %1868 = vmatpush1.bf16.msra.mxu0 %v526
  %1869 = vmatprep.subr.bf16.mxu0 0
  %1870 = vmatpush1.bf16.msra.mxu0 %v529
  %1871 = vmatprep.subr.bf16.mxu0 0
  %1872 = vmatpush1.bf16.msra.mxu0 %v532
  %1873 = vmatprep.subr.bf16.mxu0 0
  %1874 = vmatpush1.bf16.msra.mxu0 %v535
  %1875 = vmatprep.subr.bf16.mxu0 0
  %1876 = vmatpush1.bf16.msra.mxu0 %v538
  %1877 = vmatprep.subr.bf16.mxu0 0
  %1878 = vmatpush1.bf16.msra.mxu0 0
  %1879 = vmatprep.subr.bf16.mxu0 0
  %1880 = vmatpush1.bf16.msra.mxu0 0
  %1881 = vmatprep.subr.bf16.mxu0 0
  %1882 = vmatpush1.bf16.msra.mxu0 0
  %1883 = vmatprep.subr.bf16.mxu0 0
  %1884 = vmatpush1.bf16.msra.mxu0 0
  %1885 = vmatprep.subr.bf16.mxu0 0
  %1886 = vmatpush1.bf16.msra.mxu0 0
  %1887 = vmatprep.subr.bf16.mxu0 0
  %1888 = vmatpush1.bf16.msra.mxu0 0
  %1889 = vmatprep.subr.bf16.mxu0 0
  %1890 = vmatpush1.bf16.msra.mxu0 0
  %1891 = vmatprep.subr.bf16.mxu0 0
  %1892 = vmatpush1.bf16.msra.mxu0 0
  %1893 = vmatprep.mubr.bf16.mxu0 0
  %1894 = vmatmul.mubr.bf16.gmra.mrb[0].mxu0 %v1818
  %v1895 = vpop.f32.mrb[0].mxu0
  %v1896 = vadd.f32 0.0, %v1895
  %v1897 = vpop.f32.mrb[0].mxu0
  %v1898 = vpop.f32.mrb[0].mxu0
  %v1899 = vpop.f32.mrb[0].mxu0
  %1900 = vdwg.mxu0
  %v1903 = vcombine.low %v1855, %v1857
  %v1905 = vunpack.c.l.s4 1966171168
  %v1906 = vunpack.c.0.s8 %v1905
  %v1907 = vlaneseq
  %v1908 = vshrl.u32 %v1907, 7
  %v1909 = vsub.s32 %v1906, %v1908
  %v1910 = vrot.slane %v1903, %v1909
  %v1911 = vcombine.high %v1910, %v1910
  %v1913 = vunpack.c.l.s4 1966171168
  %v1914 = vunpack.c.0.s8 %v1913
  %v1915 = vlaneseq
  %v1916 = vshrl.u32 %v1915, 7
  %v1917 = vsub.s32 %v1914, %v1916
  %v1918 = vrot.slane %v1910, %v1917
  %v1920 = vunpack.c.l.s4 1966171168
  %v1921 = vunpack.c.0.s8 %v1920
  %v1922 = vlaneseq
  %v1923 = vshrl.u32 %v1922, 7
  %v1924 = vsub.s32 %v1921, %v1923
  %v1925 = vrot.slane %v1911, %v1924
  %v1928 = vadd.f32 %v1813, %v1918
  %v1929 = vadd.f32 %v1815, %v1925
  %v1930 = vxor.u32 %v1928, 2147483648
  %v1931 = vxor.u32 %v1929, 2147483648
  %v1932 = vmul.f32 %v1930, 1.442695
  %v1933 = vpow.pop %v1932
  %v1934 = vmul.f32 %v1931, 1.442695
  %v1935 = vpow.pop %v1934
  %v1936 = vadd.f32 %v1933, 1.0
  %v1937 = vadd.f32 %v1935, 1.0
  %v1938 = vrcp.pop %v1936
  %v1939 = vmul.f32 1.0, %v1938
  %v1940 = vrcp.pop %v1937
  %v1941 = vmul.f32 1.0, %v1940
  %v1942 = vadd.f32 %v1896, %v689
  %v1945 = vunpack.c.l.s4 1966171168
  %v1946 = vunpack.c.0.s8 %v1945
  %v1947 = vlaneseq
  %v1948 = vshrl.u32 %v1947, 7
  %v1949 = vsub.s32 %v1946, %v1948
  %v1950 = vrot.slane %v1942, %v1949
  %v1951 = vcombine.high %v1950, %v1950
  %v1953 = vunpack.c.l.s4 1966171168
  %v1954 = vunpack.c.0.s8 %v1953
  %v1955 = vlaneseq
  %v1956 = vshrl.u32 %v1955, 7
  %v1957 = vsub.s32 %v1954, %v1956
  %v1958 = vrot.slane %v1950, %v1957
  %v1960 = vunpack.c.l.s4 1966171168
  %v1961 = vunpack.c.0.s8 %v1960
  %v1962 = vlaneseq
  %v1963 = vshrl.u32 %v1962, 7
  %v1964 = vsub.s32 %v1961, %v1963
  %v1965 = vrot.slane %v1951, %v1964
  %v1968 = vmul.f32 %v1939, %v1958
  %v1969 = vmul.f32 %v1941, %v1965
  %v1972 = vrot.slane %v1813, 2
  %v1973 = vrot.slane %v1815, 2
  %v1976 = vadd.f32 %v1972, %v1968
  %v1977 = vadd.f32 %v1973, %v1969
  %v1978 = vtanh.pop %v1976
  %v1979 = vtanh.pop %v1977
  %v1982 = vrot.slane %v1939, 1
  %v1983 = vrot.slane %v1941, 1
  %v1986 = vsub.f32 1.0, %v1982
  %v1987 = vsub.f32 1.0, %v1983
  %v1988 = vmul.f32 %v1986, %v1978
  %v1989 = vmul.f32 %v1987, %v1979
  %v1990 = vmul.f32 %v1982, %v1784
  %v1991 = vmul.f32 %v1983, %v1785
  %v1992 = vadd.f32 %v1988, %v1990
  %v1993 = vadd.f32 %v1989, %v1991
  %v1994 = vpack.c.bf16 %v1992, %v1992
  %v1995 = vpack.c.bf16 %v1993, %v1993
  %v1998 = vunpack.c.l.b16 %v1994
  %v1999 = vunpack.c.l.b16 %v1995
  %v2000 = vpack.c.b16 %v1998, %v1998
  %v2001 = vpack.c.b16 %v1999, %v1999
  %v2002 = vrot.slane %v2000, 5
  %v2003 = vrot.slane %v2001, 5
  %vm2006 = vcmask 1043459
  %vm2007 = vsmask.f32 3328
  %vm2008 = vmand %vm2006, %vm2007
  %v2009 = vld [vmem:[%s5] sm:$0x8]
  %v2010 = vsel %vm2008, %v2002, %v2009
  %2011 = vst [vmem:[%s5] sm:$0x8] %v2010
  %v2012 = vld [vmem:[%s5 + $0x10] sm:$0x8]
  %v2013 = vsel %vm2008, %v2003, %v2012
  %2014 = vst [vmem:[%s5 + $0x10] sm:$0x8] %v2013
  %s2015 = scalar_lea.vmem [#allocation3], 7
  %v2016 = vld [vmem:[%s2015] ss:$8 sm:$0x7]
  %s2017 = scalar_lea.vmem [#allocation3], 103
  %v2018 = vld [vmem:[%s2017] ss:$8 sm:$0x7]
  %v2019 = vrot.slane %v1999, 7
  %v2020 = vsel %vm788, %v2019, %v1998
  %v2021 = vpack.c.b16 %v2020, %v2020
  %2023 = vmatprep.subr.bf16.mxu0 %v516
  %2024 = vmatpush1.bf16.msra.mxu0 %v515
  %2025 = vmatprep.subr.bf16.mxu0 %v519
  %2026 = vmatpush1.bf16.msra.mxu0 %v518
  %2027 = vmatprep.subr.bf16.mxu0 %v522
  %2028 = vmatpush1.bf16.msra.mxu0 %v521
  %2029 = vmatprep.subr.bf16.mxu0 %v525
  %2030 = vmatpush1.bf16.msra.mxu0 %v524
  %2031 = vmatprep.subr.bf16.mxu0 %v528
  %2032 = vmatpush1.bf16.msra.mxu0 %v527
  %2033 = vmatprep.subr.bf16.mxu0 %v531
  %2034 = vmatpush1.bf16.msra.mxu0 %v530
  %2035 = vmatprep.subr.bf16.mxu0 %v534
  %2036 = vmatpush1.bf16.msra.mxu0 %v533
  %2037 = vmatprep.subr.bf16.mxu0 %v537
  %2038 = vmatpush1.bf16.msra.mxu0 %v536
  %2039 = vmatprep.subr.bf16.mxu0 0
  %2040 = vmatpush1.bf16.msra.mxu0 0
  %2041 = vmatprep.subr.bf16.mxu0 0
  %2042 = vmatpush1.bf16.msra.mxu0 0
  %2043 = vmatprep.subr.bf16.mxu0 0
  %2044 = vmatpush1.bf16.msra.mxu0 0
  %2045 = vmatprep.subr.bf16.mxu0 0
  %2046 = vmatpush1.bf16.msra.mxu0 0
  %2047 = vmatprep.subr.bf16.mxu0 0
  %2048 = vmatpush1.bf16.msra.mxu0 0
  %2049 = vmatprep.subr.bf16.mxu0 0
  %2050 = vmatpush1.bf16.msra.mxu0 0
  %2051 = vmatprep.subr.bf16.mxu0 0
  %2052 = vmatpush1.bf16.msra.mxu0 0
  %2053 = vmatprep.subr.bf16.mxu0 0
  %2054 = vmatpush1.bf16.msra.mxu0 0
  %2055 = vmatprep.mubr.bf16.mxu0 0
  %2056 = vmatmul.mubr.bf16.gmra.mrb[0].mxu0 %v2021
  %v2057 = vpop.f32.mrb[0].mxu0
  %v2058 = vadd.f32 0.0, %v2057
  %v2059 = vpop.f32.mrb[0].mxu0
  %v2060 = vadd.f32 0.0, %v2059
  %v2061 = vpop.f32.mrb[0].mxu0
  %v2062 = vpop.f32.mrb[0].mxu0
  %2063 = vdwg.mxu0
  %2064 = vmatprep.subr.bf16.mxu0 0
  %2065 = vmatpush1.bf16.msra.mxu0 %v517
  %2066 = vmatprep.subr.bf16.mxu0 0
  %2067 = vmatpush1.bf16.msra.mxu0 %v520
  %2068 = vmatprep.subr.bf16.mxu0 0
  %2069 = vmatpush1.bf16.msra.mxu0 %v523
  %2070 = vmatprep.subr.bf16.mxu0 0
  %2071 = vmatpush1.bf16.msra.mxu0 %v526
  %2072 = vmatprep.subr.bf16.mxu0 0
  %2073 = vmatpush1.bf16.msra.mxu0 %v529
  %2074 = vmatprep.subr.bf16.mxu0 0
  %2075 = vmatpush1.bf16.msra.mxu0 %v532
  %2076 = vmatprep.subr.bf16.mxu0 0
  %2077 = vmatpush1.bf16.msra.mxu0 %v535
  %2078 = vmatprep.subr.bf16.mxu0 0
  %2079 = vmatpush1.bf16.msra.mxu0 %v538
  %2080 = vmatprep.subr.bf16.mxu0 0
  %2081 = vmatpush1.bf16.msra.mxu0 0
  %2082 = vmatprep.subr.bf16.mxu0 0
  %2083 = vmatpush1.bf16.msra.mxu0 0
  %2084 = vmatprep.subr.bf16.mxu0 0
  %2085 = vmatpush1.bf16.msra.mxu0 0
  %2086 = vmatprep.subr.bf16.mxu0 0
  %2087 = vmatpush1.bf16.msra.mxu0 0
  %2088 = vmatprep.subr.bf16.mxu0 0
  %2089 = vmatpush1.bf16.msra.mxu0 0
  %2090 = vmatprep.subr.bf16.mxu0 0
  %2091 = vmatpush1.bf16.msra.mxu0 0
  %2092 = vmatprep.subr.bf16.mxu0 0
  %2093 = vmatpush1.bf16.msra.mxu0 0
  %2094 = vmatprep.subr.bf16.mxu0 0
  %2095 = vmatpush1.bf16.msra.mxu0 0
  %2096 = vmatprep.mubr.bf16.mxu0 0
  %2097 = vmatmul.mubr.bf16.gmra.mrb[0].mxu0 %v2021
  %v2098 = vpop.f32.mrb[0].mxu0
  %v2099 = vadd.f32 0.0, %v2098
  %v2100 = vpop.f32.mrb[0].mxu0
  %v2101 = vpop.f32.mrb[0].mxu0
  %v2102 = vpop.f32.mrb[0].mxu0
  %2103 = vdwg.mxu0
  %v2106 = vcombine.low %v2058, %v2060
  %v2108 = vunpack.c.l.s4 1966171168
  %v2109 = vunpack.c.0.s8 %v2108
  %v2110 = vlaneseq
  %v2111 = vshrl.u32 %v2110, 7
  %v2112 = vsub.s32 %v2109, %v2111
  %v2113 = vrot.slane %v2106, %v2112
  %v2114 = vcombine.high %v2113, %v2113
  %v2116 = vunpack.c.l.s4 1966171168
  %v2117 = vunpack.c.0.s8 %v2116
  %v2118 = vlaneseq
  %v2119 = vshrl.u32 %v2118, 7
  %v2120 = vsub.s32 %v2117, %v2119
  %v2121 = vrot.slane %v2113, %v2120
  %v2123 = vunpack.c.l.s4 1966171168
  %v2124 = vunpack.c.0.s8 %v2123
  %v2125 = vlaneseq
  %v2126 = vshrl.u32 %v2125, 7
  %v2127 = vsub.s32 %v2124, %v2126
  %v2128 = vrot.slane %v2114, %v2127
  %v2131 = vadd.f32 %v2016, %v2121
  %v2132 = vadd.f32 %v2018, %v2128
  %v2133 = vxor.u32 %v2131, 2147483648
  %v2134 = vxor.u32 %v2132, 2147483648
  %v2135 = vmul.f32 %v2133, 1.442695
  %v2136 = vpow.pop %v2135
  %v2137 = vmul.f32 %v2134, 1.442695
  %v2138 = vpow.pop %v2137
  %v2139 = vadd.f32 %v2136, 1.0
  %v2140 = vadd.f32 %v2138, 1.0
  %v2141 = vrcp.pop %v2139
  %v2142 = vmul.f32 1.0, %v2141
  %v2143 = vrcp.pop %v2140
  %v2144 = vmul.f32 1.0, %v2143
  %v2145 = vadd.f32 %v2099, %v689
  %v2148 = vunpack.c.l.s4 1966171168
  %v2149 = vunpack.c.0.s8 %v2148
  %v2150 = vlaneseq
  %v2151 = vshrl.u32 %v2150, 7
  %v2152 = vsub.s32 %v2149, %v2151
  %v2153 = vrot.slane %v2145, %v2152
  %v2154 = vcombine.high %v2153, %v2153
  %v2156 = vunpack.c.l.s4 1966171168
  %v2157 = vunpack.c.0.s8 %v2156
  %v2158 = vlaneseq
  %v2159 = vshrl.u32 %v2158, 7
  %v2160 = vsub.s32 %v2157, %v2159
  %v2161 = vrot.slane %v2153, %v2160
  %v2163 = vunpack.c.l.s4 1966171168
  %v2164 = vunpack.c.0.s8 %v2163
  %v2165 = vlaneseq
  %v2166 = vshrl.u32 %v2165, 7
  %v2167 = vsub.s32 %v2164, %v2166
  %v2168 = vrot.slane %v2154, %v2167
  %v2171 = vmul.f32 %v2142, %v2161
  %v2172 = vmul.f32 %v2144, %v2168
  %v2175 = vrot.slane %v2016, 2
  %v2176 = vrot.slane %v2018, 2
  %v2179 = vadd.f32 %v2175, %v2171
  %v2180 = vadd.f32 %v2176, %v2172
  %v2181 = vtanh.pop %v2179
  %v2182 = vtanh.pop %v2180
  %v2185 = vrot.slane %v2142, 1
  %v2186 = vrot.slane %v2144, 1
  %v2189 = vsub.f32 1.0, %v2185
  %v2190 = vsub.f32 1.0, %v2186
  %v2191 = vmul.f32 %v2189, %v2181
  %v2192 = vmul.f32 %v2190, %v2182
  %v2193 = vmul.f32 %v2185, %v1992
  %v2194 = vmul.f32 %v2186, %v1993
  %v2195 = vadd.f32 %v2191, %v2193
  %v2196 = vadd.f32 %v2192, %v2194
  %v2197 = vpack.c.bf16 %v2195, %v2195
  %v2198 = vpack.c.bf16 %v2196, %v2196
  %v2201 = vunpack.c.l.b16 %v2197
  %v2202 = vunpack.c.l.b16 %v2198
  %v2203 = vpack.c.b16 %v2201, %v2201
  %v2204 = vpack.c.b16 %v2202, %v2202
  %v2206 = vshll.u32 %v2203, 16
  %v2208 = vrot.slane %v2206, 5
  %v2210 = vshll.u32 %v2204, 16
  %v2212 = vrot.slane %v2210, 5
  %vm2215 = vsmask.f32 7950
  %vm2216 = vmand %vm2006, %vm2215
  %v2217 = vld [vmem:[%s5] sm:$0x8]
  %v2218 = vsel %vm2216, %v2208, %v2217
  %2219 = vst [vmem:[%s5] sm:$0x8] %v2218
  %v2220 = vld [vmem:[%s5 + $0x10] sm:$0x8]
  %v2221 = vsel %vm2216, %v2212, %v2220
  %2222 = vst [vmem:[%s5 + $0x10] sm:$0x8] %v2221
  %s2223 = scalar_lea.vmem [#allocation3], 24
  %v2224 = vld [vmem:[%s2223] ss:$8 sm:$0x7]
  %s2225 = scalar_lea.vmem [#allocation3], 120
  %v2226 = vld [vmem:[%s2225] ss:$8 sm:$0x7]
  %v2227 = vrot.slane %v2202, 7
  %v2228 = vsel %vm788, %v2227, %v2201
  %v2229 = vpack.c.b16 %v2228, %v2228
  %2231 = vmatprep.subr.bf16.mxu0 %v516
  %2232 = vmatpush1.bf16.msra.mxu0 %v515
  %2233 = vmatprep.subr.bf16.mxu0 %v519
  %2234 = vmatpush1.bf16.msra.mxu0 %v518
  %2235 = vmatprep.subr.bf16.mxu0 %v522
  %2236 = vmatpush1.bf16.msra.mxu0 %v521
  %2237 = vmatprep.subr.bf16.mxu0 %v525
  %2238 = vmatpush1.bf16.msra.mxu0 %v524
  %2239 = vmatprep.subr.bf16.mxu0 %v528
  %2240 = vmatpush1.bf16.msra.mxu0 %v527
  %2241 = vmatprep.subr.bf16.mxu0 %v531
  %2242 = vmatpush1.bf16.msra.mxu0 %v530
  %2243 = vmatprep.subr.bf16.mxu0 %v534
  %2244 = vmatpush1.bf16.msra.mxu0 %v533
  %2245 = vmatprep.subr.bf16.mxu0 %v537
  %2246 = vmatpush1.bf16.msra.mxu0 %v536
  %2247 = vmatprep.subr.bf16.mxu0 0
  %2248 = vmatpush1.bf16.msra.mxu0 0
  %2249 = vmatprep.subr.bf16.mxu0 0
  %2250 = vmatpush1.bf16.msra.mxu0 0
  %2251 = vmatprep.subr.bf16.mxu0 0
  %2252 = vmatpush1.bf16.msra.mxu0 0
  %2253 = vmatprep.subr.bf16.mxu0 0
  %2254 = vmatpush1.bf16.msra.mxu0 0
  %2255 = vmatprep.subr.bf16.mxu0 0
  %2256 = vmatpush1.bf16.msra.mxu0 0
  %2257 = vmatprep.subr.bf16.mxu0 0
  %2258 = vmatpush1.bf16.msra.mxu0 0
  %2259 = vmatprep.subr.bf16.mxu0 0
  %2260 = vmatpush1.bf16.msra.mxu0 0
  %2261 = vmatprep.subr.bf16.mxu0 0
  %2262 = vmatpush1.bf16.msra.mxu0 0
  %2263 = vmatprep.mubr.bf16.mxu0 0
  %2264 = vmatmul.mubr.bf16.gmra.mrb[0].mxu0 %v2229
  %v2265 = vpop.f32.mrb[0].mxu0
  %v2266 = vadd.f32 0.0, %v2265
  %v2267 = vpop.f32.mrb[0].mxu0
  %v2268 = vadd.f32 0.0, %v2267
  %v2269 = vpop.f32.mrb[0].mxu0
  %v2270 = vpop.f32.mrb[0].mxu0
  %2271 = vdwg.mxu0
  %2272 = vmatprep.subr.bf16.mxu0 0
  %2273 = vmatpush1.bf16.msra.mxu0 %v517
  %2274 = vmatprep.subr.bf16.mxu0 0
  %2275 = vmatpush1.bf16.msra.mxu0 %v520
  %2276 = vmatprep.subr.bf16.mxu0 0
  %2277 = vmatpush1.bf16.msra.mxu0 %v523
  %2278 = vmatprep.subr.bf16.mxu0 0
  %2279 = vmatpush1.bf16.msra.mxu0 %v526
  %2280 = vmatprep.subr.bf16.mxu0 0
  %2281 = vmatpush1.bf16.msra.mxu0 %v529
  %2282 = vmatprep.subr.bf16.mxu0 0
  %2283 = vmatpush1.bf16.msra.mxu0 %v532
  %2284 = vmatprep.subr.bf16.mxu0 0
  %2285 = vmatpush1.bf16.msra.mxu0 %v535
  %2286 = vmatprep.subr.bf16.mxu0 0
  %2287 = vmatpush1.bf16.msra.mxu0 %v538
  %2288 = vmatprep.subr.bf16.mxu0 0
  %2289 = vmatpush1.bf16.msra.mxu0 0
  %2290 = vmatprep.subr.bf16.mxu0 0
  %2291 = vmatpush1.bf16.msra.mxu0 0
  %2292 = vmatprep.subr.bf16.mxu0 0
  %2293 = vmatpush1.bf16.msra.mxu0 0
  %2294 = vmatprep.subr.bf16.mxu0 0
  %2295 = vmatpush1.bf16.msra.mxu0 0
  %2296 = vmatprep.subr.bf16.mxu0 0
  %2297 = vmatpush1.bf16.msra.mxu0 0
  %2298 = vmatprep.subr.bf16.mxu0 0
  %2299 = vmatpush1.bf16.msra.mxu0 0
  %2300 = vmatprep.subr.bf16.mxu0 0
  %2301 = vmatpush1.bf16.msra.mxu0 0
  %2302 = vmatprep.subr.bf16.mxu0 0
  %2303 = vmatpush1.bf16.msra.mxu0 0
  %2304 = vmatprep.mubr.bf16.mxu0 0
  %2305 = vmatmul.mubr.bf16.gmra.mrb[0].mxu0 %v2229
  %v2306 = vpop.f32.mrb[0].mxu0
  %v2307 = vadd.f32 0.0, %v2306
  %v2308 = vpop.f32.mrb[0].mxu0
  %v2309 = vpop.f32.mrb[0].mxu0
  %v2310 = vpop.f32.mrb[0].mxu0
  %2311 = vdwg.mxu0
  %v2314 = vcombine.low %v2266, %v2268
  %v2316 = vunpack.c.l.s4 1966171168
  %v2317 = vunpack.c.0.s8 %v2316
  %v2318 = vlaneseq
  %v2319 = vshrl.u32 %v2318, 7
  %v2320 = vsub.s32 %v2317, %v2319
  %v2321 = vrot.slane %v2314, %v2320
  %v2322 = vcombine.high %v2321, %v2321
  %v2324 = vunpack.c.l.s4 1966171168
  %v2325 = vunpack.c.0.s8 %v2324
  %v2326 = vlaneseq
  %v2327 = vshrl.u32 %v2326, 7
  %v2328 = vsub.s32 %v2325, %v2327
  %v2329 = vrot.slane %v2321, %v2328
  %v2331 = vunpack.c.l.s4 1966171168
  %v2332 = vunpack.c.0.s8 %v2331
  %v2333 = vlaneseq
  %v2334 = vshrl.u32 %v2333, 7
  %v2335 = vsub.s32 %v2332, %v2334
  %v2336 = vrot.slane %v2322, %v2335
  %v2339 = vadd.f32 %v2224, %v2329
  %v2340 = vadd.f32 %v2226, %v2336
  %v2341 = vxor.u32 %v2339, 2147483648
  %v2342 = vxor.u32 %v2340, 2147483648
  %v2343 = vmul.f32 %v2341, 1.442695
  %v2344 = vpow.pop %v2343
  %v2345 = vmul.f32 %v2342, 1.442695
  %v2346 = vpow.pop %v2345
  %v2347 = vadd.f32 %v2344, 1.0
  %v2348 = vadd.f32 %v2346, 1.0
  %v2349 = vrcp.pop %v2347
  %v2350 = vmul.f32 1.0, %v2349
  %v2351 = vrcp.pop %v2348
  %v2352 = vmul.f32 1.0, %v2351
  %v2353 = vadd.f32 %v2307, %v689
  %v2356 = vunpack.c.l.s4 1966171168
  %v2357 = vunpack.c.0.s8 %v2356
  %v2358 = vlaneseq
  %v2359 = vshrl.u32 %v2358, 7
  %v2360 = vsub.s32 %v2357, %v2359
  %v2361 = vrot.slane %v2353, %v2360
  %v2362 = vcombine.high %v2361, %v2361
  %v2364 = vunpack.c.l.s4 1966171168
  %v2365 = vunpack.c.0.s8 %v2364
  %v2366 = vlaneseq
  %v2367 = vshrl.u32 %v2366, 7
  %v2368 = vsub.s32 %v2365, %v2367
  %v2369 = vrot.slane %v2361, %v2368
  %v2371 = vunpack.c.l.s4 1966171168
  %v2372 = vunpack.c.0.s8 %v2371
  %v2373 = vlaneseq
  %v2374 = vshrl.u32 %v2373, 7
  %v2375 = vsub.s32 %v2372, %v2374
  %v2376 = vrot.slane %v2362, %v2375
  %v2379 = vmul.f32 %v2350, %v2369
  %v2380 = vmul.f32 %v2352, %v2376
  %v2383 = vrot.slane %v2224, 2
  %v2384 = vrot.slane %v2226, 2
  %v2387 = vadd.f32 %v2383, %v2379
  %v2388 = vadd.f32 %v2384, %v2380
  %v2389 = vtanh.pop %v2387
  %v2390 = vtanh.pop %v2388
  %v2393 = vrot.slane %v2350, 1
  %v2394 = vrot.slane %v2352, 1
  %v2397 = vsub.f32 1.0, %v2393
  %v2398 = vsub.f32 1.0, %v2394
  %v2399 = vmul.f32 %v2397, %v2389
  %v2400 = vmul.f32 %v2398, %v2390
  %v2401 = vmul.f32 %v2393, %v2195
  %v2402 = vmul.f32 %v2394, %v2196
  %v2403 = vadd.f32 %v2399, %v2401
  %v2404 = vadd.f32 %v2400, %v2402
  %v2405 = vpack.c.bf16 %v2403, %v2403
  %v2406 = vpack.c.bf16 %v2404, %v2404
  %v2407 = vld [vmem:[%s5 + $0x4] sm:$0x1]
  %v2408 = vsel %vm772, %v2405, %v2407
  %2409 = vst [vmem:[%s5 + $0x4] sm:$0x1] %v2408
  %v2410 = vld [vmem:[%s5 + $0x14] sm:$0x1]
  %v2411 = vsel %vm772, %v2406, %v2410
  %2412 = vst [vmem:[%s5 + $0x14] sm:$0x1] %v2411
  %s2413 = scalar_lea.vmem [#allocation3], 25
  %v2414 = vld [vmem:[%s2413] ss:$8 sm:$0x7]
  %s2415 = scalar_lea.vmem [#allocation3], 121
  %v2416 = vld [vmem:[%s2415] ss:$8 sm:$0x7]
  %v2419 = vunpack.c.l.b16 %v2405
  %v2420 = vunpack.c.l.b16 %v2406
  %v2421 = vrot.slane %v2420, 7
  %v2422 = vsel %vm788, %v2421, %v2419
  %v2423 = vpack.c.b16 %v2422, %v2422
  %2425 = vmatprep.subr.bf16.mxu0 %v516
  %2426 = vmatpush1.bf16.msra.mxu0 %v515
  %2427 = vmatprep.subr.bf16.mxu0 %v519
  %2428 = vmatpush1.bf16.msra.mxu0 %v518
  %2429 = vmatprep.subr.bf16.mxu0 %v522
  %2430 = vmatpush1.bf16.msra.mxu0 %v521
  %2431 = vmatprep.subr.bf16.mxu0 %v525
  %2432 = vmatpush1.bf16.msra.mxu0 %v524
  %2433 = vmatprep.subr.bf16.mxu0 %v528
  %2434 = vmatpush1.bf16.msra.mxu0 %v527
  %2435 = vmatprep.subr.bf16.mxu0 %v531
  %2436 = vmatpush1.bf16.msra.mxu0 %v530
  %2437 = vmatprep.subr.bf16.mxu0 %v534
  %2438 = vmatpush1.bf16.msra.mxu0 %v533
  %2439 = vmatprep.subr.bf16.mxu0 %v537
  %2440 = vmatpush1.bf16.msra.mxu0 %v536
  %2441 = vmatprep.subr.bf16.mxu0 0
  %2442 = vmatpush1.bf16.msra.mxu0 0
  %2443 = vmatprep.subr.bf16.mxu0 0
  %2444 = vmatpush1.bf16.msra.mxu0 0
  %2445 = vmatprep.subr.bf16.mxu0 0
  %2446 = vmatpush1.bf16.msra.mxu0 0
  %2447 = vmatprep.subr.bf16.mxu0 0
  %2448 = vmatpush1.bf16.msra.mxu0 0
  %2449 = vmatprep.subr.bf16.mxu0 0
  %2450 = vmatpush1.bf16.msra.mxu0 0
  %2451 = vmatprep.subr.bf16.mxu0 0
  %2452 = vmatpush1.bf16.msra.mxu0 0
  %2453 = vmatprep.subr.bf16.mxu0 0
  %2454 = vmatpush1.bf16.msra.mxu0 0
  %2455 = vmatprep.subr.bf16.mxu0 0
  %2456 = vmatpush1.bf16.msra.mxu0 0
  %2457 = vmatprep.mubr.bf16.mxu0 0
  %2458 = vmatmul.mubr.bf16.gmra.mrb[0].mxu0 %v2423
  %v2459 = vpop.f32.mrb[0].mxu0
  %v2460 = vadd.f32 0.0, %v2459
  %v2461 = vpop.f32.mrb[0].mxu0
  %v2462 = vadd.f32 0.0, %v2461
  %v2463 = vpop.f32.mrb[0].mxu0
  %v2464 = vpop.f32.mrb[0].mxu0
  %2465 = vdwg.mxu0
  %2466 = vmatprep.subr.bf16.mxu0 0
  %2467 = vmatpush1.bf16.msra.mxu0 %v517
  %2468 = vmatprep.subr.bf16.mxu0 0
  %2469 = vmatpush1.bf16.msra.mxu0 %v520
  %2470 = vmatprep.subr.bf16.mxu0 0
  %2471 = vmatpush1.bf16.msra.mxu0 %v523
  %2472 = vmatprep.subr.bf16.mxu0 0
  %2473 = vmatpush1.bf16.msra.mxu0 %v526
  %2474 = vmatprep.subr.bf16.mxu0 0
  %2475 = vmatpush1.bf16.msra.mxu0 %v529
  %2476 = vmatprep.subr.bf16.mxu0 0
  %2477 = vmatpush1.bf16.msra.mxu0 %v532
  %2478 = vmatprep.subr.bf16.mxu0 0
  %2479 = vmatpush1.bf16.msra.mxu0 %v535
  %2480 = vmatprep.subr.bf16.mxu0 0
  %2481 = vmatpush1.bf16.msra.mxu0 %v538
  %2482 = vmatprep.subr.bf16.mxu0 0
  %2483 = vmatpush1.bf16.msra.mxu0 0
  %2484 = vmatprep.subr.bf16.mxu0 0
  %2485 = vmatpush1.bf16.msra.mxu0 0
  %2486 = vmatprep.subr.bf16.mxu0 0
  %2487 = vmatpush1.bf16.msra.mxu0 0
  %2488 = vmatprep.subr.bf16.mxu0 0
  %2489 = vmatpush1.bf16.msra.mxu0 0
  %2490 = vmatprep.subr.bf16.mxu0 0
  %2491 = vmatpush1.bf16.msra.mxu0 0
  %2492 = vmatprep.subr.bf16.mxu0 0
  %2493 = vmatpush1.bf16.msra.mxu0 0
  %2494 = vmatprep.subr.bf16.mxu0 0
  %2495 = vmatpush1.bf16.msra.mxu0 0
  %2496 = vmatprep.subr.bf16.mxu0 0
  %2497 = vmatpush1.bf16.msra.mxu0 0
  %2498 = vmatprep.mubr.bf16.mxu0 0
  %2499 = vmatmul.mubr.bf16.gmra.mrb[0].mxu0 %v2423
  %v2500 = vpop.f32.mrb[0].mxu0
  %v2501 = vadd.f32 0.0, %v2500
  %v2502 = vpop.f32.mrb[0].mxu0
  %v2503 = vpop.f32.mrb[0].mxu0
  %v2504 = vpop.f32.mrb[0].mxu0
  %2505 = vdwg.mxu0
  %v2508 = vcombine.low %v2460, %v2462
  %v2510 = vunpack.c.l.s4 1966171168
  %v2511 = vunpack.c.0.s8 %v2510
  %v2512 = vlaneseq
  %v2513 = vshrl.u32 %v2512, 7
  %v2514 = vsub.s32 %v2511, %v2513
  %v2515 = vrot.slane %v2508, %v2514
  %v2516 = vcombine.high %v2515, %v2515
  %v2518 = vunpack.c.l.s4 1966171168
  %v2519 = vunpack.c.0.s8 %v2518
  %v2520 = vlaneseq
  %v2521 = vshrl.u32 %v2520, 7
  %v2522 = vsub.s32 %v2519, %v2521
  %v2523 = vrot.slane %v2515, %v2522
  %v2525 = vunpack.c.l.s4 1966171168
  %v2526 = vunpack.c.0.s8 %v2525
  %v2527 = vlaneseq
  %v2528 = vshrl.u32 %v2527, 7
  %v2529 = vsub.s32 %v2526, %v2528
  %v2530 = vrot.slane %v2516, %v2529
  %v2533 = vadd.f32 %v2414, %v2523
  %v2534 = vadd.f32 %v2416, %v2530
  %v2535 = vxor.u32 %v2533, 2147483648
  %v2536 = vxor.u32 %v2534, 2147483648
  %v2537 = vmul.f32 %v2535, 1.442695
  %v2538 = vpow.pop %v2537
  %v2539 = vmul.f32 %v2536, 1.442695
  %v2540 = vpow.pop %v2539
  %v2541 = vadd.f32 %v2538, 1.0
  %v2542 = vadd.f32 %v2540, 1.0
  %v2543 = vrcp.pop %v2541
  %v2544 = vmul.f32 1.0, %v2543
  %v2545 = vrcp.pop %v2542
  %v2546 = vmul.f32 1.0, %v2545
  %v2547 = vadd.f32 %v2501, %v689
  %v2550 = vunpack.c.l.s4 1966171168
  %v2551 = vunpack.c.0.s8 %v2550
  %v2552 = vlaneseq
  %v2553 = vshrl.u32 %v2552, 7
  %v2554 = vsub.s32 %v2551, %v2553
  %v2555 = vrot.slane %v2547, %v2554
  %v2556 = vcombine.high %v2555, %v2555
  %v2558 = vunpack.c.l.s4 1966171168
  %v2559 = vunpack.c.0.s8 %v2558
  %v2560 = vlaneseq
  %v2561 = vshrl.u32 %v2560, 7
  %v2562 = vsub.s32 %v2559, %v2561
  %v2563 = vrot.slane %v2555, %v2562
  %v2565 = vunpack.c.l.s4 1966171168
  %v2566 = vunpack.c.0.s8 %v2565
  %v2567 = vlaneseq
  %v2568 = vshrl.u32 %v2567, 7
  %v2569 = vsub.s32 %v2566, %v2568
  %v2570 = vrot.slane %v2556, %v2569
  %v2573 = vmul.f32 %v2544, %v2563
  %v2574 = vmul.f32 %v2546, %v2570
  %v2577 = vrot.slane %v2414, 2
  %v2578 = vrot.slane %v2416, 2
  %v2581 = vadd.f32 %v2577, %v2573
  %v2582 = vadd.f32 %v2578, %v2574
  %v2583 = vtanh.pop %v2581
  %v2584 = vtanh.pop %v2582
  %v2587 = vrot.slane %v2544, 1
  %v2588 = vrot.slane %v2546, 1
  %v2591 = vsub.f32 1.0, %v2587
  %v2592 = vsub.f32 1.0, %v2588
  %v2593 = vmul.f32 %v2591, %v2583
  %v2594 = vmul.f32 %v2592, %v2584
  %v2595 = vmul.f32 %v2587, %v2403
  %v2596 = vmul.f32 %v2588, %v2404
  %v2597 = vadd.f32 %v2593, %v2595
  %v2598 = vadd.f32 %v2594, %v2596
  %v2599 = vpack.c.bf16 %v2597, %v2597
  %v2600 = vpack.c.bf16 %v2598, %v2598
  %v2603 = vunpack.c.l.b16 %v2599
  %v2604 = vunpack.c.l.b16 %v2600
  %v2605 = vpack.c.b16 %v2603, %v2603
  %v2606 = vpack.c.b16 %v2604, %v2604
  %v2608 = vshll.u32 %v2605, 16
  %v2611 = vshll.u32 %v2606, 16
  %v2615 = vld [vmem:[%s5 + $0x4] sm:$0x1]
  %v2616 = vsel %vm983, %v2608, %v2615
  %2617 = vst [vmem:[%s5 + $0x4] sm:$0x1] %v2616
  %v2618 = vld [vmem:[%s5 + $0x14] sm:$0x1]
  %v2619 = vsel %vm983, %v2611, %v2618
  %2620 = vst [vmem:[%s5 + $0x14] sm:$0x1] %v2619
  %s2621 = scalar_lea.vmem [#allocation3], 26
  %v2622 = vld [vmem:[%s2621] ss:$8 sm:$0x7]
  %s2623 = scalar_lea.vmem [#allocation3], 122
  %v2624 = vld [vmem:[%s2623] ss:$8 sm:$0x7]
  %v2625 = vrot.slane %v2604, 7
  %v2626 = vsel %vm788, %v2625, %v2603
  %v2627 = vpack.c.b16 %v2626, %v2626
  %2629 = vmatprep.subr.bf16.mxu0 %v516
  %2630 = vmatpush1.bf16.msra.mxu0 %v515
  %2631 = vmatprep.subr.bf16.mxu0 %v519
  %2632 = vmatpush1.bf16.msra.mxu0 %v518
  %2633 = vmatprep.subr.bf16.mxu0 %v522
  %2634 = vmatpush1.bf16.msra.mxu0 %v521
  %2635 = vmatprep.subr.bf16.mxu0 %v525
  %2636 = vmatpush1.bf16.msra.mxu0 %v524
  %2637 = vmatprep.subr.bf16.mxu0 %v528
  %2638 = vmatpush1.bf16.msra.mxu0 %v527
  %2639 = vmatprep.subr.bf16.mxu0 %v531
  %2640 = vmatpush1.bf16.msra.mxu0 %v530
  %2641 = vmatprep.subr.bf16.mxu0 %v534
  %2642 = vmatpush1.bf16.msra.mxu0 %v533
  %2643 = vmatprep.subr.bf16.mxu0 %v537
  %2644 = vmatpush1.bf16.msra.mxu0 %v536
  %2645 = vmatprep.subr.bf16.mxu0 0
  %2646 = vmatpush1.bf16.msra.mxu0 0
  %2647 = vmatprep.subr.bf16.mxu0 0
  %2648 = vmatpush1.bf16.msra.mxu0 0
  %2649 = vmatprep.subr.bf16.mxu0 0
  %2650 = vmatpush1.bf16.msra.mxu0 0
  %2651 = vmatprep.subr.bf16.mxu0 0
  %2652 = vmatpush1.bf16.msra.mxu0 0
  %2653 = vmatprep.subr.bf16.mxu0 0
  %2654 = vmatpush1.bf16.msra.mxu0 0
  %2655 = vmatprep.subr.bf16.mxu0 0
  %2656 = vmatpush1.bf16.msra.mxu0 0
  %2657 = vmatprep.subr.bf16.mxu0 0
  %2658 = vmatpush1.bf16.msra.mxu0 0
  %2659 = vmatprep.subr.bf16.mxu0 0
  %2660 = vmatpush1.bf16.msra.mxu0 0
  %2661 = vmatprep.mubr.bf16.mxu0 0
  %2662 = vmatmul.mubr.bf16.gmra.mrb[0].mxu0 %v2627
  %v2663 = vpop.f32.mrb[0].mxu0
  %v2664 = vadd.f32 0.0, %v2663
  %v2665 = vpop.f32.mrb[0].mxu0
  %v2666 = vadd.f32 0.0, %v2665
  %v2667 = vpop.f32.mrb[0].mxu0
  %v2668 = vpop.f32.mrb[0].mxu0
  %2669 = vdwg.mxu0
  %2670 = vmatprep.subr.bf16.mxu0 0
  %2671 = vmatpush1.bf16.msra.mxu0 %v517
  %2672 = vmatprep.subr.bf16.mxu0 0
  %2673 = vmatpush1.bf16.msra.mxu0 %v520
  %2674 = vmatprep.subr.bf16.mxu0 0
  %2675 = vmatpush1.bf16.msra.mxu0 %v523
  %2676 = vmatprep.subr.bf16.mxu0 0
  %2677 = vmatpush1.bf16.msra.mxu0 %v526
  %2678 = vmatprep.subr.bf16.mxu0 0
  %2679 = vmatpush1.bf16.msra.mxu0 %v529
  %2680 = vmatprep.subr.bf16.mxu0 0
  %2681 = vmatpush1.bf16.msra.mxu0 %v532
  %2682 = vmatprep.subr.bf16.mxu0 0
  %2683 = vmatpush1.bf16.msra.mxu0 %v535
  %2684 = vmatprep.subr.bf16.mxu0 0
  %2685 = vmatpush1.bf16.msra.mxu0 %v538
  %2686 = vmatprep.subr.bf16.mxu0 0
  %2687 = vmatpush1.bf16.msra.mxu0 0
  %2688 = vmatprep.subr.bf16.mxu0 0
  %2689 = vmatpush1.bf16.msra.mxu0 0
  %2690 = vmatprep.subr.bf16.mxu0 0
  %2691 = vmatpush1.bf16.msra.mxu0 0
  %2692 = vmatprep.subr.bf16.mxu0 0
  %2693 = vmatpush1.bf16.msra.mxu0 0
  %2694 = vmatprep.subr.bf16.mxu0 0
  %2695 = vmatpush1.bf16.msra.mxu0 0
  %2696 = vmatprep.subr.bf16.mxu0 0
  %2697 = vmatpush1.bf16.msra.mxu0 0
  %2698 = vmatprep.subr.bf16.mxu0 0
  %2699 = vmatpush1.bf16.msra.mxu0 0
  %2700 = vmatprep.subr.bf16.mxu0 0
  %2701 = vmatpush1.bf16.msra.mxu0 0
  %2702 = vmatprep.mubr.bf16.mxu0 0
  %2703 = vmatmul.mubr.bf16.gmra.mrb[0].mxu0 %v2627
  %v2704 = vpop.f32.mrb[0].mxu0
  %v2705 = vadd.f32 0.0, %v2704
  %v2706 = vpop.f32.mrb[0].mxu0
  %v2707 = vpop.f32.mrb[0].mxu0
  %v2708 = vpop.f32.mrb[0].mxu0
  %2709 = vdwg.mxu0
  %v2712 = vcombine.low %v2664, %v2666
  %v2714 = vunpack.c.l.s4 1966171168
  %v2715 = vunpack.c.0.s8 %v2714
  %v2716 = vlaneseq
  %v2717 = vshrl.u32 %v2716, 7
  %v2718 = vsub.s32 %v2715, %v2717
  %v2719 = vrot.slane %v2712, %v2718
  %v2720 = vcombine.high %v2719, %v2719
  %v2722 = vunpack.c.l.s4 1966171168
  %v2723 = vunpack.c.0.s8 %v2722
  %v2724 = vlaneseq
  %v2725 = vshrl.u32 %v2724, 7
  %v2726 = vsub.s32 %v2723, %v2725
  %v2727 = vrot.slane %v2719, %v2726
  %v2729 = vunpack.c.l.s4 1966171168
  %v2730 = vunpack.c.0.s8 %v2729
  %v2731 = vlaneseq
  %v2732 = vshrl.u32 %v2731, 7
  %v2733 = vsub.s32 %v2730, %v2732
  %v2734 = vrot.slane %v2720, %v2733
  %v2737 = vadd.f32 %v2622, %v2727
  %v2738 = vadd.f32 %v2624, %v2734
  %v2739 = vxor.u32 %v2737, 2147483648
  %v2740 = vxor.u32 %v2738, 2147483648
  %v2741 = vmul.f32 %v2739, 1.442695
  %v2742 = vpow.pop %v2741
  %v2743 = vmul.f32 %v2740, 1.442695
  %v2744 = vpow.pop %v2743
  %v2745 = vadd.f32 %v2742, 1.0
  %v2746 = vadd.f32 %v2744, 1.0
  %v2747 = vrcp.pop %v2745
  %v2748 = vmul.f32 1.0, %v2747
  %v2749 = vrcp.pop %v2746
  %v2750 = vmul.f32 1.0, %v2749
  %v2751 = vadd.f32 %v2705, %v689
  %v2754 = vunpack.c.l.s4 1966171168
  %v2755 = vunpack.c.0.s8 %v2754
  %v2756 = vlaneseq
  %v2757 = vshrl.u32 %v2756, 7
  %v2758 = vsub.s32 %v2755, %v2757
  %v2759 = vrot.slane %v2751, %v2758
  %v2760 = vcombine.high %v2759, %v2759
  %v2762 = vunpack.c.l.s4 1966171168
  %v2763 = vunpack.c.0.s8 %v2762
  %v2764 = vlaneseq
  %v2765 = vshrl.u32 %v2764, 7
  %v2766 = vsub.s32 %v2763, %v2765
  %v2767 = vrot.slane %v2759, %v2766
  %v2769 = vunpack.c.l.s4 1966171168
  %v2770 = vunpack.c.0.s8 %v2769
  %v2771 = vlaneseq
  %v2772 = vshrl.u32 %v2771, 7
  %v2773 = vsub.s32 %v2770, %v2772
  %v2774 = vrot.slane %v2760, %v2773
  %v2777 = vmul.f32 %v2748, %v2767
  %v2778 = vmul.f32 %v2750, %v2774
  %v2781 = vrot.slane %v2622, 2
  %v2782 = vrot.slane %v2624, 2
  %v2785 = vadd.f32 %v2781, %v2777
  %v2786 = vadd.f32 %v2782, %v2778
  %v2787 = vtanh.pop %v2785
  %v2788 = vtanh.pop %v2786
  %v2791 = vrot.slane %v2748, 1
  %v2792 = vrot.slane %v2750, 1
  %v2795 = vsub.f32 1.0, %v2791
  %v2796 = vsub.f32 1.0, %v2792
  %v2797 = vmul.f32 %v2795, %v2787
  %v2798 = vmul.f32 %v2796, %v2788
  %v2799 = vmul.f32 %v2791, %v2597
  %v2800 = vmul.f32 %v2792, %v2598
  %v2801 = vadd.f32 %v2797, %v2799
  %v2802 = vadd.f32 %v2798, %v2800
  %v2803 = vpack.c.bf16 %v2801, %v2801
  %v2804 = vpack.c.bf16 %v2802, %v2802
  %v2807 = vunpack.c.l.b16 %v2803
  %v2808 = vunpack.c.l.b16 %v2804
  %v2809 = vpack.c.b16 %v2807, %v2807
  %v2810 = vpack.c.b16 %v2808, %v2808
  %v2811 = vrot.slane %v2809, 7
  %v2812 = vrot.slane %v2810, 7
  %v2815 = vld [vmem:[%s5 + $0x4] sm:$0x2]
  %v2816 = vsel %vm1186, %v2811, %v2815
  %2817 = vst [vmem:[%s5 + $0x4] sm:$0x2] %v2816
  %v2818 = vld [vmem:[%s5 + $0x14] sm:$0x2]
  %v2819 = vsel %vm1186, %v2812, %v2818
  %2820 = vst [vmem:[%s5 + $0x14] sm:$0x2] %v2819
  %s2821 = scalar_lea.vmem [#allocation3], 27
  %v2822 = vld [vmem:[%s2821] ss:$8 sm:$0x7]
  %s2823 = scalar_lea.vmem [#allocation3], 123
  %v2824 = vld [vmem:[%s2823] ss:$8 sm:$0x7]
  %v2825 = vrot.slane %v2808, 7
  %v2826 = vsel %vm788, %v2825, %v2807
  %v2827 = vpack.c.b16 %v2826, %v2826
  %2829 = vmatprep.subr.bf16.mxu0 %v516
  %2830 = vmatpush1.bf16.msra.mxu0 %v515
  %2831 = vmatprep.subr.bf16.mxu0 %v519
  %2832 = vmatpush1.bf16.msra.mxu0 %v518
  %2833 = vmatprep.subr.bf16.mxu0 %v522
  %2834 = vmatpush1.bf16.msra.mxu0 %v521
  %2835 = vmatprep.subr.bf16.mxu0 %v525
  %2836 = vmatpush1.bf16.msra.mxu0 %v524
  %2837 = vmatprep.subr.bf16.mxu0 %v528
  %2838 = vmatpush1.bf16.msra.mxu0 %v527
  %2839 = vmatprep.subr.bf16.mxu0 %v531
  %2840 = vmatpush1.bf16.msra.mxu0 %v530
  %2841 = vmatprep.subr.bf16.mxu0 %v534
  %2842 = vmatpush1.bf16.msra.mxu0 %v533
  %2843 = vmatprep.subr.bf16.mxu0 %v537
  %2844 = vmatpush1.bf16.msra.mxu0 %v536
  %2845 = vmatprep.subr.bf16.mxu0 0
  %2846 = vmatpush1.bf16.msra.mxu0 0
  %2847 = vmatprep.subr.bf16.mxu0 0
  %2848 = vmatpush1.bf16.msra.mxu0 0
  %2849 = vmatprep.subr.bf16.mxu0 0
  %2850 = vmatpush1.bf16.msra.mxu0 0
  %2851 = vmatprep.subr.bf16.mxu0 0
  %2852 = vmatpush1.bf16.msra.mxu0 0
  %2853 = vmatprep.subr.bf16.mxu0 0
  %2854 = vmatpush1.bf16.msra.mxu0 0
  %2855 = vmatprep.subr.bf16.mxu0 0
  %2856 = vmatpush1.bf16.msra.mxu0 0
  %2857 = vmatprep.subr.bf16.mxu0 0
  %2858 = vmatpush1.bf16.msra.mxu0 0
  %2859 = vmatprep.subr.bf16.mxu0 0
  %2860 = vmatpush1.bf16.msra.mxu0 0
  %2861 = vmatprep.mubr.bf16.mxu0 0
  %2862 = vmatmul.mubr.bf16.gmra.mrb[0].mxu0 %v2827
  %v2863 = vpop.f32.mrb[0].mxu0
  %v2864 = vadd.f32 0.0, %v2863
  %v2865 = vpop.f32.mrb[0].mxu0
  %v2866 = vadd.f32 0.0, %v2865
  %v2867 = vpop.f32.mrb[0].mxu0
  %v2868 = vpop.f32.mrb[0].mxu0
  %2869 = vdwg.mxu0
  %2870 = vmatprep.subr.bf16.mxu0 0
  %2871 = vmatpush1.bf16.msra.mxu0 %v517
  %2872 = vmatprep.subr.bf16.mxu0 0
  %2873 = vmatpush1.bf16.msra.mxu0 %v520
  %2874 = vmatprep.subr.bf16.mxu0 0
  %2875 = vmatpush1.bf16.msra.mxu0 %v523
  %2876 = vmatprep.subr.bf16.mxu0 0
  %2877 = vmatpush1.bf16.msra.mxu0 %v526
  %2878 = vmatprep.subr.bf16.mxu0 0
  %2879 = vmatpush1.bf16.msra.mxu0 %v529
  %2880 = vmatprep.subr.bf16.mxu0 0
  %2881 = vmatpush1.bf16.msra.mxu0 %v532
  %2882 = vmatprep.subr.bf16.mxu0 0
  %2883 = vmatpush1.bf16.msra.mxu0 %v535
  %2884 = vmatprep.subr.bf16.mxu0 0
  %2885 = vmatpush1.bf16.msra.mxu0 %v538
  %2886 = vmatprep.subr.bf16.mxu0 0
  %2887 = vmatpush1.bf16.msra.mxu0 0
  %2888 = vmatprep.subr.bf16.mxu0 0
  %2889 = vmatpush1.bf16.msra.mxu0 0
  %2890 = vmatprep.subr.bf16.mxu0 0
  %2891 = vmatpush1.bf16.msra.mxu0 0
  %2892 = vmatprep.subr.bf16.mxu0 0
  %2893 = vmatpush1.bf16.msra.mxu0 0
  %2894 = vmatprep.subr.bf16.mxu0 0
  %2895 = vmatpush1.bf16.msra.mxu0 0
  %2896 = vmatprep.subr.bf16.mxu0 0
  %2897 = vmatpush1.bf16.msra.mxu0 0
  %2898 = vmatprep.subr.bf16.mxu0 0
  %2899 = vmatpush1.bf16.msra.mxu0 0
  %2900 = vmatprep.subr.bf16.mxu0 0
  %2901 = vmatpush1.bf16.msra.mxu0 0
  %2902 = vmatprep.mubr.bf16.mxu0 0
  %2903 = vmatmul.mubr.bf16.gmra.mrb[0].mxu0 %v2827
  %v2904 = vpop.f32.mrb[0].mxu0
  %v2905 = vadd.f32 0.0, %v2904
  %v2906 = vpop.f32.mrb[0].mxu0
  %v2907 = vpop.f32.mrb[0].mxu0
  %v2908 = vpop.f32.mrb[0].mxu0
  %2909 = vdwg.mxu0
  %v2912 = vcombine.low %v2864, %v2866
  %v2914 = vunpack.c.l.s4 1966171168
  %v2915 = vunpack.c.0.s8 %v2914
  %v2916 = vlaneseq
  %v2917 = vshrl.u32 %v2916, 7
  %v2918 = vsub.s32 %v2915, %v2917
  %v2919 = vrot.slane %v2912, %v2918
  %v2920 = vcombine.high %v2919, %v2919
  %v2922 = vunpack.c.l.s4 1966171168
  %v2923 = vunpack.c.0.s8 %v2922
  %v2924 = vlaneseq
  %v2925 = vshrl.u32 %v2924, 7
  %v2926 = vsub.s32 %v2923, %v2925
  %v2927 = vrot.slane %v2919, %v2926
  %v2929 = vunpack.c.l.s4 1966171168
  %v2930 = vunpack.c.0.s8 %v2929
  %v2931 = vlaneseq
  %v2932 = vshrl.u32 %v2931, 7
  %v2933 = vsub.s32 %v2930, %v2932
  %v2934 = vrot.slane %v2920, %v2933
  %v2937 = vadd.f32 %v2822, %v2927
  %v2938 = vadd.f32 %v2824, %v2934
  %v2939 = vxor.u32 %v2937, 2147483648
  %v2940 = vxor.u32 %v2938, 2147483648
  %v2941 = vmul.f32 %v2939, 1.442695
  %v2942 = vpow.pop %v2941
  %v2943 = vmul.f32 %v2940, 1.442695
  %v2944 = vpow.pop %v2943
  %v2945 = vadd.f32 %v2942, 1.0
  %v2946 = vadd.f32 %v2944, 1.0
  %v2947 = vrcp.pop %v2945
  %v2948 = vmul.f32 1.0, %v2947
  %v2949 = vrcp.pop %v2946
  %v2950 = vmul.f32 1.0, %v2949
  %v2951 = vadd.f32 %v2905, %v689
  %v2954 = vunpack.c.l.s4 1966171168
  %v2955 = vunpack.c.0.s8 %v2954
  %v2956 = vlaneseq
  %v2957 = vshrl.u32 %v2956, 7
  %v2958 = vsub.s32 %v2955, %v2957
  %v2959 = vrot.slane %v2951, %v2958
  %v2960 = vcombine.high %v2959, %v2959
  %v2962 = vunpack.c.l.s4 1966171168
  %v2963 = vunpack.c.0.s8 %v2962
  %v2964 = vlaneseq
  %v2965 = vshrl.u32 %v2964, 7
  %v2966 = vsub.s32 %v2963, %v2965
  %v2967 = vrot.slane %v2959, %v2966
  %v2969 = vunpack.c.l.s4 1966171168
  %v2970 = vunpack.c.0.s8 %v2969
  %v2971 = vlaneseq
  %v2972 = vshrl.u32 %v2971, 7
  %v2973 = vsub.s32 %v2970, %v2972
  %v2974 = vrot.slane %v2960, %v2973
  %v2977 = vmul.f32 %v2948, %v2967
  %v2978 = vmul.f32 %v2950, %v2974
  %v2981 = vrot.slane %v2822, 2
  %v2982 = vrot.slane %v2824, 2
  %v2985 = vadd.f32 %v2981, %v2977
  %v2986 = vadd.f32 %v2982, %v2978
  %v2987 = vtanh.pop %v2985
  %v2988 = vtanh.pop %v2986
  %v2991 = vrot.slane %v2948, 1
  %v2992 = vrot.slane %v2950, 1
  %v2995 = vsub.f32 1.0, %v2991
  %v2996 = vsub.f32 1.0, %v2992
  %v2997 = vmul.f32 %v2995, %v2987
  %v2998 = vmul.f32 %v2996, %v2988
  %v2999 = vmul.f32 %v2991, %v2801
  %v3000 = vmul.f32 %v2992, %v2802
  %v3001 = vadd.f32 %v2997, %v2999
  %v3002 = vadd.f32 %v2998, %v3000
  %v3003 = vpack.c.bf16 %v3001, %v3001
  %v3004 = vpack.c.bf16 %v3002, %v3002
  %v3007 = vunpack.c.l.b16 %v3003
  %v3008 = vunpack.c.l.b16 %v3004
  %v3009 = vpack.c.b16 %v3007, %v3007
  %v3010 = vpack.c.b16 %v3008, %v3008
  %v3012 = vshll.u32 %v3009, 16
  %v3014 = vrot.slane %v3012, 7
  %v3016 = vshll.u32 %v3010, 16
  %v3018 = vrot.slane %v3016, 7
  %v3021 = vld [vmem:[%s5 + $0x4] sm:$0x2]
  %v3022 = vsel %vm1394, %v3014, %v3021
  %3023 = vst [vmem:[%s5 + $0x4] sm:$0x2] %v3022
  %v3024 = vld [vmem:[%s5 + $0x14] sm:$0x2]
  %v3025 = vsel %vm1394, %v3018, %v3024
  %3026 = vst [vmem:[%s5 + $0x14] sm:$0x2] %v3025
  %s3027 = scalar_lea.vmem [#allocation3], 28
  %v3028 = vld [vmem:[%s3027] ss:$8 sm:$0x7]
  %s3029 = scalar_lea.vmem [#allocation3], 124
  %v3030 = vld [vmem:[%s3029] ss:$8 sm:$0x7]
  %v3031 = vrot.slane %v3008, 7
  %v3032 = vsel %vm788, %v3031, %v3007
  %v3033 = vpack.c.b16 %v3032, %v3032
  %3035 = vmatprep.subr.bf16.mxu0 %v516
  %3036 = vmatpush1.bf16.msra.mxu0 %v515
  %3037 = vmatprep.subr.bf16.mxu0 %v519
  %3038 = vmatpush1.bf16.msra.mxu0 %v518
  %3039 = vmatprep.subr.bf16.mxu0 %v522
  %3040 = vmatpush1.bf16.msra.mxu0 %v521
  %3041 = vmatprep.subr.bf16.mxu0 %v525
  %3042 = vmatpush1.bf16.msra.mxu0 %v524
  %3043 = vmatprep.subr.bf16.mxu0 %v528
  %3044 = vmatpush1.bf16.msra.mxu0 %v527
  %3045 = vmatprep.subr.bf16.mxu0 %v531
  %3046 = vmatpush1.bf16.msra.mxu0 %v530
  %3047 = vmatprep.subr.bf16.mxu0 %v534
  %3048 = vmatpush1.bf16.msra.mxu0 %v533
  %3049 = vmatprep.subr.bf16.mxu0 %v537
  %3050 = vmatpush1.bf16.msra.mxu0 %v536
  %3051 = vmatprep.subr.bf16.mxu0 0
  %3052 = vmatpush1.bf16.msra.mxu0 0
  %3053 = vmatprep.subr.bf16.mxu0 0
  %3054 = vmatpush1.bf16.msra.mxu0 0
  %3055 = vmatprep.subr.bf16.mxu0 0
  %3056 = vmatpush1.bf16.msra.mxu0 0
  %3057 = vmatprep.subr.bf16.mxu0 0
  %3058 = vmatpush1.bf16.msra.mxu0 0
  %3059 = vmatprep.subr.bf16.mxu0 0
  %3060 = vmatpush1.bf16.msra.mxu0 0
  %3061 = vmatprep.subr.bf16.mxu0 0
  %3062 = vmatpush1.bf16.msra.mxu0 0
  %3063 = vmatprep.subr.bf16.mxu0 0
  %3064 = vmatpush1.bf16.msra.mxu0 0
  %3065 = vmatprep.subr.bf16.mxu0 0
  %3066 = vmatpush1.bf16.msra.mxu0 0
  %3067 = vmatprep.mubr.bf16.mxu0 0
  %3068 = vmatmul.mubr.bf16.gmra.mrb[0].mxu0 %v3033
  %v3069 = vpop.f32.mrb[0].mxu0
  %v3070 = vadd.f32 0.0, %v3069
  %v3071 = vpop.f32.mrb[0].mxu0
  %v3072 = vadd.f32 0.0, %v3071
  %v3073 = vpop.f32.mrb[0].mxu0
  %v3074 = vpop.f32.mrb[0].mxu0
  %3075 = vdwg.mxu0
  %3076 = vmatprep.subr.bf16.mxu0 0
  %3077 = vmatpush1.bf16.msra.mxu0 %v517
  %3078 = vmatprep.subr.bf16.mxu0 0
  %3079 = vmatpush1.bf16.msra.mxu0 %v520
  %3080 = vmatprep.subr.bf16.mxu0 0
  %3081 = vmatpush1.bf16.msra.mxu0 %v523
  %3082 = vmatprep.subr.bf16.mxu0 0
  %3083 = vmatpush1.bf16.msra.mxu0 %v526
  %3084 = vmatprep.subr.bf16.mxu0 0
  %3085 = vmatpush1.bf16.msra.mxu0 %v529
  %3086 = vmatprep.subr.bf16.mxu0 0
  %3087 = vmatpush1.bf16.msra.mxu0 %v532
  %3088 = vmatprep.subr.bf16.mxu0 0
  %3089 = vmatpush1.bf16.msra.mxu0 %v535
  %3090 = vmatprep.subr.bf16.mxu0 0
  %3091 = vmatpush1.bf16.msra.mxu0 %v538
  %3092 = vmatprep.subr.bf16.mxu0 0
  %3093 = vmatpush1.bf16.msra.mxu0 0
  %3094 = vmatprep.subr.bf16.mxu0 0
  %3095 = vmatpush1.bf16.msra.mxu0 0
  %3096 = vmatprep.subr.bf16.mxu0 0
  %3097 = vmatpush1.bf16.msra.mxu0 0
  %3098 = vmatprep.subr.bf16.mxu0 0
  %3099 = vmatpush1.bf16.msra.mxu0 0
  %3100 = vmatprep.subr.bf16.mxu0 0
  %3101 = vmatpush1.bf16.msra.mxu0 0
  %3102 = vmatprep.subr.bf16.mxu0 0
  %3103 = vmatpush1.bf16.msra.mxu0 0
  %3104 = vmatprep.subr.bf16.mxu0 0
  %3105 = vmatpush1.bf16.msra.mxu0 0
  %3106 = vmatprep.subr.bf16.mxu0 0
  %3107 = vmatpush1.bf16.msra.mxu0 0
  %3108 = vmatprep.mubr.bf16.mxu0 0
  %3109 = vmatmul.mubr.bf16.gmra.mrb[0].mxu0 %v3033
  %v3110 = vpop.f32.mrb[0].mxu0
  %v3111 = vadd.f32 0.0, %v3110
  %v3112 = vpop.f32.mrb[0].mxu0
  %v3113 = vpop.f32.mrb[0].mxu0
  %v3114 = vpop.f32.mrb[0].mxu0
  %3115 = vdwg.mxu0
  %v3118 = vcombine.low %v3070, %v3072
  %v3120 = vunpack.c.l.s4 1966171168
  %v3121 = vunpack.c.0.s8 %v3120
  %v3122 = vlaneseq
  %v3123 = vshrl.u32 %v3122, 7
  %v3124 = vsub.s32 %v3121, %v3123
  %v3125 = vrot.slane %v3118, %v3124
  %v3126 = vcombine.high %v3125, %v3125
  %v3128 = vunpack.c.l.s4 1966171168
  %v3129 = vunpack.c.0.s8 %v3128
  %v3130 = vlaneseq
  %v3131 = vshrl.u32 %v3130, 7
  %v3132 = vsub.s32 %v3129, %v3131
  %v3133 = vrot.slane %v3125, %v3132
  %v3135 = vunpack.c.l.s4 1966171168
  %v3136 = vunpack.c.0.s8 %v3135
  %v3137 = vlaneseq
  %v3138 = vshrl.u32 %v3137, 7
  %v3139 = vsub.s32 %v3136, %v3138
  %v3140 = vrot.slane %v3126, %v3139
  %v3143 = vadd.f32 %v3028, %v3133
  %v3144 = vadd.f32 %v3030, %v3140
  %v3145 = vxor.u32 %v3143, 2147483648
  %v3146 = vxor.u32 %v3144, 2147483648
  %v3147 = vmul.f32 %v3145, 1.442695
  %v3148 = vpow.pop %v3147
  %v3149 = vmul.f32 %v3146, 1.442695
  %v3150 = vpow.pop %v3149
  %v3151 = vadd.f32 %v3148, 1.0
  %v3152 = vadd.f32 %v3150, 1.0
  %v3153 = vrcp.pop %v3151
  %v3154 = vmul.f32 1.0, %v3153
  %v3155 = vrcp.pop %v3152
  %v3156 = vmul.f32 1.0, %v3155
  %v3157 = vadd.f32 %v3111, %v689
  %v3160 = vunpack.c.l.s4 1966171168
  %v3161 = vunpack.c.0.s8 %v3160
  %v3162 = vlaneseq
  %v3163 = vshrl.u32 %v3162, 7
  %v3164 = vsub.s32 %v3161, %v3163
  %v3165 = vrot.slane %v3157, %v3164
  %v3166 = vcombine.high %v3165, %v3165
  %v3168 = vunpack.c.l.s4 1966171168
  %v3169 = vunpack.c.0.s8 %v3168
  %v3170 = vlaneseq
  %v3171 = vshrl.u32 %v3170, 7
  %v3172 = vsub.s32 %v3169, %v3171
  %v3173 = vrot.slane %v3165, %v3172
  %v3175 = vunpack.c.l.s4 1966171168
  %v3176 = vunpack.c.0.s8 %v3175
  %v3177 = vlaneseq
  %v3178 = vshrl.u32 %v3177, 7
  %v3179 = vsub.s32 %v3176, %v3178
  %v3180 = vrot.slane %v3166, %v3179
  %v3183 = vmul.f32 %v3154, %v3173
  %v3184 = vmul.f32 %v3156, %v3180
  %v3187 = vrot.slane %v3028, 2
  %v3188 = vrot.slane %v3030, 2
  %v3191 = vadd.f32 %v3187, %v3183
  %v3192 = vadd.f32 %v3188, %v3184
  %v3193 = vtanh.pop %v3191
  %v3194 = vtanh.pop %v3192
  %v3197 = vrot.slane %v3154, 1
  %v3198 = vrot.slane %v3156, 1
  %v3201 = vsub.f32 1.0, %v3197
  %v3202 = vsub.f32 1.0, %v3198
  %v3203 = vmul.f32 %v3201, %v3193
  %v3204 = vmul.f32 %v3202, %v3194
  %v3205 = vmul.f32 %v3197, %v3001
  %v3206 = vmul.f32 %v3198, %v3002
  %v3207 = vadd.f32 %v3203, %v3205
  %v3208 = vadd.f32 %v3204, %v3206
  %v3209 = vpack.c.bf16 %v3207, %v3207
  %v3210 = vpack.c.bf16 %v3208, %v3208
  %v3213 = vunpack.c.l.b16 %v3209
  %v3214 = vunpack.c.l.b16 %v3210
  %v3215 = vpack.c.b16 %v3213, %v3213
  %v3216 = vpack.c.b16 %v3214, %v3214
  %v3217 = vrot.slane %v3215, 6
  %v3218 = vrot.slane %v3216, 6
  %v3221 = vld [vmem:[%s5 + $0x4] sm:$0x4]
  %v3222 = vsel %vm1597, %v3217, %v3221
  %3223 = vst [vmem:[%s5 + $0x4] sm:$0x4] %v3222
  %v3224 = vld [vmem:[%s5 + $0x14] sm:$0x4]
  %v3225 = vsel %vm1597, %v3218, %v3224
  %3226 = vst [vmem:[%s5 + $0x14] sm:$0x4] %v3225
  %s3227 = scalar_lea.vmem [#allocation3], 29
  %v3228 = vld [vmem:[%s3227] ss:$8 sm:$0x7]
  %s3229 = scalar_lea.vmem [#allocation3], 125
  %v3230 = vld [vmem:[%s3229] ss:$8 sm:$0x7]
  %v3231 = vrot.slane %v3214, 7
  %v3232 = vsel %vm788, %v3231, %v3213
  %v3233 = vpack.c.b16 %v3232, %v3232
  %3235 = vmatprep.subr.bf16.mxu0 %v516
  %3236 = vmatpush1.bf16.msra.mxu0 %v515
  %3237 = vmatprep.subr.bf16.mxu0 %v519
  %3238 = vmatpush1.bf16.msra.mxu0 %v518
  %3239 = vmatprep.subr.bf16.mxu0 %v522
  %3240 = vmatpush1.bf16.msra.mxu0 %v521
  %3241 = vmatprep.subr.bf16.mxu0 %v525
  %3242 = vmatpush1.bf16.msra.mxu0 %v524
  %3243 = vmatprep.subr.bf16.mxu0 %v528
  %3244 = vmatpush1.bf16.msra.mxu0 %v527
  %3245 = vmatprep.subr.bf16.mxu0 %v531
  %3246 = vmatpush1.bf16.msra.mxu0 %v530
  %3247 = vmatprep.subr.bf16.mxu0 %v534
  %3248 = vmatpush1.bf16.msra.mxu0 %v533
  %3249 = vmatprep.subr.bf16.mxu0 %v537
  %3250 = vmatpush1.bf16.msra.mxu0 %v536
  %3251 = vmatprep.subr.bf16.mxu0 0
  %3252 = vmatpush1.bf16.msra.mxu0 0
  %3253 = vmatprep.subr.bf16.mxu0 0
  %3254 = vmatpush1.bf16.msra.mxu0 0
  %3255 = vmatprep.subr.bf16.mxu0 0
  %3256 = vmatpush1.bf16.msra.mxu0 0
  %3257 = vmatprep.subr.bf16.mxu0 0
  %3258 = vmatpush1.bf16.msra.mxu0 0
  %3259 = vmatprep.subr.bf16.mxu0 0
  %3260 = vmatpush1.bf16.msra.mxu0 0
  %3261 = vmatprep.subr.bf16.mxu0 0
  %3262 = vmatpush1.bf16.msra.mxu0 0
  %3263 = vmatprep.subr.bf16.mxu0 0
  %3264 = vmatpush1.bf16.msra.mxu0 0
  %3265 = vmatprep.subr.bf16.mxu0 0
  %3266 = vmatpush1.bf16.msra.mxu0 0
  %3267 = vmatprep.mubr.bf16.mxu0 0
  %3268 = vmatmul.mubr.bf16.gmra.mrb[0].mxu0 %v3233
  %v3269 = vpop.f32.mrb[0].mxu0
  %v3270 = vadd.f32 0.0, %v3269
  %v3271 = vpop.f32.mrb[0].mxu0
  %v3272 = vadd.f32 0.0, %v3271
  %v3273 = vpop.f32.mrb[0].mxu0
  %v3274 = vpop.f32.mrb[0].mxu0
  %3275 = vdwg.mxu0
  %3276 = vmatprep.subr.bf16.mxu0 0
  %3277 = vmatpush1.bf16.msra.mxu0 %v517
  %3278 = vmatprep.subr.bf16.mxu0 0
  %3279 = vmatpush1.bf16.msra.mxu0 %v520
  %3280 = vmatprep.subr.bf16.mxu0 0
  %3281 = vmatpush1.bf16.msra.mxu0 %v523
  %3282 = vmatprep.subr.bf16.mxu0 0
  %3283 = vmatpush1.bf16.msra.mxu0 %v526
  %3284 = vmatprep.subr.bf16.mxu0 0
  %3285 = vmatpush1.bf16.msra.mxu0 %v529
  %3286 = vmatprep.subr.bf16.mxu0 0
  %3287 = vmatpush1.bf16.msra.mxu0 %v532
  %3288 = vmatprep.subr.bf16.mxu0 0
  %3289 = vmatpush1.bf16.msra.mxu0 %v535
  %3290 = vmatprep.subr.bf16.mxu0 0
  %3291 = vmatpush1.bf16.msra.mxu0 %v538
  %3292 = vmatprep.subr.bf16.mxu0 0
  %3293 = vmatpush1.bf16.msra.mxu0 0
  %3294 = vmatprep.subr.bf16.mxu0 0
  %3295 = vmatpush1.bf16.msra.mxu0 0
  %3296 = vmatprep.subr.bf16.mxu0 0
  %3297 = vmatpush1.bf16.msra.mxu0 0
  %3298 = vmatprep.subr.bf16.mxu0 0
  %3299 = vmatpush1.bf16.msra.mxu0 0
  %3300 = vmatprep.subr.bf16.mxu0 0
  %3301 = vmatpush1.bf16.msra.mxu0 0
  %3302 = vmatprep.subr.bf16.mxu0 0
  %3303 = vmatpush1.bf16.msra.mxu0 0
  %3304 = vmatprep.subr.bf16.mxu0 0
  %3305 = vmatpush1.bf16.msra.mxu0 0
  %3306 = vmatprep.subr.bf16.mxu0 0
  %3307 = vmatpush1.bf16.msra.mxu0 0
  %3308 = vmatprep.mubr.bf16.mxu0 0
  %3309 = vmatmul.mubr.bf16.gmra.mrb[0].mxu0 %v3233
  %v3310 = vpop.f32.mrb[0].mxu0
  %v3311 = vadd.f32 0.0, %v3310
  %v3312 = vpop.f32.mrb[0].mxu0
  %v3313 = vpop.f32.mrb[0].mxu0
  %v3314 = vpop.f32.mrb[0].mxu0
  %3315 = vdwg.mxu0
  %v3318 = vcombine.low %v3270, %v3272
  %v3320 = vunpack.c.l.s4 1966171168
  %v3321 = vunpack.c.0.s8 %v3320
  %v3322 = vlaneseq
  %v3323 = vshrl.u32 %v3322, 7
  %v3324 = vsub.s32 %v3321, %v3323
  %v3325 = vrot.slane %v3318, %v3324
  %v3326 = vcombine.high %v3325, %v3325
  %v3328 = vunpack.c.l.s4 1966171168
  %v3329 = vunpack.c.0.s8 %v3328
  %v3330 = vlaneseq
  %v3331 = vshrl.u32 %v3330, 7
  %v3332 = vsub.s32 %v3329, %v3331
  %v3333 = vrot.slane %v3325, %v3332
  %v3335 = vunpack.c.l.s4 1966171168
  %v3336 = vunpack.c.0.s8 %v3335
  %v3337 = vlaneseq
  %v3338 = vshrl.u32 %v3337, 7
  %v3339 = vsub.s32 %v3336, %v3338
  %v3340 = vrot.slane %v3326, %v3339
  %v3343 = vadd.f32 %v3228, %v3333
  %v3344 = vadd.f32 %v3230, %v3340
  %v3345 = vxor.u32 %v3343, 2147483648
  %v3346 = vxor.u32 %v3344, 2147483648
  %v3347 = vmul.f32 %v3345, 1.442695
  %v3348 = vpow.pop %v3347
  %v3349 = vmul.f32 %v3346, 1.442695
  %v3350 = vpow.pop %v3349
  %v3351 = vadd.f32 %v3348, 1.0
  %v3352 = vadd.f32 %v3350, 1.0
  %v3353 = vrcp.pop %v3351
  %v3354 = vmul.f32 1.0, %v3353
  %v3355 = vrcp.pop %v3352
  %v3356 = vmul.f32 1.0, %v3355
  %v3357 = vadd.f32 %v3311, %v689
  %v3360 = vunpack.c.l.s4 1966171168
  %v3361 = vunpack.c.0.s8 %v3360
  %v3362 = vlaneseq
  %v3363 = vshrl.u32 %v3362, 7
  %v3364 = vsub.s32 %v3361, %v3363
  %v3365 = vrot.slane %v3357, %v3364
  %v3366 = vcombine.high %v3365, %v3365
  %v3368 = vunpack.c.l.s4 1966171168
  %v3369 = vunpack.c.0.s8 %v3368
  %v3370 = vlaneseq
  %v3371 = vshrl.u32 %v3370, 7
  %v3372 = vsub.s32 %v3369, %v3371
  %v3373 = vrot.slane %v3365, %v3372
  %v3375 = vunpack.c.l.s4 1966171168
  %v3376 = vunpack.c.0.s8 %v3375
  %v3377 = vlaneseq
  %v3378 = vshrl.u32 %v3377, 7
  %v3379 = vsub.s32 %v3376, %v3378
  %v3380 = vrot.slane %v3366, %v3379
  %v3383 = vmul.f32 %v3354, %v3373
  %v3384 = vmul.f32 %v3356, %v3380
  %v3387 = vrot.slane %v3228, 2
  %v3388 = vrot.slane %v3230, 2
  %v3391 = vadd.f32 %v3387, %v3383
  %v3392 = vadd.f32 %v3388, %v3384
  %v3393 = vtanh.pop %v3391
  %v3394 = vtanh.pop %v3392
  %v3397 = vrot.slane %v3354, 1
  %v3398 = vrot.slane %v3356, 1
  %v3401 = vsub.f32 1.0, %v3397
  %v3402 = vsub.f32 1.0, %v3398
  %v3403 = vmul.f32 %v3401, %v3393
  %v3404 = vmul.f32 %v3402, %v3394
  %v3405 = vmul.f32 %v3397, %v3207
  %v3406 = vmul.f32 %v3398, %v3208
  %v3407 = vadd.f32 %v3403, %v3405
  %v3408 = vadd.f32 %v3404, %v3406
  %v3409 = vpack.c.bf16 %v3407, %v3407
  %v3410 = vpack.c.bf16 %v3408, %v3408
  %v3413 = vunpack.c.l.b16 %v3409
  %v3414 = vunpack.c.l.b16 %v3410
  %v3415 = vpack.c.b16 %v3413, %v3413
  %v3416 = vpack.c.b16 %v3414, %v3414
  %v3418 = vshll.u32 %v3415, 16
  %v3420 = vrot.slane %v3418, 6
  %v3422 = vshll.u32 %v3416, 16
  %v3424 = vrot.slane %v3422, 6
  %v3427 = vld [vmem:[%s5 + $0x4] sm:$0x4]
  %v3428 = vsel %vm1805, %v3420, %v3427
  %3429 = vst [vmem:[%s5 + $0x4] sm:$0x4] %v3428
  %v3430 = vld [vmem:[%s5 + $0x14] sm:$0x4]
  %v3431 = vsel %vm1805, %v3424, %v3430
  %3432 = vst [vmem:[%s5 + $0x14] sm:$0x4] %v3431
  %s3433 = scalar_lea.vmem [#allocation3], 30
  %v3434 = vld [vmem:[%s3433] ss:$8 sm:$0x7]
  %s3435 = scalar_lea.vmem [#allocation3], 126
  %v3436 = vld [vmem:[%s3435] ss:$8 sm:$0x7]
  %v3437 = vrot.slane %v3414, 7
  %v3438 = vsel %vm788, %v3437, %v3413
  %v3439 = vpack.c.b16 %v3438, %v3438
  %3441 = vmatprep.subr.bf16.mxu0 %v516
  %3442 = vmatpush1.bf16.msra.mxu0 %v515
  %3443 = vmatprep.subr.bf16.mxu0 %v519
  %3444 = vmatpush1.bf16.msra.mxu0 %v518
  %3445 = vmatprep.subr.bf16.mxu0 %v522
  %3446 = vmatpush1.bf16.msra.mxu0 %v521
  %3447 = vmatprep.subr.bf16.mxu0 %v525
  %3448 = vmatpush1.bf16.msra.mxu0 %v524
  %3449 = vmatprep.subr.bf16.mxu0 %v528
  %3450 = vmatpush1.bf16.msra.mxu0 %v527
  %3451 = vmatprep.subr.bf16.mxu0 %v531
  %3452 = vmatpush1.bf16.msra.mxu0 %v530
  %3453 = vmatprep.subr.bf16.mxu0 %v534
  %3454 = vmatpush1.bf16.msra.mxu0 %v533
  %3455 = vmatprep.subr.bf16.mxu0 %v537
  %3456 = vmatpush1.bf16.msra.mxu0 %v536
  %3457 = vmatprep.subr.bf16.mxu0 0
  %3458 = vmatpush1.bf16.msra.mxu0 0
  %3459 = vmatprep.subr.bf16.mxu0 0
  %3460 = vmatpush1.bf16.msra.mxu0 0
  %3461 = vmatprep.subr.bf16.mxu0 0
  %3462 = vmatpush1.bf16.msra.mxu0 0
  %3463 = vmatprep.subr.bf16.mxu0 0
  %3464 = vmatpush1.bf16.msra.mxu0 0
  %3465 = vmatprep.subr.bf16.mxu0 0
  %3466 = vmatpush1.bf16.msra.mxu0 0
  %3467 = vmatprep.subr.bf16.mxu0 0
  %3468 = vmatpush1.bf16.msra.mxu0 0
  %3469 = vmatprep.subr.bf16.mxu0 0
  %3470 = vmatpush1.bf16.msra.mxu0 0
  %3471 = vmatprep.subr.bf16.mxu0 0
  %3472 = vmatpush1.bf16.msra.mxu0 0
  %3473 = vmatprep.mubr.bf16.mxu0 0
  %3474 = vmatmul.mubr.bf16.gmra.mrb[0].mxu0 %v3439
  %v3475 = vpop.f32.mrb[0].mxu0
  %v3476 = vadd.f32 0.0, %v3475
  %v3477 = vpop.f32.mrb[0].mxu0
  %v3478 = vadd.f32 0.0, %v3477
  %v3479 = vpop.f32.mrb[0].mxu0
  %v3480 = vpop.f32.mrb[0].mxu0
  %3481 = vdwg.mxu0
  %3482 = vmatprep.subr.bf16.mxu0 0
  %3483 = vmatpush1.bf16.msra.mxu0 %v517
  %3484 = vmatprep.subr.bf16.mxu0 0
  %3485 = vmatpush1.bf16.msra.mxu0 %v520
  %3486 = vmatprep.subr.bf16.mxu0 0
  %3487 = vmatpush1.bf16.msra.mxu0 %v523
  %3488 = vmatprep.subr.bf16.mxu0 0
  %3489 = vmatpush1.bf16.msra.mxu0 %v526
  %3490 = vmatprep.subr.bf16.mxu0 0
  %3491 = vmatpush1.bf16.msra.mxu0 %v529
  %3492 = vmatprep.subr.bf16.mxu0 0
  %3493 = vmatpush1.bf16.msra.mxu0 %v532
  %3494 = vmatprep.subr.bf16.mxu0 0
  %3495 = vmatpush1.bf16.msra.mxu0 %v535
  %3496 = vmatprep.subr.bf16.mxu0 0
  %3497 = vmatpush1.bf16.msra.mxu0 %v538
  %3498 = vmatprep.subr.bf16.mxu0 0
  %3499 = vmatpush1.bf16.msra.mxu0 0
  %3500 = vmatprep.subr.bf16.mxu0 0
  %3501 = vmatpush1.bf16.msra.mxu0 0
  %3502 = vmatprep.subr.bf16.mxu0 0
  %3503 = vmatpush1.bf16.msra.mxu0 0
  %3504 = vmatprep.subr.bf16.mxu0 0
  %3505 = vmatpush1.bf16.msra.mxu0 0
  %3506 = vmatprep.subr.bf16.mxu0 0
  %3507 = vmatpush1.bf16.msra.mxu0 0
  %3508 = vmatprep.subr.bf16.mxu0 0
  %3509 = vmatpush1.bf16.msra.mxu0 0
  %3510 = vmatprep.subr.bf16.mxu0 0
  %3511 = vmatpush1.bf16.msra.mxu0 0
  %3512 = vmatprep.subr.bf16.mxu0 0
  %3513 = vmatpush1.bf16.msra.mxu0 0
  %3514 = vmatprep.mubr.bf16.mxu0 0
  %3515 = vmatmul.mubr.bf16.gmra.mrb[0].mxu0 %v3439
  %v3516 = vpop.f32.mrb[0].mxu0
  %v3517 = vadd.f32 0.0, %v3516
  %v3518 = vpop.f32.mrb[0].mxu0
  %v3519 = vpop.f32.mrb[0].mxu0
  %v3520 = vpop.f32.mrb[0].mxu0
  %3521 = vdwg.mxu0
  %v3524 = vcombine.low %v3476, %v3478
  %v3526 = vunpack.c.l.s4 1966171168
  %v3527 = vunpack.c.0.s8 %v3526
  %v3528 = vlaneseq
  %v3529 = vshrl.u32 %v3528, 7
  %v3530 = vsub.s32 %v3527, %v3529
  %v3531 = vrot.slane %v3524, %v3530
  %v3532 = vcombine.high %v3531, %v3531
  %v3534 = vunpack.c.l.s4 1966171168
  %v3535 = vunpack.c.0.s8 %v3534
  %v3536 = vlaneseq
  %v3537 = vshrl.u32 %v3536, 7
  %v3538 = vsub.s32 %v3535, %v3537
  %v3539 = vrot.slane %v3531, %v3538
  %v3541 = vunpack.c.l.s4 1966171168
  %v3542 = vunpack.c.0.s8 %v3541
  %v3543 = vlaneseq
  %v3544 = vshrl.u32 %v3543, 7
  %v3545 = vsub.s32 %v3542, %v3544
  %v3546 = vrot.slane %v3532, %v3545
  %v3549 = vadd.f32 %v3434, %v3539
  %v3550 = vadd.f32 %v3436, %v3546
  %v3551 = vxor.u32 %v3549, 2147483648
  %v3552 = vxor.u32 %v3550, 2147483648
  %v3553 = vmul.f32 %v3551, 1.442695
  %v3554 = vpow.pop %v3553
  %v3555 = vmul.f32 %v3552, 1.442695
  %v3556 = vpow.pop %v3555
  %v3557 = vadd.f32 %v3554, 1.0
  %v3558 = vadd.f32 %v3556, 1.0
  %v3559 = vrcp.pop %v3557
  %v3560 = vmul.f32 1.0, %v3559
  %v3561 = vrcp.pop %v3558
  %v3562 = vmul.f32 1.0, %v3561
  %v3563 = vadd.f32 %v3517, %v689
  %v3566 = vunpack.c.l.s4 1966171168
  %v3567 = vunpack.c.0.s8 %v3566
  %v3568 = vlaneseq
  %v3569 = vshrl.u32 %v3568, 7
  %v3570 = vsub.s32 %v3567, %v3569
  %v3571 = vrot.slane %v3563, %v3570
  %v3572 = vcombine.high %v3571, %v3571
  %v3574 = vunpack.c.l.s4 1966171168
  %v3575 = vunpack.c.0.s8 %v3574
  %v3576 = vlaneseq
  %v3577 = vshrl.u32 %v3576, 7
  %v3578 = vsub.s32 %v3575, %v3577
  %v3579 = vrot.slane %v3571, %v3578
  %v3581 = vunpack.c.l.s4 1966171168
  %v3582 = vunpack.c.0.s8 %v3581
  %v3583 = vlaneseq
  %v3584 = vshrl.u32 %v3583, 7
  %v3585 = vsub.s32 %v3582, %v3584
  %v3586 = vrot.slane %v3572, %v3585
  %v3589 = vmul.f32 %v3560, %v3579
  %v3590 = vmul.f32 %v3562, %v3586
  %v3593 = vrot.slane %v3434, 2
  %v3594 = vrot.slane %v3436, 2
  %v3597 = vadd.f32 %v3593, %v3589
  %v3598 = vadd.f32 %v3594, %v3590
  %v3599 = vtanh.pop %v3597
  %v3600 = vtanh.pop %v3598
  %v3603 = vrot.slane %v3560, 1
  %v3604 = vrot.slane %v3562, 1
  %v3607 = vsub.f32 1.0, %v3603
  %v3608 = vsub.f32 1.0, %v3604
  %v3609 = vmul.f32 %v3607, %v3599
  %v3610 = vmul.f32 %v3608, %v3600
  %v3611 = vmul.f32 %v3603, %v3407
  %v3612 = vmul.f32 %v3604, %v3408
  %v3613 = vadd.f32 %v3609, %v3611
  %v3614 = vadd.f32 %v3610, %v3612
  %v3615 = vpack.c.bf16 %v3613, %v3613
  %v3616 = vpack.c.bf16 %v3614, %v3614
  %v3619 = vunpack.c.l.b16 %v3615
  %v3620 = vunpack.c.l.b16 %v3616
  %v3621 = vpack.c.b16 %v3619, %v3619
  %v3622 = vpack.c.b16 %v3620, %v3620
  %v3623 = vrot.slane %v3621, 5
  %v3624 = vrot.slane %v3622, 5
  %v3627 = vld [vmem:[%s5 + $0x4] sm:$0x8]
  %v3628 = vsel %vm2008, %v3623, %v3627
  %3629 = vst [vmem:[%s5 + $0x4] sm:$0x8] %v3628
  %v3630 = vld [vmem:[%s5 + $0x14] sm:$0x8]
  %v3631 = vsel %vm2008, %v3624, %v3630
  %3632 = vst [vmem:[%s5 + $0x14] sm:$0x8] %v3631
  %s3633 = scalar_lea.vmem [#allocation3], 31
  %v3634 = vld [vmem:[%s3633] ss:$8 sm:$0x7]
  %s3635 = scalar_lea.vmem [#allocation3], 127
  %v3636 = vld [vmem:[%s3635] ss:$8 sm:$0x7]
  %v3637 = vrot.slane %v3620, 7
  %v3638 = vsel %vm788, %v3637, %v3619
  %v3639 = vpack.c.b16 %v3638, %v3638
  %3641 = vmatprep.subr.bf16.mxu0 %v516
  %3642 = vmatpush1.bf16.msra.mxu0 %v515
  %3643 = vmatprep.subr.bf16.mxu0 %v519
  %3644 = vmatpush1.bf16.msra.mxu0 %v518
  %3645 = vmatprep.subr.bf16.mxu0 %v522
  %3646 = vmatpush1.bf16.msra.mxu0 %v521
  %3647 = vmatprep.subr.bf16.mxu0 %v525
  %3648 = vmatpush1.bf16.msra.mxu0 %v524
  %3649 = vmatprep.subr.bf16.mxu0 %v528
  %3650 = vmatpush1.bf16.msra.mxu0 %v527
  %3651 = vmatprep.subr.bf16.mxu0 %v531
  %3652 = vmatpush1.bf16.msra.mxu0 %v530
  %3653 = vmatprep.subr.bf16.mxu0 %v534
  %3654 = vmatpush1.bf16.msra.mxu0 %v533
  %3655 = vmatprep.subr.bf16.mxu0 %v537
  %3656 = vmatpush1.bf16.msra.mxu0 %v536
  %3657 = vmatprep.subr.bf16.mxu0 0
  %3658 = vmatpush1.bf16.msra.mxu0 0
  %3659 = vmatprep.subr.bf16.mxu0 0
  %3660 = vmatpush1.bf16.msra.mxu0 0
  %3661 = vmatprep.subr.bf16.mxu0 0
  %3662 = vmatpush1.bf16.msra.mxu0 0
  %3663 = vmatprep.subr.bf16.mxu0 0
  %3664 = vmatpush1.bf16.msra.mxu0 0
  %3665 = vmatprep.subr.bf16.mxu0 0
  %3666 = vmatpush1.bf16.msra.mxu0 0
  %3667 = vmatprep.subr.bf16.mxu0 0
  %3668 = vmatpush1.bf16.msra.mxu0 0
  %3669 = vmatprep.subr.bf16.mxu0 0
  %3670 = vmatpush1.bf16.msra.mxu0 0
  %3671 = vmatprep.subr.bf16.mxu0 0
  %3672 = vmatpush1.bf16.msra.mxu0 0
  %3673 = vmatprep.mubr.bf16.mxu0 0
  %3674 = vmatmul.mubr.bf16.gmra.mrb[0].mxu0 %v3639
  %v3675 = vpop.f32.mrb[0].mxu0
  %v3676 = vadd.f32 0.0, %v3675
  %v3677 = vpop.f32.mrb[0].mxu0
  %v3678 = vadd.f32 0.0, %v3677
  %v3679 = vpop.f32.mrb[0].mxu0
  %v3680 = vpop.f32.mrb[0].mxu0
  %3681 = vdwg.mxu0
  %3682 = vmatprep.subr.bf16.mxu0 0
  %3683 = vmatpush1.bf16.msra.mxu0 %v517
  %3684 = vmatprep.subr.bf16.mxu0 0
  %3685 = vmatpush1.bf16.msra.mxu0 %v520
  %3686 = vmatprep.subr.bf16.mxu0 0
  %3687 = vmatpush1.bf16.msra.mxu0 %v523
  %3688 = vmatprep.subr.bf16.mxu0 0
  %3689 = vmatpush1.bf16.msra.mxu0 %v526
  %3690 = vmatprep.subr.bf16.mxu0 0
  %3691 = vmatpush1.bf16.msra.mxu0 %v529
  %3692 = vmatprep.subr.bf16.mxu0 0
  %3693 = vmatpush1.bf16.msra.mxu0 %v532
  %3694 = vmatprep.subr.bf16.mxu0 0
  %3695 = vmatpush1.bf16.msra.mxu0 %v535
  %3696 = vmatprep.subr.bf16.mxu0 0
  %3697 = vmatpush1.bf16.msra.mxu0 %v538
  %3698 = vmatprep.subr.bf16.mxu0 0
  %3699 = vmatpush1.bf16.msra.mxu0 0
  %3700 = vmatprep.subr.bf16.mxu0 0
  %3701 = vmatpush1.bf16.msra.mxu0 0
  %3702 = vmatprep.subr.bf16.mxu0 0
  %3703 = vmatpush1.bf16.msra.mxu0 0
  %3704 = vmatprep.subr.bf16.mxu0 0
  %3705 = vmatpush1.bf16.msra.mxu0 0
  %3706 = vmatprep.subr.bf16.mxu0 0
  %3707 = vmatpush1.bf16.msra.mxu0 0
  %3708 = vmatprep.subr.bf16.mxu0 0
  %3709 = vmatpush1.bf16.msra.mxu0 0
  %3710 = vmatprep.subr.bf16.mxu0 0
  %3711 = vmatpush1.bf16.msra.mxu0 0
  %3712 = vmatprep.subr.bf16.mxu0 0
  %3713 = vmatpush1.bf16.msra.mxu0 0
  %3714 = vmatprep.mubr.bf16.mxu0 0
  %3715 = vmatmul.mubr.bf16.gmra.mrb[0].mxu0 %v3639
  %v3716 = vpop.f32.mrb[0].mxu0
  %v3717 = vadd.f32 0.0, %v3716
  %v3718 = vpop.f32.mrb[0].mxu0
  %v3719 = vpop.f32.mrb[0].mxu0
  %v3720 = vpop.f32.mrb[0].mxu0
  %3721 = vdwg.mxu0
  %v3724 = vcombine.low %v3676, %v3678
  %v3726 = vunpack.c.l.s4 1966171168
  %v3727 = vunpack.c.0.s8 %v3726
  %v3728 = vlaneseq
  %v3729 = vshrl.u32 %v3728, 7
  %v3730 = vsub.s32 %v3727, %v3729
  %v3731 = vrot.slane %v3724, %v3730
  %v3732 = vcombine.high %v3731, %v3731
  %v3734 = vunpack.c.l.s4 1966171168
  %v3735 = vunpack.c.0.s8 %v3734
  %v3736 = vlaneseq
  %v3737 = vshrl.u32 %v3736, 7
  %v3738 = vsub.s32 %v3735, %v3737
  %v3739 = vrot.slane %v3731, %v3738
  %v3741 = vunpack.c.l.s4 1966171168
  %v3742 = vunpack.c.0.s8 %v3741
  %v3743 = vlaneseq
  %v3744 = vshrl.u32 %v3743, 7
  %v3745 = vsub.s32 %v3742, %v3744
  %v3746 = vrot.slane %v3732, %v3745
  %v3749 = vadd.f32 %v3634, %v3739
  %v3750 = vadd.f32 %v3636, %v3746
  %v3751 = vxor.u32 %v3749, 2147483648
  %v3752 = vxor.u32 %v3750, 2147483648
  %v3753 = vmul.f32 %v3751, 1.442695
  %v3754 = vpow.pop %v3753
  %v3755 = vmul.f32 %v3752, 1.442695
  %v3756 = vpow.pop %v3755
  %v3757 = vadd.f32 %v3754, 1.0
  %v3758 = vadd.f32 %v3756, 1.0
  %v3759 = vrcp.pop %v3757
  %v3760 = vmul.f32 1.0, %v3759
  %v3761 = vrcp.pop %v3758
  %v3762 = vmul.f32 1.0, %v3761
  %v3763 = vadd.f32 %v3717, %v689
  %v3766 = vunpack.c.l.s4 1966171168
  %v3767 = vunpack.c.0.s8 %v3766
  %v3768 = vlaneseq
  %v3769 = vshrl.u32 %v3768, 7
  %v3770 = vsub.s32 %v3767, %v3769
  %v3771 = vrot.slane %v3763, %v3770
  %v3772 = vcombine.high %v3771, %v3771
  %v3774 = vunpack.c.l.s4 1966171168
  %v3775 = vunpack.c.0.s8 %v3774
  %v3776 = vlaneseq
  %v3777 = vshrl.u32 %v3776, 7
  %v3778 = vsub.s32 %v3775, %v3777
  %v3779 = vrot.slane %v3771, %v3778
  %v3781 = vunpack.c.l.s4 1966171168
  %v3782 = vunpack.c.0.s8 %v3781
  %v3783 = vlaneseq
  %v3784 = vshrl.u32 %v3783, 7
  %v3785 = vsub.s32 %v3782, %v3784
  %v3786 = vrot.slane %v3772, %v3785
  %v3789 = vmul.f32 %v3760, %v3779
  %v3790 = vmul.f32 %v3762, %v3786
  %v3793 = vrot.slane %v3634, 2
  %v3794 = vrot.slane %v3636, 2
  %v3797 = vadd.f32 %v3793, %v3789
  %v3798 = vadd.f32 %v3794, %v3790
  %v3799 = vtanh.pop %v3797
  %v3800 = vtanh.pop %v3798
  %v3803 = vrot.slane %v3760, 1
  %v3804 = vrot.slane %v3762, 1
  %v3807 = vsub.f32 1.0, %v3803
  %v3808 = vsub.f32 1.0, %v3804
  %v3809 = vmul.f32 %v3807, %v3799
  %v3810 = vmul.f32 %v3808, %v3800
  %v3811 = vmul.f32 %v3803, %v3613
  %v3812 = vmul.f32 %v3804, %v3614
  %v3813 = vadd.f32 %v3809, %v3811
  %v3814 = vadd.f32 %v3810, %v3812
  %v3815 = vpack.c.bf16 %v3813, %v3813
  %v3816 = vpack.c.bf16 %v3814, %v3814
  %v3819 = vunpack.c.l.b16 %v3815
  %v3820 = vunpack.c.l.b16 %v3816
  %v3821 = vpack.c.b16 %v3819, %v3819
  %v3822 = vpack.c.b16 %v3820, %v3820
  %v3824 = vshll.u32 %v3821, 16
  %v3826 = vrot.slane %v3824, 5
  %v3828 = vshll.u32 %v3822, 16
  %v3830 = vrot.slane %v3828, 5
  %v3833 = vld [vmem:[%s5 + $0x4] sm:$0x8]
  %v3834 = vsel %vm2216, %v3826, %v3833
  %3835 = vst [vmem:[%s5 + $0x4] sm:$0x8] %v3834
  %v3836 = vld [vmem:[%s5 + $0x14] sm:$0x8]
  %v3837 = vsel %vm2216, %v3830, %v3836
  %3838 = vst [vmem:[%s5 + $0x14] sm:$0x8] %v3837
  %s3839 = scalar_lea.vmem [#allocation3], 48
  %v3840 = vld [vmem:[%s3839] ss:$8 sm:$0x7]
  %s3841 = scalar_lea.vmem [#allocation3], 144
  %v3842 = vld [vmem:[%s3841] ss:$8 sm:$0x7]
  %v3843 = vrot.slane %v3820, 7
  %v3844 = vsel %vm788, %v3843, %v3819
  %v3845 = vpack.c.b16 %v3844, %v3844
  %3847 = vmatprep.subr.bf16.mxu0 %v516
  %3848 = vmatpush1.bf16.msra.mxu0 %v515
  %3849 = vmatprep.subr.bf16.mxu0 %v519
  %3850 = vmatpush1.bf16.msra.mxu0 %v518
  %3851 = vmatprep.subr.bf16.mxu0 %v522
  %3852 = vmatpush1.bf16.msra.mxu0 %v521
  %3853 = vmatprep.subr.bf16.mxu0 %v525
  %3854 = vmatpush1.bf16.msra.mxu0 %v524
  %3855 = vmatprep.subr.bf16.mxu0 %v528
  %3856 = vmatpush1.bf16.msra.mxu0 %v527
  %3857 = vmatprep.subr.bf16.mxu0 %v531
  %3858 = vmatpush1.bf16.msra.mxu0 %v530
  %3859 = vmatprep.subr.bf16.mxu0 %v534
  %3860 = vmatpush1.bf16.msra.mxu0 %v533
  %3861 = vmatprep.subr.bf16.mxu0 %v537
  %3862 = vmatpush1.bf16.msra.mxu0 %v536
  %3863 = vmatprep.subr.bf16.mxu0 0
  %3864 = vmatpush1.bf16.msra.mxu0 0
  %3865 = vmatprep.subr.bf16.mxu0 0
  %3866 = vmatpush1.bf16.msra.mxu0 0
  %3867 = vmatprep.subr.bf16.mxu0 0
  %3868 = vmatpush1.bf16.msra.mxu0 0
  %3869 = vmatprep.subr.bf16.mxu0 0
  %3870 = vmatpush1.bf16.msra.mxu0 0
  %3871 = vmatprep.subr.bf16.mxu0 0
  %3872 = vmatpush1.bf16.msra.mxu0 0
  %3873 = vmatprep.subr.bf16.mxu0 0
  %3874 = vmatpush1.bf16.msra.mxu0 0
  %3875 = vmatprep.subr.bf16.mxu0 0
  %3876 = vmatpush1.bf16.msra.mxu0 0
  %3877 = vmatprep.subr.bf16.mxu0 0
  %3878 = vmatpush1.bf16.msra.mxu0 0
  %3879 = vmatprep.mubr.bf16.mxu0 0
  %3880 = vmatmul.mubr.bf16.gmra.mrb[0].mxu0 %v3845
  %v3881 = vpop.f32.mrb[0].mxu0
  %v3882 = vadd.f32 0.0, %v3881
  %v3883 = vpop.f32.mrb[0].mxu0
  %v3884 = vadd.f32 0.0, %v3883
  %v3885 = vpop.f32.mrb[0].mxu0
  %v3886 = vpop.f32.mrb[0].mxu0
  %3887 = vdwg.mxu0
  %3888 = vmatprep.subr.bf16.mxu0 0
  %3889 = vmatpush1.bf16.msra.mxu0 %v517
  %3890 = vmatprep.subr.bf16.mxu0 0
  %3891 = vmatpush1.bf16.msra.mxu0 %v520
  %3892 = vmatprep.subr.bf16.mxu0 0
  %3893 = vmatpush1.bf16.msra.mxu0 %v523
  %3894 = vmatprep.subr.bf16.mxu0 0
  %3895 = vmatpush1.bf16.msra.mxu0 %v526
  %3896 = vmatprep.subr.bf16.mxu0 0
  %3897 = vmatpush1.bf16.msra.mxu0 %v529
  %3898 = vmatprep.subr.bf16.mxu0 0
  %3899 = vmatpush1.bf16.msra.mxu0 %v532
  %3900 = vmatprep.subr.bf16.mxu0 0
  %3901 = vmatpush1.bf16.msra.mxu0 %v535
  %3902 = vmatprep.subr.bf16.mxu0 0
  %3903 = vmatpush1.bf16.msra.mxu0 %v538
  %3904 = vmatprep.subr.bf16.mxu0 0
  %3905 = vmatpush1.bf16.msra.mxu0 0
  %3906 = vmatprep.subr.bf16.mxu0 0
  %3907 = vmatpush1.bf16.msra.mxu0 0
  %3908 = vmatprep.subr.bf16.mxu0 0
  %3909 = vmatpush1.bf16.msra.mxu0 0
  %3910 = vmatprep.subr.bf16.mxu0 0
  %3911 = vmatpush1.bf16.msra.mxu0 0
  %3912 = vmatprep.subr.bf16.mxu0 0
  %3913 = vmatpush1.bf16.msra.mxu0 0
  %3914 = vmatprep.subr.bf16.mxu0 0
  %3915 = vmatpush1.bf16.msra.mxu0 0
  %3916 = vmatprep.subr.bf16.mxu0 0
  %3917 = vmatpush1.bf16.msra.mxu0 0
  %3918 = vmatprep.subr.bf16.mxu0 0
  %3919 = vmatpush1.bf16.msra.mxu0 0
  %3920 = vmatprep.mubr.bf16.mxu0 0
  %3921 = vmatmul.mubr.bf16.gmra.mrb[0].mxu0 %v3845
  %v3922 = vpop.f32.mrb[0].mxu0
  %v3923 = vadd.f32 0.0, %v3922
  %v3924 = vpop.f32.mrb[0].mxu0
  %v3925 = vpop.f32.mrb[0].mxu0
  %v3926 = vpop.f32.mrb[0].mxu0
  %3927 = vdwg.mxu0
  %v3930 = vcombine.low %v3882, %v3884
  %v3932 = vunpack.c.l.s4 1966171168
  %v3933 = vunpack.c.0.s8 %v3932
  %v3934 = vlaneseq
  %v3935 = vshrl.u32 %v3934, 7
  %v3936 = vsub.s32 %v3933, %v3935
  %v3937 = vrot.slane %v3930, %v3936
  %v3938 = vcombine.high %v3937, %v3937
  %v3940 = vunpack.c.l.s4 1966171168
  %v3941 = vunpack.c.0.s8 %v3940
  %v3942 = vlaneseq
  %v3943 = vshrl.u32 %v3942, 7
  %v3944 = vsub.s32 %v3941, %v3943
  %v3945 = vrot.slane %v3937, %v3944
  %v3947 = vunpack.c.l.s4 1966171168
  %v3948 = vunpack.c.0.s8 %v3947
  %v3949 = vlaneseq
  %v3950 = vshrl.u32 %v3949, 7
  %v3951 = vsub.s32 %v3948, %v3950
  %v3952 = vrot.slane %v3938, %v3951
  %v3955 = vadd.f32 %v3840, %v3945
  %v3956 = vadd.f32 %v3842, %v3952
  %v3957 = vxor.u32 %v3955, 2147483648
  %v3958 = vxor.u32 %v3956, 2147483648
  %v3959 = vmul.f32 %v3957, 1.442695
  %v3960 = vpow.pop %v3959
  %v3961 = vmul.f32 %v3958, 1.442695
  %v3962 = vpow.pop %v3961
  %v3963 = vadd.f32 %v3960, 1.0
  %v3964 = vadd.f32 %v3962, 1.0
  %v3965 = vrcp.pop %v3963
  %v3966 = vmul.f32 1.0, %v3965
  %v3967 = vrcp.pop %v3964
  %v3968 = vmul.f32 1.0, %v3967
  %v3969 = vadd.f32 %v3923, %v689
  %v3972 = vunpack.c.l.s4 1966171168
  %v3973 = vunpack.c.0.s8 %v3972
  %v3974 = vlaneseq
  %v3975 = vshrl.u32 %v3974, 7
  %v3976 = vsub.s32 %v3973, %v3975
  %v3977 = vrot.slane %v3969, %v3976
  %v3978 = vcombine.high %v3977, %v3977
  %v3980 = vunpack.c.l.s4 1966171168
  %v3981 = vunpack.c.0.s8 %v3980
  %v3982 = vlaneseq
  %v3983 = vshrl.u32 %v3982, 7
  %v3984 = vsub.s32 %v3981, %v3983
  %v3985 = vrot.slane %v3977, %v3984
  %v3987 = vunpack.c.l.s4 1966171168
  %v3988 = vunpack.c.0.s8 %v3987
  %v3989 = vlaneseq
  %v3990 = vshrl.u32 %v3989, 7
  %v3991 = vsub.s32 %v3988, %v3990
  %v3992 = vrot.slane %v3978, %v3991
  %v3995 = vmul.f32 %v3966, %v3985
  %v3996 = vmul.f32 %v3968, %v3992
  %v3999 = vrot.slane %v3840, 2
  %v4000 = vrot.slane %v3842, 2
  %v4003 = vadd.f32 %v3999, %v3995
  %v4004 = vadd.f32 %v4000, %v3996
  %v4005 = vtanh.pop %v4003
  %v4006 = vtanh.pop %v4004
  %v4009 = vrot.slane %v3966, 1
  %v4010 = vrot.slane %v3968, 1
  %v4013 = vsub.f32 1.0, %v4009
  %v4014 = vsub.f32 1.0, %v4010
  %v4015 = vmul.f32 %v4013, %v4005
  %v4016 = vmul.f32 %v4014, %v4006
  %v4017 = vmul.f32 %v4009, %v3813
  %v4018 = vmul.f32 %v4010, %v3814
  %v4019 = vadd.f32 %v4015, %v4017
  %v4020 = vadd.f32 %v4016, %v4018
  %v4021 = vpack.c.bf16 %v4019, %v4019
  %v4022 = vpack.c.bf16 %v4020, %v4020
  %v4023 = vld [vmem:[%s5 + $0x8] sm:$0x1]
  %v4024 = vsel %vm772, %v4021, %v4023
  %4025 = vst [vmem:[%s5 + $0x8] sm:$0x1] %v4024
  %v4026 = vld [vmem:[%s5 + $0x18] sm:$0x1]
  %v4027 = vsel %vm772, %v4022, %v4026
  %4028 = vst [vmem:[%s5 + $0x18] sm:$0x1] %v4027
  %s4029 = scalar_lea.vmem [#allocation3], 49
  %v4030 = vld [vmem:[%s4029] ss:$8 sm:$0x7]
  %s4031 = scalar_lea.vmem [#allocation3], 145
  %v4032 = vld [vmem:[%s4031] ss:$8 sm:$0x7]
  %v4035 = vunpack.c.l.b16 %v4021
  %v4036 = vunpack.c.l.b16 %v4022
  %v4037 = vrot.slane %v4036, 7
  %v4038 = vsel %vm788, %v4037, %v4035
  %v4039 = vpack.c.b16 %v4038, %v4038
  %4041 = vmatprep.subr.bf16.mxu0 %v516
  %4042 = vmatpush1.bf16.msra.mxu0 %v515
  %4043 = vmatprep.subr.bf16.mxu0 %v519
  %4044 = vmatpush1.bf16.msra.mxu0 %v518
  %4045 = vmatprep.subr.bf16.mxu0 %v522
  %4046 = vmatpush1.bf16.msra.mxu0 %v521
  %4047 = vmatprep.subr.bf16.mxu0 %v525
  %4048 = vmatpush1.bf16.msra.mxu0 %v524
  %4049 = vmatprep.subr.bf16.mxu0 %v528
  %4050 = vmatpush1.bf16.msra.mxu0 %v527
  %4051 = vmatprep.subr.bf16.mxu0 %v531
  %4052 = vmatpush1.bf16.msra.mxu0 %v530
  %4053 = vmatprep.subr.bf16.mxu0 %v534
  %4054 = vmatpush1.bf16.msra.mxu0 %v533
  %4055 = vmatprep.subr.bf16.mxu0 %v537
  %4056 = vmatpush1.bf16.msra.mxu0 %v536
  %4057 = vmatprep.subr.bf16.mxu0 0
  %4058 = vmatpush1.bf16.msra.mxu0 0
  %4059 = vmatprep.subr.bf16.mxu0 0
  %4060 = vmatpush1.bf16.msra.mxu0 0
  %4061 = vmatprep.subr.bf16.mxu0 0
  %4062 = vmatpush1.bf16.msra.mxu0 0
  %4063 = vmatprep.subr.bf16.mxu0 0
  %4064 = vmatpush1.bf16.msra.mxu0 0
  %4065 = vmatprep.subr.bf16.mxu0 0
  %4066 = vmatpush1.bf16.msra.mxu0 0
  %4067 = vmatprep.subr.bf16.mxu0 0
  %4068 = vmatpush1.bf16.msra.mxu0 0
  %4069 = vmatprep.subr.bf16.mxu0 0
  %4070 = vmatpush1.bf16.msra.mxu0 0
  %4071 = vmatprep.subr.bf16.mxu0 0
  %4072 = vmatpush1.bf16.msra.mxu0 0
  %4073 = vmatprep.mubr.bf16.mxu0 0
  %4074 = vmatmul.mubr.bf16.gmra.mrb[0].mxu0 %v4039
  %v4075 = vpop.f32.mrb[0].mxu0
  %v4076 = vadd.f32 0.0, %v4075
  %v4077 = vpop.f32.mrb[0].mxu0
  %v4078 = vadd.f32 0.0, %v4077
  %v4079 = vpop.f32.mrb[0].mxu0
  %v4080 = vpop.f32.mrb[0].mxu0
  %4081 = vdwg.mxu0
  %4082 = vmatprep.subr.bf16.mxu0 0
  %4083 = vmatpush1.bf16.msra.mxu0 %v517
  %4084 = vmatprep.subr.bf16.mxu0 0
  %4085 = vmatpush1.bf16.msra.mxu0 %v520
  %4086 = vmatprep.subr.bf16.mxu0 0
  %4087 = vmatpush1.bf16.msra.mxu0 %v523
  %4088 = vmatprep.subr.bf16.mxu0 0
  %4089 = vmatpush1.bf16.msra.mxu0 %v526
  %4090 = vmatprep.subr.bf16.mxu0 0
  %4091 = vmatpush1.bf16.msra.mxu0 %v529
  %4092 = vmatprep.subr.bf16.mxu0 0
  %4093 = vmatpush1.bf16.msra.mxu0 %v532
  %4094 = vmatprep.subr.bf16.mxu0 0
  %4095 = vmatpush1.bf16.msra.mxu0 %v535
  %4096 = vmatprep.subr.bf16.mxu0 0
  %4097 = vmatpush1.bf16.msra.mxu0 %v538
  %4098 = vmatprep.subr.bf16.mxu0 0
  %4099 = vmatpush1.bf16.msra.mxu0 0
  %4100 = vmatprep.subr.bf16.mxu0 0
  %4101 = vmatpush1.bf16.msra.mxu0 0
  %4102 = vmatprep.subr.bf16.mxu0 0
  %4103 = vmatpush1.bf16.msra.mxu0 0
  %4104 = vmatprep.subr.bf16.mxu0 0
  %4105 = vmatpush1.bf16.msra.mxu0 0
  %4106 = vmatprep.subr.bf16.mxu0 0
  %4107 = vmatpush1.bf16.msra.mxu0 0
  %4108 = vmatprep.subr.bf16.mxu0 0
  %4109 = vmatpush1.bf16.msra.mxu0 0
  %4110 = vmatprep.subr.bf16.mxu0 0
  %4111 = vmatpush1.bf16.msra.mxu0 0
  %4112 = vmatprep.subr.bf16.mxu0 0
  %4113 = vmatpush1.bf16.msra.mxu0 0
  %4114 = vmatprep.mubr.bf16.mxu0 0
  %4115 = vmatmul.mubr.bf16.gmra.mrb[0].mxu0 %v4039
  %v4116 = vpop.f32.mrb[0].mxu0
  %v4117 = vadd.f32 0.0, %v4116
  %v4118 = vpop.f32.mrb[0].mxu0
  %v4119 = vpop.f32.mrb[0].mxu0
  %v4120 = vpop.f32.mrb[0].mxu0
  %4121 = vdwg.mxu0
  %v4124 = vcombine.low %v4076, %v4078
  %v4126 = vunpack.c.l.s4 1966171168
  %v4127 = vunpack.c.0.s8 %v4126
  %v4128 = vlaneseq
  %v4129 = vshrl.u32 %v4128, 7
  %v4130 = vsub.s32 %v4127, %v4129
  %v4131 = vrot.slane %v4124, %v4130
  %v4132 = vcombine.high %v4131, %v4131
  %v4134 = vunpack.c.l.s4 1966171168
  %v4135 = vunpack.c.0.s8 %v4134
  %v4136 = vlaneseq
  %v4137 = vshrl.u32 %v4136, 7
  %v4138 = vsub.s32 %v4135, %v4137
  %v4139 = vrot.slane %v4131, %v4138
  %v4141 = vunpack.c.l.s4 1966171168
  %v4142 = vunpack.c.0.s8 %v4141
  %v4143 = vlaneseq
  %v4144 = vshrl.u32 %v4143, 7
  %v4145 = vsub.s32 %v4142, %v4144
  %v4146 = vrot.slane %v4132, %v4145
  %v4149 = vadd.f32 %v4030, %v4139
  %v4150 = vadd.f32 %v4032, %v4146
  %v4151 = vxor.u32 %v4149, 2147483648
  %v4152 = vxor.u32 %v4150, 2147483648
  %v4153 = vmul.f32 %v4151, 1.442695
  %v4154 = vpow.pop %v4153
  %v4155 = vmul.f32 %v4152, 1.442695
  %v4156 = vpow.pop %v4155
  %v4157 = vadd.f32 %v4154, 1.0
  %v4158 = vadd.f32 %v4156, 1.0
  %v4159 = vrcp.pop %v4157
  %v4160 = vmul.f32 1.0, %v4159
  %v4161 = vrcp.pop %v4158
  %v4162 = vmul.f32 1.0, %v4161
  %v4163 = vadd.f32 %v4117, %v689
  %v4166 = vunpack.c.l.s4 1966171168
  %v4167 = vunpack.c.0.s8 %v4166
  %v4168 = vlaneseq
  %v4169 = vshrl.u32 %v4168, 7
  %v4170 = vsub.s32 %v4167, %v4169
  %v4171 = vrot.slane %v4163, %v4170
  %v4172 = vcombine.high %v4171, %v4171
  %v4174 = vunpack.c.l.s4 1966171168
  %v4175 = vunpack.c.0.s8 %v4174
  %v4176 = vlaneseq
  %v4177 = vshrl.u32 %v4176, 7
  %v4178 = vsub.s32 %v4175, %v4177
  %v4179 = vrot.slane %v4171, %v4178
  %v4181 = vunpack.c.l.s4 1966171168
  %v4182 = vunpack.c.0.s8 %v4181
  %v4183 = vlaneseq
  %v4184 = vshrl.u32 %v4183, 7
  %v4185 = vsub.s32 %v4182, %v4184
  %v4186 = vrot.slane %v4172, %v4185
  %v4189 = vmul.f32 %v4160, %v4179
  %v4190 = vmul.f32 %v4162, %v4186
  %v4193 = vrot.slane %v4030, 2
  %v4194 = vrot.slane %v4032, 2
  %v4197 = vadd.f32 %v4193, %v4189
  %v4198 = vadd.f32 %v4194, %v4190
  %v4199 = vtanh.pop %v4197
  %v4200 = vtanh.pop %v4198
  %v4203 = vrot.slane %v4160, 1
  %v4204 = vrot.slane %v4162, 1
  %v4207 = vsub.f32 1.0, %v4203
  %v4208 = vsub.f32 1.0, %v4204
  %v4209 = vmul.f32 %v4207, %v4199
  %v4210 = vmul.f32 %v4208, %v4200
  %v4211 = vmul.f32 %v4203, %v4019
  %v4212 = vmul.f32 %v4204, %v4020
  %v4213 = vadd.f32 %v4209, %v4211
  %v4214 = vadd.f32 %v4210, %v4212
  %v4215 = vpack.c.bf16 %v4213, %v4213
  %v4216 = vpack.c.bf16 %v4214, %v4214
  %v4219 = vunpack.c.l.b16 %v4215
  %v4220 = vunpack.c.l.b16 %v4216
  %v4221 = vpack.c.b16 %v4219, %v4219
  %v4222 = vpack.c.b16 %v4220, %v4220
  %v4224 = vshll.u32 %v4221, 16
  %v4227 = vshll.u32 %v4222, 16
  %v4231 = vld [vmem:[%s5 + $0x8] sm:$0x1]
  %v4232 = vsel %vm983, %v4224, %v4231
  %4233 = vst [vmem:[%s5 + $0x8] sm:$0x1] %v4232
  %v4234 = vld [vmem:[%s5 + $0x18] sm:$0x1]
  %v4235 = vsel %vm983, %v4227, %v4234
  %4236 = vst [vmem:[%s5 + $0x18] sm:$0x1] %v4235
  %s4237 = scalar_lea.vmem [#allocation3], 50
  %v4238 = vld [vmem:[%s4237] ss:$8 sm:$0x7]
  %s4239 = scalar_lea.vmem [#allocation3], 146
  %v4240 = vld [vmem:[%s4239] ss:$8 sm:$0x7]
  %v4241 = vrot.slane %v4220, 7
  %v4242 = vsel %vm788, %v4241, %v4219
  %v4243 = vpack.c.b16 %v4242, %v4242
  %4245 = vmatprep.subr.bf16.mxu0 %v516
  %4246 = vmatpush1.bf16.msra.mxu0 %v515
  %4247 = vmatprep.subr.bf16.mxu0 %v519
  %4248 = vmatpush1.bf16.msra.mxu0 %v518
  %4249 = vmatprep.subr.bf16.mxu0 %v522
  %4250 = vmatpush1.bf16.msra.mxu0 %v521
  %4251 = vmatprep.subr.bf16.mxu0 %v525
  %4252 = vmatpush1.bf16.msra.mxu0 %v524
  %4253 = vmatprep.subr.bf16.mxu0 %v528
  %4254 = vmatpush1.bf16.msra.mxu0 %v527
  %4255 = vmatprep.subr.bf16.mxu0 %v531
  %4256 = vmatpush1.bf16.msra.mxu0 %v530
  %4257 = vmatprep.subr.bf16.mxu0 %v534
  %4258 = vmatpush1.bf16.msra.mxu0 %v533
  %4259 = vmatprep.subr.bf16.mxu0 %v537
  %4260 = vmatpush1.bf16.msra.mxu0 %v536
  %4261 = vmatprep.subr.bf16.mxu0 0
  %4262 = vmatpush1.bf16.msra.mxu0 0
  %4263 = vmatprep.subr.bf16.mxu0 0
  %4264 = vmatpush1.bf16.msra.mxu0 0
  %4265 = vmatprep.subr.bf16.mxu0 0
  %4266 = vmatpush1.bf16.msra.mxu0 0
  %4267 = vmatprep.subr.bf16.mxu0 0
  %4268 = vmatpush1.bf16.msra.mxu0 0
  %4269 = vmatprep.subr.bf16.mxu0 0
  %4270 = vmatpush1.bf16.msra.mxu0 0
  %4271 = vmatprep.subr.bf16.mxu0 0
  %4272 = vmatpush1.bf16.msra.mxu0 0
  %4273 = vmatprep.subr.bf16.mxu0 0
  %4274 = vmatpush1.bf16.msra.mxu0 0
  %4275 = vmatprep.subr.bf16.mxu0 0
  %4276 = vmatpush1.bf16.msra.mxu0 0
  %4277 = vmatprep.mubr.bf16.mxu0 0
  %4278 = vmatmul.mubr.bf16.gmra.mrb[0].mxu0 %v4243
  %v4279 = vpop.f32.mrb[0].mxu0
  %v4280 = vadd.f32 0.0, %v4279
  %v4281 = vpop.f32.mrb[0].mxu0
  %v4282 = vadd.f32 0.0, %v4281
  %v4283 = vpop.f32.mrb[0].mxu0
  %v4284 = vpop.f32.mrb[0].mxu0
  %4285 = vdwg.mxu0
  %4286 = vmatprep.subr.bf16.mxu0 0
  %4287 = vmatpush1.bf16.msra.mxu0 %v517
  %4288 = vmatprep.subr.bf16.mxu0 0
  %4289 = vmatpush1.bf16.msra.mxu0 %v520
  %4290 = vmatprep.subr.bf16.mxu0 0
  %4291 = vmatpush1.bf16.msra.mxu0 %v523
  %4292 = vmatprep.subr.bf16.mxu0 0
  %4293 = vmatpush1.bf16.msra.mxu0 %v526
  %4294 = vmatprep.subr.bf16.mxu0 0
  %4295 = vmatpush1.bf16.msra.mxu0 %v529
  %4296 = vmatprep.subr.bf16.mxu0 0
  %4297 = vmatpush1.bf16.msra.mxu0 %v532
  %4298 = vmatprep.subr.bf16.mxu0 0
  %4299 = vmatpush1.bf16.msra.mxu0 %v535
  %4300 = vmatprep.subr.bf16.mxu0 0
  %4301 = vmatpush1.bf16.msra.mxu0 %v538
  %4302 = vmatprep.subr.bf16.mxu0 0
  %4303 = vmatpush1.bf16.msra.mxu0 0
  %4304 = vmatprep.subr.bf16.mxu0 0
  %4305 = vmatpush1.bf16.msra.mxu0 0
  %4306 = vmatprep.subr.bf16.mxu0 0
  %4307 = vmatpush1.bf16.msra.mxu0 0
  %4308 = vmatprep.subr.bf16.mxu0 0
  %4309 = vmatpush1.bf16.msra.mxu0 0
  %4310 = vmatprep.subr.bf16.mxu0 0
  %4311 = vmatpush1.bf16.msra.mxu0 0
  %4312 = vmatprep.subr.bf16.mxu0 0
  %4313 = vmatpush1.bf16.msra.mxu0 0
  %4314 = vmatprep.subr.bf16.mxu0 0
  %4315 = vmatpush1.bf16.msra.mxu0 0
  %4316 = vmatprep.subr.bf16.mxu0 0
  %4317 = vmatpush1.bf16.msra.mxu0 0
  %4318 = vmatprep.mubr.bf16.mxu0 0
  %4319 = vmatmul.mubr.bf16.gmra.mrb[0].mxu0 %v4243
  %v4320 = vpop.f32.mrb[0].mxu0
  %v4321 = vadd.f32 0.0, %v4320
  %v4322 = vpop.f32.mrb[0].mxu0
  %v4323 = vpop.f32.mrb[0].mxu0
  %v4324 = vpop.f32.mrb[0].mxu0
  %4325 = vdwg.mxu0
  %v4328 = vcombine.low %v4280, %v4282
  %v4330 = vunpack.c.l.s4 1966171168
  %v4331 = vunpack.c.0.s8 %v4330
  %v4332 = vlaneseq
  %v4333 = vshrl.u32 %v4332, 7
  %v4334 = vsub.s32 %v4331, %v4333
  %v4335 = vrot.slane %v4328, %v4334
  %v4336 = vcombine.high %v4335, %v4335
  %v4338 = vunpack.c.l.s4 1966171168
  %v4339 = vunpack.c.0.s8 %v4338
  %v4340 = vlaneseq
  %v4341 = vshrl.u32 %v4340, 7
  %v4342 = vsub.s32 %v4339, %v4341
  %v4343 = vrot.slane %v4335, %v4342
  %v4345 = vunpack.c.l.s4 1966171168
  %v4346 = vunpack.c.0.s8 %v4345
  %v4347 = vlaneseq
  %v4348 = vshrl.u32 %v4347, 7
  %v4349 = vsub.s32 %v4346, %v4348
  %v4350 = vrot.slane %v4336, %v4349
  %v4353 = vadd.f32 %v4238, %v4343
  %v4354 = vadd.f32 %v4240, %v4350
  %v4355 = vxor.u32 %v4353, 2147483648
  %v4356 = vxor.u32 %v4354, 2147483648
  %v4357 = vmul.f32 %v4355, 1.442695
  %v4358 = vpow.pop %v4357
  %v4359 = vmul.f32 %v4356, 1.442695
  %v4360 = vpow.pop %v4359
  %v4361 = vadd.f32 %v4358, 1.0
  %v4362 = vadd.f32 %v4360, 1.0
  %v4363 = vrcp.pop %v4361
  %v4364 = vmul.f32 1.0, %v4363
  %v4365 = vrcp.pop %v4362
  %v4366 = vmul.f32 1.0, %v4365
  %v4367 = vadd.f32 %v4321, %v689
  %v4370 = vunpack.c.l.s4 1966171168
  %v4371 = vunpack.c.0.s8 %v4370
  %v4372 = vlaneseq
  %v4373 = vshrl.u32 %v4372, 7
  %v4374 = vsub.s32 %v4371, %v4373
  %v4375 = vrot.slane %v4367, %v4374
  %v4376 = vcombine.high %v4375, %v4375
  %v4378 = vunpack.c.l.s4 1966171168
  %v4379 = vunpack.c.0.s8 %v4378
  %v4380 = vlaneseq
  %v4381 = vshrl.u32 %v4380, 7
  %v4382 = vsub.s32 %v4379, %v4381
  %v4383 = vrot.slane %v4375, %v4382
  %v4385 = vunpack.c.l.s4 1966171168
  %v4386 = vunpack.c.0.s8 %v4385
  %v4387 = vlaneseq
  %v4388 = vshrl.u32 %v4387, 7
  %v4389 = vsub.s32 %v4386, %v4388
  %v4390 = vrot.slane %v4376, %v4389
  %v4393 = vmul.f32 %v4364, %v4383
  %v4394 = vmul.f32 %v4366, %v4390
  %v4397 = vrot.slane %v4238, 2
  %v4398 = vrot.slane %v4240, 2
  %v4401 = vadd.f32 %v4397, %v4393
  %v4402 = vadd.f32 %v4398, %v4394
  %v4403 = vtanh.pop %v4401
  %v4404 = vtanh.pop %v4402
  %v4407 = vrot.slane %v4364, 1
  %v4408 = vrot.slane %v4366, 1
  %v4411 = vsub.f32 1.0, %v4407
  %v4412 = vsub.f32 1.0, %v4408
  %v4413 = vmul.f32 %v4411, %v4403
  %v4414 = vmul.f32 %v4412, %v4404
  %v4415 = vmul.f32 %v4407, %v4213
  %v4416 = vmul.f32 %v4408, %v4214
  %v4417 = vadd.f32 %v4413, %v4415
  %v4418 = vadd.f32 %v4414, %v4416
  %v4419 = vpack.c.bf16 %v4417, %v4417
  %v4420 = vpack.c.bf16 %v4418, %v4418
  %v4423 = vunpack.c.l.b16 %v4419
  %v4424 = vunpack.c.l.b16 %v4420
  %v4425 = vpack.c.b16 %v4423, %v4423
  %v4426 = vpack.c.b16 %v4424, %v4424
  %v4427 = vrot.slane %v4425, 7
  %v4428 = vrot.slane %v4426, 7
  %v4431 = vld [vmem:[%s5 + $0x8] sm:$0x2]
  %v4432 = vsel %vm1186, %v4427, %v4431
  %4433 = vst [vmem:[%s5 + $0x8] sm:$0x2] %v4432
  %v4434 = vld [vmem:[%s5 + $0x18] sm:$0x2]
  %v4435 = vsel %vm1186, %v4428, %v4434
  %4436 = vst [vmem:[%s5 + $0x18] sm:$0x2] %v4435
  %s4437 = scalar_lea.vmem [#allocation3], 51
  %v4438 = vld [vmem:[%s4437] ss:$8 sm:$0x7]
  %s4439 = scalar_lea.vmem [#allocation3], 147
  %v4440 = vld [vmem:[%s4439] ss:$8 sm:$0x7]
  %v4441 = vrot.slane %v4424, 7
  %v4442 = vsel %vm788, %v4441, %v4423
  %v4443 = vpack.c.b16 %v4442, %v4442
  %4445 = vmatprep.subr.bf16.mxu0 %v516
  %4446 = vmatpush1.bf16.msra.mxu0 %v515
  %4447 = vmatprep.subr.bf16.mxu0 %v519
  %4448 = vmatpush1.bf16.msra.mxu0 %v518
  %4449 = vmatprep.subr.bf16.mxu0 %v522
  %4450 = vmatpush1.bf16.msra.mxu0 %v521
  %4451 = vmatprep.subr.bf16.mxu0 %v525
  %4452 = vmatpush1.bf16.msra.mxu0 %v524
  %4453 = vmatprep.subr.bf16.mxu0 %v528
  %4454 = vmatpush1.bf16.msra.mxu0 %v527
  %4455 = vmatprep.subr.bf16.mxu0 %v531
  %4456 = vmatpush1.bf16.msra.mxu0 %v530
  %4457 = vmatprep.subr.bf16.mxu0 %v534
  %4458 = vmatpush1.bf16.msra.mxu0 %v533
  %4459 = vmatprep.subr.bf16.mxu0 %v537
  %4460 = vmatpush1.bf16.msra.mxu0 %v536
  %4461 = vmatprep.subr.bf16.mxu0 0
  %4462 = vmatpush1.bf16.msra.mxu0 0
  %4463 = vmatprep.subr.bf16.mxu0 0
  %4464 = vmatpush1.bf16.msra.mxu0 0
  %4465 = vmatprep.subr.bf16.mxu0 0
  %4466 = vmatpush1.bf16.msra.mxu0 0
  %4467 = vmatprep.subr.bf16.mxu0 0
  %4468 = vmatpush1.bf16.msra.mxu0 0
  %4469 = vmatprep.subr.bf16.mxu0 0
  %4470 = vmatpush1.bf16.msra.mxu0 0
  %4471 = vmatprep.subr.bf16.mxu0 0
  %4472 = vmatpush1.bf16.msra.mxu0 0
  %4473 = vmatprep.subr.bf16.mxu0 0
  %4474 = vmatpush1.bf16.msra.mxu0 0
  %4475 = vmatprep.subr.bf16.mxu0 0
  %4476 = vmatpush1.bf16.msra.mxu0 0
  %4477 = vmatprep.mubr.bf16.mxu0 0
  %4478 = vmatmul.mubr.bf16.gmra.mrb[0].mxu0 %v4443
  %v4479 = vpop.f32.mrb[0].mxu0
  %v4480 = vadd.f32 0.0, %v4479
  %v4481 = vpop.f32.mrb[0].mxu0
  %v4482 = vadd.f32 0.0, %v4481
  %v4483 = vpop.f32.mrb[0].mxu0
  %v4484 = vpop.f32.mrb[0].mxu0
  %4485 = vdwg.mxu0
  %4486 = vmatprep.subr.bf16.mxu0 0
  %4487 = vmatpush1.bf16.msra.mxu0 %v517
  %4488 = vmatprep.subr.bf16.mxu0 0
  %4489 = vmatpush1.bf16.msra.mxu0 %v520
  %4490 = vmatprep.subr.bf16.mxu0 0
  %4491 = vmatpush1.bf16.msra.mxu0 %v523
  %4492 = vmatprep.subr.bf16.mxu0 0
  %4493 = vmatpush1.bf16.msra.mxu0 %v526
  %4494 = vmatprep.subr.bf16.mxu0 0
  %4495 = vmatpush1.bf16.msra.mxu0 %v529
  %4496 = vmatprep.subr.bf16.mxu0 0
  %4497 = vmatpush1.bf16.msra.mxu0 %v532
  %4498 = vmatprep.subr.bf16.mxu0 0
  %4499 = vmatpush1.bf16.msra.mxu0 %v535
  %4500 = vmatprep.subr.bf16.mxu0 0
  %4501 = vmatpush1.bf16.msra.mxu0 %v538
  %4502 = vmatprep.subr.bf16.mxu0 0
  %4503 = vmatpush1.bf16.msra.mxu0 0
  %4504 = vmatprep.subr.bf16.mxu0 0
  %4505 = vmatpush1.bf16.msra.mxu0 0
  %4506 = vmatprep.subr.bf16.mxu0 0
  %4507 = vmatpush1.bf16.msra.mxu0 0
  %4508 = vmatprep.subr.bf16.mxu0 0
  %4509 = vmatpush1.bf16.msra.mxu0 0
  %4510 = vmatprep.subr.bf16.mxu0 0
  %4511 = vmatpush1.bf16.msra.mxu0 0
  %4512 = vmatprep.subr.bf16.mxu0 0
  %4513 = vmatpush1.bf16.msra.mxu0 0
  %4514 = vmatprep.subr.bf16.mxu0 0
  %4515 = vmatpush1.bf16.msra.mxu0 0
  %4516 = vmatprep.subr.bf16.mxu0 0
  %4517 = vmatpush1.bf16.msra.mxu0 0
  %4518 = vmatprep.mubr.bf16.mxu0 0
  %4519 = vmatmul.mubr.bf16.gmra.mrb[0].mxu0 %v4443
  %v4520 = vpop.f32.mrb[0].mxu0
  %v4521 = vadd.f32 0.0, %v4520
  %v4522 = vpop.f32.mrb[0].mxu0
  %v4523 = vpop.f32.mrb[0].mxu0
  %v4524 = vpop.f32.mrb[0].mxu0
  %4525 = vdwg.mxu0
  %v4528 = vcombine.low %v4480, %v4482
  %v4530 = vunpack.c.l.s4 1966171168
  %v4531 = vunpack.c.0.s8 %v4530
  %v4532 = vlaneseq
  %v4533 = vshrl.u32 %v4532, 7
  %v4534 = vsub.s32 %v4531, %v4533
  %v4535 = vrot.slane %v4528, %v4534
  %v4536 = vcombine.high %v4535, %v4535
  %v4538 = vunpack.c.l.s4 1966171168
  %v4539 = vunpack.c.0.s8 %v4538
  %v4540 = vlaneseq
  %v4541 = vshrl.u32 %v4540, 7
  %v4542 = vsub.s32 %v4539, %v4541
  %v4543 = vrot.slane %v4535, %v4542
  %v4545 = vunpack.c.l.s4 1966171168
  %v4546 = vunpack.c.0.s8 %v4545
  %v4547 = vlaneseq
  %v4548 = vshrl.u32 %v4547, 7
  %v4549 = vsub.s32 %v4546, %v4548
  %v4550 = vrot.slane %v4536, %v4549
  %v4553 = vadd.f32 %v4438, %v4543
  %v4554 = vadd.f32 %v4440, %v4550
  %v4555 = vxor.u32 %v4553, 2147483648
  %v4556 = vxor.u32 %v4554, 2147483648
  %v4557 = vmul.f32 %v4555, 1.442695
  %v4558 = vpow.pop %v4557
  %v4559 = vmul.f32 %v4556, 1.442695
  %v4560 = vpow.pop %v4559
  %v4561 = vadd.f32 %v4558, 1.0
  %v4562 = vadd.f32 %v4560, 1.0
  %v4563 = vrcp.pop %v4561
  %v4564 = vmul.f32 1.0, %v4563
  %v4565 = vrcp.pop %v4562
  %v4566 = vmul.f32 1.0, %v4565
  %v4567 = vadd.f32 %v4521, %v689
  %v4570 = vunpack.c.l.s4 1966171168
  %v4571 = vunpack.c.0.s8 %v4570
  %v4572 = vlaneseq
  %v4573 = vshrl.u32 %v4572, 7
  %v4574 = vsub.s32 %v4571, %v4573
  %v4575 = vrot.slane %v4567, %v4574
  %v4576 = vcombine.high %v4575, %v4575
  %v4578 = vunpack.c.l.s4 1966171168
  %v4579 = vunpack.c.0.s8 %v4578
  %v4580 = vlaneseq
  %v4581 = vshrl.u32 %v4580, 7
  %v4582 = vsub.s32 %v4579, %v4581
  %v4583 = vrot.slane %v4575, %v4582
  %v4585 = vunpack.c.l.s4 1966171168
  %v4586 = vunpack.c.0.s8 %v4585
  %v4587 = vlaneseq
  %v4588 = vshrl.u32 %v4587, 7
  %v4589 = vsub.s32 %v4586, %v4588
  %v4590 = vrot.slane %v4576, %v4589
  %v4593 = vmul.f32 %v4564, %v4583
  %v4594 = vmul.f32 %v4566, %v4590
  %v4597 = vrot.slane %v4438, 2
  %v4598 = vrot.slane %v4440, 2
  %v4601 = vadd.f32 %v4597, %v4593
  %v4602 = vadd.f32 %v4598, %v4594
  %v4603 = vtanh.pop %v4601
  %v4604 = vtanh.pop %v4602
  %v4607 = vrot.slane %v4564, 1
  %v4608 = vrot.slane %v4566, 1
  %v4611 = vsub.f32 1.0, %v4607
  %v4612 = vsub.f32 1.0, %v4608
  %v4613 = vmul.f32 %v4611, %v4603
  %v4614 = vmul.f32 %v4612, %v4604
  %v4615 = vmul.f32 %v4607, %v4417
  %v4616 = vmul.f32 %v4608, %v4418
  %v4617 = vadd.f32 %v4613, %v4615
  %v4618 = vadd.f32 %v4614, %v4616
  %v4619 = vpack.c.bf16 %v4617, %v4617
  %v4620 = vpack.c.bf16 %v4618, %v4618
  %v4623 = vunpack.c.l.b16 %v4619
  %v4624 = vunpack.c.l.b16 %v4620
  %v4625 = vpack.c.b16 %v4623, %v4623
  %v4626 = vpack.c.b16 %v4624, %v4624
  %v4628 = vshll.u32 %v4625, 16
  %v4630 = vrot.slane %v4628, 7
  %v4632 = vshll.u32 %v4626, 16
  %v4634 = vrot.slane %v4632, 7
  %v4637 = vld [vmem:[%s5 + $0x8] sm:$0x2]
  %v4638 = vsel %vm1394, %v4630, %v4637
  %4639 = vst [vmem:[%s5 + $0x8] sm:$0x2] %v4638
  %v4640 = vld [vmem:[%s5 + $0x18] sm:$0x2]
  %v4641 = vsel %vm1394, %v4634, %v4640
  %4642 = vst [vmem:[%s5 + $0x18] sm:$0x2] %v4641
  %s4643 = scalar_lea.vmem [#allocation3], 52
  %v4644 = vld [vmem:[%s4643] ss:$8 sm:$0x7]
  %s4645 = scalar_lea.vmem [#allocation3], 148
  %v4646 = vld [vmem:[%s4645] ss:$8 sm:$0x7]
  %v4647 = vrot.slane %v4624, 7
  %v4648 = vsel %vm788, %v4647, %v4623
  %v4649 = vpack.c.b16 %v4648, %v4648
  %4651 = vmatprep.subr.bf16.mxu0 %v516
  %4652 = vmatpush1.bf16.msra.mxu0 %v515
  %4653 = vmatprep.subr.bf16.mxu0 %v519
  %4654 = vmatpush1.bf16.msra.mxu0 %v518
  %4655 = vmatprep.subr.bf16.mxu0 %v522
  %4656 = vmatpush1.bf16.msra.mxu0 %v521
  %4657 = vmatprep.subr.bf16.mxu0 %v525
  %4658 = vmatpush1.bf16.msra.mxu0 %v524
  %4659 = vmatprep.subr.bf16.mxu0 %v528
  %4660 = vmatpush1.bf16.msra.mxu0 %v527
  %4661 = vmatprep.subr.bf16.mxu0 %v531
  %4662 = vmatpush1.bf16.msra.mxu0 %v530
  %4663 = vmatprep.subr.bf16.mxu0 %v534
  %4664 = vmatpush1.bf16.msra.mxu0 %v533
  %4665 = vmatprep.subr.bf16.mxu0 %v537
  %4666 = vmatpush1.bf16.msra.mxu0 %v536
  %4667 = vmatprep.subr.bf16.mxu0 0
  %4668 = vmatpush1.bf16.msra.mxu0 0
  %4669 = vmatprep.subr.bf16.mxu0 0
  %4670 = vmatpush1.bf16.msra.mxu0 0
  %4671 = vmatprep.subr.bf16.mxu0 0
  %4672 = vmatpush1.bf16.msra.mxu0 0
  %4673 = vmatprep.subr.bf16.mxu0 0
  %4674 = vmatpush1.bf16.msra.mxu0 0
  %4675 = vmatprep.subr.bf16.mxu0 0
  %4676 = vmatpush1.bf16.msra.mxu0 0
  %4677 = vmatprep.subr.bf16.mxu0 0
  %4678 = vmatpush1.bf16.msra.mxu0 0
  %4679 = vmatprep.subr.bf16.mxu0 0
  %4680 = vmatpush1.bf16.msra.mxu0 0
  %4681 = vmatprep.subr.bf16.mxu0 0
  %4682 = vmatpush1.bf16.msra.mxu0 0
  %4683 = vmatprep.mubr.bf16.mxu0 0
  %4684 = vmatmul.mubr.bf16.gmra.mrb[0].mxu0 %v4649
  %v4685 = vpop.f32.mrb[0].mxu0
  %v4686 = vadd.f32 0.0, %v4685
  %v4687 = vpop.f32.mrb[0].mxu0
  %v4688 = vadd.f32 0.0, %v4687
  %v4689 = vpop.f32.mrb[0].mxu0
  %v4690 = vpop.f32.mrb[0].mxu0
  %4691 = vdwg.mxu0
  %4692 = vmatprep.subr.bf16.mxu0 0
  %4693 = vmatpush1.bf16.msra.mxu0 %v517
  %4694 = vmatprep.subr.bf16.mxu0 0
  %4695 = vmatpush1.bf16.msra.mxu0 %v520
  %4696 = vmatprep.subr.bf16.mxu0 0
  %4697 = vmatpush1.bf16.msra.mxu0 %v523
  %4698 = vmatprep.subr.bf16.mxu0 0
  %4699 = vmatpush1.bf16.msra.mxu0 %v526
  %4700 = vmatprep.subr.bf16.mxu0 0
  %4701 = vmatpush1.bf16.msra.mxu0 %v529
  %4702 = vmatprep.subr.bf16.mxu0 0
  %4703 = vmatpush1.bf16.msra.mxu0 %v532
  %4704 = vmatprep.subr.bf16.mxu0 0
  %4705 = vmatpush1.bf16.msra.mxu0 %v535
  %4706 = vmatprep.subr.bf16.mxu0 0
  %4707 = vmatpush1.bf16.msra.mxu0 %v538
  %4708 = vmatprep.subr.bf16.mxu0 0
  %4709 = vmatpush1.bf16.msra.mxu0 0
  %4710 = vmatprep.subr.bf16.mxu0 0
  %4711 = vmatpush1.bf16.msra.mxu0 0
  %4712 = vmatprep.subr.bf16.mxu0 0
  %4713 = vmatpush1.bf16.msra.mxu0 0
  %4714 = vmatprep.subr.bf16.mxu0 0
  %4715 = vmatpush1.bf16.msra.mxu0 0
  %4716 = vmatprep.subr.bf16.mxu0 0
  %4717 = vmatpush1.bf16.msra.mxu0 0
  %4718 = vmatprep.subr.bf16.mxu0 0
  %4719 = vmatpush1.bf16.msra.mxu0 0
  %4720 = vmatprep.subr.bf16.mxu0 0
  %4721 = vmatpush1.bf16.msra.mxu0 0
  %4722 = vmatprep.subr.bf16.mxu0 0
  %4723 = vmatpush1.bf16.msra.mxu0 0
  %4724 = vmatprep.mubr.bf16.mxu0 0
  %4725 = vmatmul.mubr.bf16.gmra.mrb[0].mxu0 %v4649
  %v4726 = vpop.f32.mrb[0].mxu0
  %v4727 = vadd.f32 0.0, %v4726
  %v4728 = vpop.f32.mrb[0].mxu0
  %v4729 = vpop.f32.mrb[0].mxu0
  %v4730 = vpop.f32.mrb[0].mxu0
  %4731 = vdwg.mxu0
  %v4734 = vcombine.low %v4686, %v4688
  %v4736 = vunpack.c.l.s4 1966171168
  %v4737 = vunpack.c.0.s8 %v4736
  %v4738 = vlaneseq
  %v4739 = vshrl.u32 %v4738, 7
  %v4740 = vsub.s32 %v4737, %v4739
  %v4741 = vrot.slane %v4734, %v4740
  %v4742 = vcombine.high %v4741, %v4741
  %v4744 = vunpack.c.l.s4 1966171168
  %v4745 = vunpack.c.0.s8 %v4744
  %v4746 = vlaneseq
  %v4747 = vshrl.u32 %v4746, 7
  %v4748 = vsub.s32 %v4745, %v4747
  %v4749 = vrot.slane %v4741, %v4748
  %v4751 = vunpack.c.l.s4 1966171168
  %v4752 = vunpack.c.0.s8 %v4751
  %v4753 = vlaneseq
  %v4754 = vshrl.u32 %v4753, 7
  %v4755 = vsub.s32 %v4752, %v4754
  %v4756 = vrot.slane %v4742, %v4755
  %v4759 = vadd.f32 %v4644, %v4749
  %v4760 = vadd.f32 %v4646, %v4756
  %v4761 = vxor.u32 %v4759, 2147483648
  %v4762 = vxor.u32 %v4760, 2147483648
  %v4763 = vmul.f32 %v4761, 1.442695
  %v4764 = vpow.pop %v4763
  %v4765 = vmul.f32 %v4762, 1.442695
  %v4766 = vpow.pop %v4765
  %v4767 = vadd.f32 %v4764, 1.0
  %v4768 = vadd.f32 %v4766, 1.0
  %v4769 = vrcp.pop %v4767
  %v4770 = vmul.f32 1.0, %v4769
  %v4771 = vrcp.pop %v4768
  %v4772 = vmul.f32 1.0, %v4771
  %v4773 = vadd.f32 %v4727, %v689
  %v4776 = vunpack.c.l.s4 1966171168
  %v4777 = vunpack.c.0.s8 %v4776
  %v4778 = vlaneseq
  %v4779 = vshrl.u32 %v4778, 7
  %v4780 = vsub.s32 %v4777, %v4779
  %v4781 = vrot.slane %v4773, %v4780
  %v4782 = vcombine.high %v4781, %v4781
  %v4784 = vunpack.c.l.s4 1966171168
  %v4785 = vunpack.c.0.s8 %v4784
  %v4786 = vlaneseq
  %v4787 = vshrl.u32 %v4786, 7
  %v4788 = vsub.s32 %v4785, %v4787
  %v4789 = vrot.slane %v4781, %v4788
  %v4791 = vunpack.c.l.s4 1966171168
  %v4792 = vunpack.c.0.s8 %v4791
  %v4793 = vlaneseq
  %v4794 = vshrl.u32 %v4793, 7
  %v4795 = vsub.s32 %v4792, %v4794
  %v4796 = vrot.slane %v4782, %v4795
  %v4799 = vmul.f32 %v4770, %v4789
  %v4800 = vmul.f32 %v4772, %v4796
  %v4803 = vrot.slane %v4644, 2
  %v4804 = vrot.slane %v4646, 2
  %v4807 = vadd.f32 %v4803, %v4799
  %v4808 = vadd.f32 %v4804, %v4800
  %v4809 = vtanh.pop %v4807
  %v4810 = vtanh.pop %v4808
  %v4813 = vrot.slane %v4770, 1
  %v4814 = vrot.slane %v4772, 1
  %v4817 = vsub.f32 1.0, %v4813
  %v4818 = vsub.f32 1.0, %v4814
  %v4819 = vmul.f32 %v4817, %v4809
  %v4820 = vmul.f32 %v4818, %v4810
  %v4821 = vmul.f32 %v4813, %v4617
  %v4822 = vmul.f32 %v4814, %v4618
  %v4823 = vadd.f32 %v4819, %v4821
  %v4824 = vadd.f32 %v4820, %v4822
  %v4825 = vpack.c.bf16 %v4823, %v4823
  %v4826 = vpack.c.bf16 %v4824, %v4824
  %v4829 = vunpack.c.l.b16 %v4825
  %v4830 = vunpack.c.l.b16 %v4826
  %v4831 = vpack.c.b16 %v4829, %v4829
  %v4832 = vpack.c.b16 %v4830, %v4830
  %v4833 = vrot.slane %v4831, 6
  %v4834 = vrot.slane %v4832, 6
  %v4837 = vld [vmem:[%s5 + $0x8] sm:$0x4]
  %v4838 = vsel %vm1597, %v4833, %v4837
  %4839 = vst [vmem:[%s5 + $0x8] sm:$0x4] %v4838
  %v4840 = vld [vmem:[%s5 + $0x18] sm:$0x4]
  %v4841 = vsel %vm1597, %v4834, %v4840
  %4842 = vst [vmem:[%s5 + $0x18] sm:$0x4] %v4841
  %s4843 = scalar_lea.vmem [#allocation3], 53
  %v4844 = vld [vmem:[%s4843] ss:$8 sm:$0x7]
  %s4845 = scalar_lea.vmem [#allocation3], 149
  %v4846 = vld [vmem:[%s4845] ss:$8 sm:$0x7]
  %v4847 = vrot.slane %v4830, 7
  %v4848 = vsel %vm788, %v4847, %v4829
  %v4849 = vpack.c.b16 %v4848, %v4848
  %4851 = vmatprep.subr.bf16.mxu0 %v516
  %4852 = vmatpush1.bf16.msra.mxu0 %v515
  %4853 = vmatprep.subr.bf16.mxu0 %v519
  %4854 = vmatpush1.bf16.msra.mxu0 %v518
  %4855 = vmatprep.subr.bf16.mxu0 %v522
  %4856 = vmatpush1.bf16.msra.mxu0 %v521
  %4857 = vmatprep.subr.bf16.mxu0 %v525
  %4858 = vmatpush1.bf16.msra.mxu0 %v524
  %4859 = vmatprep.subr.bf16.mxu0 %v528
  %4860 = vmatpush1.bf16.msra.mxu0 %v527
  %4861 = vmatprep.subr.bf16.mxu0 %v531
  %4862 = vmatpush1.bf16.msra.mxu0 %v530
  %4863 = vmatprep.subr.bf16.mxu0 %v534
  %4864 = vmatpush1.bf16.msra.mxu0 %v533
  %4865 = vmatprep.subr.bf16.mxu0 %v537
  %4866 = vmatpush1.bf16.msra.mxu0 %v536
  %4867 = vmatprep.subr.bf16.mxu0 0
  %4868 = vmatpush1.bf16.msra.mxu0 0
  %4869 = vmatprep.subr.bf16.mxu0 0
  %4870 = vmatpush1.bf16.msra.mxu0 0
  %4871 = vmatprep.subr.bf16.mxu0 0
  %4872 = vmatpush1.bf16.msra.mxu0 0
  %4873 = vmatprep.subr.bf16.mxu0 0
  %4874 = vmatpush1.bf16.msra.mxu0 0
  %4875 = vmatprep.subr.bf16.mxu0 0
  %4876 = vmatpush1.bf16.msra.mxu0 0
  %4877 = vmatprep.subr.bf16.mxu0 0
  %4878 = vmatpush1.bf16.msra.mxu0 0
  %4879 = vmatprep.subr.bf16.mxu0 0
  %4880 = vmatpush1.bf16.msra.mxu0 0
  %4881 = vmatprep.subr.bf16.mxu0 0
  %4882 = vmatpush1.bf16.msra.mxu0 0
  %4883 = vmatprep.mubr.bf16.mxu0 0
  %4884 = vmatmul.mubr.bf16.gmra.mrb[0].mxu0 %v4849
  %v4885 = vpop.f32.mrb[0].mxu0
  %v4886 = vadd.f32 0.0, %v4885
  %v4887 = vpop.f32.mrb[0].mxu0
  %v4888 = vadd.f32 0.0, %v4887
  %v4889 = vpop.f32.mrb[0].mxu0
  %v4890 = vpop.f32.mrb[0].mxu0
  %4891 = vdwg.mxu0
  %4892 = vmatprep.subr.bf16.mxu0 0
  %4893 = vmatpush1.bf16.msra.mxu0 %v517
  %4894 = vmatprep.subr.bf16.mxu0 0
  %4895 = vmatpush1.bf16.msra.mxu0 %v520
  %4896 = vmatprep.subr.bf16.mxu0 0
  %4897 = vmatpush1.bf16.msra.mxu0 %v523
  %4898 = vmatprep.subr.bf16.mxu0 0
  %4899 = vmatpush1.bf16.msra.mxu0 %v526
  %4900 = vmatprep.subr.bf16.mxu0 0
  %4901 = vmatpush1.bf16.msra.mxu0 %v529
  %4902 = vmatprep.subr.bf16.mxu0 0
  %4903 = vmatpush1.bf16.msra.mxu0 %v532
  %4904 = vmatprep.subr.bf16.mxu0 0
  %4905 = vmatpush1.bf16.msra.mxu0 %v535
  %4906 = vmatprep.subr.bf16.mxu0 0
  %4907 = vmatpush1.bf16.msra.mxu0 %v538
  %4908 = vmatprep.subr.bf16.mxu0 0
  %4909 = vmatpush1.bf16.msra.mxu0 0
  %4910 = vmatprep.subr.bf16.mxu0 0
  %4911 = vmatpush1.bf16.msra.mxu0 0
  %4912 = vmatprep.subr.bf16.mxu0 0
  %4913 = vmatpush1.bf16.msra.mxu0 0
  %4914 = vmatprep.subr.bf16.mxu0 0
  %4915 = vmatpush1.bf16.msra.mxu0 0
  %4916 = vmatprep.subr.bf16.mxu0 0
  %4917 = vmatpush1.bf16.msra.mxu0 0
  %4918 = vmatprep.subr.bf16.mxu0 0
  %4919 = vmatpush1.bf16.msra.mxu0 0
  %4920 = vmatprep.subr.bf16.mxu0 0
  %4921 = vmatpush1.bf16.msra.mxu0 0
  %4922 = vmatprep.subr.bf16.mxu0 0
  %4923 = vmatpush1.bf16.msra.mxu0 0
  %4924 = vmatprep.mubr.bf16.mxu0 0
  %4925 = vmatmul.mubr.bf16.gmra.mrb[0].mxu0 %v4849
  %v4926 = vpop.f32.mrb[0].mxu0
  %v4927 = vadd.f32 0.0, %v4926
  %v4928 = vpop.f32.mrb[0].mxu0
  %v4929 = vpop.f32.mrb[0].mxu0
  %v4930 = vpop.f32.mrb[0].mxu0
  %4931 = vdwg.mxu0
  %v4934 = vcombine.low %v4886, %v4888
  %v4936 = vunpack.c.l.s4 1966171168
  %v4937 = vunpack.c.0.s8 %v4936
  %v4938 = vlaneseq
  %v4939 = vshrl.u32 %v4938, 7
  %v4940 = vsub.s32 %v4937, %v4939
  %v4941 = vrot.slane %v4934, %v4940
  %v4942 = vcombine.high %v4941, %v4941
  %v4944 = vunpack.c.l.s4 1966171168
  %v4945 = vunpack.c.0.s8 %v4944
  %v4946 = vlaneseq
  %v4947 = vshrl.u32 %v4946, 7
  %v4948 = vsub.s32 %v4945, %v4947
  %v4949 = vrot.slane %v4941, %v4948
  %v4951 = vunpack.c.l.s4 1966171168
  %v4952 = vunpack.c.0.s8 %v4951
  %v4953 = vlaneseq
  %v4954 = vshrl.u32 %v4953, 7
  %v4955 = vsub.s32 %v4952, %v4954
  %v4956 = vrot.slane %v4942, %v4955
  %v4959 = vadd.f32 %v4844, %v4949
  %v4960 = vadd.f32 %v4846, %v4956
  %v4961 = vxor.u32 %v4959, 2147483648
  %v4962 = vxor.u32 %v4960, 2147483648
  %v4963 = vmul.f32 %v4961, 1.442695
  %v4964 = vpow.pop %v4963
  %v4965 = vmul.f32 %v4962, 1.442695
  %v4966 = vpow.pop %v4965
  %v4967 = vadd.f32 %v4964, 1.0
  %v4968 = vadd.f32 %v4966, 1.0
  %v4969 = vrcp.pop %v4967
  %v4970 = vmul.f32 1.0, %v4969
  %v4971 = vrcp.pop %v4968
  %v4972 = vmul.f32 1.0, %v4971
  %v4973 = vadd.f32 %v4927, %v689
  %v4976 = vunpack.c.l.s4 1966171168
  %v4977 = vunpack.c.0.s8 %v4976
  %v4978 = vlaneseq
  %v4979 = vshrl.u32 %v4978, 7
  %v4980 = vsub.s32 %v4977, %v4979
  %v4981 = vrot.slane %v4973, %v4980
  %v4982 = vcombine.high %v4981, %v4981
  %v4984 = vunpack.c.l.s4 1966171168
  %v4985 = vunpack.c.0.s8 %v4984
  %v4986 = vlaneseq
  %v4987 = vshrl.u32 %v4986, 7
  %v4988 = vsub.s32 %v4985, %v4987
  %v4989 = vrot.slane %v4981, %v4988
  %v4991 = vunpack.c.l.s4 1966171168
  %v4992 = vunpack.c.0.s8 %v4991
  %v4993 = vlaneseq
  %v4994 = vshrl.u32 %v4993, 7
  %v4995 = vsub.s32 %v4992, %v4994
  %v4996 = vrot.slane %v4982, %v4995
  %v4999 = vmul.f32 %v4970, %v4989
  %v5000 = vmul.f32 %v4972, %v4996
  %v5003 = vrot.slane %v4844, 2
  %v5004 = vrot.slane %v4846, 2
  %v5007 = vadd.f32 %v5003, %v4999
  %v5008 = vadd.f32 %v5004, %v5000
  %v5009 = vtanh.pop %v5007
  %v5010 = vtanh.pop %v5008
  %v5013 = vrot.slane %v4970, 1
  %v5014 = vrot.slane %v4972, 1
  %v5017 = vsub.f32 1.0, %v5013
  %v5018 = vsub.f32 1.0, %v5014
  %v5019 = vmul.f32 %v5017, %v5009
  %v5020 = vmul.f32 %v5018, %v5010
  %v5021 = vmul.f32 %v5013, %v4823
  %v5022 = vmul.f32 %v5014, %v4824
  %v5023 = vadd.f32 %v5019, %v5021
  %v5024 = vadd.f32 %v5020, %v5022
  %v5025 = vpack.c.bf16 %v5023, %v5023
  %v5026 = vpack.c.bf16 %v5024, %v5024
  %v5029 = vunpack.c.l.b16 %v5025
  %v5030 = vunpack.c.l.b16 %v5026
  %v5031 = vpack.c.b16 %v5029, %v5029
  %v5032 = vpack.c.b16 %v5030, %v5030
  %v5034 = vshll.u32 %v5031, 16
  %v5036 = vrot.slane %v5034, 6
  %v5038 = vshll.u32 %v5032, 16
  %v5040 = vrot.slane %v5038, 6
  %v5043 = vld [vmem:[%s5 + $0x8] sm:$0x4]
  %v5044 = vsel %vm1805, %v5036, %v5043
  %5045 = vst [vmem:[%s5 + $0x8] sm:$0x4] %v5044
  %v5046 = vld [vmem:[%s5 + $0x18] sm:$0x4]
  %v5047 = vsel %vm1805, %v5040, %v5046
  %5048 = vst [vmem:[%s5 + $0x18] sm:$0x4] %v5047
  %s5049 = scalar_lea.vmem [#allocation3], 54
  %v5050 = vld [vmem:[%s5049] ss:$8 sm:$0x7]
  %s5051 = scalar_lea.vmem [#allocation3], 150
  %v5052 = vld [vmem:[%s5051] ss:$8 sm:$0x7]
  %v5053 = vrot.slane %v5030, 7
  %v5054 = vsel %vm788, %v5053, %v5029
  %v5055 = vpack.c.b16 %v5054, %v5054
  %5057 = vmatprep.subr.bf16.mxu0 %v516
  %5058 = vmatpush1.bf16.msra.mxu0 %v515
  %5059 = vmatprep.subr.bf16.mxu0 %v519
  %5060 = vmatpush1.bf16.msra.mxu0 %v518
  %5061 = vmatprep.subr.bf16.mxu0 %v522
  %5062 = vmatpush1.bf16.msra.mxu0 %v521
  %5063 = vmatprep.subr.bf16.mxu0 %v525
  %5064 = vmatpush1.bf16.msra.mxu0 %v524
  %5065 = vmatprep.subr.bf16.mxu0 %v528
  %5066 = vmatpush1.bf16.msra.mxu0 %v527
  %5067 = vmatprep.subr.bf16.mxu0 %v531
  %5068 = vmatpush1.bf16.msra.mxu0 %v530
  %5069 = vmatprep.subr.bf16.mxu0 %v534
  %5070 = vmatpush1.bf16.msra.mxu0 %v533
  %5071 = vmatprep.subr.bf16.mxu0 %v537
  %5072 = vmatpush1.bf16.msra.mxu0 %v536
  %5073 = vmatprep.subr.bf16.mxu0 0
  %5074 = vmatpush1.bf16.msra.mxu0 0
  %5075 = vmatprep.subr.bf16.mxu0 0
  %5076 = vmatpush1.bf16.msra.mxu0 0
  %5077 = vmatprep.subr.bf16.mxu0 0
  %5078 = vmatpush1.bf16.msra.mxu0 0
  %5079 = vmatprep.subr.bf16.mxu0 0
  %5080 = vmatpush1.bf16.msra.mxu0 0
  %5081 = vmatprep.subr.bf16.mxu0 0
  %5082 = vmatpush1.bf16.msra.mxu0 0
  %5083 = vmatprep.subr.bf16.mxu0 0
  %5084 = vmatpush1.bf16.msra.mxu0 0
  %5085 = vmatprep.subr.bf16.mxu0 0
  %5086 = vmatpush1.bf16.msra.mxu0 0
  %5087 = vmatprep.subr.bf16.mxu0 0
  %5088 = vmatpush1.bf16.msra.mxu0 0
  %5089 = vmatprep.mubr.bf16.mxu0 0
  %5090 = vmatmul.mubr.bf16.gmra.mrb[0].mxu0 %v5055
  %v5091 = vpop.f32.mrb[0].mxu0
  %v5092 = vadd.f32 0.0, %v5091
  %v5093 = vpop.f32.mrb[0].mxu0
  %v5094 = vadd.f32 0.0, %v5093
  %v5095 = vpop.f32.mrb[0].mxu0
  %v5096 = vpop.f32.mrb[0].mxu0
  %5097 = vdwg.mxu0
  %5098 = vmatprep.subr.bf16.mxu0 0
  %5099 = vmatpush1.bf16.msra.mxu0 %v517
  %5100 = vmatprep.subr.bf16.mxu0 0
  %5101 = vmatpush1.bf16.msra.mxu0 %v520
  %5102 = vmatprep.subr.bf16.mxu0 0
  %5103 = vmatpush1.bf16.msra.mxu0 %v523
  %5104 = vmatprep.subr.bf16.mxu0 0
  %5105 = vmatpush1.bf16.msra.mxu0 %v526
  %5106 = vmatprep.subr.bf16.mxu0 0
  %5107 = vmatpush1.bf16.msra.mxu0 %v529
  %5108 = vmatprep.subr.bf16.mxu0 0
  %5109 = vmatpush1.bf16.msra.mxu0 %v532
  %5110 = vmatprep.subr.bf16.mxu0 0
  %5111 = vmatpush1.bf16.msra.mxu0 %v535
  %5112 = vmatprep.subr.bf16.mxu0 0
  %5113 = vmatpush1.bf16.msra.mxu0 %v538
  %5114 = vmatprep.subr.bf16.mxu0 0
  %5115 = vmatpush1.bf16.msra.mxu0 0
  %5116 = vmatprep.subr.bf16.mxu0 0
  %5117 = vmatpush1.bf16.msra.mxu0 0
  %5118 = vmatprep.subr.bf16.mxu0 0
  %5119 = vmatpush1.bf16.msra.mxu0 0
  %5120 = vmatprep.subr.bf16.mxu0 0
  %5121 = vmatpush1.bf16.msra.mxu0 0
  %5122 = vmatprep.subr.bf16.mxu0 0
  %5123 = vmatpush1.bf16.msra.mxu0 0
  %5124 = vmatprep.subr.bf16.mxu0 0
  %5125 = vmatpush1.bf16.msra.mxu0 0
  %5126 = vmatprep.subr.bf16.mxu0 0
  %5127 = vmatpush1.bf16.msra.mxu0 0
  %5128 = vmatprep.subr.bf16.mxu0 0
  %5129 = vmatpush1.bf16.msra.mxu0 0
  %5130 = vmatprep.mubr.bf16.mxu0 0
  %5131 = vmatmul.mubr.bf16.gmra.mrb[0].mxu0 %v5055
  %v5132 = vpop.f32.mrb[0].mxu0
  %v5133 = vadd.f32 0.0, %v5132
  %v5134 = vpop.f32.mrb[0].mxu0
  %v5135 = vpop.f32.mrb[0].mxu0
  %v5136 = vpop.f32.mrb[0].mxu0
  %5137 = vdwg.mxu0
  %v5140 = vcombine.low %v5092, %v5094
  %v5142 = vunpack.c.l.s4 1966171168
  %v5143 = vunpack.c.0.s8 %v5142
  %v5144 = vlaneseq
  %v5145 = vshrl.u32 %v5144, 7
  %v5146 = vsub.s32 %v5143, %v5145
  %v5147 = vrot.slane %v5140, %v5146
  %v5148 = vcombine.high %v5147, %v5147
  %v5150 = vunpack.c.l.s4 1966171168
  %v5151 = vunpack.c.0.s8 %v5150
  %v5152 = vlaneseq
  %v5153 = vshrl.u32 %v5152, 7
  %v5154 = vsub.s32 %v5151, %v5153
  %v5155 = vrot.slane %v5147, %v5154
  %v5157 = vunpack.c.l.s4 1966171168
  %v5158 = vunpack.c.0.s8 %v5157
  %v5159 = vlaneseq
  %v5160 = vshrl.u32 %v5159, 7
  %v5161 = vsub.s32 %v5158, %v5160
  %v5162 = vrot.slane %v5148, %v5161
  %v5165 = vadd.f32 %v5050, %v5155
  %v5166 = vadd.f32 %v5052, %v5162
  %v5167 = vxor.u32 %v5165, 2147483648
  %v5168 = vxor.u32 %v5166, 2147483648
  %v5169 = vmul.f32 %v5167, 1.442695
  %v5170 = vpow.pop %v5169
  %v5171 = vmul.f32 %v5168, 1.442695
  %v5172 = vpow.pop %v5171
  %v5173 = vadd.f32 %v5170, 1.0
  %v5174 = vadd.f32 %v5172, 1.0
  %v5175 = vrcp.pop %v5173
  %v5176 = vmul.f32 1.0, %v5175
  %v5177 = vrcp.pop %v5174
  %v5178 = vmul.f32 1.0, %v5177
  %v5179 = vadd.f32 %v5133, %v689
  %v5182 = vunpack.c.l.s4 1966171168
  %v5183 = vunpack.c.0.s8 %v5182
  %v5184 = vlaneseq
  %v5185 = vshrl.u32 %v5184, 7
  %v5186 = vsub.s32 %v5183, %v5185
  %v5187 = vrot.slane %v5179, %v5186
  %v5188 = vcombine.high %v5187, %v5187
  %v5190 = vunpack.c.l.s4 1966171168
  %v5191 = vunpack.c.0.s8 %v5190
  %v5192 = vlaneseq
  %v5193 = vshrl.u32 %v5192, 7
  %v5194 = vsub.s32 %v5191, %v5193
  %v5195 = vrot.slane %v5187, %v5194
  %v5197 = vunpack.c.l.s4 1966171168
  %v5198 = vunpack.c.0.s8 %v5197
  %v5199 = vlaneseq
  %v5200 = vshrl.u32 %v5199, 7
  %v5201 = vsub.s32 %v5198, %v5200
  %v5202 = vrot.slane %v5188, %v5201
  %v5205 = vmul.f32 %v5176, %v5195
  %v5206 = vmul.f32 %v5178, %v5202
  %v5209 = vrot.slane %v5050, 2
  %v5210 = vrot.slane %v5052, 2
  %v5213 = vadd.f32 %v5209, %v5205
  %v5214 = vadd.f32 %v5210, %v5206
  %v5215 = vtanh.pop %v5213
  %v5216 = vtanh.pop %v5214
  %v5219 = vrot.slane %v5176, 1
  %v5220 = vrot.slane %v5178, 1
  %v5223 = vsub.f32 1.0, %v5219
  %v5224 = vsub.f32 1.0, %v5220
  %v5225 = vmul.f32 %v5223, %v5215
  %v5226 = vmul.f32 %v5224, %v5216
  %v5227 = vmul.f32 %v5219, %v5023
  %v5228 = vmul.f32 %v5220, %v5024
  %v5229 = vadd.f32 %v5225, %v5227
  %v5230 = vadd.f32 %v5226, %v5228
  %v5231 = vpack.c.bf16 %v5229, %v5229
  %v5232 = vpack.c.bf16 %v5230, %v5230
  %v5235 = vunpack.c.l.b16 %v5231
  %v5236 = vunpack.c.l.b16 %v5232
  %v5237 = vpack.c.b16 %v5235, %v5235
  %v5238 = vpack.c.b16 %v5236, %v5236
  %v5239 = vrot.slane %v5237, 5
  %v5240 = vrot.slane %v5238, 5
  %v5243 = vld [vmem:[%s5 + $0x8] sm:$0x8]
  %v5244 = vsel %vm2008, %v5239, %v5243
  %5245 = vst [vmem:[%s5 + $0x8] sm:$0x8] %v5244
  %v5246 = vld [vmem:[%s5 + $0x18] sm:$0x8]
  %v5247 = vsel %vm2008, %v5240, %v5246
  %5248 = vst [vmem:[%s5 + $0x18] sm:$0x8] %v5247
  %s5249 = scalar_lea.vmem [#allocation3], 55
  %v5250 = vld [vmem:[%s5249] ss:$8 sm:$0x7]
  %s5251 = scalar_lea.vmem [#allocation3], 151
  %v5252 = vld [vmem:[%s5251] ss:$8 sm:$0x7]
  %v5253 = vrot.slane %v5236, 7
  %v5254 = vsel %vm788, %v5253, %v5235
  %v5255 = vpack.c.b16 %v5254, %v5254
  %5257 = vmatprep.subr.bf16.mxu0 %v516
  %5258 = vmatpush1.bf16.msra.mxu0 %v515
  %5259 = vmatprep.subr.bf16.mxu0 %v519
  %5260 = vmatpush1.bf16.msra.mxu0 %v518
  %5261 = vmatprep.subr.bf16.mxu0 %v522
  %5262 = vmatpush1.bf16.msra.mxu0 %v521
  %5263 = vmatprep.subr.bf16.mxu0 %v525
  %5264 = vmatpush1.bf16.msra.mxu0 %v524
  %5265 = vmatprep.subr.bf16.mxu0 %v528
  %5266 = vmatpush1.bf16.msra.mxu0 %v527
  %5267 = vmatprep.subr.bf16.mxu0 %v531
  %5268 = vmatpush1.bf16.msra.mxu0 %v530
  %5269 = vmatprep.subr.bf16.mxu0 %v534
  %5270 = vmatpush1.bf16.msra.mxu0 %v533
  %5271 = vmatprep.subr.bf16.mxu0 %v537
  %5272 = vmatpush1.bf16.msra.mxu0 %v536
  %5273 = vmatprep.subr.bf16.mxu0 0
  %5274 = vmatpush1.bf16.msra.mxu0 0
  %5275 = vmatprep.subr.bf16.mxu0 0
  %5276 = vmatpush1.bf16.msra.mxu0 0
  %5277 = vmatprep.subr.bf16.mxu0 0
  %5278 = vmatpush1.bf16.msra.mxu0 0
  %5279 = vmatprep.subr.bf16.mxu0 0
  %5280 = vmatpush1.bf16.msra.mxu0 0
  %5281 = vmatprep.subr.bf16.mxu0 0
  %5282 = vmatpush1.bf16.msra.mxu0 0
  %5283 = vmatprep.subr.bf16.mxu0 0
  %5284 = vmatpush1.bf16.msra.mxu0 0
  %5285 = vmatprep.subr.bf16.mxu0 0
  %5286 = vmatpush1.bf16.msra.mxu0 0
  %5287 = vmatprep.subr.bf16.mxu0 0
  %5288 = vmatpush1.bf16.msra.mxu0 0
  %5289 = vmatprep.mubr.bf16.mxu0 0
  %5290 = vmatmul.mubr.bf16.gmra.mrb[0].mxu0 %v5255
  %v5291 = vpop.f32.mrb[0].mxu0
  %v5292 = vadd.f32 0.0, %v5291
  %v5293 = vpop.f32.mrb[0].mxu0
  %v5294 = vadd.f32 0.0, %v5293
  %v5295 = vpop.f32.mrb[0].mxu0
  %v5296 = vpop.f32.mrb[0].mxu0
  %5297 = vdwg.mxu0
  %5298 = vmatprep.subr.bf16.mxu0 0
  %5299 = vmatpush1.bf16.msra.mxu0 %v517
  %5300 = vmatprep.subr.bf16.mxu0 0
  %5301 = vmatpush1.bf16.msra.mxu0 %v520
  %5302 = vmatprep.subr.bf16.mxu0 0
  %5303 = vmatpush1.bf16.msra.mxu0 %v523
  %5304 = vmatprep.subr.bf16.mxu0 0
  %5305 = vmatpush1.bf16.msra.mxu0 %v526
  %5306 = vmatprep.subr.bf16.mxu0 0
  %5307 = vmatpush1.bf16.msra.mxu0 %v529
  %5308 = vmatprep.subr.bf16.mxu0 0
  %5309 = vmatpush1.bf16.msra.mxu0 %v532
  %5310 = vmatprep.subr.bf16.mxu0 0
  %5311 = vmatpush1.bf16.msra.mxu0 %v535
  %5312 = vmatprep.subr.bf16.mxu0 0
  %5313 = vmatpush1.bf16.msra.mxu0 %v538
  %5314 = vmatprep.subr.bf16.mxu0 0
  %5315 = vmatpush1.bf16.msra.mxu0 0
  %5316 = vmatprep.subr.bf16.mxu0 0
  %5317 = vmatpush1.bf16.msra.mxu0 0
  %5318 = vmatprep.subr.bf16.mxu0 0
  %5319 = vmatpush1.bf16.msra.mxu0 0
  %5320 = vmatprep.subr.bf16.mxu0 0
  %5321 = vmatpush1.bf16.msra.mxu0 0
  %5322 = vmatprep.subr.bf16.mxu0 0
  %5323 = vmatpush1.bf16.msra.mxu0 0
  %5324 = vmatprep.subr.bf16.mxu0 0
  %5325 = vmatpush1.bf16.msra.mxu0 0
  %5326 = vmatprep.subr.bf16.mxu0 0
  %5327 = vmatpush1.bf16.msra.mxu0 0
  %5328 = vmatprep.subr.bf16.mxu0 0
  %5329 = vmatpush1.bf16.msra.mxu0 0
  %5330 = vmatprep.mubr.bf16.mxu0 0
  %5331 = vmatmul.mubr.bf16.gmra.mrb[0].mxu0 %v5255
  %v5332 = vpop.f32.mrb[0].mxu0
  %v5333 = vadd.f32 0.0, %v5332
  %v5334 = vpop.f32.mrb[0].mxu0
  %v5335 = vpop.f32.mrb[0].mxu0
  %v5336 = vpop.f32.mrb[0].mxu0
  %5337 = vdwg.mxu0
  %v5340 = vcombine.low %v5292, %v5294
  %v5342 = vunpack.c.l.s4 1966171168
  %v5343 = vunpack.c.0.s8 %v5342
  %v5344 = vlaneseq
  %v5345 = vshrl.u32 %v5344, 7
  %v5346 = vsub.s32 %v5343, %v5345
  %v5347 = vrot.slane %v5340, %v5346
  %v5348 = vcombine.high %v5347, %v5347
  %v5350 = vunpack.c.l.s4 1966171168
  %v5351 = vunpack.c.0.s8 %v5350
  %v5352 = vlaneseq
  %v5353 = vshrl.u32 %v5352, 7
  %v5354 = vsub.s32 %v5351, %v5353
  %v5355 = vrot.slane %v5347, %v5354
  %v5357 = vunpack.c.l.s4 1966171168
  %v5358 = vunpack.c.0.s8 %v5357
  %v5359 = vlaneseq
  %v5360 = vshrl.u32 %v5359, 7
  %v5361 = vsub.s32 %v5358, %v5360
  %v5362 = vrot.slane %v5348, %v5361
  %v5365 = vadd.f32 %v5250, %v5355
  %v5366 = vadd.f32 %v5252, %v5362
  %v5367 = vxor.u32 %v5365, 2147483648
  %v5368 = vxor.u32 %v5366, 2147483648
  %v5369 = vmul.f32 %v5367, 1.442695
  %v5370 = vpow.pop %v5369
  %v5371 = vmul.f32 %v5368, 1.442695
  %v5372 = vpow.pop %v5371
  %v5373 = vadd.f32 %v5370, 1.0
  %v5374 = vadd.f32 %v5372, 1.0
  %v5375 = vrcp.pop %v5373
  %v5376 = vmul.f32 1.0, %v5375
  %v5377 = vrcp.pop %v5374
  %v5378 = vmul.f32 1.0, %v5377
  %v5379 = vadd.f32 %v5333, %v689
  %v5382 = vunpack.c.l.s4 1966171168
  %v5383 = vunpack.c.0.s8 %v5382
  %v5384 = vlaneseq
  %v5385 = vshrl.u32 %v5384, 7
  %v5386 = vsub.s32 %v5383, %v5385
  %v5387 = vrot.slane %v5379, %v5386
  %v5388 = vcombine.high %v5387, %v5387
  %v5390 = vunpack.c.l.s4 1966171168
  %v5391 = vunpack.c.0.s8 %v5390
  %v5392 = vlaneseq
  %v5393 = vshrl.u32 %v5392, 7
  %v5394 = vsub.s32 %v5391, %v5393
  %v5395 = vrot.slane %v5387, %v5394
  %v5397 = vunpack.c.l.s4 1966171168
  %v5398 = vunpack.c.0.s8 %v5397
  %v5399 = vlaneseq
  %v5400 = vshrl.u32 %v5399, 7
  %v5401 = vsub.s32 %v5398, %v5400
  %v5402 = vrot.slane %v5388, %v5401
  %v5405 = vmul.f32 %v5376, %v5395
  %v5406 = vmul.f32 %v5378, %v5402
  %v5409 = vrot.slane %v5250, 2
  %v5410 = vrot.slane %v5252, 2
  %v5413 = vadd.f32 %v5409, %v5405
  %v5414 = vadd.f32 %v5410, %v5406
  %v5415 = vtanh.pop %v5413
  %v5416 = vtanh.pop %v5414
  %v5419 = vrot.slane %v5376, 1
  %v5420 = vrot.slane %v5378, 1
  %v5423 = vsub.f32 1.0, %v5419
  %v5424 = vsub.f32 1.0, %v5420
  %v5425 = vmul.f32 %v5423, %v5415
  %v5426 = vmul.f32 %v5424, %v5416
  %v5427 = vmul.f32 %v5419, %v5229
  %v5428 = vmul.f32 %v5420, %v5230
  %v5429 = vadd.f32 %v5425, %v5427
  %v5430 = vadd.f32 %v5426, %v5428
  %v5431 = vpack.c.bf16 %v5429, %v5429
  %v5432 = vpack.c.bf16 %v5430, %v5430
  %v5435 = vunpack.c.l.b16 %v5431
  %v5436 = vunpack.c.l.b16 %v5432
  %v5437 = vpack.c.b16 %v5435, %v5435
  %v5438 = vpack.c.b16 %v5436, %v5436
  %v5440 = vshll.u32 %v5437, 16
  %v5442 = vrot.slane %v5440, 5
  %v5444 = vshll.u32 %v5438, 16
  %v5446 = vrot.slane %v5444, 5
  %v5449 = vld [vmem:[%s5 + $0x8] sm:$0x8]
  %v5450 = vsel %vm2216, %v5442, %v5449
  %5451 = vst [vmem:[%s5 + $0x8] sm:$0x8] %v5450
  %v5452 = vld [vmem:[%s5 + $0x18] sm:$0x8]
  %v5453 = vsel %vm2216, %v5446, %v5452
  %5454 = vst [vmem:[%s5 + $0x18] sm:$0x8] %v5453
  %s5455 = scalar_lea.vmem [#allocation3], 72
  %v5456 = vld [vmem:[%s5455] ss:$8 sm:$0x7]
  %s5457 = scalar_lea.vmem [#allocation3], 168
  %v5458 = vld [vmem:[%s5457] ss:$8 sm:$0x7]
  %v5459 = vrot.slane %v5436, 7
  %v5460 = vsel %vm788, %v5459, %v5435
  %v5461 = vpack.c.b16 %v5460, %v5460
  %5463 = vmatprep.subr.bf16.mxu0 %v516
  %5464 = vmatpush1.bf16.msra.mxu0 %v515
  %5465 = vmatprep.subr.bf16.mxu0 %v519
  %5466 = vmatpush1.bf16.msra.mxu0 %v518
  %5467 = vmatprep.subr.bf16.mxu0 %v522
  %5468 = vmatpush1.bf16.msra.mxu0 %v521
  %5469 = vmatprep.subr.bf16.mxu0 %v525
  %5470 = vmatpush1.bf16.msra.mxu0 %v524
  %5471 = vmatprep.subr.bf16.mxu0 %v528
  %5472 = vmatpush1.bf16.msra.mxu0 %v527
  %5473 = vmatprep.subr.bf16.mxu0 %v531
  %5474 = vmatpush1.bf16.msra.mxu0 %v530
  %5475 = vmatprep.subr.bf16.mxu0 %v534
  %5476 = vmatpush1.bf16.msra.mxu0 %v533
  %5477 = vmatprep.subr.bf16.mxu0 %v537
  %5478 = vmatpush1.bf16.msra.mxu0 %v536
  %5479 = vmatprep.subr.bf16.mxu0 0
  %5480 = vmatpush1.bf16.msra.mxu0 0
  %5481 = vmatprep.subr.bf16.mxu0 0
  %5482 = vmatpush1.bf16.msra.mxu0 0
  %5483 = vmatprep.subr.bf16.mxu0 0
  %5484 = vmatpush1.bf16.msra.mxu0 0
  %5485 = vmatprep.subr.bf16.mxu0 0
  %5486 = vmatpush1.bf16.msra.mxu0 0
  %5487 = vmatprep.subr.bf16.mxu0 0
  %5488 = vmatpush1.bf16.msra.mxu0 0
  %5489 = vmatprep.subr.bf16.mxu0 0
  %5490 = vmatpush1.bf16.msra.mxu0 0
  %5491 = vmatprep.subr.bf16.mxu0 0
  %5492 = vmatpush1.bf16.msra.mxu0 0
  %5493 = vmatprep.subr.bf16.mxu0 0
  %5494 = vmatpush1.bf16.msra.mxu0 0
  %5495 = vmatprep.mubr.bf16.mxu0 0
  %5496 = vmatmul.mubr.bf16.gmra.mrb[0].mxu0 %v5461
  %v5497 = vpop.f32.mrb[0].mxu0
  %v5498 = vadd.f32 0.0, %v5497
  %v5499 = vpop.f32.mrb[0].mxu0
  %v5500 = vadd.f32 0.0, %v5499
  %v5501 = vpop.f32.mrb[0].mxu0
  %v5502 = vpop.f32.mrb[0].mxu0
  %5503 = vdwg.mxu0
  %5504 = vmatprep.subr.bf16.mxu0 0
  %5505 = vmatpush1.bf16.msra.mxu0 %v517
  %5506 = vmatprep.subr.bf16.mxu0 0
  %5507 = vmatpush1.bf16.msra.mxu0 %v520
  %5508 = vmatprep.subr.bf16.mxu0 0
  %5509 = vmatpush1.bf16.msra.mxu0 %v523
  %5510 = vmatprep.subr.bf16.mxu0 0
  %5511 = vmatpush1.bf16.msra.mxu0 %v526
  %5512 = vmatprep.subr.bf16.mxu0 0
  %5513 = vmatpush1.bf16.msra.mxu0 %v529
  %5514 = vmatprep.subr.bf16.mxu0 0
  %5515 = vmatpush1.bf16.msra.mxu0 %v532
  %5516 = vmatprep.subr.bf16.mxu0 0
  %5517 = vmatpush1.bf16.msra.mxu0 %v535
  %5518 = vmatprep.subr.bf16.mxu0 0
  %5519 = vmatpush1.bf16.msra.mxu0 %v538
  %5520 = vmatprep.subr.bf16.mxu0 0
  %5521 = vmatpush1.bf16.msra.mxu0 0
  %5522 = vmatprep.subr.bf16.mxu0 0
  %5523 = vmatpush1.bf16.msra.mxu0 0
  %5524 = vmatprep.subr.bf16.mxu0 0
  %5525 = vmatpush1.bf16.msra.mxu0 0
  %5526 = vmatprep.subr.bf16.mxu0 0
  %5527 = vmatpush1.bf16.msra.mxu0 0
  %5528 = vmatprep.subr.bf16.mxu0 0
  %5529 = vmatpush1.bf16.msra.mxu0 0
  %5530 = vmatprep.subr.bf16.mxu0 0
  %5531 = vmatpush1.bf16.msra.mxu0 0
  %5532 = vmatprep.subr.bf16.mxu0 0
  %5533 = vmatpush1.bf16.msra.mxu0 0
  %5534 = vmatprep.subr.bf16.mxu0 0
  %5535 = vmatpush1.bf16.msra.mxu0 0
  %5536 = vmatprep.mubr.bf16.mxu0 0
  %5537 = vmatmul.mubr.bf16.gmra.mrb[0].mxu0 %v5461
  %v5538 = vpop.f32.mrb[0].mxu0
  %v5539 = vadd.f32 0.0, %v5538
  %v5540 = vpop.f32.mrb[0].mxu0
  %v5541 = vpop.f32.mrb[0].mxu0
  %v5542 = vpop.f32.mrb[0].mxu0
  %5543 = vdwg.mxu0
  %v5546 = vcombine.low %v5498, %v5500
  %v5548 = vunpack.c.l.s4 1966171168
  %v5549 = vunpack.c.0.s8 %v5548
  %v5550 = vlaneseq
  %v5551 = vshrl.u32 %v5550, 7
  %v5552 = vsub.s32 %v5549, %v5551
  %v5553 = vrot.slane %v5546, %v5552
  %v5554 = vcombine.high %v5553, %v5553
  %v5556 = vunpack.c.l.s4 1966171168
  %v5557 = vunpack.c.0.s8 %v5556
  %v5558 = vlaneseq
  %v5559 = vshrl.u32 %v5558, 7
  %v5560 = vsub.s32 %v5557, %v5559
  %v5561 = vrot.slane %v5553, %v5560
  %v5563 = vunpack.c.l.s4 1966171168
  %v5564 = vunpack.c.0.s8 %v5563
  %v5565 = vlaneseq
  %v5566 = vshrl.u32 %v5565, 7
  %v5567 = vsub.s32 %v5564, %v5566
  %v5568 = vrot.slane %v5554, %v5567
  %v5571 = vadd.f32 %v5456, %v5561
  %v5572 = vadd.f32 %v5458, %v5568
  %v5573 = vxor.u32 %v5571, 2147483648
  %v5574 = vxor.u32 %v5572, 2147483648
  %v5575 = vmul.f32 %v5573, 1.442695
  %v5576 = vpow.pop %v5575
  %v5577 = vmul.f32 %v5574, 1.442695
  %v5578 = vpow.pop %v5577
  %v5579 = vadd.f32 %v5576, 1.0
  %v5580 = vadd.f32 %v5578, 1.0
  %v5581 = vrcp.pop %v5579
  %v5582 = vmul.f32 1.0, %v5581
  %v5583 = vrcp.pop %v5580
  %v5584 = vmul.f32 1.0, %v5583
  %v5585 = vadd.f32 %v5539, %v689
  %v5588 = vunpack.c.l.s4 1966171168
  %v5589 = vunpack.c.0.s8 %v5588
  %v5590 = vlaneseq
  %v5591 = vshrl.u32 %v5590, 7
  %v5592 = vsub.s32 %v5589, %v5591
  %v5593 = vrot.slane %v5585, %v5592
  %v5594 = vcombine.high %v5593, %v5593
  %v5596 = vunpack.c.l.s4 1966171168
  %v5597 = vunpack.c.0.s8 %v5596
  %v5598 = vlaneseq
  %v5599 = vshrl.u32 %v5598, 7
  %v5600 = vsub.s32 %v5597, %v5599
  %v5601 = vrot.slane %v5593, %v5600
  %v5603 = vunpack.c.l.s4 1966171168
  %v5604 = vunpack.c.0.s8 %v5603
  %v5605 = vlaneseq
  %v5606 = vshrl.u32 %v5605, 7
  %v5607 = vsub.s32 %v5604, %v5606
  %v5608 = vrot.slane %v5594, %v5607
  %v5611 = vmul.f32 %v5582, %v5601
  %v5612 = vmul.f32 %v5584, %v5608
  %v5615 = vrot.slane %v5456, 2
  %v5616 = vrot.slane %v5458, 2
  %v5619 = vadd.f32 %v5615, %v5611
  %v5620 = vadd.f32 %v5616, %v5612
  %v5621 = vtanh.pop %v5619
  %v5622 = vtanh.pop %v5620
  %v5625 = vrot.slane %v5582, 1
  %v5626 = vrot.slane %v5584, 1
  %v5629 = vsub.f32 1.0, %v5625
  %v5630 = vsub.f32 1.0, %v5626
  %v5631 = vmul.f32 %v5629, %v5621
  %v5632 = vmul.f32 %v5630, %v5622
  %v5633 = vmul.f32 %v5625, %v5429
  %v5634 = vmul.f32 %v5626, %v5430
  %v5635 = vadd.f32 %v5631, %v5633
  %v5636 = vadd.f32 %v5632, %v5634
  %v5637 = vpack.c.bf16 %v5635, %v5635
  %v5638 = vpack.c.bf16 %v5636, %v5636
  %v5639 = vld [vmem:[%s5 + $0xc] sm:$0x1]
  %v5640 = vsel %vm772, %v5637, %v5639
  %5641 = vst [vmem:[%s5 + $0xc] sm:$0x1] %v5640
  %v5642 = vld [vmem:[%s5 + $0x1c] sm:$0x1]
  %v5643 = vsel %vm772, %v5638, %v5642
  %5644 = vst [vmem:[%s5 + $0x1c] sm:$0x1] %v5643
  %s5645 = scalar_lea.vmem [#allocation3], 73
  %v5646 = vld [vmem:[%s5645] ss:$8 sm:$0x7]
  %s5647 = scalar_lea.vmem [#allocation3], 169
  %v5648 = vld [vmem:[%s5647] ss:$8 sm:$0x7]
  %v5651 = vunpack.c.l.b16 %v5637
  %v5652 = vunpack.c.l.b16 %v5638
  %v5653 = vrot.slane %v5652, 7
  %v5654 = vsel %vm788, %v5653, %v5651
  %v5655 = vpack.c.b16 %v5654, %v5654
  %5657 = vmatprep.subr.bf16.mxu0 %v516
  %5658 = vmatpush1.bf16.msra.mxu0 %v515
  %5659 = vmatprep.subr.bf16.mxu0 %v519
  %5660 = vmatpush1.bf16.msra.mxu0 %v518
  %5661 = vmatprep.subr.bf16.mxu0 %v522
  %5662 = vmatpush1.bf16.msra.mxu0 %v521
  %5663 = vmatprep.subr.bf16.mxu0 %v525
  %5664 = vmatpush1.bf16.msra.mxu0 %v524
  %5665 = vmatprep.subr.bf16.mxu0 %v528
  %5666 = vmatpush1.bf16.msra.mxu0 %v527
  %5667 = vmatprep.subr.bf16.mxu0 %v531
  %5668 = vmatpush1.bf16.msra.mxu0 %v530
  %5669 = vmatprep.subr.bf16.mxu0 %v534
  %5670 = vmatpush1.bf16.msra.mxu0 %v533
  %5671 = vmatprep.subr.bf16.mxu0 %v537
  %5672 = vmatpush1.bf16.msra.mxu0 %v536
  %5673 = vmatprep.subr.bf16.mxu0 0
  %5674 = vmatpush1.bf16.msra.mxu0 0
  %5675 = vmatprep.subr.bf16.mxu0 0
  %5676 = vmatpush1.bf16.msra.mxu0 0
  %5677 = vmatprep.subr.bf16.mxu0 0
  %5678 = vmatpush1.bf16.msra.mxu0 0
  %5679 = vmatprep.subr.bf16.mxu0 0
  %5680 = vmatpush1.bf16.msra.mxu0 0
  %5681 = vmatprep.subr.bf16.mxu0 0
  %5682 = vmatpush1.bf16.msra.mxu0 0
  %5683 = vmatprep.subr.bf16.mxu0 0
  %5684 = vmatpush1.bf16.msra.mxu0 0
  %5685 = vmatprep.subr.bf16.mxu0 0
  %5686 = vmatpush1.bf16.msra.mxu0 0
  %5687 = vmatprep.subr.bf16.mxu0 0
  %5688 = vmatpush1.bf16.msra.mxu0 0
  %5689 = vmatprep.mubr.bf16.mxu0 0
  %5690 = vmatmul.mubr.bf16.gmra.mrb[0].mxu0 %v5655
  %v5691 = vpop.f32.mrb[0].mxu0
  %v5692 = vadd.f32 0.0, %v5691
  %v5693 = vpop.f32.mrb[0].mxu0
  %v5694 = vadd.f32 0.0, %v5693
  %v5695 = vpop.f32.mrb[0].mxu0
  %v5696 = vpop.f32.mrb[0].mxu0
  %5697 = vdwg.mxu0
  %5698 = vmatprep.subr.bf16.mxu0 0
  %5699 = vmatpush1.bf16.msra.mxu0 %v517
  %5700 = vmatprep.subr.bf16.mxu0 0
  %5701 = vmatpush1.bf16.msra.mxu0 %v520
  %5702 = vmatprep.subr.bf16.mxu0 0
  %5703 = vmatpush1.bf16.msra.mxu0 %v523
  %5704 = vmatprep.subr.bf16.mxu0 0
  %5705 = vmatpush1.bf16.msra.mxu0 %v526
  %5706 = vmatprep.subr.bf16.mxu0 0
  %5707 = vmatpush1.bf16.msra.mxu0 %v529
  %5708 = vmatprep.subr.bf16.mxu0 0
  %5709 = vmatpush1.bf16.msra.mxu0 %v532
  %5710 = vmatprep.subr.bf16.mxu0 0
  %5711 = vmatpush1.bf16.msra.mxu0 %v535
  %5712 = vmatprep.subr.bf16.mxu0 0
  %5713 = vmatpush1.bf16.msra.mxu0 %v538
  %5714 = vmatprep.subr.bf16.mxu0 0
  %5715 = vmatpush1.bf16.msra.mxu0 0
  %5716 = vmatprep.subr.bf16.mxu0 0
  %5717 = vmatpush1.bf16.msra.mxu0 0
  %5718 = vmatprep.subr.bf16.mxu0 0
  %5719 = vmatpush1.bf16.msra.mxu0 0
  %5720 = vmatprep.subr.bf16.mxu0 0
  %5721 = vmatpush1.bf16.msra.mxu0 0
  %5722 = vmatprep.subr.bf16.mxu0 0
  %5723 = vmatpush1.bf16.msra.mxu0 0
  %5724 = vmatprep.subr.bf16.mxu0 0
  %5725 = vmatpush1.bf16.msra.mxu0 0
  %5726 = vmatprep.subr.bf16.mxu0 0
  %5727 = vmatpush1.bf16.msra.mxu0 0
  %5728 = vmatprep.subr.bf16.mxu0 0
  %5729 = vmatpush1.bf16.msra.mxu0 0
  %5730 = vmatprep.mubr.bf16.mxu0 0
  %5731 = vmatmul.mubr.bf16.gmra.mrb[0].mxu0 %v5655
  %v5732 = vpop.f32.mrb[0].mxu0
  %v5733 = vadd.f32 0.0, %v5732
  %v5734 = vpop.f32.mrb[0].mxu0
  %v5735 = vpop.f32.mrb[0].mxu0
  %v5736 = vpop.f32.mrb[0].mxu0
  %5737 = vdwg.mxu0
  %v5740 = vcombine.low %v5692, %v5694
  %v5742 = vunpack.c.l.s4 1966171168
  %v5743 = vunpack.c.0.s8 %v5742
  %v5744 = vlaneseq
  %v5745 = vshrl.u32 %v5744, 7
  %v5746 = vsub.s32 %v5743, %v5745
  %v5747 = vrot.slane %v5740, %v5746
  %v5748 = vcombine.high %v5747, %v5747
  %v5750 = vunpack.c.l.s4 1966171168
  %v5751 = vunpack.c.0.s8 %v5750
  %v5752 = vlaneseq
  %v5753 = vshrl.u32 %v5752, 7
  %v5754 = vsub.s32 %v5751, %v5753
  %v5755 = vrot.slane %v5747, %v5754
  %v5757 = vunpack.c.l.s4 1966171168
  %v5758 = vunpack.c.0.s8 %v5757
  %v5759 = vlaneseq
  %v5760 = vshrl.u32 %v5759, 7
  %v5761 = vsub.s32 %v5758, %v5760
  %v5762 = vrot.slane %v5748, %v5761
  %v5765 = vadd.f32 %v5646, %v5755
  %v5766 = vadd.f32 %v5648, %v5762
  %v5767 = vxor.u32 %v5765, 2147483648
  %v5768 = vxor.u32 %v5766, 2147483648
  %v5769 = vmul.f32 %v5767, 1.442695
  %v5770 = vpow.pop %v5769
  %v5771 = vmul.f32 %v5768, 1.442695
  %v5772 = vpow.pop %v5771
  %v5773 = vadd.f32 %v5770, 1.0
  %v5774 = vadd.f32 %v5772, 1.0
  %v5775 = vrcp.pop %v5773
  %v5776 = vmul.f32 1.0, %v5775
  %v5777 = vrcp.pop %v5774
  %v5778 = vmul.f32 1.0, %v5777
  %v5779 = vadd.f32 %v5733, %v689
  %v5782 = vunpack.c.l.s4 1966171168
  %v5783 = vunpack.c.0.s8 %v5782
  %v5784 = vlaneseq
  %v5785 = vshrl.u32 %v5784, 7
  %v5786 = vsub.s32 %v5783, %v5785
  %v5787 = vrot.slane %v5779, %v5786
  %v5788 = vcombine.high %v5787, %v5787
  %v5790 = vunpack.c.l.s4 1966171168
  %v5791 = vunpack.c.0.s8 %v5790
  %v5792 = vlaneseq
  %v5793 = vshrl.u32 %v5792, 7
  %v5794 = vsub.s32 %v5791, %v5793
  %v5795 = vrot.slane %v5787, %v5794
  %v5797 = vunpack.c.l.s4 1966171168
  %v5798 = vunpack.c.0.s8 %v5797
  %v5799 = vlaneseq
  %v5800 = vshrl.u32 %v5799, 7
  %v5801 = vsub.s32 %v5798, %v5800
  %v5802 = vrot.slane %v5788, %v5801
  %v5805 = vmul.f32 %v5776, %v5795
  %v5806 = vmul.f32 %v5778, %v5802
  %v5809 = vrot.slane %v5646, 2
  %v5810 = vrot.slane %v5648, 2
  %v5813 = vadd.f32 %v5809, %v5805
  %v5814 = vadd.f32 %v5810, %v5806
  %v5815 = vtanh.pop %v5813
  %v5816 = vtanh.pop %v5814
  %v5819 = vrot.slane %v5776, 1
  %v5820 = vrot.slane %v5778, 1
  %v5823 = vsub.f32 1.0, %v5819
  %v5824 = vsub.f32 1.0, %v5820
  %v5825 = vmul.f32 %v5823, %v5815
  %v5826 = vmul.f32 %v5824, %v5816
  %v5827 = vmul.f32 %v5819, %v5635
  %v5828 = vmul.f32 %v5820, %v5636
  %v5829 = vadd.f32 %v5825, %v5827
  %v5830 = vadd.f32 %v5826, %v5828
  %v5831 = vpack.c.bf16 %v5829, %v5829
  %v5832 = vpack.c.bf16 %v5830, %v5830
  %v5835 = vunpack.c.l.b16 %v5831
  %v5836 = vunpack.c.l.b16 %v5832
  %v5837 = vpack.c.b16 %v5835, %v5835
  %v5838 = vpack.c.b16 %v5836, %v5836
  %v5840 = vshll.u32 %v5837, 16
  %v5843 = vshll.u32 %v5838, 16
  %v5847 = vld [vmem:[%s5 + $0xc] sm:$0x1]
  %v5848 = vsel %vm983, %v5840, %v5847
  %5849 = vst [vmem:[%s5 + $0xc] sm:$0x1] %v5848
  %v5850 = vld [vmem:[%s5 + $0x1c] sm:$0x1]
  %v5851 = vsel %vm983, %v5843, %v5850
  %5852 = vst [vmem:[%s5 + $0x1c] sm:$0x1] %v5851
  %s5853 = scalar_lea.vmem [#allocation3], 74
  %v5854 = vld [vmem:[%s5853] ss:$8 sm:$0x7]
  %s5855 = scalar_lea.vmem [#allocation3], 170
  %v5856 = vld [vmem:[%s5855] ss:$8 sm:$0x7]
  %v5857 = vrot.slane %v5836, 7
  %v5858 = vsel %vm788, %v5857, %v5835
  %v5859 = vpack.c.b16 %v5858, %v5858
  %5861 = vmatprep.subr.bf16.mxu0 %v516
  %5862 = vmatpush1.bf16.msra.mxu0 %v515
  %5863 = vmatprep.subr.bf16.mxu0 %v519
  %5864 = vmatpush1.bf16.msra.mxu0 %v518
  %5865 = vmatprep.subr.bf16.mxu0 %v522
  %5866 = vmatpush1.bf16.msra.mxu0 %v521
  %5867 = vmatprep.subr.bf16.mxu0 %v525
  %5868 = vmatpush1.bf16.msra.mxu0 %v524
  %5869 = vmatprep.subr.bf16.mxu0 %v528
  %5870 = vmatpush1.bf16.msra.mxu0 %v527
  %5871 = vmatprep.subr.bf16.mxu0 %v531
  %5872 = vmatpush1.bf16.msra.mxu0 %v530
  %5873 = vmatprep.subr.bf16.mxu0 %v534
  %5874 = vmatpush1.bf16.msra.mxu0 %v533
  %5875 = vmatprep.subr.bf16.mxu0 %v537
  %5876 = vmatpush1.bf16.msra.mxu0 %v536
  %5877 = vmatprep.subr.bf16.mxu0 0
  %5878 = vmatpush1.bf16.msra.mxu0 0
  %5879 = vmatprep.subr.bf16.mxu0 0
  %5880 = vmatpush1.bf16.msra.mxu0 0
  %5881 = vmatprep.subr.bf16.mxu0 0
  %5882 = vmatpush1.bf16.msra.mxu0 0
  %5883 = vmatprep.subr.bf16.mxu0 0
  %5884 = vmatpush1.bf16.msra.mxu0 0
  %5885 = vmatprep.subr.bf16.mxu0 0
  %5886 = vmatpush1.bf16.msra.mxu0 0
  %5887 = vmatprep.subr.bf16.mxu0 0
  %5888 = vmatpush1.bf16.msra.mxu0 0
  %5889 = vmatprep.subr.bf16.mxu0 0
  %5890 = vmatpush1.bf16.msra.mxu0 0
  %5891 = vmatprep.subr.bf16.mxu0 0
  %5892 = vmatpush1.bf16.msra.mxu0 0
  %5893 = vmatprep.mubr.bf16.mxu0 0
  %5894 = vmatmul.mubr.bf16.gmra.mrb[0].mxu0 %v5859
  %v5895 = vpop.f32.mrb[0].mxu0
  %v5896 = vadd.f32 0.0, %v5895
  %v5897 = vpop.f32.mrb[0].mxu0
  %v5898 = vadd.f32 0.0, %v5897
  %v5899 = vpop.f32.mrb[0].mxu0
  %v5900 = vpop.f32.mrb[0].mxu0
  %5901 = vdwg.mxu0
  %5902 = vmatprep.subr.bf16.mxu0 0
  %5903 = vmatpush1.bf16.msra.mxu0 %v517
  %5904 = vmatprep.subr.bf16.mxu0 0
  %5905 = vmatpush1.bf16.msra.mxu0 %v520
  %5906 = vmatprep.subr.bf16.mxu0 0
  %5907 = vmatpush1.bf16.msra.mxu0 %v523
  %5908 = vmatprep.subr.bf16.mxu0 0
  %5909 = vmatpush1.bf16.msra.mxu0 %v526
  %5910 = vmatprep.subr.bf16.mxu0 0
  %5911 = vmatpush1.bf16.msra.mxu0 %v529
  %5912 = vmatprep.subr.bf16.mxu0 0
  %5913 = vmatpush1.bf16.msra.mxu0 %v532
  %5914 = vmatprep.subr.bf16.mxu0 0
  %5915 = vmatpush1.bf16.msra.mxu0 %v535
  %5916 = vmatprep.subr.bf16.mxu0 0
  %5917 = vmatpush1.bf16.msra.mxu0 %v538
  %5918 = vmatprep.subr.bf16.mxu0 0
  %5919 = vmatpush1.bf16.msra.mxu0 0
  %5920 = vmatprep.subr.bf16.mxu0 0
  %5921 = vmatpush1.bf16.msra.mxu0 0
  %5922 = vmatprep.subr.bf16.mxu0 0
  %5923 = vmatpush1.bf16.msra.mxu0 0
  %5924 = vmatprep.subr.bf16.mxu0 0
  %5925 = vmatpush1.bf16.msra.mxu0 0
  %5926 = vmatprep.subr.bf16.mxu0 0
  %5927 = vmatpush1.bf16.msra.mxu0 0
  %5928 = vmatprep.subr.bf16.mxu0 0
  %5929 = vmatpush1.bf16.msra.mxu0 0
  %5930 = vmatprep.subr.bf16.mxu0 0
  %5931 = vmatpush1.bf16.msra.mxu0 0
  %5932 = vmatprep.subr.bf16.mxu0 0
  %5933 = vmatpush1.bf16.msra.mxu0 0
  %5934 = vmatprep.mubr.bf16.mxu0 0
  %5935 = vmatmul.mubr.bf16.gmra.mrb[0].mxu0 %v5859
  %v5936 = vpop.f32.mrb[0].mxu0
  %v5937 = vadd.f32 0.0, %v5936
  %v5938 = vpop.f32.mrb[0].mxu0
  %v5939 = vpop.f32.mrb[0].mxu0
  %v5940 = vpop.f32.mrb[0].mxu0
  %5941 = vdwg.mxu0
  %v5944 = vcombine.low %v5896, %v5898
  %v5946 = vunpack.c.l.s4 1966171168
  %v5947 = vunpack.c.0.s8 %v5946
  %v5948 = vlaneseq
  %v5949 = vshrl.u32 %v5948, 7
  %v5950 = vsub.s32 %v5947, %v5949
  %v5951 = vrot.slane %v5944, %v5950
  %v5952 = vcombine.high %v5951, %v5951
  %v5954 = vunpack.c.l.s4 1966171168
  %v5955 = vunpack.c.0.s8 %v5954
  %v5956 = vlaneseq
  %v5957 = vshrl.u32 %v5956, 7
  %v5958 = vsub.s32 %v5955, %v5957
  %v5959 = vrot.slane %v5951, %v5958
  %v5961 = vunpack.c.l.s4 1966171168
  %v5962 = vunpack.c.0.s8 %v5961
  %v5963 = vlaneseq
  %v5964 = vshrl.u32 %v5963, 7
  %v5965 = vsub.s32 %v5962, %v5964
  %v5966 = vrot.slane %v5952, %v5965
  %v5969 = vadd.f32 %v5854, %v5959
  %v5970 = vadd.f32 %v5856, %v5966
  %v5971 = vxor.u32 %v5969, 2147483648
  %v5972 = vxor.u32 %v5970, 2147483648
  %v5973 = vmul.f32 %v5971, 1.442695
  %v5974 = vpow.pop %v5973
  %v5975 = vmul.f32 %v5972, 1.442695
  %v5976 = vpow.pop %v5975
  %v5977 = vadd.f32 %v5974, 1.0
  %v5978 = vadd.f32 %v5976, 1.0
  %v5979 = vrcp.pop %v5977
  %v5980 = vmul.f32 1.0, %v5979
  %v5981 = vrcp.pop %v5978
  %v5982 = vmul.f32 1.0, %v5981
  %v5983 = vadd.f32 %v5937, %v689
  %v5986 = vunpack.c.l.s4 1966171168
  %v5987 = vunpack.c.0.s8 %v5986
  %v5988 = vlaneseq
  %v5989 = vshrl.u32 %v5988, 7
  %v5990 = vsub.s32 %v5987, %v5989
  %v5991 = vrot.slane %v5983, %v5990
  %v5992 = vcombine.high %v5991, %v5991
  %v5994 = vunpack.c.l.s4 1966171168
  %v5995 = vunpack.c.0.s8 %v5994
  %v5996 = vlaneseq
  %v5997 = vshrl.u32 %v5996, 7
  %v5998 = vsub.s32 %v5995, %v5997
  %v5999 = vrot.slane %v5991, %v5998
  %v6001 = vunpack.c.l.s4 1966171168
  %v6002 = vunpack.c.0.s8 %v6001
  %v6003 = vlaneseq
  %v6004 = vshrl.u32 %v6003, 7
  %v6005 = vsub.s32 %v6002, %v6004
  %v6006 = vrot.slane %v5992, %v6005
  %v6009 = vmul.f32 %v5980, %v5999
  %v6010 = vmul.f32 %v5982, %v6006
  %v6013 = vrot.slane %v5854, 2
  %v6014 = vrot.slane %v5856, 2
  %v6017 = vadd.f32 %v6013, %v6009
  %v6018 = vadd.f32 %v6014, %v6010
  %v6019 = vtanh.pop %v6017
  %v6020 = vtanh.pop %v6018
  %v6023 = vrot.slane %v5980, 1
  %v6024 = vrot.slane %v5982, 1
  %v6027 = vsub.f32 1.0, %v6023
  %v6028 = vsub.f32 1.0, %v6024
  %v6029 = vmul.f32 %v6027, %v6019
  %v6030 = vmul.f32 %v6028, %v6020
  %v6031 = vmul.f32 %v6023, %v5829
  %v6032 = vmul.f32 %v6024, %v5830
  %v6033 = vadd.f32 %v6029, %v6031
  %v6034 = vadd.f32 %v6030, %v6032
  %v6035 = vpack.c.bf16 %v6033, %v6033
  %v6036 = vpack.c.bf16 %v6034, %v6034
  %v6039 = vunpack.c.l.b16 %v6035
  %v6040 = vunpack.c.l.b16 %v6036
  %v6041 = vpack.c.b16 %v6039, %v6039
  %v6042 = vpack.c.b16 %v6040, %v6040
  %v6043 = vrot.slane %v6041, 7
  %v6044 = vrot.slane %v6042, 7
  %v6047 = vld [vmem:[%s5 + $0xc] sm:$0x2]
  %v6048 = vsel %vm1186, %v6043, %v6047
  %6049 = vst [vmem:[%s5 + $0xc] sm:$0x2] %v6048
  %v6050 = vld [vmem:[%s5 + $0x1c] sm:$0x2]
  %v6051 = vsel %vm1186, %v6044, %v6050
  %6052 = vst [vmem:[%s5 + $0x1c] sm:$0x2] %v6051
  %s6053 = scalar_lea.vmem [#allocation3], 75
  %v6054 = vld [vmem:[%s6053] ss:$8 sm:$0x7]
  %s6055 = scalar_lea.vmem [#allocation3], 171
  %v6056 = vld [vmem:[%s6055] ss:$8 sm:$0x7]
  %v6057 = vrot.slane %v6040, 7
  %v6058 = vsel %vm788, %v6057, %v6039
  %v6059 = vpack.c.b16 %v6058, %v6058
  %6061 = vmatprep.subr.bf16.mxu0 %v516
  %6062 = vmatpush1.bf16.msra.mxu0 %v515
  %6063 = vmatprep.subr.bf16.mxu0 %v519
  %6064 = vmatpush1.bf16.msra.mxu0 %v518
  %6065 = vmatprep.subr.bf16.mxu0 %v522
  %6066 = vmatpush1.bf16.msra.mxu0 %v521
  %6067 = vmatprep.subr.bf16.mxu0 %v525
  %6068 = vmatpush1.bf16.msra.mxu0 %v524
  %6069 = vmatprep.subr.bf16.mxu0 %v528
  %6070 = vmatpush1.bf16.msra.mxu0 %v527
  %6071 = vmatprep.subr.bf16.mxu0 %v531
  %6072 = vmatpush1.bf16.msra.mxu0 %v530
  %6073 = vmatprep.subr.bf16.mxu0 %v534
  %6074 = vmatpush1.bf16.msra.mxu0 %v533
  %6075 = vmatprep.subr.bf16.mxu0 %v537
  %6076 = vmatpush1.bf16.msra.mxu0 %v536
  %6077 = vmatprep.subr.bf16.mxu0 0
  %6078 = vmatpush1.bf16.msra.mxu0 0
  %6079 = vmatprep.subr.bf16.mxu0 0
  %6080 = vmatpush1.bf16.msra.mxu0 0
  %6081 = vmatprep.subr.bf16.mxu0 0
  %6082 = vmatpush1.bf16.msra.mxu0 0
  %6083 = vmatprep.subr.bf16.mxu0 0
  %6084 = vmatpush1.bf16.msra.mxu0 0
  %6085 = vmatprep.subr.bf16.mxu0 0
  %6086 = vmatpush1.bf16.msra.mxu0 0
  %6087 = vmatprep.subr.bf16.mxu0 0
  %6088 = vmatpush1.bf16.msra.mxu0 0
  %6089 = vmatprep.subr.bf16.mxu0 0
  %6090 = vmatpush1.bf16.msra.mxu0 0
  %6091 = vmatprep.subr.bf16.mxu0 0
  %6092 = vmatpush1.bf16.msra.mxu0 0
  %6093 = vmatprep.mubr.bf16.mxu0 0
  %6094 = vmatmul.mubr.bf16.gmra.mrb[0].mxu0 %v6059
  %v6095 = vpop.f32.mrb[0].mxu0
  %v6096 = vadd.f32 0.0, %v6095
  %v6097 = vpop.f32.mrb[0].mxu0
  %v6098 = vadd.f32 0.0, %v6097
  %v6099 = vpop.f32.mrb[0].mxu0
  %v6100 = vpop.f32.mrb[0].mxu0
  %6101 = vdwg.mxu0
  %6102 = vmatprep.subr.bf16.mxu0 0
  %6103 = vmatpush1.bf16.msra.mxu0 %v517
  %6104 = vmatprep.subr.bf16.mxu0 0
  %6105 = vmatpush1.bf16.msra.mxu0 %v520
  %6106 = vmatprep.subr.bf16.mxu0 0
  %6107 = vmatpush1.bf16.msra.mxu0 %v523
  %6108 = vmatprep.subr.bf16.mxu0 0
  %6109 = vmatpush1.bf16.msra.mxu0 %v526
  %6110 = vmatprep.subr.bf16.mxu0 0
  %6111 = vmatpush1.bf16.msra.mxu0 %v529
  %6112 = vmatprep.subr.bf16.mxu0 0
  %6113 = vmatpush1.bf16.msra.mxu0 %v532
  %6114 = vmatprep.subr.bf16.mxu0 0
  %6115 = vmatpush1.bf16.msra.mxu0 %v535
  %6116 = vmatprep.subr.bf16.mxu0 0
  %6117 = vmatpush1.bf16.msra.mxu0 %v538
  %6118 = vmatprep.subr.bf16.mxu0 0
  %6119 = vmatpush1.bf16.msra.mxu0 0
  %6120 = vmatprep.subr.bf16.mxu0 0
  %6121 = vmatpush1.bf16.msra.mxu0 0
  %6122 = vmatprep.subr.bf16.mxu0 0
  %6123 = vmatpush1.bf16.msra.mxu0 0
  %6124 = vmatprep.subr.bf16.mxu0 0
  %6125 = vmatpush1.bf16.msra.mxu0 0
  %6126 = vmatprep.subr.bf16.mxu0 0
  %6127 = vmatpush1.bf16.msra.mxu0 0
  %6128 = vmatprep.subr.bf16.mxu0 0
  %6129 = vmatpush1.bf16.msra.mxu0 0
  %6130 = vmatprep.subr.bf16.mxu0 0
  %6131 = vmatpush1.bf16.msra.mxu0 0
  %6132 = vmatprep.subr.bf16.mxu0 0
  %6133 = vmatpush1.bf16.msra.mxu0 0
  %6134 = vmatprep.mubr.bf16.mxu0 0
  %6135 = vmatmul.mubr.bf16.gmra.mrb[0].mxu0 %v6059
  %v6136 = vpop.f32.mrb[0].mxu0
  %v6137 = vadd.f32 0.0, %v6136
  %v6138 = vpop.f32.mrb[0].mxu0
  %v6139 = vpop.f32.mrb[0].mxu0
  %v6140 = vpop.f32.mrb[0].mxu0
  %6141 = vdwg.mxu0
  %v6144 = vcombine.low %v6096, %v6098
  %v6146 = vunpack.c.l.s4 1966171168
  %v6147 = vunpack.c.0.s8 %v6146
  %v6148 = vlaneseq
  %v6149 = vshrl.u32 %v6148, 7
  %v6150 = vsub.s32 %v6147, %v6149
  %v6151 = vrot.slane %v6144, %v6150
  %v6152 = vcombine.high %v6151, %v6151
  %v6154 = vunpack.c.l.s4 1966171168
  %v6155 = vunpack.c.0.s8 %v6154
  %v6156 = vlaneseq
  %v6157 = vshrl.u32 %v6156, 7
  %v6158 = vsub.s32 %v6155, %v6157
  %v6159 = vrot.slane %v6151, %v6158
  %v6161 = vunpack.c.l.s4 1966171168
  %v6162 = vunpack.c.0.s8 %v6161
  %v6163 = vlaneseq
  %v6164 = vshrl.u32 %v6163, 7
  %v6165 = vsub.s32 %v6162, %v6164
  %v6166 = vrot.slane %v6152, %v6165
  %v6169 = vadd.f32 %v6054, %v6159
  %v6170 = vadd.f32 %v6056, %v6166
  %v6171 = vxor.u32 %v6169, 2147483648
  %v6172 = vxor.u32 %v6170, 2147483648
  %v6173 = vmul.f32 %v6171, 1.442695
  %v6174 = vpow.pop %v6173
  %v6175 = vmul.f32 %v6172, 1.442695
  %v6176 = vpow.pop %v6175
  %v6177 = vadd.f32 %v6174, 1.0
  %v6178 = vadd.f32 %v6176, 1.0
  %v6179 = vrcp.pop %v6177
  %v6180 = vmul.f32 1.0, %v6179
  %v6181 = vrcp.pop %v6178
  %v6182 = vmul.f32 1.0, %v6181
  %v6183 = vadd.f32 %v6137, %v689
  %v6186 = vunpack.c.l.s4 1966171168
  %v6187 = vunpack.c.0.s8 %v6186
  %v6188 = vlaneseq
  %v6189 = vshrl.u32 %v6188, 7
  %v6190 = vsub.s32 %v6187, %v6189
  %v6191 = vrot.slane %v6183, %v6190
  %v6192 = vcombine.high %v6191, %v6191
  %v6194 = vunpack.c.l.s4 1966171168
  %v6195 = vunpack.c.0.s8 %v6194
  %v6196 = vlaneseq
  %v6197 = vshrl.u32 %v6196, 7
  %v6198 = vsub.s32 %v6195, %v6197
  %v6199 = vrot.slane %v6191, %v6198
  %v6201 = vunpack.c.l.s4 1966171168
  %v6202 = vunpack.c.0.s8 %v6201
  %v6203 = vlaneseq
  %v6204 = vshrl.u32 %v6203, 7
  %v6205 = vsub.s32 %v6202, %v6204
  %v6206 = vrot.slane %v6192, %v6205
  %v6209 = vmul.f32 %v6180, %v6199
  %v6210 = vmul.f32 %v6182, %v6206
  %v6213 = vrot.slane %v6054, 2
  %v6214 = vrot.slane %v6056, 2
  %v6217 = vadd.f32 %v6213, %v6209
  %v6218 = vadd.f32 %v6214, %v6210
  %v6219 = vtanh.pop %v6217
  %v6220 = vtanh.pop %v6218
  %v6223 = vrot.slane %v6180, 1
  %v6224 = vrot.slane %v6182, 1
  %v6227 = vsub.f32 1.0, %v6223
  %v6228 = vsub.f32 1.0, %v6224
  %v6229 = vmul.f32 %v6227, %v6219
  %v6230 = vmul.f32 %v6228, %v6220
  %v6231 = vmul.f32 %v6223, %v6033
  %v6232 = vmul.f32 %v6224, %v6034
  %v6233 = vadd.f32 %v6229, %v6231
  %v6234 = vadd.f32 %v6230, %v6232
  %v6235 = vpack.c.bf16 %v6233, %v6233
  %v6236 = vpack.c.bf16 %v6234, %v6234
  %v6239 = vunpack.c.l.b16 %v6235
  %v6240 = vunpack.c.l.b16 %v6236
  %v6241 = vpack.c.b16 %v6239, %v6239
  %v6242 = vpack.c.b16 %v6240, %v6240
  %v6244 = vshll.u32 %v6241, 16
  %v6246 = vrot.slane %v6244, 7
  %v6248 = vshll.u32 %v6242, 16
  %v6250 = vrot.slane %v6248, 7
  %v6253 = vld [vmem:[%s5 + $0xc] sm:$0x2]
  %v6254 = vsel %vm1394, %v6246, %v6253
  %6255 = vst [vmem:[%s5 + $0xc] sm:$0x2] %v6254
  %v6256 = vld [vmem:[%s5 + $0x1c] sm:$0x2]
  %v6257 = vsel %vm1394, %v6250, %v6256
  %6258 = vst [vmem:[%s5 + $0x1c] sm:$0x2] %v6257
  %s6259 = scalar_lea.vmem [#allocation3], 76
  %v6260 = vld [vmem:[%s6259] ss:$8 sm:$0x7]
  %s6261 = scalar_lea.vmem [#allocation3], 172
  %v6262 = vld [vmem:[%s6261] ss:$8 sm:$0x7]
  %v6263 = vrot.slane %v6240, 7
  %v6264 = vsel %vm788, %v6263, %v6239
  %v6265 = vpack.c.b16 %v6264, %v6264
  %6267 = vmatprep.subr.bf16.mxu0 %v516
  %6268 = vmatpush1.bf16.msra.mxu0 %v515
  %6269 = vmatprep.subr.bf16.mxu0 %v519
  %6270 = vmatpush1.bf16.msra.mxu0 %v518
  %6271 = vmatprep.subr.bf16.mxu0 %v522
  %6272 = vmatpush1.bf16.msra.mxu0 %v521
  %6273 = vmatprep.subr.bf16.mxu0 %v525
  %6274 = vmatpush1.bf16.msra.mxu0 %v524
  %6275 = vmatprep.subr.bf16.mxu0 %v528
  %6276 = vmatpush1.bf16.msra.mxu0 %v527
  %6277 = vmatprep.subr.bf16.mxu0 %v531
  %6278 = vmatpush1.bf16.msra.mxu0 %v530
  %6279 = vmatprep.subr.bf16.mxu0 %v534
  %6280 = vmatpush1.bf16.msra.mxu0 %v533
  %6281 = vmatprep.subr.bf16.mxu0 %v537
  %6282 = vmatpush1.bf16.msra.mxu0 %v536
  %6283 = vmatprep.subr.bf16.mxu0 0
  %6284 = vmatpush1.bf16.msra.mxu0 0
  %6285 = vmatprep.subr.bf16.mxu0 0
  %6286 = vmatpush1.bf16.msra.mxu0 0
  %6287 = vmatprep.subr.bf16.mxu0 0
  %6288 = vmatpush1.bf16.msra.mxu0 0
  %6289 = vmatprep.subr.bf16.mxu0 0
  %6290 = vmatpush1.bf16.msra.mxu0 0
  %6291 = vmatprep.subr.bf16.mxu0 0
  %6292 = vmatpush1.bf16.msra.mxu0 0
  %6293 = vmatprep.subr.bf16.mxu0 0
  %6294 = vmatpush1.bf16.msra.mxu0 0
  %6295 = vmatprep.subr.bf16.mxu0 0
  %6296 = vmatpush1.bf16.msra.mxu0 0
  %6297 = vmatprep.subr.bf16.mxu0 0
  %6298 = vmatpush1.bf16.msra.mxu0 0
  %6299 = vmatprep.mubr.bf16.mxu0 0
  %6300 = vmatmul.mubr.bf16.gmra.mrb[0].mxu0 %v6265
  %v6301 = vpop.f32.mrb[0].mxu0
  %v6302 = vadd.f32 0.0, %v6301
  %v6303 = vpop.f32.mrb[0].mxu0
  %v6304 = vadd.f32 0.0, %v6303
  %v6305 = vpop.f32.mrb[0].mxu0
  %v6306 = vpop.f32.mrb[0].mxu0
  %6307 = vdwg.mxu0
  %6308 = vmatprep.subr.bf16.mxu0 0
  %6309 = vmatpush1.bf16.msra.mxu0 %v517
  %6310 = vmatprep.subr.bf16.mxu0 0
  %6311 = vmatpush1.bf16.msra.mxu0 %v520
  %6312 = vmatprep.subr.bf16.mxu0 0
  %6313 = vmatpush1.bf16.msra.mxu0 %v523
  %6314 = vmatprep.subr.bf16.mxu0 0
  %6315 = vmatpush1.bf16.msra.mxu0 %v526
  %6316 = vmatprep.subr.bf16.mxu0 0
  %6317 = vmatpush1.bf16.msra.mxu0 %v529
  %6318 = vmatprep.subr.bf16.mxu0 0
  %6319 = vmatpush1.bf16.msra.mxu0 %v532
  %6320 = vmatprep.subr.bf16.mxu0 0
  %6321 = vmatpush1.bf16.msra.mxu0 %v535
  %6322 = vmatprep.subr.bf16.mxu0 0
  %6323 = vmatpush1.bf16.msra.mxu0 %v538
  %6324 = vmatprep.subr.bf16.mxu0 0
  %6325 = vmatpush1.bf16.msra.mxu0 0
  %6326 = vmatprep.subr.bf16.mxu0 0
  %6327 = vmatpush1.bf16.msra.mxu0 0
  %6328 = vmatprep.subr.bf16.mxu0 0
  %6329 = vmatpush1.bf16.msra.mxu0 0
  %6330 = vmatprep.subr.bf16.mxu0 0
  %6331 = vmatpush1.bf16.msra.mxu0 0
  %6332 = vmatprep.subr.bf16.mxu0 0
  %6333 = vmatpush1.bf16.msra.mxu0 0
  %6334 = vmatprep.subr.bf16.mxu0 0
  %6335 = vmatpush1.bf16.msra.mxu0 0
  %6336 = vmatprep.subr.bf16.mxu0 0
  %6337 = vmatpush1.bf16.msra.mxu0 0
  %6338 = vmatprep.subr.bf16.mxu0 0
  %6339 = vmatpush1.bf16.msra.mxu0 0
  %6340 = vmatprep.mubr.bf16.mxu0 0
  %6341 = vmatmul.mubr.bf16.gmra.mrb[0].mxu0 %v6265
  %v6342 = vpop.f32.mrb[0].mxu0
  %v6343 = vadd.f32 0.0, %v6342
  %v6344 = vpop.f32.mrb[0].mxu0
  %v6345 = vpop.f32.mrb[0].mxu0
  %v6346 = vpop.f32.mrb[0].mxu0
  %6347 = vdwg.mxu0
  %v6350 = vcombine.low %v6302, %v6304
  %v6352 = vunpack.c.l.s4 1966171168
  %v6353 = vunpack.c.0.s8 %v6352
  %v6354 = vlaneseq
  %v6355 = vshrl.u32 %v6354, 7
  %v6356 = vsub.s32 %v6353, %v6355
  %v6357 = vrot.slane %v6350, %v6356
  %v6358 = vcombine.high %v6357, %v6357
  %v6360 = vunpack.c.l.s4 1966171168
  %v6361 = vunpack.c.0.s8 %v6360
  %v6362 = vlaneseq
  %v6363 = vshrl.u32 %v6362, 7
  %v6364 = vsub.s32 %v6361, %v6363
  %v6365 = vrot.slane %v6357, %v6364
  %v6367 = vunpack.c.l.s4 1966171168
  %v6368 = vunpack.c.0.s8 %v6367
  %v6369 = vlaneseq
  %v6370 = vshrl.u32 %v6369, 7
  %v6371 = vsub.s32 %v6368, %v6370
  %v6372 = vrot.slane %v6358, %v6371
  %v6375 = vadd.f32 %v6260, %v6365
  %v6376 = vadd.f32 %v6262, %v6372
  %v6377 = vxor.u32 %v6375, 2147483648
  %v6378 = vxor.u32 %v6376, 2147483648
  %v6379 = vmul.f32 %v6377, 1.442695
  %v6380 = vpow.pop %v6379
  %v6381 = vmul.f32 %v6378, 1.442695
  %v6382 = vpow.pop %v6381
  %v6383 = vadd.f32 %v6380, 1.0
  %v6384 = vadd.f32 %v6382, 1.0
  %v6385 = vrcp.pop %v6383
  %v6386 = vmul.f32 1.0, %v6385
  %v6387 = vrcp.pop %v6384
  %v6388 = vmul.f32 1.0, %v6387
  %v6389 = vadd.f32 %v6343, %v689
  %v6392 = vunpack.c.l.s4 1966171168
  %v6393 = vunpack.c.0.s8 %v6392
  %v6394 = vlaneseq
  %v6395 = vshrl.u32 %v6394, 7
  %v6396 = vsub.s32 %v6393, %v6395
  %v6397 = vrot.slane %v6389, %v6396
  %v6398 = vcombine.high %v6397, %v6397
  %v6400 = vunpack.c.l.s4 1966171168
  %v6401 = vunpack.c.0.s8 %v6400
  %v6402 = vlaneseq
  %v6403 = vshrl.u32 %v6402, 7
  %v6404 = vsub.s32 %v6401, %v6403
  %v6405 = vrot.slane %v6397, %v6404
  %v6407 = vunpack.c.l.s4 1966171168
  %v6408 = vunpack.c.0.s8 %v6407
  %v6409 = vlaneseq
  %v6410 = vshrl.u32 %v6409, 7
  %v6411 = vsub.s32 %v6408, %v6410
  %v6412 = vrot.slane %v6398, %v6411
  %v6415 = vmul.f32 %v6386, %v6405
  %v6416 = vmul.f32 %v6388, %v6412
  %v6419 = vrot.slane %v6260, 2
  %v6420 = vrot.slane %v6262, 2
  %v6423 = vadd.f32 %v6419, %v6415
  %v6424 = vadd.f32 %v6420, %v6416
  %v6425 = vtanh.pop %v6423
  %v6426 = vtanh.pop %v6424
  %v6429 = vrot.slane %v6386, 1
  %v6430 = vrot.slane %v6388, 1
  %v6433 = vsub.f32 1.0, %v6429
  %v6434 = vsub.f32 1.0, %v6430
  %v6435 = vmul.f32 %v6433, %v6425
  %v6436 = vmul.f32 %v6434, %v6426
  %v6437 = vmul.f32 %v6429, %v6233
  %v6438 = vmul.f32 %v6430, %v6234
  %v6439 = vadd.f32 %v6435, %v6437
  %v6440 = vadd.f32 %v6436, %v6438
  %v6441 = vpack.c.bf16 %v6439, %v6439
  %v6442 = vpack.c.bf16 %v6440, %v6440
  %v6445 = vunpack.c.l.b16 %v6441
  %v6446 = vunpack.c.l.b16 %v6442
  %v6447 = vpack.c.b16 %v6445, %v6445
  %v6448 = vpack.c.b16 %v6446, %v6446
  %v6449 = vrot.slane %v6447, 6
  %v6450 = vrot.slane %v6448, 6
  %v6453 = vld [vmem:[%s5 + $0xc] sm:$0x4]
  %v6454 = vsel %vm1597, %v6449, %v6453
  %6455 = vst [vmem:[%s5 + $0xc] sm:$0x4] %v6454
  %v6456 = vld [vmem:[%s5 + $0x1c] sm:$0x4]
  %v6457 = vsel %vm1597, %v6450, %v6456
  %6458 = vst [vmem:[%s5 + $0x1c] sm:$0x4] %v6457
  %s6459 = scalar_lea.vmem [#allocation3], 77
  %v6460 = vld [vmem:[%s6459] ss:$8 sm:$0x7]
  %s6461 = scalar_lea.vmem [#allocation3], 173
  %v6462 = vld [vmem:[%s6461] ss:$8 sm:$0x7]
  %v6463 = vrot.slane %v6446, 7
  %v6464 = vsel %vm788, %v6463, %v6445
  %v6465 = vpack.c.b16 %v6464, %v6464
  %6467 = vmatprep.subr.bf16.mxu0 %v516
  %6468 = vmatpush1.bf16.msra.mxu0 %v515
  %6469 = vmatprep.subr.bf16.mxu0 %v519
  %6470 = vmatpush1.bf16.msra.mxu0 %v518
  %6471 = vmatprep.subr.bf16.mxu0 %v522
  %6472 = vmatpush1.bf16.msra.mxu0 %v521
  %6473 = vmatprep.subr.bf16.mxu0 %v525
  %6474 = vmatpush1.bf16.msra.mxu0 %v524
  %6475 = vmatprep.subr.bf16.mxu0 %v528
  %6476 = vmatpush1.bf16.msra.mxu0 %v527
  %6477 = vmatprep.subr.bf16.mxu0 %v531
  %6478 = vmatpush1.bf16.msra.mxu0 %v530
  %6479 = vmatprep.subr.bf16.mxu0 %v534
  %6480 = vmatpush1.bf16.msra.mxu0 %v533
  %6481 = vmatprep.subr.bf16.mxu0 %v537
  %6482 = vmatpush1.bf16.msra.mxu0 %v536
  %6483 = vmatprep.subr.bf16.mxu0 0
  %6484 = vmatpush1.bf16.msra.mxu0 0
  %6485 = vmatprep.subr.bf16.mxu0 0
  %6486 = vmatpush1.bf16.msra.mxu0 0
  %6487 = vmatprep.subr.bf16.mxu0 0
  %6488 = vmatpush1.bf16.msra.mxu0 0
  %6489 = vmatprep.subr.bf16.mxu0 0
  %6490 = vmatpush1.bf16.msra.mxu0 0
  %6491 = vmatprep.subr.bf16.mxu0 0
  %6492 = vmatpush1.bf16.msra.mxu0 0
  %6493 = vmatprep.subr.bf16.mxu0 0
  %6494 = vmatpush1.bf16.msra.mxu0 0
  %6495 = vmatprep.subr.bf16.mxu0 0
  %6496 = vmatpush1.bf16.msra.mxu0 0
  %6497 = vmatprep.subr.bf16.mxu0 0
  %6498 = vmatpush1.bf16.msra.mxu0 0
  %6499 = vmatprep.mubr.bf16.mxu0 0
  %6500 = vmatmul.mubr.bf16.gmra.mrb[0].mxu0 %v6465
  %v6501 = vpop.f32.mrb[0].mxu0
  %v6502 = vadd.f32 0.0, %v6501
  %v6503 = vpop.f32.mrb[0].mxu0
  %v6504 = vadd.f32 0.0, %v6503
  %v6505 = vpop.f32.mrb[0].mxu0
  %v6506 = vpop.f32.mrb[0].mxu0
  %6507 = vdwg.mxu0
  %6508 = vmatprep.subr.bf16.mxu0 0
  %6509 = vmatpush1.bf16.msra.mxu0 %v517
  %6510 = vmatprep.subr.bf16.mxu0 0
  %6511 = vmatpush1.bf16.msra.mxu0 %v520
  %6512 = vmatprep.subr.bf16.mxu0 0
  %6513 = vmatpush1.bf16.msra.mxu0 %v523
  %6514 = vmatprep.subr.bf16.mxu0 0
  %6515 = vmatpush1.bf16.msra.mxu0 %v526
  %6516 = vmatprep.subr.bf16.mxu0 0
  %6517 = vmatpush1.bf16.msra.mxu0 %v529
  %6518 = vmatprep.subr.bf16.mxu0 0
  %6519 = vmatpush1.bf16.msra.mxu0 %v532
  %6520 = vmatprep.subr.bf16.mxu0 0
  %6521 = vmatpush1.bf16.msra.mxu0 %v535
  %6522 = vmatprep.subr.bf16.mxu0 0
  %6523 = vmatpush1.bf16.msra.mxu0 %v538
  %6524 = vmatprep.subr.bf16.mxu0 0
  %6525 = vmatpush1.bf16.msra.mxu0 0
  %6526 = vmatprep.subr.bf16.mxu0 0
  %6527 = vmatpush1.bf16.msra.mxu0 0
  %6528 = vmatprep.subr.bf16.mxu0 0
  %6529 = vmatpush1.bf16.msra.mxu0 0
  %6530 = vmatprep.subr.bf16.mxu0 0
  %6531 = vmatpush1.bf16.msra.mxu0 0
  %6532 = vmatprep.subr.bf16.mxu0 0
  %6533 = vmatpush1.bf16.msra.mxu0 0
  %6534 = vmatprep.subr.bf16.mxu0 0
  %6535 = vmatpush1.bf16.msra.mxu0 0
  %6536 = vmatprep.subr.bf16.mxu0 0
  %6537 = vmatpush1.bf16.msra.mxu0 0
  %6538 = vmatprep.subr.bf16.mxu0 0
  %6539 = vmatpush1.bf16.msra.mxu0 0
  %6540 = vmatprep.mubr.bf16.mxu0 0
  %6541 = vmatmul.mubr.bf16.gmra.mrb[0].mxu0 %v6465
  %v6542 = vpop.f32.mrb[0].mxu0
  %v6543 = vadd.f32 0.0, %v6542
  %v6544 = vpop.f32.mrb[0].mxu0
  %v6545 = vpop.f32.mrb[0].mxu0
  %v6546 = vpop.f32.mrb[0].mxu0
  %6547 = vdwg.mxu0
  %v6550 = vcombine.low %v6502, %v6504
  %v6552 = vunpack.c.l.s4 1966171168
  %v6553 = vunpack.c.0.s8 %v6552
  %v6554 = vlaneseq
  %v6555 = vshrl.u32 %v6554, 7
  %v6556 = vsub.s32 %v6553, %v6555
  %v6557 = vrot.slane %v6550, %v6556
  %v6558 = vcombine.high %v6557, %v6557
  %v6560 = vunpack.c.l.s4 1966171168
  %v6561 = vunpack.c.0.s8 %v6560
  %v6562 = vlaneseq
  %v6563 = vshrl.u32 %v6562, 7
  %v6564 = vsub.s32 %v6561, %v6563
  %v6565 = vrot.slane %v6557, %v6564
  %v6567 = vunpack.c.l.s4 1966171168
  %v6568 = vunpack.c.0.s8 %v6567
  %v6569 = vlaneseq
  %v6570 = vshrl.u32 %v6569, 7
  %v6571 = vsub.s32 %v6568, %v6570
  %v6572 = vrot.slane %v6558, %v6571
  %v6575 = vadd.f32 %v6460, %v6565
  %v6576 = vadd.f32 %v6462, %v6572
  %v6577 = vxor.u32 %v6575, 2147483648
  %v6578 = vxor.u32 %v6576, 2147483648
  %v6579 = vmul.f32 %v6577, 1.442695
  %v6580 = vpow.pop %v6579
  %v6581 = vmul.f32 %v6578, 1.442695
  %v6582 = vpow.pop %v6581
  %v6583 = vadd.f32 %v6580, 1.0
  %v6584 = vadd.f32 %v6582, 1.0
  %v6585 = vrcp.pop %v6583
  %v6586 = vmul.f32 1.0, %v6585
  %v6587 = vrcp.pop %v6584
  %v6588 = vmul.f32 1.0, %v6587
  %v6589 = vadd.f32 %v6543, %v689
  %v6592 = vunpack.c.l.s4 1966171168
  %v6593 = vunpack.c.0.s8 %v6592
  %v6594 = vlaneseq
  %v6595 = vshrl.u32 %v6594, 7
  %v6596 = vsub.s32 %v6593, %v6595
  %v6597 = vrot.slane %v6589, %v6596
  %v6598 = vcombine.high %v6597, %v6597
  %v6600 = vunpack.c.l.s4 1966171168
  %v6601 = vunpack.c.0.s8 %v6600
  %v6602 = vlaneseq
  %v6603 = vshrl.u32 %v6602, 7
  %v6604 = vsub.s32 %v6601, %v6603
  %v6605 = vrot.slane %v6597, %v6604
  %v6607 = vunpack.c.l.s4 1966171168
  %v6608 = vunpack.c.0.s8 %v6607
  %v6609 = vlaneseq
  %v6610 = vshrl.u32 %v6609, 7
  %v6611 = vsub.s32 %v6608, %v6610
  %v6612 = vrot.slane %v6598, %v6611
  %v6615 = vmul.f32 %v6586, %v6605
  %v6616 = vmul.f32 %v6588, %v6612
  %v6619 = vrot.slane %v6460, 2
  %v6620 = vrot.slane %v6462, 2
  %v6623 = vadd.f32 %v6619, %v6615
  %v6624 = vadd.f32 %v6620, %v6616
  %v6625 = vtanh.pop %v6623
  %v6626 = vtanh.pop %v6624
  %v6629 = vrot.slane %v6586, 1
  %v6630 = vrot.slane %v6588, 1
  %v6633 = vsub.f32 1.0, %v6629
  %v6634 = vsub.f32 1.0, %v6630
  %v6635 = vmul.f32 %v6633, %v6625
  %v6636 = vmul.f32 %v6634, %v6626
  %v6637 = vmul.f32 %v6629, %v6439
  %v6638 = vmul.f32 %v6630, %v6440
  %v6639 = vadd.f32 %v6635, %v6637
  %v6640 = vadd.f32 %v6636, %v6638
  %v6641 = vpack.c.bf16 %v6639, %v6639
  %v6642 = vpack.c.bf16 %v6640, %v6640
  %v6645 = vunpack.c.l.b16 %v6641
  %v6646 = vunpack.c.l.b16 %v6642
  %v6647 = vpack.c.b16 %v6645, %v6645
  %v6648 = vpack.c.b16 %v6646, %v6646
  %v6650 = vshll.u32 %v6647, 16
  %v6652 = vrot.slane %v6650, 6
  %v6654 = vshll.u32 %v6648, 16
  %v6656 = vrot.slane %v6654, 6
  %v6659 = vld [vmem:[%s5 + $0xc] sm:$0x4]
  %v6660 = vsel %vm1805, %v6652, %v6659
  %6661 = vst [vmem:[%s5 + $0xc] sm:$0x4] %v6660
  %v6662 = vld [vmem:[%s5 + $0x1c] sm:$0x4]
  %v6663 = vsel %vm1805, %v6656, %v6662
  %6664 = vst [vmem:[%s5 + $0x1c] sm:$0x4] %v6663
  %s6665 = scalar_lea.vmem [#allocation3], 78
  %v6666 = vld [vmem:[%s6665] ss:$8 sm:$0x7]
  %s6667 = scalar_lea.vmem [#allocation3], 174
  %v6668 = vld [vmem:[%s6667] ss:$8 sm:$0x7]
  %v6669 = vrot.slane %v6646, 7
  %v6670 = vsel %vm788, %v6669, %v6645
  %v6671 = vpack.c.b16 %v6670, %v6670
  %6673 = vmatprep.subr.bf16.mxu0 %v516
  %6674 = vmatpush1.bf16.msra.mxu0 %v515
  %6675 = vmatprep.subr.bf16.mxu0 %v519
  %6676 = vmatpush1.bf16.msra.mxu0 %v518
  %6677 = vmatprep.subr.bf16.mxu0 %v522
  %6678 = vmatpush1.bf16.msra.mxu0 %v521
  %6679 = vmatprep.subr.bf16.mxu0 %v525
  %6680 = vmatpush1.bf16.msra.mxu0 %v524
  %6681 = vmatprep.subr.bf16.mxu0 %v528
  %6682 = vmatpush1.bf16.msra.mxu0 %v527
  %6683 = vmatprep.subr.bf16.mxu0 %v531
  %6684 = vmatpush1.bf16.msra.mxu0 %v530
  %6685 = vmatprep.subr.bf16.mxu0 %v534
  %6686 = vmatpush1.bf16.msra.mxu0 %v533
  %6687 = vmatprep.subr.bf16.mxu0 %v537
  %6688 = vmatpush1.bf16.msra.mxu0 %v536
  %6689 = vmatprep.subr.bf16.mxu0 0
  %6690 = vmatpush1.bf16.msra.mxu0 0
  %6691 = vmatprep.subr.bf16.mxu0 0
  %6692 = vmatpush1.bf16.msra.mxu0 0
  %6693 = vmatprep.subr.bf16.mxu0 0
  %6694 = vmatpush1.bf16.msra.mxu0 0
  %6695 = vmatprep.subr.bf16.mxu0 0
  %6696 = vmatpush1.bf16.msra.mxu0 0
  %6697 = vmatprep.subr.bf16.mxu0 0
  %6698 = vmatpush1.bf16.msra.mxu0 0
  %6699 = vmatprep.subr.bf16.mxu0 0
  %6700 = vmatpush1.bf16.msra.mxu0 0
  %6701 = vmatprep.subr.bf16.mxu0 0
  %6702 = vmatpush1.bf16.msra.mxu0 0
  %6703 = vmatprep.subr.bf16.mxu0 0
  %6704 = vmatpush1.bf16.msra.mxu0 0
  %6705 = vmatprep.mubr.bf16.mxu0 0
  %6706 = vmatmul.mubr.bf16.gmra.mrb[0].mxu0 %v6671
  %v6707 = vpop.f32.mrb[0].mxu0
  %v6708 = vadd.f32 0.0, %v6707
  %v6709 = vpop.f32.mrb[0].mxu0
  %v6710 = vadd.f32 0.0, %v6709
  %v6711 = vpop.f32.mrb[0].mxu0
  %v6712 = vpop.f32.mrb[0].mxu0
  %6713 = vdwg.mxu0
  %6714 = vmatprep.subr.bf16.mxu0 0
  %6715 = vmatpush1.bf16.msra.mxu0 %v517
  %6716 = vmatprep.subr.bf16.mxu0 0
  %6717 = vmatpush1.bf16.msra.mxu0 %v520
  %6718 = vmatprep.subr.bf16.mxu0 0
  %6719 = vmatpush1.bf16.msra.mxu0 %v523
  %6720 = vmatprep.subr.bf16.mxu0 0
  %6721 = vmatpush1.bf16.msra.mxu0 %v526
  %6722 = vmatprep.subr.bf16.mxu0 0
  %6723 = vmatpush1.bf16.msra.mxu0 %v529
  %6724 = vmatprep.subr.bf16.mxu0 0
  %6725 = vmatpush1.bf16.msra.mxu0 %v532
  %6726 = vmatprep.subr.bf16.mxu0 0
  %6727 = vmatpush1.bf16.msra.mxu0 %v535
  %6728 = vmatprep.subr.bf16.mxu0 0
  %6729 = vmatpush1.bf16.msra.mxu0 %v538
  %6730 = vmatprep.subr.bf16.mxu0 0
  %6731 = vmatpush1.bf16.msra.mxu0 0
  %6732 = vmatprep.subr.bf16.mxu0 0
  %6733 = vmatpush1.bf16.msra.mxu0 0
  %6734 = vmatprep.subr.bf16.mxu0 0
  %6735 = vmatpush1.bf16.msra.mxu0 0
  %6736 = vmatprep.subr.bf16.mxu0 0
  %6737 = vmatpush1.bf16.msra.mxu0 0
  %6738 = vmatprep.subr.bf16.mxu0 0
  %6739 = vmatpush1.bf16.msra.mxu0 0
  %6740 = vmatprep.subr.bf16.mxu0 0
  %6741 = vmatpush1.bf16.msra.mxu0 0
  %6742 = vmatprep.subr.bf16.mxu0 0
  %6743 = vmatpush1.bf16.msra.mxu0 0
  %6744 = vmatprep.subr.bf16.mxu0 0
  %6745 = vmatpush1.bf16.msra.mxu0 0
  %6746 = vmatprep.mubr.bf16.mxu0 0
  %6747 = vmatmul.mubr.bf16.gmra.mrb[0].mxu0 %v6671
  %v6748 = vpop.f32.mrb[0].mxu0
  %v6749 = vadd.f32 0.0, %v6748
  %v6750 = vpop.f32.mrb[0].mxu0
  %v6751 = vpop.f32.mrb[0].mxu0
  %v6752 = vpop.f32.mrb[0].mxu0
  %6753 = vdwg.mxu0
  %v6756 = vcombine.low %v6708, %v6710
  %v6758 = vunpack.c.l.s4 1966171168
  %v6759 = vunpack.c.0.s8 %v6758
  %v6760 = vlaneseq
  %v6761 = vshrl.u32 %v6760, 7
  %v6762 = vsub.s32 %v6759, %v6761
  %v6763 = vrot.slane %v6756, %v6762
  %v6764 = vcombine.high %v6763, %v6763
  %v6766 = vunpack.c.l.s4 1966171168
  %v6767 = vunpack.c.0.s8 %v6766
  %v6768 = vlaneseq
  %v6769 = vshrl.u32 %v6768, 7
  %v6770 = vsub.s32 %v6767, %v6769
  %v6771 = vrot.slane %v6763, %v6770
  %v6773 = vunpack.c.l.s4 1966171168
  %v6774 = vunpack.c.0.s8 %v6773
  %v6775 = vlaneseq
  %v6776 = vshrl.u32 %v6775, 7
  %v6777 = vsub.s32 %v6774, %v6776
  %v6778 = vrot.slane %v6764, %v6777
  %v6781 = vadd.f32 %v6666, %v6771
  %v6782 = vadd.f32 %v6668, %v6778
  %v6783 = vxor.u32 %v6781, 2147483648
  %v6784 = vxor.u32 %v6782, 2147483648
  %v6785 = vmul.f32 %v6783, 1.442695
  %v6786 = vpow.pop %v6785
  %v6787 = vmul.f32 %v6784, 1.442695
  %v6788 = vpow.pop %v6787
  %v6789 = vadd.f32 %v6786, 1.0
  %v6790 = vadd.f32 %v6788, 1.0
  %v6791 = vrcp.pop %v6789
  %v6792 = vmul.f32 1.0, %v6791
  %v6793 = vrcp.pop %v6790
  %v6794 = vmul.f32 1.0, %v6793
  %v6795 = vadd.f32 %v6749, %v689
  %v6798 = vunpack.c.l.s4 1966171168
  %v6799 = vunpack.c.0.s8 %v6798
  %v6800 = vlaneseq
  %v6801 = vshrl.u32 %v6800, 7
  %v6802 = vsub.s32 %v6799, %v6801
  %v6803 = vrot.slane %v6795, %v6802
  %v6804 = vcombine.high %v6803, %v6803
  %v6806 = vunpack.c.l.s4 1966171168
  %v6807 = vunpack.c.0.s8 %v6806
  %v6808 = vlaneseq
  %v6809 = vshrl.u32 %v6808, 7
  %v6810 = vsub.s32 %v6807, %v6809
  %v6811 = vrot.slane %v6803, %v6810
  %v6813 = vunpack.c.l.s4 1966171168
  %v6814 = vunpack.c.0.s8 %v6813
  %v6815 = vlaneseq
  %v6816 = vshrl.u32 %v6815, 7
  %v6817 = vsub.s32 %v6814, %v6816
  %v6818 = vrot.slane %v6804, %v6817
  %v6821 = vmul.f32 %v6792, %v6811
  %v6822 = vmul.f32 %v6794, %v6818
  %v6825 = vrot.slane %v6666, 2
  %v6826 = vrot.slane %v6668, 2
  %v6829 = vadd.f32 %v6825, %v6821
  %v6830 = vadd.f32 %v6826, %v6822
  %v6831 = vtanh.pop %v6829
  %v6832 = vtanh.pop %v6830
  %v6835 = vrot.slane %v6792, 1
  %v6836 = vrot.slane %v6794, 1
  %v6839 = vsub.f32 1.0, %v6835
  %v6840 = vsub.f32 1.0, %v6836
  %v6841 = vmul.f32 %v6839, %v6831
  %v6842 = vmul.f32 %v6840, %v6832
  %v6843 = vmul.f32 %v6835, %v6639
  %v6844 = vmul.f32 %v6836, %v6640
  %v6845 = vadd.f32 %v6841, %v6843
  %v6846 = vadd.f32 %v6842, %v6844
  %v6847 = vpack.c.bf16 %v6845, %v6845
  %v6848 = vpack.c.bf16 %v6846, %v6846
  %v6851 = vunpack.c.l.b16 %v6847
  %v6852 = vunpack.c.l.b16 %v6848
  %v6853 = vpack.c.b16 %v6851, %v6851
  %v6854 = vpack.c.b16 %v6852, %v6852
  %v6855 = vrot.slane %v6853, 5
  %v6856 = vrot.slane %v6854, 5
  %v6859 = vld [vmem:[%s5 + $0xc] sm:$0x8]
  %v6860 = vsel %vm2008, %v6855, %v6859
  %6861 = vst [vmem:[%s5 + $0xc] sm:$0x8] %v6860
  %v6862 = vld [vmem:[%s5 + $0x1c] sm:$0x8]
  %v6863 = vsel %vm2008, %v6856, %v6862
  %6864 = vst [vmem:[%s5 + $0x1c] sm:$0x8] %v6863
  %s6865 = scalar_lea.vmem [#allocation3], 79
  %v6866 = vld [vmem:[%s6865] ss:$8 sm:$0x7]
  %s6867 = scalar_lea.vmem [#allocation3], 175
  %v6868 = vld [vmem:[%s6867] ss:$8 sm:$0x7]
  %v6869 = vrot.slane %v6852, 7
  %v6870 = vsel %vm788, %v6869, %v6851
  %v6871 = vpack.c.b16 %v6870, %v6870
  %6873 = vmatprep.subr.bf16.mxu0 %v516
  %6874 = vmatpush1.bf16.msra.mxu0 %v515
  %6875 = vmatprep.subr.bf16.mxu0 %v519
  %6876 = vmatpush1.bf16.msra.mxu0 %v518
  %6877 = vmatprep.subr.bf16.mxu0 %v522
  %6878 = vmatpush1.bf16.msra.mxu0 %v521
  %6879 = vmatprep.subr.bf16.mxu0 %v525
  %6880 = vmatpush1.bf16.msra.mxu0 %v524
  %6881 = vmatprep.subr.bf16.mxu0 %v528
  %6882 = vmatpush1.bf16.msra.mxu0 %v527
  %6883 = vmatprep.subr.bf16.mxu0 %v531
  %6884 = vmatpush1.bf16.msra.mxu0 %v530
  %6885 = vmatprep.subr.bf16.mxu0 %v534
  %6886 = vmatpush1.bf16.msra.mxu0 %v533
  %6887 = vmatprep.subr.bf16.mxu0 %v537
  %6888 = vmatpush1.bf16.msra.mxu0 %v536
  %6889 = vmatprep.subr.bf16.mxu0 0
  %6890 = vmatpush1.bf16.msra.mxu0 0
  %6891 = vmatprep.subr.bf16.mxu0 0
  %6892 = vmatpush1.bf16.msra.mxu0 0
  %6893 = vmatprep.subr.bf16.mxu0 0
  %6894 = vmatpush1.bf16.msra.mxu0 0
  %6895 = vmatprep.subr.bf16.mxu0 0
  %6896 = vmatpush1.bf16.msra.mxu0 0
  %6897 = vmatprep.subr.bf16.mxu0 0
  %6898 = vmatpush1.bf16.msra.mxu0 0
  %6899 = vmatprep.subr.bf16.mxu0 0
  %6900 = vmatpush1.bf16.msra.mxu0 0
  %6901 = vmatprep.subr.bf16.mxu0 0
  %6902 = vmatpush1.bf16.msra.mxu0 0
  %6903 = vmatprep.subr.bf16.mxu0 0
  %6904 = vmatpush1.bf16.msra.mxu0 0
  %6905 = vmatprep.mubr.bf16.mxu0 0
  %6906 = vmatmul.mubr.bf16.gmra.mrb[0].mxu0 %v6871
  %v6907 = vpop.f32.mrb[0].mxu0
  %v6908 = vadd.f32 0.0, %v6907
  %v6909 = vpop.f32.mrb[0].mxu0
  %v6910 = vadd.f32 0.0, %v6909
  %v6911 = vpop.f32.mrb[0].mxu0
  %v6912 = vpop.f32.mrb[0].mxu0
  %6913 = vdwg.mxu0
  %6914 = vmatprep.subr.bf16.mxu0 0
  %6915 = vmatpush1.bf16.msra.mxu0 %v517
  %6916 = vmatprep.subr.bf16.mxu0 0
  %6917 = vmatpush1.bf16.msra.mxu0 %v520
  %6918 = vmatprep.subr.bf16.mxu0 0
  %6919 = vmatpush1.bf16.msra.mxu0 %v523
  %6920 = vmatprep.subr.bf16.mxu0 0
  %6921 = vmatpush1.bf16.msra.mxu0 %v526
  %6922 = vmatprep.subr.bf16.mxu0 0
  %6923 = vmatpush1.bf16.msra.mxu0 %v529
  %6924 = vmatprep.subr.bf16.mxu0 0
  %6925 = vmatpush1.bf16.msra.mxu0 %v532
  %6926 = vmatprep.subr.bf16.mxu0 0
  %6927 = vmatpush1.bf16.msra.mxu0 %v535
  %6928 = vmatprep.subr.bf16.mxu0 0
  %6929 = vmatpush1.bf16.msra.mxu0 %v538
  %6930 = vmatprep.subr.bf16.mxu0 0
  %6931 = vmatpush1.bf16.msra.mxu0 0
  %6932 = vmatprep.subr.bf16.mxu0 0
  %6933 = vmatpush1.bf16.msra.mxu0 0
  %6934 = vmatprep.subr.bf16.mxu0 0
  %6935 = vmatpush1.bf16.msra.mxu0 0
  %6936 = vmatprep.subr.bf16.mxu0 0
  %6937 = vmatpush1.bf16.msra.mxu0 0
  %6938 = vmatprep.subr.bf16.mxu0 0
  %6939 = vmatpush1.bf16.msra.mxu0 0
  %6940 = vmatprep.subr.bf16.mxu0 0
  %6941 = vmatpush1.bf16.msra.mxu0 0
  %6942 = vmatprep.subr.bf16.mxu0 0
  %6943 = vmatpush1.bf16.msra.mxu0 0
  %6944 = vmatprep.subr.bf16.mxu0 0
  %6945 = vmatpush1.bf16.msra.mxu0 0
  %6946 = vmatprep.mubr.bf16.mxu0 0
  %6947 = vmatmul.mubr.bf16.gmra.mrb[0].mxu0 %v6871
  %v6948 = vpop.f32.mrb[0].mxu0
  %v6949 = vadd.f32 0.0, %v6948
  %v6950 = vpop.f32.mrb[0].mxu0
  %v6951 = vpop.f32.mrb[0].mxu0
  %v6952 = vpop.f32.mrb[0].mxu0
  %6953 = vdwg.mxu0
  %v6956 = vcombine.low %v6908, %v6910
  %v6958 = vunpack.c.l.s4 1966171168
  %v6959 = vunpack.c.0.s8 %v6958
  %v6960 = vlaneseq
  %v6961 = vshrl.u32 %v6960, 7
  %v6962 = vsub.s32 %v6959, %v6961
  %v6963 = vrot.slane %v6956, %v6962
  %v6964 = vcombine.high %v6963, %v6963
  %v6966 = vunpack.c.l.s4 1966171168
  %v6967 = vunpack.c.0.s8 %v6966
  %v6968 = vlaneseq
  %v6969 = vshrl.u32 %v6968, 7
  %v6970 = vsub.s32 %v6967, %v6969
  %v6971 = vrot.slane %v6963, %v6970
  %v6973 = vunpack.c.l.s4 1966171168
  %v6974 = vunpack.c.0.s8 %v6973
  %v6975 = vlaneseq
  %v6976 = vshrl.u32 %v6975, 7
  %v6977 = vsub.s32 %v6974, %v6976
  %v6978 = vrot.slane %v6964, %v6977
  %v6981 = vadd.f32 %v6866, %v6971
  %v6982 = vadd.f32 %v6868, %v6978
  %v6983 = vxor.u32 %v6981, 2147483648
  %v6984 = vxor.u32 %v6982, 2147483648
  %v6985 = vmul.f32 %v6983, 1.442695
  %v6986 = vpow.pop %v6985
  %v6987 = vmul.f32 %v6984, 1.442695
  %v6988 = vpow.pop %v6987
  %v6989 = vadd.f32 %v6986, 1.0
  %v6990 = vadd.f32 %v6988, 1.0
  %v6991 = vrcp.pop %v6989
  %v6992 = vmul.f32 1.0, %v6991
  %v6993 = vrcp.pop %v6990
  %v6994 = vmul.f32 1.0, %v6993
  %v6995 = vadd.f32 %v6949, %v689
  %v6998 = vunpack.c.l.s4 1966171168
  %v6999 = vunpack.c.0.s8 %v6998
  %v7000 = vlaneseq
  %v7001 = vshrl.u32 %v7000, 7
  %v7002 = vsub.s32 %v6999, %v7001
  %v7003 = vrot.slane %v6995, %v7002
  %v7004 = vcombine.high %v7003, %v7003
  %v7006 = vunpack.c.l.s4 1966171168
  %v7007 = vunpack.c.0.s8 %v7006
  %v7008 = vlaneseq
  %v7009 = vshrl.u32 %v7008, 7
  %v7010 = vsub.s32 %v7007, %v7009
  %v7011 = vrot.slane %v7003, %v7010
  %v7013 = vunpack.c.l.s4 1966171168
  %v7014 = vunpack.c.0.s8 %v7013
  %v7015 = vlaneseq
  %v7016 = vshrl.u32 %v7015, 7
  %v7017 = vsub.s32 %v7014, %v7016
  %v7018 = vrot.slane %v7004, %v7017
  %v7021 = vmul.f32 %v6992, %v7011
  %v7022 = vmul.f32 %v6994, %v7018
  %v7025 = vrot.slane %v6866, 2
  %v7026 = vrot.slane %v6868, 2
  %v7029 = vadd.f32 %v7025, %v7021
  %v7030 = vadd.f32 %v7026, %v7022
  %v7031 = vtanh.pop %v7029
  %v7032 = vtanh.pop %v7030
  %v7035 = vrot.slane %v6992, 1
  %v7036 = vrot.slane %v6994, 1
  %v7039 = vsub.f32 1.0, %v7035
  %v7040 = vsub.f32 1.0, %v7036
  %v7041 = vmul.f32 %v7039, %v7031
  %v7042 = vmul.f32 %v7040, %v7032
  %v7043 = vmul.f32 %v7035, %v6845
  %v7044 = vmul.f32 %v7036, %v6846
  %v7045 = vadd.f32 %v7041, %v7043
  %v7046 = vadd.f32 %v7042, %v7044
  %v7047 = vpack.c.bf16 %v7045, %v7045
  %v7048 = vpack.c.bf16 %v7046, %v7046
  %v7051 = vunpack.c.l.b16 %v7047
  %v7052 = vunpack.c.l.b16 %v7048
  %v7053 = vpack.c.b16 %v7051, %v7051
  %v7054 = vpack.c.b16 %v7052, %v7052
  %v7056 = vshll.u32 %v7053, 16
  %v7058 = vrot.slane %v7056, 5
  %v7060 = vshll.u32 %v7054, 16
  %v7062 = vrot.slane %v7060, 5
  %v7065 = vld [vmem:[%s5 + $0xc] sm:$0x8]
  %v7066 = vsel %vm2216, %v7058, %v7065
  %7067 = vst [vmem:[%s5 + $0xc] sm:$0x8] %v7066
  %v7068 = vld [vmem:[%s5 + $0x1c] sm:$0x8]
  %v7069 = vsel %vm2216, %v7062, %v7068
  %7070 = vst [vmem:[%s5 + $0x1c] sm:$0x8] %v7069
  %v7073 = vcombine.low %v7045, %v7046
  %v7075 = vunpack.c.l.s4 1966171168
  %v7076 = vunpack.c.0.s8 %v7075
  %v7077 = vlaneseq
  %v7078 = vshrl.u32 %v7077, 7
  %v7079 = vsub.s32 %v7076, %v7078
  %v7080 = vrot.slane %v7073, %v7079
  %v7082 = vunpack.c.l.s4 1966171168
  %v7083 = vunpack.c.0.s8 %v7082
  %v7084 = vlaneseq
  %v7085 = vshrl.u32 %v7084, 7
  %v7086 = vsub.s32 %v7083, %v7085
  %v7087 = vrot.slane %v7080, %v7086
  %7089 = vst [vmem:[#allocation2] sm:$0x3] %v7087
  // Predicated region
  $region26: #{fwd.6} parent=0 // pred_check
    _
  $region27: #{fwd.6} parent=0 // pred_check_branch
    %7091 = sbr.rel (0) target = $region29
  $region28: #{fwd.6} parent=0 // pred_region
    _
  $region29: #{fwd.6} parent=0 // pred_fallthru
    _
  // Predicated region
  $region30: #{fwd.6} parent=0 // pred_check
    _
  $region31: #{fwd.6} parent=0 // pred_check_branch
    %7093 = sbr.rel (0) target = $region33
  $region32: #{fwd.6} parent=0 // pred_region
    _
  $region33: #{fwd.6} parent=0 // pred_fallthru
    _

</llo_original>
